<compile_context>
chip_gen: v7x
topology: tpu7x:2x2x1
jax: 0.10.0
libtpu: 0.0.40
codegen_flags: <defaults>
</compile_context>

<pallas_src>
import functools

import jax
import jax.numpy as jnp
from jax import lax
from jax.experimental import pallas as pl
from jax.experimental.pallas import tpu as pltpu


# ----------------------------- fused Pallas kernel -------------------------- #

def _esa_kernel(x_ref, rwt_ref, lx_ref, b2e_ref, sq_ref, lcat_ref, b34_ref,
                mwt_ref, mh_ref, axf_ref, bxf_ref, o_ref,
                *, Cn, f, H, W, H2, W2, H3, W3):
    """Whole ESA forward for one image (row layout: (Cn*H, W))."""
    xr = x_ref[0]                                             # (Cn*H, W)

    # ---------------- reduced-resolution branch ---------------- #
    # stride-2 column selection, all 3 horizontal taps in ONE matmul
    xw = jnp.dot(xr, rwt_ref[...], preferred_element_type=jnp.float32)  # (Cn*H, 3*W2)

    # conv2(conv1(x)) with the dy-sum folded into the left operator: 3 matmuls
    acc = None
    for dx in range(3):
        term = jnp.dot(lx_ref[dx], xw[:, dx * W2:(dx + 1) * W2],
                       preferred_element_type=jnp.float32)    # (f*H2, W2)
        acc = term if acc is None else acc + term
    c1 = acc + b2e_ref[...]                                   # (f*H2, W2)

    # F.max_pool2d(kernel=7, stride=3): width reduce, then height reduce,
    # assembled in (c, p) row order with static slices + concatenates.
    cw = jnp.concatenate(
        [jnp.max(c1[:, 3 * q:3 * q + 7], axis=1, keepdims=True)
         for q in range(W3)], axis=1)                         # (f*H2, W3)
    vr = jnp.concatenate(
        [jnp.max(cw[c * H2 + 3 * p: c * H2 + 3 * p + 7, :],
                 axis=0, keepdims=True)
         for c in range(f) for p in range(H3)], axis=0)       # (f*H3, W3)

    # conv3 (3x3, pad 1) with conv4's channel map folded in: 2 matmuls.
    vs = jnp.dot(vr, sq_ref[...], preferred_element_type=jnp.float32)    # (f*H3, 3*W3)
    vstk = jnp.concatenate([vs[:, k * W3:(k + 1) * W3] for k in range(3)],
                           axis=0)                            # (3*f*H3, W3)
    g = jnp.dot(lcat_ref[...], vstk,
                preferred_element_type=jnp.float32) + b34_ref[...]       # (Cn*H3, W3)

    # ---------------- full-resolution tail ---------------- #
    # separable bilinear upsample: width expansion once, height per channel
    t1 = jnp.dot(g, mwt_ref[...], preferred_element_type=jnp.float32)    # (Cn*H3, W)
    mh = mh_ref[...]                                          # (H, H3)

    xb = [xr[c * H:(c + 1) * H, :] for c in range(Cn)]        # per-channel views
    for d in range(Cn):
        c4 = jnp.dot(mh, t1[d * H3:(d + 1) * H3, :],
                     preferred_element_type=jnp.float32) + bxf_ref[d]     # (H, W)
        # folded 1x1 chain conv4(conv_f(conv1(x))): channel mix via SMEM scalars
        # TODO(synk): at large n_feats this Cn^2 scalar-FMA mix should move to
        # the MXU via an in-kernel (Cn, H*W) relayout.
        for c in range(Cn):
            c4 = c4 + axf_ref[d, c] * xb[c]
        m = 1.0 / (1.0 + jnp.exp(-c4))                        # sigmoid
        o_ref[0, d * H:(d + 1) * H, :] = (xb[d] * m).astype(o_ref.dtype)


# ------------------------ trace-time operator folding ----------------------- #

def _interp_matrix(out_size, in_size):
    """PyTorch bilinear (align_corners=False) 1-D interpolation matrix."""
    scale = in_size / out_size
    dst = jnp.arange(out_size, dtype=jnp.float32)
    src = jnp.maximum((dst + 0.5) * scale - 0.5, 0.0)
    i0 = jnp.minimum(jnp.floor(src).astype(jnp.int32), in_size - 1)
    i1 = jnp.minimum(i0 + 1, in_size - 1)
    wr = src - i0.astype(jnp.float32)
    wl = 1.0 - wr
    rows = jnp.arange(out_size)
    M = jnp.zeros((out_size, in_size), jnp.float32)
    M = M.at[rows, i0].add(wl)
    M = M.at[rows, i1].add(wr)
    return M


def _build_operators(params, Cn, H, W):
    w1, b1, w2, b2, w3, b3, wf, bf, w4, b4 = params
    f = w1.shape[1]
    H2 = (H - 3) // 2 + 1
    W2 = (W - 3) // 2 + 1
    H3 = (H2 - 7) // 3 + 1
    W3 = (W2 - 7) // 3 + 1

    A1 = w1.T                       # (f, Cn)  conv1
    Af = wf.T                       # (f, f)   conv_f
    A4 = w4.T                       # (Cn, f)  conv4

    # conv2 ∘ conv1 with the dy-sum folded: one (f*H2, Cn*H) operator per dx.
    lx = []
    for dx in range(3):
        op = None
        for dy in range(3):
            Rh = (jnp.arange(H)[None, :] ==
                  (2 * jnp.arange(H2)[:, None] + dy)).astype(jnp.float32)  # (H2, H)
            term = jnp.kron(w2[dy, dx].T @ A1, Rh)             # (f*H2, Cn*H)
            op = term if op is None else op + term
        lx.append(op)
    lx3 = jnp.stack(lx)                                        # (3, f*H2, Cn*H)

    # stride-2 column selection, 3 dx taps concatenated along N.
    rwt = jnp.concatenate(
        [(jnp.arange(W)[:, None] ==
          (2 * jnp.arange(W2)[None, :] + dx)).astype(jnp.float32)
         for dx in range(3)], axis=1)                          # (W, 3*W2)

    b2e = jnp.repeat(b2 + jnp.einsum('yxco,c->o', w2, b1), H2)[:, None]  # (f*H2, 1)

    # conv3 (+ conv4 fold): lane shift operator (right) and folded left op.
    sq = jnp.concatenate(
        [(jnp.arange(W3)[:, None] ==
          (jnp.arange(W3)[None, :] + dx - 1)).astype(jnp.float32)
         for dx in range(3)], axis=1)                          # (W3, 3*W3)
    lc = []
    for dx in range(3):
        op = None
        for dy in range(3):
            P = ((jnp.arange(H3)[:, None] + dy - 1) ==
                 jnp.arange(H3)[None, :]).astype(jnp.float32)  # (H3_out, H3_in)
            term = jnp.kron(A4 @ w3[dy, dx].T, P)              # (Cn*H3, f*H3)
            op = term if op is None else op + term
        lc.append(op)
    lcat = jnp.concatenate(lc, axis=1)                         # (Cn*H3, 3*f*H3)
    b34 = jnp.repeat(A4 @ b3, H3)[:, None]                     # (Cn*H3, 1)

    # separable bilinear upsample operators (align_corners=False)
    mh = _interp_matrix(H, H3)                                 # (H, H3)
    mwt = _interp_matrix(W, W3).T                              # (W3, W)

    # fully folded 1x1 chain conv4(conv_f(conv1(x)))
    axf = A4 @ Af @ A1                                         # (Cn, Cn)
    bxf = A4 @ (Af @ b1 + bf) + b4                             # (Cn,)

    dims = (f, H2, W2, H3, W3)
    return dims, (rwt, lx3, b2e, sq, lcat, b34, mwt, mh, axf, bxf)


def _const_spec(*shape):
    return pl.BlockSpec(shape, lambda b: (0,) * len(shape))


# --------------------------------- forward ---------------------------------- #

@jax.jit
def esa_forward(x_nchw, params):
    x = x_nchw.astype(jnp.float32)
    B, Cn, H, W = x.shape
    (f, H2, W2, H3, W3), ops = _build_operators(params, Cn, H, W)
    rwt, lx3, b2e, sq, lcat, b34, mwt, mh, axf, bxf = ops

    # TODO(synk): for very large H*W the whole-image-per-step block should be
    # split into an HW-tiled tail pass (and bf16 streaming used on v5e/v6e) so
    # it keeps fitting v7x's 64 MiB VMEM; at typical ESA feature-map sizes one
    # image per step is well within budget.
    x_rows = x.reshape(B, Cn * H, W)
    kern = functools.partial(_esa_kernel, Cn=Cn, f=f, H=H, W=W,
                             H2=H2, W2=W2, H3=H3, W3=W3)

    flops = B * (2 * Cn * H * W * 3 * W2            # column-tap matmul
                 + 2 * 3 * f * H2 * Cn * H * W2     # folded conv2
                 + 2 * Cn * H3 * 3 * f * H3 * W3    # folded conv3/conv4
                 + 2 * Cn * H3 * W3 * W             # upsample (width)
                 + 2 * Cn * H * H3 * W              # upsample (height)
                 + 2 * Cn * Cn * H * W              # folded 1x1 chain
                 + 6 * Cn * H * W)                  # sigmoid + gating
    op_bytes = 4 * int(rwt.size + lx3.size + b2e.size + sq.size + lcat.size
                       + b34.size + mwt.size + mh.size + axf.size + bxf.size)
    bytes_accessed = 2 * B * Cn * H * W * 4 + op_bytes

    out_rows = pl.pallas_call(
        kern,
        out_shape=jax.ShapeDtypeStruct((B, Cn * H, W), jnp.float32),
        grid=(B,),
        in_specs=[
            pl.BlockSpec((1, Cn * H, W), lambda b: (b, 0, 0)),
            _const_spec(W, 3 * W2),
            _const_spec(3, f * H2, Cn * H),
            _const_spec(f * H2, 1),
            _const_spec(W3, 3 * W3),
            _const_spec(Cn * H3, 3 * f * H3),
            _const_spec(Cn * H3, 1),
            _const_spec(W3, W),
            _const_spec(H, H3),
            pl.BlockSpec(memory_space=pltpu.MemorySpace.SMEM),
            pl.BlockSpec(memory_space=pltpu.MemorySpace.SMEM),
        ],
        out_specs=pl.BlockSpec((1, Cn * H, W), lambda b: (b, 0, 0)),
        compiler_params=pltpu.CompilerParams(
            dimension_semantics=("parallel",),
            vmem_limit_bytes=32 * 1024 * 1024),
        cost_estimate=pl.CostEstimate(flops=int(flops),
                                      transcendentals=int(B * Cn * H * W),
                                      bytes_accessed=int(bytes_accessed)),
    )(x_rows, rwt, lx3, b2e, sq, lcat, b34, mwt, mh, axf, bxf)

    return out_rows.reshape(B, Cn, H, W)


# ------------------------ pure-JAX reference (check) ------------------------ #

def esa_reference(x_nchw, params):
    w1, b1, w2, b2, w3, b3, wf, bf, w4, b4 = params
    B, Cn, H, W = x_nchw.shape
    x = jnp.transpose(x_nchw, (0, 2, 3, 1)).astype(jnp.float32)
    dn = ('NHWC', 'HWIO', 'NHWC')
    c1_ = jnp.einsum('bhwc,cf->bhwf', x, w1) + b1
    c1 = lax.conv_general_dilated(c1_, w2, (2, 2), 'VALID',
                                  dimension_numbers=dn) + b2
    v = lax.reduce_window(c1, -jnp.inf, lax.max, (1, 7, 7, 1), (1, 3, 3, 1),
                          'VALID')
    c3 = lax.conv_general_dilated(v, w3, (1, 1), ((1, 1), (1, 1)),
                                  dimension_numbers=dn) + b3
    H3, W3 = c3.shape[1], c3.shape[2]
    Mh = _interp_matrix(H, H3)
    Mw = _interp_matrix(W, W3)
    up = jnp.einsum('ip,jq,bpqf->bijf', Mh, Mw, c3)
    cf = jnp.einsum('bhwc,cf->bhwf', c1_, wf) + bf
    c4 = jnp.einsum('bhwf,fc->bhwc', up + cf, w4) + b4
    out = x * (1.0 / (1.0 + jnp.exp(-c4)))
    return out.transpose(0, 3, 1, 2)


# ----------------------------------- main ----------------------------------- #

if __name__ == "__main__":
    B, n_feats, H, W = 2, 16, 32, 32
    f = 8  # esa_channels

    key = jax.random.PRNGKey(0)
    ks = jax.random.split(key, 11)
    s = 0.1
    # synthetic deterministic parameters (conv weights stored HWIO / (Cin,Cout))
    w1 = jax.random.normal(ks[0], (n_feats, f), jnp.float32) * s   # conv1 1x1
    b1 = jax.random.normal(ks[1], (f,), jnp.float32) * s
    w2 = jax.random.normal(ks[2], (3, 3, f, f), jnp.float32) * s   # conv2 3x3 s2
    b2 = jax.random.normal(ks[3], (f,), jnp.float32) * s
    w3 = jax.random.normal(ks[4], (3, 3, f, f), jnp.float32) * s   # conv3 3x3 p1
    b3 = jax.random.normal(ks[5], (f,), jnp.float32) * s
    wf = jax.random.normal(ks[6], (f, f), jnp.float32) * s         # conv_f 1x1
    bf = jax.random.normal(ks[7], (f,), jnp.float32) * s
    w4 = jax.random.normal(ks[8], (f, n_feats), jnp.float32) * s   # conv4 1x1
    b4 = jax.random.normal(ks[9], (n_feats,), jnp.float32) * s
    x = jax.random.normal(ks[10], (B, n_feats, H, W), jnp.float32)
    params = (w1, b1, w2, b2, w3, b3, wf, bf, w4, b4)

    out = jax.block_until_ready(esa_forward(x, params))
    ref = jax.block_until_ready(esa_reference(x, params))

    assert out.shape == x.shape and out.dtype == jnp.float32
    err = float(jnp.max(jnp.abs(out - ref)))
    assert jnp.allclose(out, ref, rtol=1e-3, atol=1e-3), err
    print("KERNEL_OK")
</pallas_src>

<mosaic_0001>
module attributes {stable_mosaic.version = 11 : i64} {
  func.func private @main(%arg0: i32) attributes {dimension_semantics = [#tpu.dimension_semantics<core_parallel>], iteration_bounds = array<i64: 2>, tpu.core_type = #tpu.core_type<sc_scalar_subcore>, window_params = []} {
    return
  }
}

module attributes {stable_mosaic.version = 11 : i64} {
  func.func private @main(%arg0: i32) attributes {dimension_semantics = [#tpu.dimension_semantics<core_parallel>], iteration_bounds = array<i64: 2>, tpu.core_type = #tpu.core_type<sc_scalar_subcore>, window_params = []} {
    return
  }
}

module attributes {stable_mosaic.version = 11 : i64} {
  func.func @_esa_kernel(%arg0: i32, %arg1: memref<1x512x32xf32, #tpu.memory_space<vmem>>, %arg2: memref<32x45xf32, #tpu.memory_space<vmem>>, %arg3: memref<3x120x512xf32, #tpu.memory_space<vmem>>, %arg4: memref<120x1xf32, #tpu.memory_space<vmem>>, %arg5: memref<3x9xf32, #tpu.memory_space<vmem>>, %arg6: memref<48x72xf32, #tpu.memory_space<vmem>>, %arg7: memref<48x1xf32, #tpu.memory_space<vmem>>, %arg8: memref<3x32xf32, #tpu.memory_space<vmem>>, %arg9: memref<32x3xf32, #tpu.memory_space<vmem>>, %arg10: memref<16x16xf32, #tpu.memory_space<smem>>, %arg11: memref<16xf32, #tpu.memory_space<smem>>, %arg12: memref<1x512x32xf32, #tpu.memory_space<vmem>>) attributes {dimension_semantics = [#tpu.dimension_semantics<parallel>], iteration_bounds = array<i64: 2>, scalar_prefetch = 0 : i64, scratch_operands = 0 : i64, tpu.core_type = #tpu.core_type<tc>, window_params = [{transform_indices = @transform_0, window_bounds = array<i64: 1, 512, 32>}, {pipeline_mode = #tpu.pipeline_mode<synchronous>, transform_indices = @transform_1, window_bounds = array<i64: 32, 45>}, {pipeline_mode = #tpu.pipeline_mode<synchronous>, transform_indices = @transform_2, window_bounds = array<i64: 3, 120, 512>}, {pipeline_mode = #tpu.pipeline_mode<synchronous>, transform_indices = @transform_3, window_bounds = array<i64: 120, 1>}, {pipeline_mode = #tpu.pipeline_mode<synchronous>, transform_indices = @transform_4, window_bounds = array<i64: 3, 9>}, {pipeline_mode = #tpu.pipeline_mode<synchronous>, transform_indices = @transform_5, window_bounds = array<i64: 48, 72>}, {pipeline_mode = #tpu.pipeline_mode<synchronous>, transform_indices = @transform_6, window_bounds = array<i64: 48, 1>}, {pipeline_mode = #tpu.pipeline_mode<synchronous>, transform_indices = @transform_7, window_bounds = array<i64: 3, 32>}, {pipeline_mode = #tpu.pipeline_mode<synchronous>, transform_indices = @transform_8, window_bounds = array<i64: 32, 3>}, {transform_indices = @transform_9, window_bounds = array<i64: 16, 16>}, {transform_indices = @transform_10, window_bounds = array<i64: 16>}, {transform_indices = @transform_11, window_bounds = array<i64: 1, 512, 32>}]} {
    %c0 = arith.constant 0 : index
    %c0_0 = arith.constant 0 : index
    %c0_1 = arith.constant 0 : index
    %0 = vector.load %arg1[%c0, %c0_0, %c0_1] : memref<1x512x32xf32, #tpu.memory_space<vmem>>, vector<1x512x32xf32>
    %1 = vector.shape_cast %0 : vector<1x512x32xf32> to vector<512x32xf32>
    %c0_2 = arith.constant 0 : index
    %c0_3 = arith.constant 0 : index
    %2 = vector.load %arg2[%c0_2, %c0_3] : memref<32x45xf32, #tpu.memory_space<vmem>>, vector<32x45xf32>
    %cst = arith.constant dense<0.000000e+00> : vector<512x45xf32>
    %3 = tpu.matmul %1, %2, %cst {dimension_numbers = #tpu.dot_dimension_numbers<[1], [0], [0], [1], [0, 0, 1, 1], [], []>} : vector<512x32xf32>, vector<32x45xf32>, vector<512x45xf32> -> vector<512x45xf32>
    %c0_4 = arith.constant 0 : index
    %c0_5 = arith.constant 0 : index
    %c0_6 = arith.constant 0 : index
    %4 = vector.load %arg3[%c0_4, %c0_5, %c0_6] : memref<3x120x512xf32, #tpu.memory_space<vmem>>, vector<1x120x512xf32>
    %5 = vector.shape_cast %4 : vector<1x120x512xf32> to vector<120x512xf32>
    %6 = vector.extract_strided_slice %3 {offsets = [0, 0], sizes = [512, 15], strides = [1, 1]} : vector<512x45xf32> to vector<512x15xf32>
    %cst_7 = arith.constant dense<0.000000e+00> : vector<120x15xf32>
    %7 = tpu.matmul %5, %6, %cst_7 {dimension_numbers = #tpu.dot_dimension_numbers<[1], [0], [0], [1], [0, 0, 1, 1], [], []>} : vector<120x512xf32>, vector<512x15xf32>, vector<120x15xf32> -> vector<120x15xf32>
    %c1 = arith.constant 1 : index
    %c0_8 = arith.constant 0 : index
    %c0_9 = arith.constant 0 : index
    %8 = vector.load %arg3[%c1, %c0_8, %c0_9] : memref<3x120x512xf32, #tpu.memory_space<vmem>>, vector<1x120x512xf32>
    %9 = vector.shape_cast %8 : vector<1x120x512xf32> to vector<120x512xf32>
    %10 = vector.extract_strided_slice %3 {offsets = [0, 15], sizes = [512, 15], strides = [1, 1]} : vector<512x45xf32> to vector<512x15xf32>
    %cst_10 = arith.constant dense<0.000000e+00> : vector<120x15xf32>
    %11 = tpu.matmul %9, %10, %cst_10 {dimension_numbers = #tpu.dot_dimension_numbers<[1], [0], [0], [1], [0, 0, 1, 1], [], []>} : vector<120x512xf32>, vector<512x15xf32>, vector<120x15xf32> -> vector<120x15xf32>
    %12 = arith.addf %7, %11 : vector<120x15xf32>
    %c2 = arith.constant 2 : index
    %c0_11 = arith.constant 0 : index
    %c0_12 = arith.constant 0 : index
    %13 = vector.load %arg3[%c2, %c0_11, %c0_12] : memref<3x120x512xf32, #tpu.memory_space<vmem>>, vector<1x120x512xf32>
    %14 = vector.shape_cast %13 : vector<1x120x512xf32> to vector<120x512xf32>
    %15 = vector.extract_strided_slice %3 {offsets = [0, 30], sizes = [512, 15], strides = [1, 1]} : vector<512x45xf32> to vector<512x15xf32>
    %cst_13 = arith.constant dense<0.000000e+00> : vector<120x15xf32>
    %16 = tpu.matmul %14, %15, %cst_13 {dimension_numbers = #tpu.dot_dimension_numbers<[1], [0], [0], [1], [0, 0, 1, 1], [], []>} : vector<120x512xf32>, vector<512x15xf32>, vector<120x15xf32> -> vector<120x15xf32>
    %17 = arith.addf %12, %16 : vector<120x15xf32>
    %c0_14 = arith.constant 0 : index
    %c0_15 = arith.constant 0 : index
    %18 = vector.load %arg4[%c0_14, %c0_15] : memref<120x1xf32, #tpu.memory_space<vmem>>, vector<120x1xf32>
    %19 = vector.broadcast %18 : vector<120x1xf32> to vector<120x15xf32>
    %20 = arith.addf %17, %19 : vector<120x15xf32>
    %21 = vector.extract_strided_slice %20 {offsets = [0, 0], sizes = [120, 7], strides = [1, 1]} : vector<120x15xf32> to vector<120x7xf32>
    %cst_16 = arith.constant dense<0xFF800000> : vector<120xf32>
    %22 = vector.multi_reduction <maximumf>, %21, %cst_16 [1] : vector<120x7xf32> to vector<120xf32>
    %23 = vector.shape_cast %22 : vector<120xf32> to vector<120x1xf32>
    %24 = vector.extract_strided_slice %20 {offsets = [0, 3], sizes = [120, 7], strides = [1, 1]} : vector<120x15xf32> to vector<120x7xf32>
    %cst_17 = arith.constant dense<0xFF800000> : vector<120xf32>
    %25 = vector.multi_reduction <maximumf>, %24, %cst_17 [1] : vector<120x7xf32> to vector<120xf32>
    %26 = vector.shape_cast %25 : vector<120xf32> to vector<120x1xf32>
    %27 = vector.extract_strided_slice %20 {offsets = [0, 6], sizes = [120, 7], strides = [1, 1]} : vector<120x15xf32> to vector<120x7xf32>
    %cst_18 = arith.constant dense<0xFF800000> : vector<120xf32>
    %28 = vector.multi_reduction <maximumf>, %27, %cst_18 [1] : vector<120x7xf32> to vector<120xf32>
    %29 = vector.shape_cast %28 : vector<120xf32> to vector<120x1xf32>
    %30 = tpu.concatenate %23, %26, %29 in 1 : vector<120x1xf32>, vector<120x1xf32>, vector<120x1xf32> -> vector<120x3xf32>
    %31 = vector.extract_strided_slice %30 {offsets = [0, 0], sizes = [7, 3], strides = [1, 1]} : vector<120x3xf32> to vector<7x3xf32>
    %cst_19 = arith.constant dense<0xFF800000> : vector<3xf32>
    %32 = vector.multi_reduction <maximumf>, %31, %cst_19 [0] : vector<7x3xf32> to vector<3xf32>
    %33 = vector.shape_cast %32 : vector<3xf32> to vector<1x3xf32>
    %34 = vector.extract_strided_slice %30 {offsets = [3, 0], sizes = [7, 3], strides = [1, 1]} : vector<120x3xf32> to vector<7x3xf32>
    %cst_20 = arith.constant dense<0xFF800000> : vector<3xf32>
    %35 = vector.multi_reduction <maximumf>, %34, %cst_20 [0] : vector<7x3xf32> to vector<3xf32>
    %36 = vector.shape_cast %35 : vector<3xf32> to vector<1x3xf32>
    %37 = vector.extract_strided_slice %30 {offsets = [6, 0], sizes = [7, 3], strides = [1, 1]} : vector<120x3xf32> to vector<7x3xf32>
    %cst_21 = arith.constant dense<0xFF800000> : vector<3xf32>
    %38 = vector.multi_reduction <maximumf>, %37, %cst_21 [0] : vector<7x3xf32> to vector<3xf32>
    %39 = vector.shape_cast %38 : vector<3xf32> to vector<1x3xf32>
    %40 = vector.extract_strided_slice %30 {offsets = [15, 0], sizes = [7, 3], strides = [1, 1]} : vector<120x3xf32> to vector<7x3xf32>
    %cst_22 = arith.constant dense<0xFF800000> : vector<3xf32>
    %41 = vector.multi_reduction <maximumf>, %40, %cst_22 [0] : vector<7x3xf32> to vector<3xf32>
    %42 = vector.shape_cast %41 : vector<3xf32> to vector<1x3xf32>
    %43 = vector.extract_strided_slice %30 {offsets = [18, 0], sizes = [7, 3], strides = [1, 1]} : vector<120x3xf32> to vector<7x3xf32>
    %cst_23 = arith.constant dense<0xFF800000> : vector<3xf32>
    %44 = vector.multi_reduction <maximumf>, %43, %cst_23 [0] : vector<7x3xf32> to vector<3xf32>
    %45 = vector.shape_cast %44 : vector<3xf32> to vector<1x3xf32>
    %46 = vector.extract_strided_slice %30 {offsets = [21, 0], sizes = [7, 3], strides = [1, 1]} : vector<120x3xf32> to vector<7x3xf32>
    %cst_24 = arith.constant dense<0xFF800000> : vector<3xf32>
    %47 = vector.multi_reduction <maximumf>, %46, %cst_24 [0] : vector<7x3xf32> to vector<3xf32>
    %48 = vector.shape_cast %47 : vector<3xf32> to vector<1x3xf32>
    %49 = vector.extract_strided_slice %30 {offsets = [30, 0], sizes = [7, 3], strides = [1, 1]} : vector<120x3xf32> to vector<7x3xf32>
    %cst_25 = arith.constant dense<0xFF800000> : vector<3xf32>
    %50 = vector.multi_reduction <maximumf>, %49, %cst_25 [0] : vector<7x3xf32> to vector<3xf32>
    %51 = vector.shape_cast %50 : vector<3xf32> to vector<1x3xf32>
    %52 = vector.extract_strided_slice %30 {offsets = [33, 0], sizes = [7, 3], strides = [1, 1]} : vector<120x3xf32> to vector<7x3xf32>
    %cst_26 = arith.constant dense<0xFF800000> : vector<3xf32>
    %53 = vector.multi_reduction <maximumf>, %52, %cst_26 [0] : vector<7x3xf32> to vector<3xf32>
    %54 = vector.shape_cast %53 : vector<3xf32> to vector<1x3xf32>
    %55 = vector.extract_strided_slice %30 {offsets = [36, 0], sizes = [7, 3], strides = [1, 1]} : vector<120x3xf32> to vector<7x3xf32>
    %cst_27 = arith.constant dense<0xFF800000> : vector<3xf32>
    %56 = vector.multi_reduction <maximumf>, %55, %cst_27 [0] : vector<7x3xf32> to vector<3xf32>
    %57 = vector.shape_cast %56 : vector<3xf32> to vector<1x3xf32>
    %58 = vector.extract_strided_slice %30 {offsets = [45, 0], sizes = [7, 3], strides = [1, 1]} : vector<120x3xf32> to vector<7x3xf32>
    %cst_28 = arith.constant dense<0xFF800000> : vector<3xf32>
    %59 = vector.multi_reduction <maximumf>, %58, %cst_28 [0] : vector<7x3xf32> to vector<3xf32>
    %60 = vector.shape_cast %59 : vector<3xf32> to vector<1x3xf32>
    %61 = vector.extract_strided_slice %30 {offsets = [48, 0], sizes = [7, 3], strides = [1, 1]} : vector<120x3xf32> to vector<7x3xf32>
    %cst_29 = arith.constant dense<0xFF800000> : vector<3xf32>
    %62 = vector.multi_reduction <maximumf>, %61, %cst_29 [0] : vector<7x3xf32> to vector<3xf32>
    %63 = vector.shape_cast %62 : vector<3xf32> to vector<1x3xf32>
    %64 = vector.extract_strided_slice %30 {offsets = [51, 0], sizes = [7, 3], strides = [1, 1]} : vector<120x3xf32> to vector<7x3xf32>
    %cst_30 = arith.constant dense<0xFF800000> : vector<3xf32>
    %65 = vector.multi_reduction <maximumf>, %64, %cst_30 [0] : vector<7x3xf32> to vector<3xf32>
    %66 = vector.shape_cast %65 : vector<3xf32> to vector<1x3xf32>
    %67 = vector.extract_strided_slice %30 {offsets = [60, 0], sizes = [7, 3], strides = [1, 1]} : vector<120x3xf32> to vector<7x3xf32>
    %cst_31 = arith.constant dense<0xFF800000> : vector<3xf32>
    %68 = vector.multi_reduction <maximumf>, %67, %cst_31 [0] : vector<7x3xf32> to vector<3xf32>
    %69 = vector.shape_cast %68 : vector<3xf32> to vector<1x3xf32>
    %70 = vector.extract_strided_slice %30 {offsets = [63, 0], sizes = [7, 3], strides = [1, 1]} : vector<120x3xf32> to vector<7x3xf32>
    %cst_32 = arith.constant dense<0xFF800000> : vector<3xf32>
    %71 = vector.multi_reduction <maximumf>, %70, %cst_32 [0] : vector<7x3xf32> to vector<3xf32>
    %72 = vector.shape_cast %71 : vector<3xf32> to vector<1x3xf32>
    %73 = vector.extract_strided_slice %30 {offsets = [66, 0], sizes = [7, 3], strides = [1, 1]} : vector<120x3xf32> to vector<7x3xf32>
    %cst_33 = arith.constant dense<0xFF800000> : vector<3xf32>
    %74 = vector.multi_reduction <maximumf>, %73, %cst_33 [0] : vector<7x3xf32> to vector<3xf32>
    %75 = vector.shape_cast %74 : vector<3xf32> to vector<1x3xf32>
    %76 = vector.extract_strided_slice %30 {offsets = [75, 0], sizes = [7, 3], strides = [1, 1]} : vector<120x3xf32> to vector<7x3xf32>
    %cst_34 = arith.constant dense<0xFF800000> : vector<3xf32>
    %77 = vector.multi_reduction <maximumf>, %76, %cst_34 [0] : vector<7x3xf32> to vector<3xf32>
    %78 = vector.shape_cast %77 : vector<3xf32> to vector<1x3xf32>
    %79 = vector.extract_strided_slice %30 {offsets = [78, 0], sizes = [7, 3], strides = [1, 1]} : vector<120x3xf32> to vector<7x3xf32>
    %cst_35 = arith.constant dense<0xFF800000> : vector<3xf32>
    %80 = vector.multi_reduction <maximumf>, %79, %cst_35 [0] : vector<7x3xf32> to vector<3xf32>
    %81 = vector.shape_cast %80 : vector<3xf32> to vector<1x3xf32>
    %82 = vector.extract_strided_slice %30 {offsets = [81, 0], sizes = [7, 3], strides = [1, 1]} : vector<120x3xf32> to vector<7x3xf32>
    %cst_36 = arith.constant dense<0xFF800000> : vector<3xf32>
    %83 = vector.multi_reduction <maximumf>, %82, %cst_36 [0] : vector<7x3xf32> to vector<3xf32>
    %84 = vector.shape_cast %83 : vector<3xf32> to vector<1x3xf32>
    %85 = vector.extract_strided_slice %30 {offsets = [90, 0], sizes = [7, 3], strides = [1, 1]} : vector<120x3xf32> to vector<7x3xf32>
    %cst_37 = arith.constant dense<0xFF800000> : vector<3xf32>
    %86 = vector.multi_reduction <maximumf>, %85, %cst_37 [0] : vector<7x3xf32> to vector<3xf32>
    %87 = vector.shape_cast %86 : vector<3xf32> to vector<1x3xf32>
    %88 = vector.extract_strided_slice %30 {offsets = [93, 0], sizes = [7, 3], strides = [1, 1]} : vector<120x3xf32> to vector<7x3xf32>
    %cst_38 = arith.constant dense<0xFF800000> : vector<3xf32>
    %89 = vector.multi_reduction <maximumf>, %88, %cst_38 [0] : vector<7x3xf32> to vector<3xf32>
    %90 = vector.shape_cast %89 : vector<3xf32> to vector<1x3xf32>
    %91 = vector.extract_strided_slice %30 {offsets = [96, 0], sizes = [7, 3], strides = [1, 1]} : vector<120x3xf32> to vector<7x3xf32>
    %cst_39 = arith.constant dense<0xFF800000> : vector<3xf32>
    %92 = vector.multi_reduction <maximumf>, %91, %cst_39 [0] : vector<7x3xf32> to vector<3xf32>
    %93 = vector.shape_cast %92 : vector<3xf32> to vector<1x3xf32>
    %94 = vector.extract_strided_slice %30 {offsets = [105, 0], sizes = [7, 3], strides = [1, 1]} : vector<120x3xf32> to vector<7x3xf32>
    %cst_40 = arith.constant dense<0xFF800000> : vector<3xf32>
    %95 = vector.multi_reduction <maximumf>, %94, %cst_40 [0] : vector<7x3xf32> to vector<3xf32>
    %96 = vector.shape_cast %95 : vector<3xf32> to vector<1x3xf32>
    %97 = vector.extract_strided_slice %30 {offsets = [108, 0], sizes = [7, 3], strides = [1, 1]} : vector<120x3xf32> to vector<7x3xf32>
    %cst_41 = arith.constant dense<0xFF800000> : vector<3xf32>
    %98 = vector.multi_reduction <maximumf>, %97, %cst_41 [0] : vector<7x3xf32> to vector<3xf32>
    %99 = vector.shape_cast %98 : vector<3xf32> to vector<1x3xf32>
    %100 = vector.extract_strided_slice %30 {offsets = [111, 0], sizes = [7, 3], strides = [1, 1]} : vector<120x3xf32> to vector<7x3xf32>
    %cst_42 = arith.constant dense<0xFF800000> : vector<3xf32>
    %101 = vector.multi_reduction <maximumf>, %100, %cst_42 [0] : vector<7x3xf32> to vector<3xf32>
    %102 = vector.shape_cast %101 : vector<3xf32> to vector<1x3xf32>
    %103 = tpu.concatenate %33, %36, %39, %42, %45, %48, %51, %54, %57, %60, %63, %66, %69, %72, %75, %78 in 0 : vector<1x3xf32>, vector<1x3xf32>, vector<1x3xf32>, vector<1x3xf32>, vector<1x3xf32>, vector<1x3xf32>, vector<1x3xf32>, vector<1x3xf32>, vector<1x3xf32>, vector<1x3xf32>, vector<1x3xf32>, vector<1x3xf32>, vector<1x3xf32>, vector<1x3xf32>, vector<1x3xf32>, vector<1x3xf32> -> vector<16x3xf32>
    %104 = tpu.concatenate %81, %84, %87, %90, %93, %96, %99, %102 in 0 : vector<1x3xf32>, vector<1x3xf32>, vector<1x3xf32>, vector<1x3xf32>, vector<1x3xf32>, vector<1x3xf32>, vector<1x3xf32>, vector<1x3xf32> -> vector<8x3xf32>
    %105 = tpu.concatenate %103, %104 in 0 : vector<16x3xf32>, vector<8x3xf32> -> vector<24x3xf32>
    %c0_43 = arith.constant 0 : index
    %c0_44 = arith.constant 0 : index
    %106 = vector.load %arg5[%c0_43, %c0_44] : memref<3x9xf32, #tpu.memory_space<vmem>>, vector<3x9xf32>
    %cst_45 = arith.constant dense<0.000000e+00> : vector<24x9xf32>
    %107 = tpu.matmul %105, %106, %cst_45 {dimension_numbers = #tpu.dot_dimension_numbers<[1], [0], [0], [1], [0, 0, 1, 1], [], []>} : vector<24x3xf32>, vector<3x9xf32>, vector<24x9xf32> -> vector<24x9xf32>
    %108 = vector.extract_strided_slice %107 {offsets = [0, 0], sizes = [24, 3], strides = [1, 1]} : vector<24x9xf32> to vector<24x3xf32>
    %109 = vector.extract_strided_slice %107 {offsets = [0, 3], sizes = [24, 3], strides = [1, 1]} : vector<24x9xf32> to vector<24x3xf32>
    %110 = vector.extract_strided_slice %107 {offsets = [0, 6], sizes = [24, 3], strides = [1, 1]} : vector<24x9xf32> to vector<24x3xf32>
    %111 = tpu.concatenate %108, %109, %110 in 0 : vector<24x3xf32>, vector<24x3xf32>, vector<24x3xf32> -> vector<72x3xf32>
    %c0_46 = arith.constant 0 : index
    %c0_47 = arith.constant 0 : index
    %112 = vector.load %arg6[%c0_46, %c0_47] : memref<48x72xf32, #tpu.memory_space<vmem>>, vector<48x72xf32>
    %cst_48 = arith.constant dense<0.000000e+00> : vector<48x3xf32>
    %113 = tpu.matmul %112, %111, %cst_48 {dimension_numbers = #tpu.dot_dimension_numbers<[1], [0], [0], [1], [0, 0, 1, 1], [], []>} : vector<48x72xf32>, vector<72x3xf32>, vector<48x3xf32> -> vector<48x3xf32>
    %c0_49 = arith.constant 0 : index
    %c0_50 = arith.constant 0 : index
    %114 = vector.load %arg7[%c0_49, %c0_50] : memref<48x1xf32, #tpu.memory_space<vmem>>, vector<48x1xf32>
    %115 = vector.broadcast %114 : vector<48x1xf32> to vector<48x3xf32>
    %116 = arith.addf %113, %115 : vector<48x3xf32>
    %c0_51 = arith.constant 0 : index
    %c0_52 = arith.constant 0 : index
    %117 = vector.load %arg8[%c0_51, %c0_52] : memref<3x32xf32, #tpu.memory_space<vmem>>, vector<3x32xf32>
    %cst_53 = arith.constant dense<0.000000e+00> : vector<48x32xf32>
    %118 = tpu.matmul %116, %117, %cst_53 {dimension_numbers = #tpu.dot_dimension_numbers<[1], [0], [0], [1], [0, 0, 1, 1], [], []>} : vector<48x3xf32>, vector<3x32xf32>, vector<48x32xf32> -> vector<48x32xf32>
    %c0_54 = arith.constant 0 : index
    %c0_55 = arith.constant 0 : index
    %119 = vector.load %arg9[%c0_54, %c0_55] : memref<32x3xf32, #tpu.memory_space<vmem>>, vector<32x3xf32>
    %120 = vector.extract_strided_slice %1 {offsets = [0, 0], sizes = [32, 32], strides = [1, 1]} : vector<512x32xf32> to vector<32x32xf32>
    %121 = vector.extract_strided_slice %1 {offsets = [32, 0], sizes = [32, 32], strides = [1, 1]} : vector<512x32xf32> to vector<32x32xf32>
    %122 = vector.extract_strided_slice %1 {offsets = [64, 0], sizes = [32, 32], strides = [1, 1]} : vector<512x32xf32> to vector<32x32xf32>
    %123 = vector.extract_strided_slice %1 {offsets = [96, 0], sizes = [32, 32], strides = [1, 1]} : vector<512x32xf32> to vector<32x32xf32>
    %124 = vector.extract_strided_slice %1 {offsets = [128, 0], sizes = [32, 32], strides = [1, 1]} : vector<512x32xf32> to vector<32x32xf32>
    %125 = vector.extract_strided_slice %1 {offsets = [160, 0], sizes = [32, 32], strides = [1, 1]} : vector<512x32xf32> to vector<32x32xf32>
    %126 = vector.extract_strided_slice %1 {offsets = [192, 0], sizes = [32, 32], strides = [1, 1]} : vector<512x32xf32> to vector<32x32xf32>
    %127 = vector.extract_strided_slice %1 {offsets = [224, 0], sizes = [32, 32], strides = [1, 1]} : vector<512x32xf32> to vector<32x32xf32>
    %128 = vector.extract_strided_slice %1 {offsets = [256, 0], sizes = [32, 32], strides = [1, 1]} : vector<512x32xf32> to vector<32x32xf32>
    %129 = vector.extract_strided_slice %1 {offsets = [288, 0], sizes = [32, 32], strides = [1, 1]} : vector<512x32xf32> to vector<32x32xf32>
    %130 = vector.extract_strided_slice %1 {offsets = [320, 0], sizes = [32, 32], strides = [1, 1]} : vector<512x32xf32> to vector<32x32xf32>
    %131 = vector.extract_strided_slice %1 {offsets = [352, 0], sizes = [32, 32], strides = [1, 1]} : vector<512x32xf32> to vector<32x32xf32>
    %132 = vector.extract_strided_slice %1 {offsets = [384, 0], sizes = [32, 32], strides = [1, 1]} : vector<512x32xf32> to vector<32x32xf32>
    %133 = vector.extract_strided_slice %1 {offsets = [416, 0], sizes = [32, 32], strides = [1, 1]} : vector<512x32xf32> to vector<32x32xf32>
    %134 = vector.extract_strided_slice %1 {offsets = [448, 0], sizes = [32, 32], strides = [1, 1]} : vector<512x32xf32> to vector<32x32xf32>
    %135 = vector.extract_strided_slice %1 {offsets = [480, 0], sizes = [32, 32], strides = [1, 1]} : vector<512x32xf32> to vector<32x32xf32>
    %136 = vector.extract_strided_slice %118 {offsets = [0, 0], sizes = [3, 32], strides = [1, 1]} : vector<48x32xf32> to vector<3x32xf32>
    %cst_56 = arith.constant dense<0.000000e+00> : vector<32x32xf32>
    %137 = tpu.matmul %119, %136, %cst_56 {dimension_numbers = #tpu.dot_dimension_numbers<[1], [0], [0], [1], [0, 0, 1, 1], [], []>} : vector<32x3xf32>, vector<3x32xf32>, vector<32x32xf32> -> vector<32x32xf32>
    %c0_57 = arith.constant 0 : index
    %138 = memref.load %arg11[%c0_57] : memref<16xf32, #tpu.memory_space<smem>>
    %139 = vector.broadcast %138 : f32 to vector<32x32xf32>
    %140 = arith.addf %137, %139 : vector<32x32xf32>
    %c0_58 = arith.constant 0 : index
    %c0_59 = arith.constant 0 : index
    %141 = memref.load %arg10[%c0_58, %c0_59] : memref<16x16xf32, #tpu.memory_space<smem>>
    %142 = vector.broadcast %141 : f32 to vector<32x32xf32>
    %143 = arith.mulf %142, %120 : vector<32x32xf32>
    %144 = arith.addf %140, %143 : vector<32x32xf32>
    %c0_60 = arith.constant 0 : index
    %c1_61 = arith.constant 1 : index
    %145 = memref.load %arg10[%c0_60, %c1_61] : memref<16x16xf32, #tpu.memory_space<smem>>
    %146 = vector.broadcast %145 : f32 to vector<32x32xf32>
    %147 = arith.mulf %146, %121 : vector<32x32xf32>
    %148 = arith.addf %144, %147 : vector<32x32xf32>
    %c0_62 = arith.constant 0 : index
    %c2_63 = arith.constant 2 : index
    %149 = memref.load %arg10[%c0_62, %c2_63] : memref<16x16xf32, #tpu.memory_space<smem>>
    %150 = vector.broadcast %149 : f32 to vector<32x32xf32>
    %151 = arith.mulf %150, %122 : vector<32x32xf32>
    %152 = arith.addf %148, %151 : vector<32x32xf32>
    %c0_64 = arith.constant 0 : index
    %c3 = arith.constant 3 : index
    %153 = memref.load %arg10[%c0_64, %c3] : memref<16x16xf32, #tpu.memory_space<smem>>
    %154 = vector.broadcast %153 : f32 to vector<32x32xf32>
    %155 = arith.mulf %154, %123 : vector<32x32xf32>
    %156 = arith.addf %152, %155 : vector<32x32xf32>
    %c0_65 = arith.constant 0 : index
    %c4 = arith.constant 4 : index
    %157 = memref.load %arg10[%c0_65, %c4] : memref<16x16xf32, #tpu.memory_space<smem>>
    %158 = vector.broadcast %157 : f32 to vector<32x32xf32>
    %159 = arith.mulf %158, %124 : vector<32x32xf32>
    %160 = arith.addf %156, %159 : vector<32x32xf32>
    %c0_66 = arith.constant 0 : index
    %c5 = arith.constant 5 : index
    %161 = memref.load %arg10[%c0_66, %c5] : memref<16x16xf32, #tpu.memory_space<smem>>
    %162 = vector.broadcast %161 : f32 to vector<32x32xf32>
    %163 = arith.mulf %162, %125 : vector<32x32xf32>
    %164 = arith.addf %160, %163 : vector<32x32xf32>
    %c0_67 = arith.constant 0 : index
    %c6 = arith.constant 6 : index
    %165 = memref.load %arg10[%c0_67, %c6] : memref<16x16xf32, #tpu.memory_space<smem>>
    %166 = vector.broadcast %165 : f32 to vector<32x32xf32>
    %167 = arith.mulf %166, %126 : vector<32x32xf32>
    %168 = arith.addf %164, %167 : vector<32x32xf32>
    %c0_68 = arith.constant 0 : index
    %c7 = arith.constant 7 : index
    %169 = memref.load %arg10[%c0_68, %c7] : memref<16x16xf32, #tpu.memory_space<smem>>
    %170 = vector.broadcast %169 : f32 to vector<32x32xf32>
    %171 = arith.mulf %170, %127 : vector<32x32xf32>
    %172 = arith.addf %168, %171 : vector<32x32xf32>
    %c0_69 = arith.constant 0 : index
    %c8 = arith.constant 8 : index
    %173 = memref.load %arg10[%c0_69, %c8] : memref<16x16xf32, #tpu.memory_space<smem>>
    %174 = vector.broadcast %173 : f32 to vector<32x32xf32>
    %175 = arith.mulf %174, %128 : vector<32x32xf32>
    %176 = arith.addf %172, %175 : vector<32x32xf32>
    %c0_70 = arith.constant 0 : index
    %c9 = arith.constant 9 : index
    %177 = memref.load %arg10[%c0_70, %c9] : memref<16x16xf32, #tpu.memory_space<smem>>
    %178 = vector.broadcast %177 : f32 to vector<32x32xf32>
    %179 = arith.mulf %178, %129 : vector<32x32xf32>
    %180 = arith.addf %176, %179 : vector<32x32xf32>
    %c0_71 = arith.constant 0 : index
    %c10 = arith.constant 10 : index
    %181 = memref.load %arg10[%c0_71, %c10] : memref<16x16xf32, #tpu.memory_space<smem>>
    %182 = vector.broadcast %181 : f32 to vector<32x32xf32>
    %183 = arith.mulf %182, %130 : vector<32x32xf32>
    %184 = arith.addf %180, %183 : vector<32x32xf32>
    %c0_72 = arith.constant 0 : index
    %c11 = arith.constant 11 : index
    %185 = memref.load %arg10[%c0_72, %c11] : memref<16x16xf32, #tpu.memory_space<smem>>
    %186 = vector.broadcast %185 : f32 to vector<32x32xf32>
    %187 = arith.mulf %186, %131 : vector<32x32xf32>
    %188 = arith.addf %184, %187 : vector<32x32xf32>
    %c0_73 = arith.constant 0 : index
    %c12 = arith.constant 12 : index
    %189 = memref.load %arg10[%c0_73, %c12] : memref<16x16xf32, #tpu.memory_space<smem>>
    %190 = vector.broadcast %189 : f32 to vector<32x32xf32>
    %191 = arith.mulf %190, %132 : vector<32x32xf32>
    %192 = arith.addf %188, %191 : vector<32x32xf32>
    %c0_74 = arith.constant 0 : index
    %c13 = arith.constant 13 : index
    %193 = memref.load %arg10[%c0_74, %c13] : memref<16x16xf32, #tpu.memory_space<smem>>
    %194 = vector.broadcast %193 : f32 to vector<32x32xf32>
    %195 = arith.mulf %194, %133 : vector<32x32xf32>
    %196 = arith.addf %192, %195 : vector<32x32xf32>
    %c0_75 = arith.constant 0 : index
    %c14 = arith.constant 14 : index
    %197 = memref.load %arg10[%c0_75, %c14] : memref<16x16xf32, #tpu.memory_space<smem>>
    %198 = vector.broadcast %197 : f32 to vector<32x32xf32>
    %199 = arith.mulf %198, %134 : vector<32x32xf32>
    %200 = arith.addf %196, %199 : vector<32x32xf32>
    %c0_76 = arith.constant 0 : index
    %c15 = arith.constant 15 : index
    %201 = memref.load %arg10[%c0_76, %c15] : memref<16x16xf32, #tpu.memory_space<smem>>
    %202 = vector.broadcast %201 : f32 to vector<32x32xf32>
    %203 = arith.mulf %202, %135 : vector<32x32xf32>
    %204 = arith.addf %200, %203 : vector<32x32xf32>
    %cst_77 = arith.constant 0.000000e+00 : f32
    %205 = vector.broadcast %cst_77 : f32 to vector<32x32xf32>
    %206 = arith.subf %205, %204 : vector<32x32xf32>
    %207 = math.exp %206 : vector<32x32xf32>
    %cst_78 = arith.constant 1.000000e+00 : f32
    %208 = vector.broadcast %cst_78 : f32 to vector<32x32xf32>
    %209 = arith.addf %208, %207 : vector<32x32xf32>
    %cst_79 = arith.constant 1.000000e+00 : f32
    %210 = vector.broadcast %cst_79 : f32 to vector<32x32xf32>
    %211 = arith.divf %210, %209 : vector<32x32xf32>
    %212 = arith.mulf %120, %211 : vector<32x32xf32>
    %c0_80 = arith.constant 0 : index
    %c0_81 = arith.constant 0 : index
    %c0_82 = arith.constant 0 : index
    %213 = vector.load %arg12[%c0_80, %c0_81, %c0_82] : memref<1x512x32xf32, #tpu.memory_space<vmem>>, vector<1x32x32xf32>
    %214 = vector.shape_cast %213 : vector<1x32x32xf32> to vector<32x32xf32>
    %215 = vector.shape_cast %212 : vector<32x32xf32> to vector<1x32x32xf32>
    tpu.vector_store %arg12[%c0_80, %c0_81, %c0_82], %215 {strides = array<i32>} : memref<1x512x32xf32, #tpu.memory_space<vmem>>, vector<1x32x32xf32>,
    %216 = vector.extract_strided_slice %118 {offsets = [3, 0], sizes = [3, 32], strides = [1, 1]} : vector<48x32xf32> to vector<3x32xf32>
    %cst_83 = arith.constant dense<0.000000e+00> : vector<32x32xf32>
    %217 = tpu.matmul %119, %216, %cst_83 {dimension_numbers = #tpu.dot_dimension_numbers<[1], [0], [0], [1], [0, 0, 1, 1], [], []>} : vector<32x3xf32>, vector<3x32xf32>, vector<32x32xf32> -> vector<32x32xf32>
    %c1_84 = arith.constant 1 : index
    %218 = memref.load %arg11[%c1_84] : memref<16xf32, #tpu.memory_space<smem>>
    %219 = vector.broadcast %218 : f32 to vector<32x32xf32>
    %220 = arith.addf %217, %219 : vector<32x32xf32>
    %c1_85 = arith.constant 1 : index
    %c0_86 = arith.constant 0 : index
    %221 = memref.load %arg10[%c1_85, %c0_86] : memref<16x16xf32, #tpu.memory_space<smem>>
    %222 = vector.broadcast %221 : f32 to vector<32x32xf32>
    %223 = arith.mulf %222, %120 : vector<32x32xf32>
    %224 = arith.addf %220, %223 : vector<32x32xf32>
    %c1_87 = arith.constant 1 : index
    %c1_88 = arith.constant 1 : index
    %225 = memref.load %arg10[%c1_87, %c1_88] : memref<16x16xf32, #tpu.memory_space<smem>>
    %226 = vector.broadcast %225 : f32 to vector<32x32xf32>
    %227 = arith.mulf %226, %121 : vector<32x32xf32>
    %228 = arith.addf %224, %227 : vector<32x32xf32>
    %c1_89 = arith.constant 1 : index
    %c2_90 = arith.constant 2 : index
    %229 = memref.load %arg10[%c1_89, %c2_90] : memref<16x16xf32, #tpu.memory_space<smem>>
    %230 = vector.broadcast %229 : f32 to vector<32x32xf32>
    %231 = arith.mulf %230, %122 : vector<32x32xf32>
    %232 = arith.addf %228, %231 : vector<32x32xf32>
    %c1_91 = arith.constant 1 : index
    %c3_92 = arith.constant 3 : index
    %233 = memref.load %arg10[%c1_91, %c3_92] : memref<16x16xf32, #tpu.memory_space<smem>>
    %234 = vector.broadcast %233 : f32 to vector<32x32xf32>
    %235 = arith.mulf %234, %123 : vector<32x32xf32>
    %236 = arith.addf %232, %235 : vector<32x32xf32>
    %c1_93 = arith.constant 1 : index
    %c4_94 = arith.constant 4 : index
    %237 = memref.load %arg10[%c1_93, %c4_94] : memref<16x16xf32, #tpu.memory_space<smem>>
    %238 = vector.broadcast %237 : f32 to vector<32x32xf32>
    %239 = arith.mulf %238, %124 : vector<32x32xf32>
    %240 = arith.addf %236, %239 : vector<32x32xf32>
    %c1_95 = arith.constant 1 : index
    %c5_96 = arith.constant 5 : index
    %241 = memref.load %arg10[%c1_95, %c5_96] : memref<16x16xf32, #tpu.memory_space<smem>>
    %242 = vector.broadcast %241 : f32 to vector<32x32xf32>
    %243 = arith.mulf %242, %125 : vector<32x32xf32>
    %244 = arith.addf %240, %243 : vector<32x32xf32>
    %c1_97 = arith.constant 1 : index
    %c6_98 = arith.constant 6 : index
    %245 = memref.load %arg10[%c1_97, %c6_98] : memref<16x16xf32, #tpu.memory_space<smem>>
    %246 = vector.broadcast %245 : f32 to vector<32x32xf32>
    %247 = arith.mulf %246, %126 : vector<32x32xf32>
    %248 = arith.addf %244, %247 : vector<32x32xf32>
    %c1_99 = arith.constant 1 : index
    %c7_100 = arith.constant 7 : index
    %249 = memref.load %arg10[%c1_99, %c7_100] : memref<16x16xf32, #tpu.memory_space<smem>>
    %250 = vector.broadcast %249 : f32 to vector<32x32xf32>
    %251 = arith.mulf %250, %127 : vector<32x32xf32>
    %252 = arith.addf %248, %251 : vector<32x32xf32>
    %c1_101 = arith.constant 1 : index
    %c8_102 = arith.constant 8 : index
    %253 = memref.load %arg10[%c1_101, %c8_102] : memref<16x16xf32, #tpu.memory_space<smem>>
    %254 = vector.broadcast %253 : f32 to vector<32x32xf32>
    %255 = arith.mulf %254, %128 : vector<32x32xf32>
    %256 = arith.addf %252, %255 : vector<32x32xf32>
    %c1_103 = arith.constant 1 : index
    %c9_104 = arith.constant 9 : index
    %257 = memref.load %arg10[%c1_103, %c9_104] : memref<16x16xf32, #tpu.memory_space<smem>>
    %258 = vector.broadcast %257 : f32 to vector<32x32xf32>
    %259 = arith.mulf %258, %129 : vector<32x32xf32>
    %260 = arith.addf %256, %259 : vector<32x32xf32>
    %c1_105 = arith.constant 1 : index
    %c10_106 = arith.constant 10 : index
    %261 = memref.load %arg10[%c1_105, %c10_106] : memref<16x16xf32, #tpu.memory_space<smem>>
    %262 = vector.broadcast %261 : f32 to vector<32x32xf32>
    %263 = arith.mulf %262, %130 : vector<32x32xf32>
    %264 = arith.addf %260, %263 : vector<32x32xf32>
    %c1_107 = arith.constant 1 : index
    %c11_108 = arith.constant 11 : index
    %265 = memref.load %arg10[%c1_107, %c11_108] : memref<16x16xf32, #tpu.memory_space<smem>>
    %266 = vector.broadcast %265 : f32 to vector<32x32xf32>
    %267 = arith.mulf %266, %131 : vector<32x32xf32>
    %268 = arith.addf %264, %267 : vector<32x32xf32>
    %c1_109 = arith.constant 1 : index
    %c12_110 = arith.constant 12 : index
    %269 = memref.load %arg10[%c1_109, %c12_110] : memref<16x16xf32, #tpu.memory_space<smem>>
    %270 = vector.broadcast %269 : f32 to vector<32x32xf32>
    %271 = arith.mulf %270, %132 : vector<32x32xf32>
    %272 = arith.addf %268, %271 : vector<32x32xf32>
    %c1_111 = arith.constant 1 : index
    %c13_112 = arith.constant 13 : index
    %273 = memref.load %arg10[%c1_111, %c13_112] : memref<16x16xf32, #tpu.memory_space<smem>>
    %274 = vector.broadcast %273 : f32 to vector<32x32xf32>
    %275 = arith.mulf %274, %133 : vector<32x32xf32>
    %276 = arith.addf %272, %275 : vector<32x32xf32>
    %c1_113 = arith.constant 1 : index
    %c14_114 = arith.constant 14 : index
    %277 = memref.load %arg10[%c1_113, %c14_114] : memref<16x16xf32, #tpu.memory_space<smem>>
    %278 = vector.broadcast %277 : f32 to vector<32x32xf32>
    %279 = arith.mulf %278, %134 : vector<32x32xf32>
    %280 = arith.addf %276, %279 : vector<32x32xf32>
    %c1_115 = arith.constant 1 : index
    %c15_116 = arith.constant 15 : index
    %281 = memref.load %arg10[%c1_115, %c15_116] : memref<16x16xf32, #tpu.memory_space<smem>>
    %282 = vector.broadcast %281 : f32 to vector<32x32xf32>
    %283 = arith.mulf %282, %135 : vector<32x32xf32>
    %284 = arith.addf %280, %283 : vector<32x32xf32>
    %cst_117 = arith.constant 0.000000e+00 : f32
    %285 = vector.broadcast %cst_117 : f32 to vector<32x32xf32>
    %286 = arith.subf %285, %284 : vector<32x32xf32>
    %287 = math.exp %286 : vector<32x32xf32>
    %cst_118 = arith.constant 1.000000e+00 : f32
    %288 = vector.broadcast %cst_118 : f32 to vector<32x32xf32>
    %289 = arith.addf %288, %287 : vector<32x32xf32>
    %cst_119 = arith.constant 1.000000e+00 : f32
    %290 = vector.broadcast %cst_119 : f32 to vector<32x32xf32>
    %291 = arith.divf %290, %289 : vector<32x32xf32>
    %292 = arith.mulf %121, %291 : vector<32x32xf32>
    %c0_120 = arith.constant 0 : index
    %c32 = arith.constant 32 : index
    %c0_121 = arith.constant 0 : index
    %293 = vector.load %arg12[%c0_120, %c32, %c0_121] : memref<1x512x32xf32, #tpu.memory_space<vmem>>, vector<1x32x32xf32>
    %294 = vector.shape_cast %293 : vector<1x32x32xf32> to vector<32x32xf32>
    %295 = vector.shape_cast %292 : vector<32x32xf32> to vector<1x32x32xf32>
    tpu.vector_store %arg12[%c0_120, %c32, %c0_121], %295 {strides = array<i32>} : memref<1x512x32xf32, #tpu.memory_space<vmem>>, vector<1x32x32xf32>,
    %296 = vector.extract_strided_slice %118 {offsets = [6, 0], sizes = [3, 32], strides = [1, 1]} : vector<48x32xf32> to vector<3x32xf32>
    %cst_122 = arith.constant dense<0.000000e+00> : vector<32x32xf32>
    %297 = tpu.matmul %119, %296, %cst_122 {dimension_numbers = #tpu.dot_dimension_numbers<[1], [0], [0], [1], [0, 0, 1, 1], [], []>} : vector<32x3xf32>, vector<3x32xf32>, vector<32x32xf32> -> vector<32x32xf32>
    %c2_123 = arith.constant 2 : index
    %298 = memref.load %arg11[%c2_123] : memref<16xf32, #tpu.memory_space<smem>>
    %299 = vector.broadcast %298 : f32 to vector<32x32xf32>
    %300 = arith.addf %297, %299 : vector<32x32xf32>
    %c2_124 = arith.constant 2 : index
    %c0_125 = arith.constant 0 : index
    %301 = memref.load %arg10[%c2_124, %c0_125] : memref<16x16xf32, #tpu.memory_space<smem>>
    %302 = vector.broadcast %301 : f32 to vector<32x32xf32>
    %303 = arith.mulf %302, %120 : vector<32x32xf32>
    %304 = arith.addf %300, %303 : vector<32x32xf32>
    %c2_126 = arith.constant 2 : index
    %c1_127 = arith.constant 1 : index
    %305 = memref.load %arg10[%c2_126, %c1_127] : memref<16x16xf32, #tpu.memory_space<smem>>
    %306 = vector.broadcast %305 : f32 to vector<32x32xf32>
    %307 = arith.mulf %306, %121 : vector<32x32xf32>
    %308 = arith.addf %304, %307 : vector<32x32xf32>
    %c2_128 = arith.constant 2 : index
    %c2_129 = arith.constant 2 : index
    %309 = memref.load %arg10[%c2_128, %c2_129] : memref<16x16xf32, #tpu.memory_space<smem>>
    %310 = vector.broadcast %309 : f32 to vector<32x32xf32>
    %311 = arith.mulf %310, %122 : vector<32x32xf32>
    %312 = arith.addf %308, %311 : vector<32x32xf32>
    %c2_130 = arith.constant 2 : index
    %c3_131 = arith.constant 3 : index
    %313 = memref.load %arg10[%c2_130, %c3_131] : memref<16x16xf32, #tpu.memory_space<smem>>
    %314 = vector.broadcast %313 : f32 to vector<32x32xf32>
    %315 = arith.mulf %314, %123 : vector<32x32xf32>
    %316 = arith.addf %312, %315 : vector<32x32xf32>
    %c2_132 = arith.constant 2 : index
    %c4_133 = arith.constant 4 : index
    %317 = memref.load %arg10[%c2_132, %c4_133] : memref<16x16xf32, #tpu.memory_space<smem>>
    %318 = vector.broadcast %317 : f32 to vector<32x32xf32>
    %319 = arith.mulf %318, %124 : vector<32x32xf32>
    %320 = arith.addf %316, %319 : vector<32x32xf32>
    %c2_134 = arith.constant 2 : index
    %c5_135 = arith.constant 5 : index
    %321 = memref.load %arg10[%c2_134, %c5_135] : memref<16x16xf32, #tpu.memory_space<smem>>
    %322 = vector.broadcast %321 : f32 to vector<32x32xf32>
    %323 = arith.mulf %322, %125 : vector<32x32xf32>
    %324 = arith.addf %320, %323 : vector<32x32xf32>
    %c2_136 = arith.constant 2 : index
    %c6_137 = arith.constant 6 : index
    %325 = memref.load %arg10[%c2_136, %c6_137] : memref<16x16xf32, #tpu.memory_space<smem>>
    %326 = vector.broadcast %325 : f32 to vector<32x32xf32>
    %327 = arith.mulf %326, %126 : vector<32x32xf32>
    %328 = arith.addf %324, %327 : vector<32x32xf32>
    %c2_138 = arith.constant 2 : index
    %c7_139 = arith.constant 7 : index
    %329 = memref.load %arg10[%c2_138, %c7_139] : memref<16x16xf32, #tpu.memory_space<smem>>
    %330 = vector.broadcast %329 : f32 to vector<32x32xf32>
    %331 = arith.mulf %330, %127 : vector<32x32xf32>
    %332 = arith.addf %328, %331 : vector<32x32xf32>
    %c2_140 = arith.constant 2 : index
    %c8_141 = arith.constant 8 : index
    %333 = memref.load %arg10[%c2_140, %c8_141] : memref<16x16xf32, #tpu.memory_space<smem>>
    %334 = vector.broadcast %333 : f32 to vector<32x32xf32>
    %335 = arith.mulf %334, %128 : vector<32x32xf32>
    %336 = arith.addf %332, %335 : vector<32x32xf32>
    %c2_142 = arith.constant 2 : index
    %c9_143 = arith.constant 9 : index
    %337 = memref.load %arg10[%c2_142, %c9_143] : memref<16x16xf32, #tpu.memory_space<smem>>
    %338 = vector.broadcast %337 : f32 to vector<32x32xf32>
    %339 = arith.mulf %338, %129 : vector<32x32xf32>
    %340 = arith.addf %336, %339 : vector<32x32xf32>
    %c2_144 = arith.constant 2 : index
    %c10_145 = arith.constant 10 : index
    %341 = memref.load %arg10[%c2_144, %c10_145] : memref<16x16xf32, #tpu.memory_space<smem>>
    %342 = vector.broadcast %341 : f32 to vector<32x32xf32>
    %343 = arith.mulf %342, %130 : vector<32x32xf32>
    %344 = arith.addf %340, %343 : vector<32x32xf32>
    %c2_146 = arith.constant 2 : index
    %c11_147 = arith.constant 11 : index
    %345 = memref.load %arg10[%c2_146, %c11_147] : memref<16x16xf32, #tpu.memory_space<smem>>
    %346 = vector.broadcast %345 : f32 to vector<32x32xf32>
    %347 = arith.mulf %346, %131 : vector<32x32xf32>
    %348 = arith.addf %344, %347 : vector<32x32xf32>
    %c2_148 = arith.constant 2 : index
    %c12_149 = arith.constant 12 : index
    %349 = memref.load %arg10[%c2_148, %c12_149] : memref<16x16xf32, #tpu.memory_space<smem>>
    %350 = vector.broadcast %349 : f32 to vector<32x32xf32>
    %351 = arith.mulf %350, %132 : vector<32x32xf32>
    %352 = arith.addf %348, %351 : vector<32x32xf32>
    %c2_150 = arith.constant 2 : index
    %c13_151 = arith.constant 13 : index
    %353 = memref.load %arg10[%c2_150, %c13_151] : memref<16x16xf32, #tpu.memory_space<smem>>
    %354 = vector.broadcast %353 : f32 to vector<32x32xf32>
    %355 = arith.mulf %354, %133 : vector<32x32xf32>
    %356 = arith.addf %352, %355 : vector<32x32xf32>
    %c2_152 = arith.constant 2 : index
    %c14_153 = arith.constant 14 : index
    %357 = memref.load %arg10[%c2_152, %c14_153] : memref<16x16xf32, #tpu.memory_space<smem>>
    %358 = vector.broadcast %357 : f32 to vector<32x32xf32>
    %359 = arith.mulf %358, %134 : vector<32x32xf32>
    %360 = arith.addf %356, %359 : vector<32x32xf32>
    %c2_154 = arith.constant 2 : index
    %c15_155 = arith.constant 15 : index
    %361 = memref.load %arg10[%c2_154, %c15_155] : memref<16x16xf32, #tpu.memory_space<smem>>
    %362 = vector.broadcast %361 : f32 to vector<32x32xf32>
    %363 = arith.mulf %362, %135 : vector<32x32xf32>
    %364 = arith.addf %360, %363 : vector<32x32xf32>
    %cst_156 = arith.constant 0.000000e+00 : f32
    %365 = vector.broadcast %cst_156 : f32 to vector<32x32xf32>
    %366 = arith.subf %365, %364 : vector<32x32xf32>
    %367 = math.exp %366 : vector<32x32xf32>
    %cst_157 = arith.constant 1.000000e+00 : f32
    %368 = vector.broadcast %cst_157 : f32 to vector<32x32xf32>
    %369 = arith.addf %368, %367 : vector<32x32xf32>
    %cst_158 = arith.constant 1.000000e+00 : f32
    %370 = vector.broadcast %cst_158 : f32 to vector<32x32xf32>
    %371 = arith.divf %370, %369 : vector<32x32xf32>
    %372 = arith.mulf %122, %371 : vector<32x32xf32>
    %c0_159 = arith.constant 0 : index
    %c64 = arith.constant 64 : index
    %c0_160 = arith.constant 0 : index
    %373 = vector.load %arg12[%c0_159, %c64, %c0_160] : memref<1x512x32xf32, #tpu.memory_space<vmem>>, vector<1x32x32xf32>
    %374 = vector.shape_cast %373 : vector<1x32x32xf32> to vector<32x32xf32>
    %375 = vector.shape_cast %372 : vector<32x32xf32> to vector<1x32x32xf32>
    tpu.vector_store %arg12[%c0_159, %c64, %c0_160], %375 {strides = array<i32>} : memref<1x512x32xf32, #tpu.memory_space<vmem>>, vector<1x32x32xf32>,
    %376 = vector.extract_strided_slice %118 {offsets = [9, 0], sizes = [3, 32], strides = [1, 1]} : vector<48x32xf32> to vector<3x32xf32>
    %cst_161 = arith.constant dense<0.000000e+00> : vector<32x32xf32>
    %377 = tpu.matmul %119, %376, %cst_161 {dimension_numbers = #tpu.dot_dimension_numbers<[1], [0], [0], [1], [0, 0, 1, 1], [], []>} : vector<32x3xf32>, vector<3x32xf32>, vector<32x32xf32> -> vector<32x32xf32>
    %c3_162 = arith.constant 3 : index
    %378 = memref.load %arg11[%c3_162] : memref<16xf32, #tpu.memory_space<smem>>
    %379 = vector.broadcast %378 : f32 to vector<32x32xf32>
    %380 = arith.addf %377, %379 : vector<32x32xf32>
    %c3_163 = arith.constant 3 : index
    %c0_164 = arith.constant 0 : index
    %381 = memref.load %arg10[%c3_163, %c0_164] : memref<16x16xf32, #tpu.memory_space<smem>>
    %382 = vector.broadcast %381 : f32 to vector<32x32xf32>
    %383 = arith.mulf %382, %120 : vector<32x32xf32>
    %384 = arith.addf %380, %383 : vector<32x32xf32>
    %c3_165 = arith.constant 3 : index
    %c1_166 = arith.constant 1 : index
    %385 = memref.load %arg10[%c3_165, %c1_166] : memref<16x16xf32, #tpu.memory_space<smem>>
    %386 = vector.broadcast %385 : f32 to vector<32x32xf32>
    %387 = arith.mulf %386, %121 : vector<32x32xf32>
    %388 = arith.addf %384, %387 : vector<32x32xf32>
    %c3_167 = arith.constant 3 : index
    %c2_168 = arith.constant 2 : index
    %389 = memref.load %arg10[%c3_167, %c2_168] : memref<16x16xf32, #tpu.memory_space<smem>>
    %390 = vector.broadcast %389 : f32 to vector<32x32xf32>
    %391 = arith.mulf %390, %122 : vector<32x32xf32>
    %392 = arith.addf %388, %391 : vector<32x32xf32>
    %c3_169 = arith.constant 3 : index
    %c3_170 = arith.constant 3 : index
    %393 = memref.load %arg10[%c3_169, %c3_170] : memref<16x16xf32, #tpu.memory_space<smem>>
    %394 = vector.broadcast %393 : f32 to vector<32x32xf32>
    %395 = arith.mulf %394, %123 : vector<32x32xf32>
    %396 = arith.addf %392, %395 : vector<32x32xf32>
    %c3_171 = arith.constant 3 : index
    %c4_172 = arith.constant 4 : index
    %397 = memref.load %arg10[%c3_171, %c4_172] : memref<16x16xf32, #tpu.memory_space<smem>>
    %398 = vector.broadcast %397 : f32 to vector<32x32xf32>
    %399 = arith.mulf %398, %124 : vector<32x32xf32>
    %400 = arith.addf %396, %399 : vector<32x32xf32>
    %c3_173 = arith.constant 3 : index
    %c5_174 = arith.constant 5 : index
    %401 = memref.load %arg10[%c3_173, %c5_174] : memref<16x16xf32, #tpu.memory_space<smem>>
    %402 = vector.broadcast %401 : f32 to vector<32x32xf32>
    %403 = arith.mulf %402, %125 : vector<32x32xf32>
    %404 = arith.addf %400, %403 : vector<32x32xf32>
    %c3_175 = arith.constant 3 : index
    %c6_176 = arith.constant 6 : index
    %405 = memref.load %arg10[%c3_175, %c6_176] : memref<16x16xf32, #tpu.memory_space<smem>>
    %406 = vector.broadcast %405 : f32 to vector<32x32xf32>
    %407 = arith.mulf %406, %126 : vector<32x32xf32>
    %408 = arith.addf %404, %407 : vector<32x32xf32>
    %c3_177 = arith.constant 3 : index
    %c7_178 = arith.constant 7 : index
    %409 = memref.load %arg10[%c3_177, %c7_178] : memref<16x16xf32, #tpu.memory_space<smem>>
    %410 = vector.broadcast %409 : f32 to vector<32x32xf32>
    %411 = arith.mulf %410, %127 : vector<32x32xf32>
    %412 = arith.addf %408, %411 : vector<32x32xf32>
    %c3_179 = arith.constant 3 : index
    %c8_180 = arith.constant 8 : index
    %413 = memref.load %arg10[%c3_179, %c8_180] : memref<16x16xf32, #tpu.memory_space<smem>>
    %414 = vector.broadcast %413 : f32 to vector<32x32xf32>
    %415 = arith.mulf %414, %128 : vector<32x32xf32>
    %416 = arith.addf %412, %415 : vector<32x32xf32>
    %c3_181 = arith.constant 3 : index
    %c9_182 = arith.constant 9 : index
    %417 = memref.load %arg10[%c3_181, %c9_182] : memref<16x16xf32, #tpu.memory_space<smem>>
    %418 = vector.broadcast %417 : f32 to vector<32x32xf32>
    %419 = arith.mulf %418, %129 : vector<32x32xf32>
    %420 = arith.addf %416, %419 : vector<32x32xf32>
    %c3_183 = arith.constant 3 : index
    %c10_184 = arith.constant 10 : index
    %421 = memref.load %arg10[%c3_183, %c10_184] : memref<16x16xf32, #tpu.memory_space<smem>>
    %422 = vector.broadcast %421 : f32 to vector<32x32xf32>
    %423 = arith.mulf %422, %130 : vector<32x32xf32>
    %424 = arith.addf %420, %423 : vector<32x32xf32>
    %c3_185 = arith.constant 3 : index
    %c11_186 = arith.constant 11 : index
    %425 = memref.load %arg10[%c3_185, %c11_186] : memref<16x16xf32, #tpu.memory_space<smem>>
    %426 = vector.broadcast %425 : f32 to vector<32x32xf32>
    %427 = arith.mulf %426, %131 : vector<32x32xf32>
    %428 = arith.addf %424, %427 : vector<32x32xf32>
    %c3_187 = arith.constant 3 : index
    %c12_188 = arith.constant 12 : index
    %429 = memref.load %arg10[%c3_187, %c12_188] : memref<16x16xf32, #tpu.memory_space<smem>>
    %430 = vector.broadcast %429 : f32 to vector<32x32xf32>
    %431 = arith.mulf %430, %132 : vector<32x32xf32>
    %432 = arith.addf %428, %431 : vector<32x32xf32>
    %c3_189 = arith.constant 3 : index
    %c13_190 = arith.constant 13 : index
    %433 = memref.load %arg10[%c3_189, %c13_190] : memref<16x16xf32, #tpu.memory_space<smem>>
    %434 = vector.broadcast %433 : f32 to vector<32x32xf32>
    %435 = arith.mulf %434, %133 : vector<32x32xf32>
    %436 = arith.addf %432, %435 : vector<32x32xf32>
    %c3_191 = arith.constant 3 : index
    %c14_192 = arith.constant 14 : index
    %437 = memref.load %arg10[%c3_191, %c14_192] : memref<16x16xf32, #tpu.memory_space<smem>>
    %438 = vector.broadcast %437 : f32 to vector<32x32xf32>
    %439 = arith.mulf %438, %134 : vector<32x32xf32>
    %440 = arith.addf %436, %439 : vector<32x32xf32>
    %c3_193 = arith.constant 3 : index
    %c15_194 = arith.constant 15 : index
    %441 = memref.load %arg10[%c3_193, %c15_194] : memref<16x16xf32, #tpu.memory_space<smem>>
    %442 = vector.broadcast %441 : f32 to vector<32x32xf32>
    %443 = arith.mulf %442, %135 : vector<32x32xf32>
    %444 = arith.addf %440, %443 : vector<32x32xf32>
    %cst_195 = arith.constant 0.000000e+00 : f32
    %445 = vector.broadcast %cst_195 : f32 to vector<32x32xf32>
    %446 = arith.subf %445, %444 : vector<32x32xf32>
    %447 = math.exp %446 : vector<32x32xf32>
    %cst_196 = arith.constant 1.000000e+00 : f32
    %448 = vector.broadcast %cst_196 : f32 to vector<32x32xf32>
    %449 = arith.addf %448, %447 : vector<32x32xf32>
    %cst_197 = arith.constant 1.000000e+00 : f32
    %450 = vector.broadcast %cst_197 : f32 to vector<32x32xf32>
    %451 = arith.divf %450, %449 : vector<32x32xf32>
    %452 = arith.mulf %123, %451 : vector<32x32xf32>
    %c0_198 = arith.constant 0 : index
    %c96 = arith.constant 96 : index
    %c0_199 = arith.constant 0 : index
    %453 = vector.load %arg12[%c0_198, %c96, %c0_199] : memref<1x512x32xf32, #tpu.memory_space<vmem>>, vector<1x32x32xf32>
    %454 = vector.shape_cast %453 : vector<1x32x32xf32> to vector<32x32xf32>
    %455 = vector.shape_cast %452 : vector<32x32xf32> to vector<1x32x32xf32>
    tpu.vector_store %arg12[%c0_198, %c96, %c0_199], %455 {strides = array<i32>} : memref<1x512x32xf32, #tpu.memory_space<vmem>>, vector<1x32x32xf32>,
    %456 = vector.extract_strided_slice %118 {offsets = [12, 0], sizes = [3, 32], strides = [1, 1]} : vector<48x32xf32> to vector<3x32xf32>
    %cst_200 = arith.constant dense<0.000000e+00> : vector<32x32xf32>
    %457 = tpu.matmul %119, %456, %cst_200 {dimension_numbers = #tpu.dot_dimension_numbers<[1], [0], [0], [1], [0, 0, 1, 1], [], []>} : vector<32x3xf32>, vector<3x32xf32>, vector<32x32xf32> -> vector<32x32xf32>
    %c4_201 = arith.constant 4 : index
    %458 = memref.load %arg11[%c4_201] : memref<16xf32, #tpu.memory_space<smem>>
    %459 = vector.broadcast %458 : f32 to vector<32x32xf32>
    %460 = arith.addf %457, %459 : vector<32x32xf32>
    %c4_202 = arith.constant 4 : index
    %c0_203 = arith.constant 0 : index
    %461 = memref.load %arg10[%c4_202, %c0_203] : memref<16x16xf32, #tpu.memory_space<smem>>
    %462 = vector.broadcast %461 : f32 to vector<32x32xf32>
    %463 = arith.mulf %462, %120 : vector<32x32xf32>
    %464 = arith.addf %460, %463 : vector<32x32xf32>
    %c4_204 = arith.constant 4 : index
    %c1_205 = arith.constant 1 : index
    %465 = memref.load %arg10[%c4_204, %c1_205] : memref<16x16xf32, #tpu.memory_space<smem>>
    %466 = vector.broadcast %465 : f32 to vector<32x32xf32>
    %467 = arith.mulf %466, %121 : vector<32x32xf32>
    %468 = arith.addf %464, %467 : vector<32x32xf32>
    %c4_206 = arith.constant 4 : index
    %c2_207 = arith.constant 2 : index
    %469 = memref.load %arg10[%c4_206, %c2_207] : memref<16x16xf32, #tpu.memory_space<smem>>
    %470 = vector.broadcast %469 : f32 to vector<32x32xf32>
    %471 = arith.mulf %470, %122 : vector<32x32xf32>
    %472 = arith.addf %468, %471 : vector<32x32xf32>
    %c4_208 = arith.constant 4 : index
    %c3_209 = arith.constant 3 : index
    %473 = memref.load %arg10[%c4_208, %c3_209] : memref<16x16xf32, #tpu.memory_space<smem>>
    %474 = vector.broadcast %473 : f32 to vector<32x32xf32>
    %475 = arith.mulf %474, %123 : vector<32x32xf32>
    %476 = arith.addf %472, %475 : vector<32x32xf32>
    %c4_210 = arith.constant 4 : index
    %c4_211 = arith.constant 4 : index
    %477 = memref.load %arg10[%c4_210, %c4_211] : memref<16x16xf32, #tpu.memory_space<smem>>
    %478 = vector.broadcast %477 : f32 to vector<32x32xf32>
    %479 = arith.mulf %478, %124 : vector<32x32xf32>
    %480 = arith.addf %476, %479 : vector<32x32xf32>
    %c4_212 = arith.constant 4 : index
    %c5_213 = arith.constant 5 : index
    %481 = memref.load %arg10[%c4_212, %c5_213] : memref<16x16xf32, #tpu.memory_space<smem>>
    %482 = vector.broadcast %481 : f32 to vector<32x32xf32>
    %483 = arith.mulf %482, %125 : vector<32x32xf32>
    %484 = arith.addf %480, %483 : vector<32x32xf32>
    %c4_214 = arith.constant 4 : index
    %c6_215 = arith.constant 6 : index
    %485 = memref.load %arg10[%c4_214, %c6_215] : memref<16x16xf32, #tpu.memory_space<smem>>
    %486 = vector.broadcast %485 : f32 to vector<32x32xf32>
    %487 = arith.mulf %486, %126 : vector<32x32xf32>
    %488 = arith.addf %484, %487 : vector<32x32xf32>
    %c4_216 = arith.constant 4 : index
    %c7_217 = arith.constant 7 : index
    %489 = memref.load %arg10[%c4_216, %c7_217] : memref<16x16xf32, #tpu.memory_space<smem>>
    %490 = vector.broadcast %489 : f32 to vector<32x32xf32>
    %491 = arith.mulf %490, %127 : vector<32x32xf32>
    %492 = arith.addf %488, %491 : vector<32x32xf32>
    %c4_218 = arith.constant 4 : index
    %c8_219 = arith.constant 8 : index
    %493 = memref.load %arg10[%c4_218, %c8_219] : memref<16x16xf32, #tpu.memory_space<smem>>
    %494 = vector.broadcast %493 : f32 to vector<32x32xf32>
    %495 = arith.mulf %494, %128 : vector<32x32xf32>
    %496 = arith.addf %492, %495 : vector<32x32xf32>
    %c4_220 = arith.constant 4 : index
    %c9_221 = arith.constant 9 : index
    %497 = memref.load %arg10[%c4_220, %c9_221] : memref<16x16xf32, #tpu.memory_space<smem>>
    %498 = vector.broadcast %497 : f32 to vector<32x32xf32>
    %499 = arith.mulf %498, %129 : vector<32x32xf32>
    %500 = arith.addf %496, %499 : vector<32x32xf32>
    %c4_222 = arith.constant 4 : index
    %c10_223 = arith.constant 10 : index
    %501 = memref.load %arg10[%c4_222, %c10_223] : memref<16x16xf32, #tpu.memory_space<smem>>
    %502 = vector.broadcast %501 : f32 to vector<32x32xf32>
    %503 = arith.mulf %502, %130 : vector<32x32xf32>
    %504 = arith.addf %500, %503 : vector<32x32xf32>
    %c4_224 = arith.constant 4 : index
    %c11_225 = arith.constant 11 : index
    %505 = memref.load %arg10[%c4_224, %c11_225] : memref<16x16xf32, #tpu.memory_space<smem>>
    %506 = vector.broadcast %505 : f32 to vector<32x32xf32>
    %507 = arith.mulf %506, %131 : vector<32x32xf32>
    %508 = arith.addf %504, %507 : vector<32x32xf32>
    %c4_226 = arith.constant 4 : index
    %c12_227 = arith.constant 12 : index
    %509 = memref.load %arg10[%c4_226, %c12_227] : memref<16x16xf32, #tpu.memory_space<smem>>
    %510 = vector.broadcast %509 : f32 to vector<32x32xf32>
    %511 = arith.mulf %510, %132 : vector<32x32xf32>
    %512 = arith.addf %508, %511 : vector<32x32xf32>
    %c4_228 = arith.constant 4 : index
    %c13_229 = arith.constant 13 : index
    %513 = memref.load %arg10[%c4_228, %c13_229] : memref<16x16xf32, #tpu.memory_space<smem>>
    %514 = vector.broadcast %513 : f32 to vector<32x32xf32>
    %515 = arith.mulf %514, %133 : vector<32x32xf32>
    %516 = arith.addf %512, %515 : vector<32x32xf32>
    %c4_230 = arith.constant 4 : index
    %c14_231 = arith.constant 14 : index
    %517 = memref.load %arg10[%c4_230, %c14_231] : memref<16x16xf32, #tpu.memory_space<smem>>
    %518 = vector.broadcast %517 : f32 to vector<32x32xf32>
    %519 = arith.mulf %518, %134 : vector<32x32xf32>
    %520 = arith.addf %516, %519 : vector<32x32xf32>
    %c4_232 = arith.constant 4 : index
    %c15_233 = arith.constant 15 : index
    %521 = memref.load %arg10[%c4_232, %c15_233] : memref<16x16xf32, #tpu.memory_space<smem>>
    %522 = vector.broadcast %521 : f32 to vector<32x32xf32>
    %523 = arith.mulf %522, %135 : vector<32x32xf32>
    %524 = arith.addf %520, %523 : vector<32x32xf32>
    %cst_234 = arith.constant 0.000000e+00 : f32
    %525 = vector.broadcast %cst_234 : f32 to vector<32x32xf32>
    %526 = arith.subf %525, %524 : vector<32x32xf32>
    %527 = math.exp %526 : vector<32x32xf32>
    %cst_235 = arith.constant 1.000000e+00 : f32
    %528 = vector.broadcast %cst_235 : f32 to vector<32x32xf32>
    %529 = arith.addf %528, %527 : vector<32x32xf32>
    %cst_236 = arith.constant 1.000000e+00 : f32
    %530 = vector.broadcast %cst_236 : f32 to vector<32x32xf32>
    %531 = arith.divf %530, %529 : vector<32x32xf32>
    %532 = arith.mulf %124, %531 : vector<32x32xf32>
    %c0_237 = arith.constant 0 : index
    %c128 = arith.constant 128 : index
    %c0_238 = arith.constant 0 : index
    %533 = vector.load %arg12[%c0_237, %c128, %c0_238] : memref<1x512x32xf32, #tpu.memory_space<vmem>>, vector<1x32x32xf32>
    %534 = vector.shape_cast %533 : vector<1x32x32xf32> to vector<32x32xf32>
    %535 = vector.shape_cast %532 : vector<32x32xf32> to vector<1x32x32xf32>
    tpu.vector_store %arg12[%c0_237, %c128, %c0_238], %535 {strides = array<i32>} : memref<1x512x32xf32, #tpu.memory_space<vmem>>, vector<1x32x32xf32>,
    %536 = vector.extract_strided_slice %118 {offsets = [15, 0], sizes = [3, 32], strides = [1, 1]} : vector<48x32xf32> to vector<3x32xf32>
    %cst_239 = arith.constant dense<0.000000e+00> : vector<32x32xf32>
    %537 = tpu.matmul %119, %536, %cst_239 {dimension_numbers = #tpu.dot_dimension_numbers<[1], [0], [0], [1], [0, 0, 1, 1], [], []>} : vector<32x3xf32>, vector<3x32xf32>, vector<32x32xf32> -> vector<32x32xf32>
    %c5_240 = arith.constant 5 : index
    %538 = memref.load %arg11[%c5_240] : memref<16xf32, #tpu.memory_space<smem>>
    %539 = vector.broadcast %538 : f32 to vector<32x32xf32>
    %540 = arith.addf %537, %539 : vector<32x32xf32>
    %c5_241 = arith.constant 5 : index
    %c0_242 = arith.constant 0 : index
    %541 = memref.load %arg10[%c5_241, %c0_242] : memref<16x16xf32, #tpu.memory_space<smem>>
    %542 = vector.broadcast %541 : f32 to vector<32x32xf32>
    %543 = arith.mulf %542, %120 : vector<32x32xf32>
    %544 = arith.addf %540, %543 : vector<32x32xf32>
    %c5_243 = arith.constant 5 : index
    %c1_244 = arith.constant 1 : index
    %545 = memref.load %arg10[%c5_243, %c1_244] : memref<16x16xf32, #tpu.memory_space<smem>>
    %546 = vector.broadcast %545 : f32 to vector<32x32xf32>
    %547 = arith.mulf %546, %121 : vector<32x32xf32>
    %548 = arith.addf %544, %547 : vector<32x32xf32>
    %c5_245 = arith.constant 5 : index
    %c2_246 = arith.constant 2 : index
    %549 = memref.load %arg10[%c5_245, %c2_246] : memref<16x16xf32, #tpu.memory_space<smem>>
    %550 = vector.broadcast %549 : f32 to vector<32x32xf32>
    %551 = arith.mulf %550, %122 : vector<32x32xf32>
    %552 = arith.addf %548, %551 : vector<32x32xf32>
    %c5_247 = arith.constant 5 : index
    %c3_248 = arith.constant 3 : index
    %553 = memref.load %arg10[%c5_247, %c3_248] : memref<16x16xf32, #tpu.memory_space<smem>>
    %554 = vector.broadcast %553 : f32 to vector<32x32xf32>
    %555 = arith.mulf %554, %123 : vector<32x32xf32>
    %556 = arith.addf %552, %555 : vector<32x32xf32>
    %c5_249 = arith.constant 5 : index
    %c4_250 = arith.constant 4 : index
    %557 = memref.load %arg10[%c5_249, %c4_250] : memref<16x16xf32, #tpu.memory_space<smem>>
    %558 = vector.broadcast %557 : f32 to vector<32x32xf32>
    %559 = arith.mulf %558, %124 : vector<32x32xf32>
    %560 = arith.addf %556, %559 : vector<32x32xf32>
    %c5_251 = arith.constant 5 : index
    %c5_252 = arith.constant 5 : index
    %561 = memref.load %arg10[%c5_251, %c5_252] : memref<16x16xf32, #tpu.memory_space<smem>>
    %562 = vector.broadcast %561 : f32 to vector<32x32xf32>
    %563 = arith.mulf %562, %125 : vector<32x32xf32>
    %564 = arith.addf %560, %563 : vector<32x32xf32>
    %c5_253 = arith.constant 5 : index
    %c6_254 = arith.constant 6 : index
    %565 = memref.load %arg10[%c5_253, %c6_254] : memref<16x16xf32, #tpu.memory_space<smem>>
    %566 = vector.broadcast %565 : f32 to vector<32x32xf32>
    %567 = arith.mulf %566, %126 : vector<32x32xf32>
    %568 = arith.addf %564, %567 : vector<32x32xf32>
    %c5_255 = arith.constant 5 : index
    %c7_256 = arith.constant 7 : index
    %569 = memref.load %arg10[%c5_255, %c7_256] : memref<16x16xf32, #tpu.memory_space<smem>>
    %570 = vector.broadcast %569 : f32 to vector<32x32xf32>
    %571 = arith.mulf %570, %127 : vector<32x32xf32>
    %572 = arith.addf %568, %571 : vector<32x32xf32>
    %c5_257 = arith.constant 5 : index
    %c8_258 = arith.constant 8 : index
    %573 = memref.load %arg10[%c5_257, %c8_258] : memref<16x16xf32, #tpu.memory_space<smem>>
    %574 = vector.broadcast %573 : f32 to vector<32x32xf32>
    %575 = arith.mulf %574, %128 : vector<32x32xf32>
    %576 = arith.addf %572, %575 : vector<32x32xf32>
    %c5_259 = arith.constant 5 : index
    %c9_260 = arith.constant 9 : index
    %577 = memref.load %arg10[%c5_259, %c9_260] : memref<16x16xf32, #tpu.memory_space<smem>>
    %578 = vector.broadcast %577 : f32 to vector<32x32xf32>
    %579 = arith.mulf %578, %129 : vector<32x32xf32>
    %580 = arith.addf %576, %579 : vector<32x32xf32>
    %c5_261 = arith.constant 5 : index
    %c10_262 = arith.constant 10 : index
    %581 = memref.load %arg10[%c5_261, %c10_262] : memref<16x16xf32, #tpu.memory_space<smem>>
    %582 = vector.broadcast %581 : f32 to vector<32x32xf32>
    %583 = arith.mulf %582, %130 : vector<32x32xf32>
    %584 = arith.addf %580, %583 : vector<32x32xf32>
    %c5_263 = arith.constant 5 : index
    %c11_264 = arith.constant 11 : index
    %585 = memref.load %arg10[%c5_263, %c11_264] : memref<16x16xf32, #tpu.memory_space<smem>>
    %586 = vector.broadcast %585 : f32 to vector<32x32xf32>
    %587 = arith.mulf %586, %131 : vector<32x32xf32>
    %588 = arith.addf %584, %587 : vector<32x32xf32>
    %c5_265 = arith.constant 5 : index
    %c12_266 = arith.constant 12 : index
    %589 = memref.load %arg10[%c5_265, %c12_266] : memref<16x16xf32, #tpu.memory_space<smem>>
    %590 = vector.broadcast %589 : f32 to vector<32x32xf32>
    %591 = arith.mulf %590, %132 : vector<32x32xf32>
    %592 = arith.addf %588, %591 : vector<32x32xf32>
    %c5_267 = arith.constant 5 : index
    %c13_268 = arith.constant 13 : index
    %593 = memref.load %arg10[%c5_267, %c13_268] : memref<16x16xf32, #tpu.memory_space<smem>>
    %594 = vector.broadcast %593 : f32 to vector<32x32xf32>
    %595 = arith.mulf %594, %133 : vector<32x32xf32>
    %596 = arith.addf %592, %595 : vector<32x32xf32>
    %c5_269 = arith.constant 5 : index
    %c14_270 = arith.constant 14 : index
    %597 = memref.load %arg10[%c5_269, %c14_270] : memref<16x16xf32, #tpu.memory_space<smem>>
    %598 = vector.broadcast %597 : f32 to vector<32x32xf32>
    %599 = arith.mulf %598, %134 : vector<32x32xf32>
    %600 = arith.addf %596, %599 : vector<32x32xf32>
    %c5_271 = arith.constant 5 : index
    %c15_272 = arith.constant 15 : index
    %601 = memref.load %arg10[%c5_271, %c15_272] : memref<16x16xf32, #tpu.memory_space<smem>>
    %602 = vector.broadcast %601 : f32 to vector<32x32xf32>
    %603 = arith.mulf %602, %135 : vector<32x32xf32>
    %604 = arith.addf %600, %603 : vector<32x32xf32>
    %cst_273 = arith.constant 0.000000e+00 : f32
    %605 = vector.broadcast %cst_273 : f32 to vector<32x32xf32>
    %606 = arith.subf %605, %604 : vector<32x32xf32>
    %607 = math.exp %606 : vector<32x32xf32>
    %cst_274 = arith.constant 1.000000e+00 : f32
    %608 = vector.broadcast %cst_274 : f32 to vector<32x32xf32>
    %609 = arith.addf %608, %607 : vector<32x32xf32>
    %cst_275 = arith.constant 1.000000e+00 : f32
    %610 = vector.broadcast %cst_275 : f32 to vector<32x32xf32>
    %611 = arith.divf %610, %609 : vector<32x32xf32>
    %612 = arith.mulf %125, %611 : vector<32x32xf32>
    %c0_276 = arith.constant 0 : index
    %c160 = arith.constant 160 : index
    %c0_277 = arith.constant 0 : index
    %613 = vector.load %arg12[%c0_276, %c160, %c0_277] : memref<1x512x32xf32, #tpu.memory_space<vmem>>, vector<1x32x32xf32>
    %614 = vector.shape_cast %613 : vector<1x32x32xf32> to vector<32x32xf32>
    %615 = vector.shape_cast %612 : vector<32x32xf32> to vector<1x32x32xf32>
    tpu.vector_store %arg12[%c0_276, %c160, %c0_277], %615 {strides = array<i32>} : memref<1x512x32xf32, #tpu.memory_space<vmem>>, vector<1x32x32xf32>,
    %616 = vector.extract_strided_slice %118 {offsets = [18, 0], sizes = [3, 32], strides = [1, 1]} : vector<48x32xf32> to vector<3x32xf32>
    %cst_278 = arith.constant dense<0.000000e+00> : vector<32x32xf32>
    %617 = tpu.matmul %119, %616, %cst_278 {dimension_numbers = #tpu.dot_dimension_numbers<[1], [0], [0], [1], [0, 0, 1, 1], [], []>} : vector<32x3xf32>, vector<3x32xf32>, vector<32x32xf32> -> vector<32x32xf32>
    %c6_279 = arith.constant 6 : index
    %618 = memref.load %arg11[%c6_279] : memref<16xf32, #tpu.memory_space<smem>>
    %619 = vector.broadcast %618 : f32 to vector<32x32xf32>
    %620 = arith.addf %617, %619 : vector<32x32xf32>
    %c6_280 = arith.constant 6 : index
    %c0_281 = arith.constant 0 : index
    %621 = memref.load %arg10[%c6_280, %c0_281] : memref<16x16xf32, #tpu.memory_space<smem>>
    %622 = vector.broadcast %621 : f32 to vector<32x32xf32>
    %623 = arith.mulf %622, %120 : vector<32x32xf32>
    %624 = arith.addf %620, %623 : vector<32x32xf32>
    %c6_282 = arith.constant 6 : index
    %c1_283 = arith.constant 1 : index
    %625 = memref.load %arg10[%c6_282, %c1_283] : memref<16x16xf32, #tpu.memory_space<smem>>
    %626 = vector.broadcast %625 : f32 to vector<32x32xf32>
    %627 = arith.mulf %626, %121 : vector<32x32xf32>
    %628 = arith.addf %624, %627 : vector<32x32xf32>
    %c6_284 = arith.constant 6 : index
    %c2_285 = arith.constant 2 : index
    %629 = memref.load %arg10[%c6_284, %c2_285] : memref<16x16xf32, #tpu.memory_space<smem>>
    %630 = vector.broadcast %629 : f32 to vector<32x32xf32>
    %631 = arith.mulf %630, %122 : vector<32x32xf32>
    %632 = arith.addf %628, %631 : vector<32x32xf32>
    %c6_286 = arith.constant 6 : index
    %c3_287 = arith.constant 3 : index
    %633 = memref.load %arg10[%c6_286, %c3_287] : memref<16x16xf32, #tpu.memory_space<smem>>
    %634 = vector.broadcast %633 : f32 to vector<32x32xf32>
    %635 = arith.mulf %634, %123 : vector<32x32xf32>
    %636 = arith.addf %632, %635 : vector<32x32xf32>
    %c6_288 = arith.constant 6 : index
    %c4_289 = arith.constant 4 : index
    %637 = memref.load %arg10[%c6_288, %c4_289] : memref<16x16xf32, #tpu.memory_space<smem>>
    %638 = vector.broadcast %637 : f32 to vector<32x32xf32>
    %639 = arith.mulf %638, %124 : vector<32x32xf32>
    %640 = arith.addf %636, %639 : vector<32x32xf32>
    %c6_290 = arith.constant 6 : index
    %c5_291 = arith.constant 5 : index
    %641 = memref.load %arg10[%c6_290, %c5_291] : memref<16x16xf32, #tpu.memory_space<smem>>
    %642 = vector.broadcast %641 : f32 to vector<32x32xf32>
    %643 = arith.mulf %642, %125 : vector<32x32xf32>
    %644 = arith.addf %640, %643 : vector<32x32xf32>
    %c6_292 = arith.constant 6 : index
    %c6_293 = arith.constant 6 : index
    %645 = memref.load %arg10[%c6_292, %c6_293] : memref<16x16xf32, #tpu.memory_space<smem>>
    %646 = vector.broadcast %645 : f32 to vector<32x32xf32>
    %647 = arith.mulf %646, %126 : vector<32x32xf32>
    %648 = arith.addf %644, %647 : vector<32x32xf32>
    %c6_294 = arith.constant 6 : index
    %c7_295 = arith.constant 7 : index
    %649 = memref.load %arg10[%c6_294, %c7_295] : memref<16x16xf32, #tpu.memory_space<smem>>
    %650 = vector.broadcast %649 : f32 to vector<32x32xf32>
    %651 = arith.mulf %650, %127 : vector<32x32xf32>
    %652 = arith.addf %648, %651 : vector<32x32xf32>
    %c6_296 = arith.constant 6 : index
    %c8_297 = arith.constant 8 : index
    %653 = memref.load %arg10[%c6_296, %c8_297] : memref<16x16xf32, #tpu.memory_space<smem>>
    %654 = vector.broadcast %653 : f32 to vector<32x32xf32>
    %655 = arith.mulf %654, %128 : vector<32x32xf32>
    %656 = arith.addf %652, %655 : vector<32x32xf32>
    %c6_298 = arith.constant 6 : index
    %c9_299 = arith.constant 9 : index
    %657 = memref.load %arg10[%c6_298, %c9_299] : memref<16x16xf32, #tpu.memory_space<smem>>
    %658 = vector.broadcast %657 : f32 to vector<32x32xf32>
    %659 = arith.mulf %658, %129 : vector<32x32xf32>
    %660 = arith.addf %656, %659 : vector<32x32xf32>
    %c6_300 = arith.constant 6 : index
    %c10_301 = arith.constant 10 : index
    %661 = memref.load %arg10[%c6_300, %c10_301] : memref<16x16xf32, #tpu.memory_space<smem>>
    %662 = vector.broadcast %661 : f32 to vector<32x32xf32>
    %663 = arith.mulf %662, %130 : vector<32x32xf32>
    %664 = arith.addf %660, %663 : vector<32x32xf32>
    %c6_302 = arith.constant 6 : index
    %c11_303 = arith.constant 11 : index
    %665 = memref.load %arg10[%c6_302, %c11_303] : memref<16x16xf32, #tpu.memory_space<smem>>
    %666 = vector.broadcast %665 : f32 to vector<32x32xf32>
    %667 = arith.mulf %666, %131 : vector<32x32xf32>
    %668 = arith.addf %664, %667 : vector<32x32xf32>
    %c6_304 = arith.constant 6 : index
    %c12_305 = arith.constant 12 : index
    %669 = memref.load %arg10[%c6_304, %c12_305] : memref<16x16xf32, #tpu.memory_space<smem>>
    %670 = vector.broadcast %669 : f32 to vector<32x32xf32>
    %671 = arith.mulf %670, %132 : vector<32x32xf32>
    %672 = arith.addf %668, %671 : vector<32x32xf32>
    %c6_306 = arith.constant 6 : index
    %c13_307 = arith.constant 13 : index
    %673 = memref.load %arg10[%c6_306, %c13_307] : memref<16x16xf32, #tpu.memory_space<smem>>
    %674 = vector.broadcast %673 : f32 to vector<32x32xf32>
    %675 = arith.mulf %674, %133 : vector<32x32xf32>
    %676 = arith.addf %672, %675 : vector<32x32xf32>
    %c6_308 = arith.constant 6 : index
    %c14_309 = arith.constant 14 : index
    %677 = memref.load %arg10[%c6_308, %c14_309] : memref<16x16xf32, #tpu.memory_space<smem>>
    %678 = vector.broadcast %677 : f32 to vector<32x32xf32>
    %679 = arith.mulf %678, %134 : vector<32x32xf32>
    %680 = arith.addf %676, %679 : vector<32x32xf32>
    %c6_310 = arith.constant 6 : index
    %c15_311 = arith.constant 15 : index
    %681 = memref.load %arg10[%c6_310, %c15_311] : memref<16x16xf32, #tpu.memory_space<smem>>
    %682 = vector.broadcast %681 : f32 to vector<32x32xf32>
    %683 = arith.mulf %682, %135 : vector<32x32xf32>
    %684 = arith.addf %680, %683 : vector<32x32xf32>
    %cst_312 = arith.constant 0.000000e+00 : f32
    %685 = vector.broadcast %cst_312 : f32 to vector<32x32xf32>
    %686 = arith.subf %685, %684 : vector<32x32xf32>
    %687 = math.exp %686 : vector<32x32xf32>
    %cst_313 = arith.constant 1.000000e+00 : f32
    %688 = vector.broadcast %cst_313 : f32 to vector<32x32xf32>
    %689 = arith.addf %688, %687 : vector<32x32xf32>
    %cst_314 = arith.constant 1.000000e+00 : f32
    %690 = vector.broadcast %cst_314 : f32 to vector<32x32xf32>
    %691 = arith.divf %690, %689 : vector<32x32xf32>
    %692 = arith.mulf %126, %691 : vector<32x32xf32>
    %c0_315 = arith.constant 0 : index
    %c192 = arith.constant 192 : index
    %c0_316 = arith.constant 0 : index
    %693 = vector.load %arg12[%c0_315, %c192, %c0_316] : memref<1x512x32xf32, #tpu.memory_space<vmem>>, vector<1x32x32xf32>
    %694 = vector.shape_cast %693 : vector<1x32x32xf32> to vector<32x32xf32>
    %695 = vector.shape_cast %692 : vector<32x32xf32> to vector<1x32x32xf32>
    tpu.vector_store %arg12[%c0_315, %c192, %c0_316], %695 {strides = array<i32>} : memref<1x512x32xf32, #tpu.memory_space<vmem>>, vector<1x32x32xf32>,
    %696 = vector.extract_strided_slice %118 {offsets = [21, 0], sizes = [3, 32], strides = [1, 1]} : vector<48x32xf32> to vector<3x32xf32>
    %cst_317 = arith.constant dense<0.000000e+00> : vector<32x32xf32>
    %697 = tpu.matmul %119, %696, %cst_317 {dimension_numbers = #tpu.dot_dimension_numbers<[1], [0], [0], [1], [0, 0, 1, 1], [], []>} : vector<32x3xf32>, vector<3x32xf32>, vector<32x32xf32> -> vector<32x32xf32>
    %c7_318 = arith.constant 7 : index
    %698 = memref.load %arg11[%c7_318] : memref<16xf32, #tpu.memory_space<smem>>
    %699 = vector.broadcast %698 : f32 to vector<32x32xf32>
    %700 = arith.addf %697, %699 : vector<32x32xf32>
    %c7_319 = arith.constant 7 : index
    %c0_320 = arith.constant 0 : index
    %701 = memref.load %arg10[%c7_319, %c0_320] : memref<16x16xf32, #tpu.memory_space<smem>>
    %702 = vector.broadcast %701 : f32 to vector<32x32xf32>
    %703 = arith.mulf %702, %120 : vector<32x32xf32>
    %704 = arith.addf %700, %703 : vector<32x32xf32>
    %c7_321 = arith.constant 7 : index
    %c1_322 = arith.constant 1 : index
    %705 = memref.load %arg10[%c7_321, %c1_322] : memref<16x16xf32, #tpu.memory_space<smem>>
    %706 = vector.broadcast %705 : f32 to vector<32x32xf32>
    %707 = arith.mulf %706, %121 : vector<32x32xf32>
    %708 = arith.addf %704, %707 : vector<32x32xf32>
    %c7_323 = arith.constant 7 : index
    %c2_324 = arith.constant 2 : index
    %709 = memref.load %arg10[%c7_323, %c2_324] : memref<16x16xf32, #tpu.memory_space<smem>>
    %710 = vector.broadcast %709 : f32 to vector<32x32xf32>
    %711 = arith.mulf %710, %122 : vector<32x32xf32>
    %712 = arith.addf %708, %711 : vector<32x32xf32>
    %c7_325 = arith.constant 7 : index
    %c3_326 = arith.constant 3 : index
    %713 = memref.load %arg10[%c7_325, %c3_326] : memref<16x16xf32, #tpu.memory_space<smem>>
    %714 = vector.broadcast %713 : f32 to vector<32x32xf32>
    %715 = arith.mulf %714, %123 : vector<32x32xf32>
    %716 = arith.addf %712, %715 : vector<32x32xf32>
    %c7_327 = arith.constant 7 : index
    %c4_328 = arith.constant 4 : index
    %717 = memref.load %arg10[%c7_327, %c4_328] : memref<16x16xf32, #tpu.memory_space<smem>>
    %718 = vector.broadcast %717 : f32 to vector<32x32xf32>
    %719 = arith.mulf %718, %124 : vector<32x32xf32>
    %720 = arith.addf %716, %719 : vector<32x32xf32>
    %c7_329 = arith.constant 7 : index
    %c5_330 = arith.constant 5 : index
    %721 = memref.load %arg10[%c7_329, %c5_330] : memref<16x16xf32, #tpu.memory_space<smem>>
    %722 = vector.broadcast %721 : f32 to vector<32x32xf32>
    %723 = arith.mulf %722, %125 : vector<32x32xf32>
    %724 = arith.addf %720, %723 : vector<32x32xf32>
    %c7_331 = arith.constant 7 : index
    %c6_332 = arith.constant 6 : index
    %725 = memref.load %arg10[%c7_331, %c6_332] : memref<16x16xf32, #tpu.memory_space<smem>>
    %726 = vector.broadcast %725 : f32 to vector<32x32xf32>
    %727 = arith.mulf %726, %126 : vector<32x32xf32>
    %728 = arith.addf %724, %727 : vector<32x32xf32>
    %c7_333 = arith.constant 7 : index
    %c7_334 = arith.constant 7 : index
    %729 = memref.load %arg10[%c7_333, %c7_334] : memref<16x16xf32, #tpu.memory_space<smem>>
    %730 = vector.broadcast %729 : f32 to vector<32x32xf32>
    %731 = arith.mulf %730, %127 : vector<32x32xf32>
    %732 = arith.addf %728, %731 : vector<32x32xf32>
    %c7_335 = arith.constant 7 : index
    %c8_336 = arith.constant 8 : index
    %733 = memref.load %arg10[%c7_335, %c8_336] : memref<16x16xf32, #tpu.memory_space<smem>>
    %734 = vector.broadcast %733 : f32 to vector<32x32xf32>
    %735 = arith.mulf %734, %128 : vector<32x32xf32>
    %736 = arith.addf %732, %735 : vector<32x32xf32>
    %c7_337 = arith.constant 7 : index
    %c9_338 = arith.constant 9 : index
    %737 = memref.load %arg10[%c7_337, %c9_338] : memref<16x16xf32, #tpu.memory_space<smem>>
    %738 = vector.broadcast %737 : f32 to vector<32x32xf32>
    %739 = arith.mulf %738, %129 : vector<32x32xf32>
    %740 = arith.addf %736, %739 : vector<32x32xf32>
    %c7_339 = arith.constant 7 : index
    %c10_340 = arith.constant 10 : index
    %741 = memref.load %arg10[%c7_339, %c10_340] : memref<16x16xf32, #tpu.memory_space<smem>>
    %742 = vector.broadcast %741 : f32 to vector<32x32xf32>
    %743 = arith.mulf %742, %130 : vector<32x32xf32>
    %744 = arith.addf %740, %743 : vector<32x32xf32>
    %c7_341 = arith.constant 7 : index
    %c11_342 = arith.constant 11 : index
    %745 = memref.load %arg10[%c7_341, %c11_342] : memref<16x16xf32, #tpu.memory_space<smem>>
    %746 = vector.broadcast %745 : f32 to vector<32x32xf32>
    %747 = arith.mulf %746, %131 : vector<32x32xf32>
    %748 = arith.addf %744, %747 : vector<32x32xf32>
    %c7_343 = arith.constant 7 : index
    %c12_344 = arith.constant 12 : index
    %749 = memref.load %arg10[%c7_343, %c12_344] : memref<16x16xf32, #tpu.memory_space<smem>>
    %750 = vector.broadcast %749 : f32 to vector<32x32xf32>
    %751 = arith.mulf %750, %132 : vector<32x32xf32>
    %752 = arith.addf %748, %751 : vector<32x32xf32>
    %c7_345 = arith.constant 7 : index
    %c13_346 = arith.constant 13 : index
    %753 = memref.load %arg10[%c7_345, %c13_346] : memref<16x16xf32, #tpu.memory_space<smem>>
    %754 = vector.broadcast %753 : f32 to vector<32x32xf32>
    %755 = arith.mulf %754, %133 : vector<32x32xf32>
    %756 = arith.addf %752, %755 : vector<32x32xf32>
    %c7_347 = arith.constant 7 : index
    %c14_348 = arith.constant 14 : index
    %757 = memref.load %arg10[%c7_347, %c14_348] : memref<16x16xf32, #tpu.memory_space<smem>>
    %758 = vector.broadcast %757 : f32 to vector<32x32xf32>
    %759 = arith.mulf %758, %134 : vector<32x32xf32>
    %760 = arith.addf %756, %759 : vector<32x32xf32>
    %c7_349 = arith.constant 7 : index
    %c15_350 = arith.constant 15 : index
    %761 = memref.load %arg10[%c7_349, %c15_350] : memref<16x16xf32, #tpu.memory_space<smem>>
    %762 = vector.broadcast %761 : f32 to vector<32x32xf32>
    %763 = arith.mulf %762, %135 : vector<32x32xf32>
    %764 = arith.addf %760, %763 : vector<32x32xf32>
    %cst_351 = arith.constant 0.000000e+00 : f32
    %765 = vector.broadcast %cst_351 : f32 to vector<32x32xf32>
    %766 = arith.subf %765, %764 : vector<32x32xf32>
    %767 = math.exp %766 : vector<32x32xf32>
    %cst_352 = arith.constant 1.000000e+00 : f32
    %768 = vector.broadcast %cst_352 : f32 to vector<32x32xf32>
    %769 = arith.addf %768, %767 : vector<32x32xf32>
    %cst_353 = arith.constant 1.000000e+00 : f32
    %770 = vector.broadcast %cst_353 : f32 to vector<32x32xf32>
    %771 = arith.divf %770, %769 : vector<32x32xf32>
    %772 = arith.mulf %127, %771 : vector<32x32xf32>
    %c0_354 = arith.constant 0 : index
    %c224 = arith.constant 224 : index
    %c0_355 = arith.constant 0 : index
    %773 = vector.load %arg12[%c0_354, %c224, %c0_355] : memref<1x512x32xf32, #tpu.memory_space<vmem>>, vector<1x32x32xf32>
    %774 = vector.shape_cast %773 : vector<1x32x32xf32> to vector<32x32xf32>
    %775 = vector.shape_cast %772 : vector<32x32xf32> to vector<1x32x32xf32>
    tpu.vector_store %arg12[%c0_354, %c224, %c0_355], %775 {strides = array<i32>} : memref<1x512x32xf32, #tpu.memory_space<vmem>>, vector<1x32x32xf32>,
    %776 = vector.extract_strided_slice %118 {offsets = [24, 0], sizes = [3, 32], strides = [1, 1]} : vector<48x32xf32> to vector<3x32xf32>
    %cst_356 = arith.constant dense<0.000000e+00> : vector<32x32xf32>
    %777 = tpu.matmul %119, %776, %cst_356 {dimension_numbers = #tpu.dot_dimension_numbers<[1], [0], [0], [1], [0, 0, 1, 1], [], []>} : vector<32x3xf32>, vector<3x32xf32>, vector<32x32xf32> -> vector<32x32xf32>
    %c8_357 = arith.constant 8 : index
    %778 = memref.load %arg11[%c8_357] : memref<16xf32, #tpu.memory_space<smem>>
    %779 = vector.broadcast %778 : f32 to vector<32x32xf32>
    %780 = arith.addf %777, %779 : vector<32x32xf32>
    %c8_358 = arith.constant 8 : index
    %c0_359 = arith.constant 0 : index
    %781 = memref.load %arg10[%c8_358, %c0_359] : memref<16x16xf32, #tpu.memory_space<smem>>
    %782 = vector.broadcast %781 : f32 to vector<32x32xf32>
    %783 = arith.mulf %782, %120 : vector<32x32xf32>
    %784 = arith.addf %780, %783 : vector<32x32xf32>
    %c8_360 = arith.constant 8 : index
    %c1_361 = arith.constant 1 : index
    %785 = memref.load %arg10[%c8_360, %c1_361] : memref<16x16xf32, #tpu.memory_space<smem>>
    %786 = vector.broadcast %785 : f32 to vector<32x32xf32>
    %787 = arith.mulf %786, %121 : vector<32x32xf32>
    %788 = arith.addf %784, %787 : vector<32x32xf32>
    %c8_362 = arith.constant 8 : index
    %c2_363 = arith.constant 2 : index
    %789 = memref.load %arg10[%c8_362, %c2_363] : memref<16x16xf32, #tpu.memory_space<smem>>
    %790 = vector.broadcast %789 : f32 to vector<32x32xf32>
    %791 = arith.mulf %790, %122 : vector<32x32xf32>
    %792 = arith.addf %788, %791 : vector<32x32xf32>
    %c8_364 = arith.constant 8 : index
    %c3_365 = arith.constant 3 : index
    %793 = memref.load %arg10[%c8_364, %c3_365] : memref<16x16xf32, #tpu.memory_space<smem>>
    %794 = vector.broadcast %793 : f32 to vector<32x32xf32>
    %795 = arith.mulf %794, %123 : vector<32x32xf32>
    %796 = arith.addf %792, %795 : vector<32x32xf32>
    %c8_366 = arith.constant 8 : index
    %c4_367 = arith.constant 4 : index
    %797 = memref.load %arg10[%c8_366, %c4_367] : memref<16x16xf32, #tpu.memory_space<smem>>
    %798 = vector.broadcast %797 : f32 to vector<32x32xf32>
    %799 = arith.mulf %798, %124 : vector<32x32xf32>
    %800 = arith.addf %796, %799 : vector<32x32xf32>
    %c8_368 = arith.constant 8 : index
    %c5_369 = arith.constant 5 : index
    %801 = memref.load %arg10[%c8_368, %c5_369] : memref<16x16xf32, #tpu.memory_space<smem>>
    %802 = vector.broadcast %801 : f32 to vector<32x32xf32>
    %803 = arith.mulf %802, %125 : vector<32x32xf32>
    %804 = arith.addf %800, %803 : vector<32x32xf32>
    %c8_370 = arith.constant 8 : index
    %c6_371 = arith.constant 6 : index
    %805 = memref.load %arg10[%c8_370, %c6_371] : memref<16x16xf32, #tpu.memory_space<smem>>
    %806 = vector.broadcast %805 : f32 to vector<32x32xf32>
    %807 = arith.mulf %806, %126 : vector<32x32xf32>
    %808 = arith.addf %804, %807 : vector<32x32xf32>
    %c8_372 = arith.constant 8 : index
    %c7_373 = arith.constant 7 : index
    %809 = memref.load %arg10[%c8_372, %c7_373] : memref<16x16xf32, #tpu.memory_space<smem>>
    %810 = vector.broadcast %809 : f32 to vector<32x32xf32>
    %811 = arith.mulf %810, %127 : vector<32x32xf32>
    %812 = arith.addf %808, %811 : vector<32x32xf32>
    %c8_374 = arith.constant 8 : index
    %c8_375 = arith.constant 8 : index
    %813 = memref.load %arg10[%c8_374, %c8_375] : memref<16x16xf32, #tpu.memory_space<smem>>
    %814 = vector.broadcast %813 : f32 to vector<32x32xf32>
    %815 = arith.mulf %814, %128 : vector<32x32xf32>
    %816 = arith.addf %812, %815 : vector<32x32xf32>
    %c8_376 = arith.constant 8 : index
    %c9_377 = arith.constant 9 : index
    %817 = memref.load %arg10[%c8_376, %c9_377] : memref<16x16xf32, #tpu.memory_space<smem>>
    %818 = vector.broadcast %817 : f32 to vector<32x32xf32>
    %819 = arith.mulf %818, %129 : vector<32x32xf32>
    %820 = arith.addf %816, %819 : vector<32x32xf32>
    %c8_378 = arith.constant 8 : index
    %c10_379 = arith.constant 10 : index
    %821 = memref.load %arg10[%c8_378, %c10_379] : memref<16x16xf32, #tpu.memory_space<smem>>
    %822 = vector.broadcast %821 : f32 to vector<32x32xf32>
    %823 = arith.mulf %822, %130 : vector<32x32xf32>
    %824 = arith.addf %820, %823 : vector<32x32xf32>
    %c8_380 = arith.constant 8 : index
    %c11_381 = arith.constant 11 : index
    %825 = memref.load %arg10[%c8_380, %c11_381] : memref<16x16xf32, #tpu.memory_space<smem>>
    %826 = vector.broadcast %825 : f32 to vector<32x32xf32>
    %827 = arith.mulf %826, %131 : vector<32x32xf32>
    %828 = arith.addf %824, %827 : vector<32x32xf32>
    %c8_382 = arith.constant 8 : index
    %c12_383 = arith.constant 12 : index
    %829 = memref.load %arg10[%c8_382, %c12_383] : memref<16x16xf32, #tpu.memory_space<smem>>
    %830 = vector.broadcast %829 : f32 to vector<32x32xf32>
    %831 = arith.mulf %830, %132 : vector<32x32xf32>
    %832 = arith.addf %828, %831 : vector<32x32xf32>
    %c8_384 = arith.constant 8 : index
    %c13_385 = arith.constant 13 : index
    %833 = memref.load %arg10[%c8_384, %c13_385] : memref<16x16xf32, #tpu.memory_space<smem>>
    %834 = vector.broadcast %833 : f32 to vector<32x32xf32>
    %835 = arith.mulf %834, %133 : vector<32x32xf32>
    %836 = arith.addf %832, %835 : vector<32x32xf32>
    %c8_386 = arith.constant 8 : index
    %c14_387 = arith.constant 14 : index
    %837 = memref.load %arg10[%c8_386, %c14_387] : memref<16x16xf32, #tpu.memory_space<smem>>
    %838 = vector.broadcast %837 : f32 to vector<32x32xf32>
    %839 = arith.mulf %838, %134 : vector<32x32xf32>
    %840 = arith.addf %836, %839 : vector<32x32xf32>
    %c8_388 = arith.constant 8 : index
    %c15_389 = arith.constant 15 : index
    %841 = memref.load %arg10[%c8_388, %c15_389] : memref<16x16xf32, #tpu.memory_space<smem>>
    %842 = vector.broadcast %841 : f32 to vector<32x32xf32>
    %843 = arith.mulf %842, %135 : vector<32x32xf32>
    %844 = arith.addf %840, %843 : vector<32x32xf32>
    %cst_390 = arith.constant 0.000000e+00 : f32
    %845 = vector.broadcast %cst_390 : f32 to vector<32x32xf32>
    %846 = arith.subf %845, %844 : vector<32x32xf32>
    %847 = math.exp %846 : vector<32x32xf32>
    %cst_391 = arith.constant 1.000000e+00 : f32
    %848 = vector.broadcast %cst_391 : f32 to vector<32x32xf32>
    %849 = arith.addf %848, %847 : vector<32x32xf32>
    %cst_392 = arith.constant 1.000000e+00 : f32
    %850 = vector.broadcast %cst_392 : f32 to vector<32x32xf32>
    %851 = arith.divf %850, %849 : vector<32x32xf32>
    %852 = arith.mulf %128, %851 : vector<32x32xf32>
    %c0_393 = arith.constant 0 : index
    %c256 = arith.constant 256 : index
    %c0_394 = arith.constant 0 : index
    %853 = vector.load %arg12[%c0_393, %c256, %c0_394] : memref<1x512x32xf32, #tpu.memory_space<vmem>>, vector<1x32x32xf32>
    %854 = vector.shape_cast %853 : vector<1x32x32xf32> to vector<32x32xf32>
    %855 = vector.shape_cast %852 : vector<32x32xf32> to vector<1x32x32xf32>
    tpu.vector_store %arg12[%c0_393, %c256, %c0_394], %855 {strides = array<i32>} : memref<1x512x32xf32, #tpu.memory_space<vmem>>, vector<1x32x32xf32>,
    %856 = vector.extract_strided_slice %118 {offsets = [27, 0], sizes = [3, 32], strides = [1, 1]} : vector<48x32xf32> to vector<3x32xf32>
    %cst_395 = arith.constant dense<0.000000e+00> : vector<32x32xf32>
    %857 = tpu.matmul %119, %856, %cst_395 {dimension_numbers = #tpu.dot_dimension_numbers<[1], [0], [0], [1], [0, 0, 1, 1], [], []>} : vector<32x3xf32>, vector<3x32xf32>, vector<32x32xf32> -> vector<32x32xf32>
    %c9_396 = arith.constant 9 : index
    %858 = memref.load %arg11[%c9_396] : memref<16xf32, #tpu.memory_space<smem>>
    %859 = vector.broadcast %858 : f32 to vector<32x32xf32>
    %860 = arith.addf %857, %859 : vector<32x32xf32>
    %c9_397 = arith.constant 9 : index
    %c0_398 = arith.constant 0 : index
    %861 = memref.load %arg10[%c9_397, %c0_398] : memref<16x16xf32, #tpu.memory_space<smem>>
    %862 = vector.broadcast %861 : f32 to vector<32x32xf32>
    %863 = arith.mulf %862, %120 : vector<32x32xf32>
    %864 = arith.addf %860, %863 : vector<32x32xf32>
    %c9_399 = arith.constant 9 : index
    %c1_400 = arith.constant 1 : index
    %865 = memref.load %arg10[%c9_399, %c1_400] : memref<16x16xf32, #tpu.memory_space<smem>>
    %866 = vector.broadcast %865 : f32 to vector<32x32xf32>
    %867 = arith.mulf %866, %121 : vector<32x32xf32>
    %868 = arith.addf %864, %867 : vector<32x32xf32>
    %c9_401 = arith.constant 9 : index
    %c2_402 = arith.constant 2 : index
    %869 = memref.load %arg10[%c9_401, %c2_402] : memref<16x16xf32, #tpu.memory_space<smem>>
    %870 = vector.broadcast %869 : f32 to vector<32x32xf32>
    %871 = arith.mulf %870, %122 : vector<32x32xf32>
    %872 = arith.addf %868, %871 : vector<32x32xf32>
    %c9_403 = arith.constant 9 : index
    %c3_404 = arith.constant 3 : index
    %873 = memref.load %arg10[%c9_403, %c3_404] : memref<16x16xf32, #tpu.memory_space<smem>>
    %874 = vector.broadcast %873 : f32 to vector<32x32xf32>
    %875 = arith.mulf %874, %123 : vector<32x32xf32>
    %876 = arith.addf %872, %875 : vector<32x32xf32>
    %c9_405 = arith.constant 9 : index
    %c4_406 = arith.constant 4 : index
    %877 = memref.load %arg10[%c9_405, %c4_406] : memref<16x16xf32, #tpu.memory_space<smem>>
    %878 = vector.broadcast %877 : f32 to vector<32x32xf32>
    %879 = arith.mulf %878, %124 : vector<32x32xf32>
    %880 = arith.addf %876, %879 : vector<32x32xf32>
    %c9_407 = arith.constant 9 : index
    %c5_408 = arith.constant 5 : index
    %881 = memref.load %arg10[%c9_407, %c5_408] : memref<16x16xf32, #tpu.memory_space<smem>>
    %882 = vector.broadcast %881 : f32 to vector<32x32xf32>
    %883 = arith.mulf %882, %125 : vector<32x32xf32>
    %884 = arith.addf %880, %883 : vector<32x32xf32>
    %c9_409 = arith.constant 9 : index
    %c6_410 = arith.constant 6 : index
    %885 = memref.load %arg10[%c9_409, %c6_410] : memref<16x16xf32, #tpu.memory_space<smem>>
    %886 = vector.broadcast %885 : f32 to vector<32x32xf32>
    %887 = arith.mulf %886, %126 : vector<32x32xf32>
    %888 = arith.addf %884, %887 : vector<32x32xf32>
    %c9_411 = arith.constant 9 : index
    %c7_412 = arith.constant 7 : index
    %889 = memref.load %arg10[%c9_411, %c7_412] : memref<16x16xf32, #tpu.memory_space<smem>>
    %890 = vector.broadcast %889 : f32 to vector<32x32xf32>
    %891 = arith.mulf %890, %127 : vector<32x32xf32>
    %892 = arith.addf %888, %891 : vector<32x32xf32>
    %c9_413 = arith.constant 9 : index
    %c8_414 = arith.constant 8 : index
    %893 = memref.load %arg10[%c9_413, %c8_414] : memref<16x16xf32, #tpu.memory_space<smem>>
    %894 = vector.broadcast %893 : f32 to vector<32x32xf32>
    %895 = arith.mulf %894, %128 : vector<32x32xf32>
    %896 = arith.addf %892, %895 : vector<32x32xf32>
    %c9_415 = arith.constant 9 : index
    %c9_416 = arith.constant 9 : index
    %897 = memref.load %arg10[%c9_415, %c9_416] : memref<16x16xf32, #tpu.memory_space<smem>>
    %898 = vector.broadcast %897 : f32 to vector<32x32xf32>
    %899 = arith.mulf %898, %129 : vector<32x32xf32>
    %900 = arith.addf %896, %899 : vector<32x32xf32>
    %c9_417 = arith.constant 9 : index
    %c10_418 = arith.constant 10 : index
    %901 = memref.load %arg10[%c9_417, %c10_418] : memref<16x16xf32, #tpu.memory_space<smem>>
    %902 = vector.broadcast %901 : f32 to vector<32x32xf32>
    %903 = arith.mulf %902, %130 : vector<32x32xf32>
    %904 = arith.addf %900, %903 : vector<32x32xf32>
    %c9_419 = arith.constant 9 : index
    %c11_420 = arith.constant 11 : index
    %905 = memref.load %arg10[%c9_419, %c11_420] : memref<16x16xf32, #tpu.memory_space<smem>>
    %906 = vector.broadcast %905 : f32 to vector<32x32xf32>
    %907 = arith.mulf %906, %131 : vector<32x32xf32>
    %908 = arith.addf %904, %907 : vector<32x32xf32>
    %c9_421 = arith.constant 9 : index
    %c12_422 = arith.constant 12 : index
    %909 = memref.load %arg10[%c9_421, %c12_422] : memref<16x16xf32, #tpu.memory_space<smem>>
    %910 = vector.broadcast %909 : f32 to vector<32x32xf32>
    %911 = arith.mulf %910, %132 : vector<32x32xf32>
    %912 = arith.addf %908, %911 : vector<32x32xf32>
    %c9_423 = arith.constant 9 : index
    %c13_424 = arith.constant 13 : index
    %913 = memref.load %arg10[%c9_423, %c13_424] : memref<16x16xf32, #tpu.memory_space<smem>>
    %914 = vector.broadcast %913 : f32 to vector<32x32xf32>
    %915 = arith.mulf %914, %133 : vector<32x32xf32>
    %916 = arith.addf %912, %915 : vector<32x32xf32>
    %c9_425 = arith.constant 9 : index
    %c14_426 = arith.constant 14 : index
    %917 = memref.load %arg10[%c9_425, %c14_426] : memref<16x16xf32, #tpu.memory_space<smem>>
    %918 = vector.broadcast %917 : f32 to vector<32x32xf32>
    %919 = arith.mulf %918, %134 : vector<32x32xf32>
    %920 = arith.addf %916, %919 : vector<32x32xf32>
    %c9_427 = arith.constant 9 : index
    %c15_428 = arith.constant 15 : index
    %921 = memref.load %arg10[%c9_427, %c15_428] : memref<16x16xf32, #tpu.memory_space<smem>>
    %922 = vector.broadcast %921 : f32 to vector<32x32xf32>
    %923 = arith.mulf %922, %135 : vector<32x32xf32>
    %924 = arith.addf %920, %923 : vector<32x32xf32>
    %cst_429 = arith.constant 0.000000e+00 : f32
    %925 = vector.broadcast %cst_429 : f32 to vector<32x32xf32>
    %926 = arith.subf %925, %924 : vector<32x32xf32>
    %927 = math.exp %926 : vector<32x32xf32>
    %cst_430 = arith.constant 1.000000e+00 : f32
    %928 = vector.broadcast %cst_430 : f32 to vector<32x32xf32>
    %929 = arith.addf %928, %927 : vector<32x32xf32>
    %cst_431 = arith.constant 1.000000e+00 : f32
    %930 = vector.broadcast %cst_431 : f32 to vector<32x32xf32>
    %931 = arith.divf %930, %929 : vector<32x32xf32>
    %932 = arith.mulf %129, %931 : vector<32x32xf32>
    %c0_432 = arith.constant 0 : index
    %c288 = arith.constant 288 : index
    %c0_433 = arith.constant 0 : index
    %933 = vector.load %arg12[%c0_432, %c288, %c0_433] : memref<1x512x32xf32, #tpu.memory_space<vmem>>, vector<1x32x32xf32>
    %934 = vector.shape_cast %933 : vector<1x32x32xf32> to vector<32x32xf32>
    %935 = vector.shape_cast %932 : vector<32x32xf32> to vector<1x32x32xf32>
    tpu.vector_store %arg12[%c0_432, %c288, %c0_433], %935 {strides = array<i32>} : memref<1x512x32xf32, #tpu.memory_space<vmem>>, vector<1x32x32xf32>,
    %936 = vector.extract_strided_slice %118 {offsets = [30, 0], sizes = [3, 32], strides = [1, 1]} : vector<48x32xf32> to vector<3x32xf32>
    %cst_434 = arith.constant dense<0.000000e+00> : vector<32x32xf32>
    %937 = tpu.matmul %119, %936, %cst_434 {dimension_numbers = #tpu.dot_dimension_numbers<[1], [0], [0], [1], [0, 0, 1, 1], [], []>} : vector<32x3xf32>, vector<3x32xf32>, vector<32x32xf32> -> vector<32x32xf32>
    %c10_435 = arith.constant 10 : index
    %938 = memref.load %arg11[%c10_435] : memref<16xf32, #tpu.memory_space<smem>>
    %939 = vector.broadcast %938 : f32 to vector<32x32xf32>
    %940 = arith.addf %937, %939 : vector<32x32xf32>
    %c10_436 = arith.constant 10 : index
    %c0_437 = arith.constant 0 : index
    %941 = memref.load %arg10[%c10_436, %c0_437] : memref<16x16xf32, #tpu.memory_space<smem>>
    %942 = vector.broadcast %941 : f32 to vector<32x32xf32>
    %943 = arith.mulf %942, %120 : vector<32x32xf32>
    %944 = arith.addf %940, %943 : vector<32x32xf32>
    %c10_438 = arith.constant 10 : index
    %c1_439 = arith.constant 1 : index
    %945 = memref.load %arg10[%c10_438, %c1_439] : memref<16x16xf32, #tpu.memory_space<smem>>
    %946 = vector.broadcast %945 : f32 to vector<32x32xf32>
    %947 = arith.mulf %946, %121 : vector<32x32xf32>
    %948 = arith.addf %944, %947 : vector<32x32xf32>
    %c10_440 = arith.constant 10 : index
    %c2_441 = arith.constant 2 : index
    %949 = memref.load %arg10[%c10_440, %c2_441] : memref<16x16xf32, #tpu.memory_space<smem>>
    %950 = vector.broadcast %949 : f32 to vector<32x32xf32>
    %951 = arith.mulf %950, %122 : vector<32x32xf32>
    %952 = arith.addf %948, %951 : vector<32x32xf32>
    %c10_442 = arith.constant 10 : index
    %c3_443 = arith.constant 3 : index
    %953 = memref.load %arg10[%c10_442, %c3_443] : memref<16x16xf32, #tpu.memory_space<smem>>
    %954 = vector.broadcast %953 : f32 to vector<32x32xf32>
    %955 = arith.mulf %954, %123 : vector<32x32xf32>
    %956 = arith.addf %952, %955 : vector<32x32xf32>
    %c10_444 = arith.constant 10 : index
    %c4_445 = arith.constant 4 : index
    %957 = memref.load %arg10[%c10_444, %c4_445] : memref<16x16xf32, #tpu.memory_space<smem>>
    %958 = vector.broadcast %957 : f32 to vector<32x32xf32>
    %959 = arith.mulf %958, %124 : vector<32x32xf32>
    %960 = arith.addf %956, %959 : vector<32x32xf32>
    %c10_446 = arith.constant 10 : index
    %c5_447 = arith.constant 5 : index
    %961 = memref.load %arg10[%c10_446, %c5_447] : memref<16x16xf32, #tpu.memory_space<smem>>
    %962 = vector.broadcast %961 : f32 to vector<32x32xf32>
    %963 = arith.mulf %962, %125 : vector<32x32xf32>
    %964 = arith.addf %960, %963 : vector<32x32xf32>
    %c10_448 = arith.constant 10 : index
    %c6_449 = arith.constant 6 : index
    %965 = memref.load %arg10[%c10_448, %c6_449] : memref<16x16xf32, #tpu.memory_space<smem>>
    %966 = vector.broadcast %965 : f32 to vector<32x32xf32>
    %967 = arith.mulf %966, %126 : vector<32x32xf32>
    %968 = arith.addf %964, %967 : vector<32x32xf32>
    %c10_450 = arith.constant 10 : index
    %c7_451 = arith.constant 7 : index
    %969 = memref.load %arg10[%c10_450, %c7_451] : memref<16x16xf32, #tpu.memory_space<smem>>
    %970 = vector.broadcast %969 : f32 to vector<32x32xf32>
    %971 = arith.mulf %970, %127 : vector<32x32xf32>
    %972 = arith.addf %968, %971 : vector<32x32xf32>
    %c10_452 = arith.constant 10 : index
    %c8_453 = arith.constant 8 : index
    %973 = memref.load %arg10[%c10_452, %c8_453] : memref<16x16xf32, #tpu.memory_space<smem>>
    %974 = vector.broadcast %973 : f32 to vector<32x32xf32>
    %975 = arith.mulf %974, %128 : vector<32x32xf32>
    %976 = arith.addf %972, %975 : vector<32x32xf32>
    %c10_454 = arith.constant 10 : index
    %c9_455 = arith.constant 9 : index
    %977 = memref.load %arg10[%c10_454, %c9_455] : memref<16x16xf32, #tpu.memory_space<smem>>
    %978 = vector.broadcast %977 : f32 to vector<32x32xf32>
    %979 = arith.mulf %978, %129 : vector<32x32xf32>
    %980 = arith.addf %976, %979 : vector<32x32xf32>
    %c10_456 = arith.constant 10 : index
    %c10_457 = arith.constant 10 : index
    %981 = memref.load %arg10[%c10_456, %c10_457] : memref<16x16xf32, #tpu.memory_space<smem>>
    %982 = vector.broadcast %981 : f32 to vector<32x32xf32>
    %983 = arith.mulf %982, %130 : vector<32x32xf32>
    %984 = arith.addf %980, %983 : vector<32x32xf32>
    %c10_458 = arith.constant 10 : index
    %c11_459 = arith.constant 11 : index
    %985 = memref.load %arg10[%c10_458, %c11_459] : memref<16x16xf32, #tpu.memory_space<smem>>
    %986 = vector.broadcast %985 : f32 to vector<32x32xf32>
    %987 = arith.mulf %986, %131 : vector<32x32xf32>
    %988 = arith.addf %984, %987 : vector<32x32xf32>
    %c10_460 = arith.constant 10 : index
    %c12_461 = arith.constant 12 : index
    %989 = memref.load %arg10[%c10_460, %c12_461] : memref<16x16xf32, #tpu.memory_space<smem>>
    %990 = vector.broadcast %989 : f32 to vector<32x32xf32>
    %991 = arith.mulf %990, %132 : vector<32x32xf32>
    %992 = arith.addf %988, %991 : vector<32x32xf32>
    %c10_462 = arith.constant 10 : index
    %c13_463 = arith.constant 13 : index
    %993 = memref.load %arg10[%c10_462, %c13_463] : memref<16x16xf32, #tpu.memory_space<smem>>
    %994 = vector.broadcast %993 : f32 to vector<32x32xf32>
    %995 = arith.mulf %994, %133 : vector<32x32xf32>
    %996 = arith.addf %992, %995 : vector<32x32xf32>
    %c10_464 = arith.constant 10 : index
    %c14_465 = arith.constant 14 : index
    %997 = memref.load %arg10[%c10_464, %c14_465] : memref<16x16xf32, #tpu.memory_space<smem>>
    %998 = vector.broadcast %997 : f32 to vector<32x32xf32>
    %999 = arith.mulf %998, %134 : vector<32x32xf32>
    %1000 = arith.addf %996, %999 : vector<32x32xf32>
    %c10_466 = arith.constant 10 : index
    %c15_467 = arith.constant 15 : index
    %1001 = memref.load %arg10[%c10_466, %c15_467] : memref<16x16xf32, #tpu.memory_space<smem>>
    %1002 = vector.broadcast %1001 : f32 to vector<32x32xf32>
    %1003 = arith.mulf %1002, %135 : vector<32x32xf32>
    %1004 = arith.addf %1000, %1003 : vector<32x32xf32>
    %cst_468 = arith.constant 0.000000e+00 : f32
    %1005 = vector.broadcast %cst_468 : f32 to vector<32x32xf32>
    %1006 = arith.subf %1005, %1004 : vector<32x32xf32>
    %1007 = math.exp %1006 : vector<32x32xf32>
    %cst_469 = arith.constant 1.000000e+00 : f32
    %1008 = vector.broadcast %cst_469 : f32 to vector<32x32xf32>
    %1009 = arith.addf %1008, %1007 : vector<32x32xf32>
    %cst_470 = arith.constant 1.000000e+00 : f32
    %1010 = vector.broadcast %cst_470 : f32 to vector<32x32xf32>
    %1011 = arith.divf %1010, %1009 : vector<32x32xf32>
    %1012 = arith.mulf %130, %1011 : vector<32x32xf32>
    %c0_471 = arith.constant 0 : index
    %c320 = arith.constant 320 : index
    %c0_472 = arith.constant 0 : index
    %1013 = vector.load %arg12[%c0_471, %c320, %c0_472] : memref<1x512x32xf32, #tpu.memory_space<vmem>>, vector<1x32x32xf32>
    %1014 = vector.shape_cast %1013 : vector<1x32x32xf32> to vector<32x32xf32>
    %1015 = vector.shape_cast %1012 : vector<32x32xf32> to vector<1x32x32xf32>
    tpu.vector_store %arg12[%c0_471, %c320, %c0_472], %1015 {strides = array<i32>} : memref<1x512x32xf32, #tpu.memory_space<vmem>>, vector<1x32x32xf32>,
    %1016 = vector.extract_strided_slice %118 {offsets = [33, 0], sizes = [3, 32], strides = [1, 1]} : vector<48x32xf32> to vector<3x32xf32>
    %cst_473 = arith.constant dense<0.000000e+00> : vector<32x32xf32>
    %1017 = tpu.matmul %119, %1016, %cst_473 {dimension_numbers = #tpu.dot_dimension_numbers<[1], [0], [0], [1], [0, 0, 1, 1], [], []>} : vector<32x3xf32>, vector<3x32xf32>, vector<32x32xf32> -> vector<32x32xf32>
    %c11_474 = arith.constant 11 : index
    %1018 = memref.load %arg11[%c11_474] : memref<16xf32, #tpu.memory_space<smem>>
    %1019 = vector.broadcast %1018 : f32 to vector<32x32xf32>
    %1020 = arith.addf %1017, %1019 : vector<32x32xf32>
    %c11_475 = arith.constant 11 : index
    %c0_476 = arith.constant 0 : index
    %1021 = memref.load %arg10[%c11_475, %c0_476] : memref<16x16xf32, #tpu.memory_space<smem>>
    %1022 = vector.broadcast %1021 : f32 to vector<32x32xf32>
    %1023 = arith.mulf %1022, %120 : vector<32x32xf32>
    %1024 = arith.addf %1020, %1023 : vector<32x32xf32>
    %c11_477 = arith.constant 11 : index
    %c1_478 = arith.constant 1 : index
    %1025 = memref.load %arg10[%c11_477, %c1_478] : memref<16x16xf32, #tpu.memory_space<smem>>
    %1026 = vector.broadcast %1025 : f32 to vector<32x32xf32>
    %1027 = arith.mulf %1026, %121 : vector<32x32xf32>
    %1028 = arith.addf %1024, %1027 : vector<32x32xf32>
    %c11_479 = arith.constant 11 : index
    %c2_480 = arith.constant 2 : index
    %1029 = memref.load %arg10[%c11_479, %c2_480] : memref<16x16xf32, #tpu.memory_space<smem>>
    %1030 = vector.broadcast %1029 : f32 to vector<32x32xf32>
    %1031 = arith.mulf %1030, %122 : vector<32x32xf32>
    %1032 = arith.addf %1028, %1031 : vector<32x32xf32>
    %c11_481 = arith.constant 11 : index
    %c3_482 = arith.constant 3 : index
    %1033 = memref.load %arg10[%c11_481, %c3_482] : memref<16x16xf32, #tpu.memory_space<smem>>
    %1034 = vector.broadcast %1033 : f32 to vector<32x32xf32>
    %1035 = arith.mulf %1034, %123 : vector<32x32xf32>
    %1036 = arith.addf %1032, %1035 : vector<32x32xf32>
    %c11_483 = arith.constant 11 : index
    %c4_484 = arith.constant 4 : index
    %1037 = memref.load %arg10[%c11_483, %c4_484] : memref<16x16xf32, #tpu.memory_space<smem>>
    %1038 = vector.broadcast %1037 : f32 to vector<32x32xf32>
    %1039 = arith.mulf %1038, %124 : vector<32x32xf32>
    %1040 = arith.addf %1036, %1039 : vector<32x32xf32>
    %c11_485 = arith.constant 11 : index
    %c5_486 = arith.constant 5 : index
    %1041 = memref.load %arg10[%c11_485, %c5_486] : memref<16x16xf32, #tpu.memory_space<smem>>
    %1042 = vector.broadcast %1041 : f32 to vector<32x32xf32>
    %1043 = arith.mulf %1042, %125 : vector<32x32xf32>
    %1044 = arith.addf %1040, %1043 : vector<32x32xf32>
    %c11_487 = arith.constant 11 : index
    %c6_488 = arith.constant 6 : index
    %1045 = memref.load %arg10[%c11_487, %c6_488] : memref<16x16xf32, #tpu.memory_space<smem>>
    %1046 = vector.broadcast %1045 : f32 to vector<32x32xf32>
    %1047 = arith.mulf %1046, %126 : vector<32x32xf32>
    %1048 = arith.addf %1044, %1047 : vector<32x32xf32>
    %c11_489 = arith.constant 11 : index
    %c7_490 = arith.constant 7 : index
    %1049 = memref.load %arg10[%c11_489, %c7_490] : memref<16x16xf32, #tpu.memory_space<smem>>
    %1050 = vector.broadcast %1049 : f32 to vector<32x32xf32>
    %1051 = arith.mulf %1050, %127 : vector<32x32xf32>
    %1052 = arith.addf %1048, %1051 : vector<32x32xf32>
    %c11_491 = arith.constant 11 : index
    %c8_492 = arith.constant 8 : index
    %1053 = memref.load %arg10[%c11_491, %c8_492] : memref<16x16xf32, #tpu.memory_space<smem>>
    %1054 = vector.broadcast %1053 : f32 to vector<32x32xf32>
    %1055 = arith.mulf %1054, %128 : vector<32x32xf32>
    %1056 = arith.addf %1052, %1055 : vector<32x32xf32>
    %c11_493 = arith.constant 11 : index
    %c9_494 = arith.constant 9 : index
    %1057 = memref.load %arg10[%c11_493, %c9_494] : memref<16x16xf32, #tpu.memory_space<smem>>
    %1058 = vector.broadcast %1057 : f32 to vector<32x32xf32>
    %1059 = arith.mulf %1058, %129 : vector<32x32xf32>
    %1060 = arith.addf %1056, %1059 : vector<32x32xf32>
    %c11_495 = arith.constant 11 : index
    %c10_496 = arith.constant 10 : index
    %1061 = memref.load %arg10[%c11_495, %c10_496] : memref<16x16xf32, #tpu.memory_space<smem>>
    %1062 = vector.broadcast %1061 : f32 to vector<32x32xf32>
    %1063 = arith.mulf %1062, %130 : vector<32x32xf32>
    %1064 = arith.addf %1060, %1063 : vector<32x32xf32>
    %c11_497 = arith.constant 11 : index
    %c11_498 = arith.constant 11 : index
    %1065 = memref.load %arg10[%c11_497, %c11_498] : memref<16x16xf32, #tpu.memory_space<smem>>
    %1066 = vector.broadcast %1065 : f32 to vector<32x32xf32>
    %1067 = arith.mulf %1066, %131 : vector<32x32xf32>
    %1068 = arith.addf %1064, %1067 : vector<32x32xf32>
    %c11_499 = arith.constant 11 : index
    %c12_500 = arith.constant 12 : index
    %1069 = memref.load %arg10[%c11_499, %c12_500] : memref<16x16xf32, #tpu.memory_space<smem>>
    %1070 = vector.broadcast %1069 : f32 to vector<32x32xf32>
    %1071 = arith.mulf %1070, %132 : vector<32x32xf32>
    %1072 = arith.addf %1068, %1071 : vector<32x32xf32>
    %c11_501 = arith.constant 11 : index
    %c13_502 = arith.constant 13 : index
    %1073 = memref.load %arg10[%c11_501, %c13_502] : memref<16x16xf32, #tpu.memory_space<smem>>
    %1074 = vector.broadcast %1073 : f32 to vector<32x32xf32>
    %1075 = arith.mulf %1074, %133 : vector<32x32xf32>
    %1076 = arith.addf %1072, %1075 : vector<32x32xf32>
    %c11_503 = arith.constant 11 : index
    %c14_504 = arith.constant 14 : index
    %1077 = memref.load %arg10[%c11_503, %c14_504] : memref<16x16xf32, #tpu.memory_space<smem>>
    %1078 = vector.broadcast %1077 : f32 to vector<32x32xf32>
    %1079 = arith.mulf %1078, %134 : vector<32x32xf32>
    %1080 = arith.addf %1076, %1079 : vector<32x32xf32>
    %c11_505 = arith.constant 11 : index
    %c15_506 = arith.constant 15 : index
    %1081 = memref.load %arg10[%c11_505, %c15_506] : memref<16x16xf32, #tpu.memory_space<smem>>
    %1082 = vector.broadcast %1081 : f32 to vector<32x32xf32>
    %1083 = arith.mulf %1082, %135 : vector<32x32xf32>
    %1084 = arith.addf %1080, %1083 : vector<32x32xf32>
    %cst_507 = arith.constant 0.000000e+00 : f32
    %1085 = vector.broadcast %cst_507 : f32 to vector<32x32xf32>
    %1086 = arith.subf %1085, %1084 : vector<32x32xf32>
    %1087 = math.exp %1086 : vector<32x32xf32>
    %cst_508 = arith.constant 1.000000e+00 : f32
    %1088 = vector.broadcast %cst_508 : f32 to vector<32x32xf32>
    %1089 = arith.addf %1088, %1087 : vector<32x32xf32>
    %cst_509 = arith.constant 1.000000e+00 : f32
    %1090 = vector.broadcast %cst_509 : f32 to vector<32x32xf32>
    %1091 = arith.divf %1090, %1089 : vector<32x32xf32>
    %1092 = arith.mulf %131, %1091 : vector<32x32xf32>
    %c0_510 = arith.constant 0 : index
    %c352 = arith.constant 352 : index
    %c0_511 = arith.constant 0 : index
    %1093 = vector.load %arg12[%c0_510, %c352, %c0_511] : memref<1x512x32xf32, #tpu.memory_space<vmem>>, vector<1x32x32xf32>
    %1094 = vector.shape_cast %1093 : vector<1x32x32xf32> to vector<32x32xf32>
    %1095 = vector.shape_cast %1092 : vector<32x32xf32> to vector<1x32x32xf32>
    tpu.vector_store %arg12[%c0_510, %c352, %c0_511], %1095 {strides = array<i32>} : memref<1x512x32xf32, #tpu.memory_space<vmem>>, vector<1x32x32xf32>,
    %1096 = vector.extract_strided_slice %118 {offsets = [36, 0], sizes = [3, 32], strides = [1, 1]} : vector<48x32xf32> to vector<3x32xf32>
    %cst_512 = arith.constant dense<0.000000e+00> : vector<32x32xf32>
    %1097 = tpu.matmul %119, %1096, %cst_512 {dimension_numbers = #tpu.dot_dimension_numbers<[1], [0], [0], [1], [0, 0, 1, 1], [], []>} : vector<32x3xf32>, vector<3x32xf32>, vector<32x32xf32> -> vector<32x32xf32>
    %c12_513 = arith.constant 12 : index
    %1098 = memref.load %arg11[%c12_513] : memref<16xf32, #tpu.memory_space<smem>>
    %1099 = vector.broadcast %1098 : f32 to vector<32x32xf32>
    %1100 = arith.addf %1097, %1099 : vector<32x32xf32>
    %c12_514 = arith.constant 12 : index
    %c0_515 = arith.constant 0 : index
    %1101 = memref.load %arg10[%c12_514, %c0_515] : memref<16x16xf32, #tpu.memory_space<smem>>
    %1102 = vector.broadcast %1101 : f32 to vector<32x32xf32>
    %1103 = arith.mulf %1102, %120 : vector<32x32xf32>
    %1104 = arith.addf %1100, %1103 : vector<32x32xf32>
    %c12_516 = arith.constant 12 : index
    %c1_517 = arith.constant 1 : index
    %1105 = memref.load %arg10[%c12_516, %c1_517] : memref<16x16xf32, #tpu.memory_space<smem>>
    %1106 = vector.broadcast %1105 : f32 to vector<32x32xf32>
    %1107 = arith.mulf %1106, %121 : vector<32x32xf32>
    %1108 = arith.addf %1104, %1107 : vector<32x32xf32>
    %c12_518 = arith.constant 12 : index
    %c2_519 = arith.constant 2 : index
    %1109 = memref.load %arg10[%c12_518, %c2_519] : memref<16x16xf32, #tpu.memory_space<smem>>
    %1110 = vector.broadcast %1109 : f32 to vector<32x32xf32>
    %1111 = arith.mulf %1110, %122 : vector<32x32xf32>
    %1112 = arith.addf %1108, %1111 : vector<32x32xf32>
    %c12_520 = arith.constant 12 : index
    %c3_521 = arith.constant 3 : index
    %1113 = memref.load %arg10[%c12_520, %c3_521] : memref<16x16xf32, #tpu.memory_space<smem>>
    %1114 = vector.broadcast %1113 : f32 to vector<32x32xf32>
    %1115 = arith.mulf %1114, %123 : vector<32x32xf32>
    %1116 = arith.addf %1112, %1115 : vector<32x32xf32>
    %c12_522 = arith.constant 12 : index
    %c4_523 = arith.constant 4 : index
    %1117 = memref.load %arg10[%c12_522, %c4_523] : memref<16x16xf32, #tpu.memory_space<smem>>
    %1118 = vector.broadcast %1117 : f32 to vector<32x32xf32>
    %1119 = arith.mulf %1118, %124 : vector<32x32xf32>
    %1120 = arith.addf %1116, %1119 : vector<32x32xf32>
    %c12_524 = arith.constant 12 : index
    %c5_525 = arith.constant 5 : index
    %1121 = memref.load %arg10[%c12_524, %c5_525] : memref<16x16xf32, #tpu.memory_space<smem>>
    %1122 = vector.broadcast %1121 : f32 to vector<32x32xf32>
    %1123 = arith.mulf %1122, %125 : vector<32x32xf32>
    %1124 = arith.addf %1120, %1123 : vector<32x32xf32>
    %c12_526 = arith.constant 12 : index
    %c6_527 = arith.constant 6 : index
    %1125 = memref.load %arg10[%c12_526, %c6_527] : memref<16x16xf32, #tpu.memory_space<smem>>
    %1126 = vector.broadcast %1125 : f32 to vector<32x32xf32>
    %1127 = arith.mulf %1126, %126 : vector<32x32xf32>
    %1128 = arith.addf %1124, %1127 : vector<32x32xf32>
    %c12_528 = arith.constant 12 : index
    %c7_529 = arith.constant 7 : index
    %1129 = memref.load %arg10[%c12_528, %c7_529] : memref<16x16xf32, #tpu.memory_space<smem>>
    %1130 = vector.broadcast %1129 : f32 to vector<32x32xf32>
    %1131 = arith.mulf %1130, %127 : vector<32x32xf32>
    %1132 = arith.addf %1128, %1131 : vector<32x32xf32>
    %c12_530 = arith.constant 12 : index
    %c8_531 = arith.constant 8 : index
    %1133 = memref.load %arg10[%c12_530, %c8_531] : memref<16x16xf32, #tpu.memory_space<smem>>
    %1134 = vector.broadcast %1133 : f32 to vector<32x32xf32>
    %1135 = arith.mulf %1134, %128 : vector<32x32xf32>
    %1136 = arith.addf %1132, %1135 : vector<32x32xf32>
    %c12_532 = arith.constant 12 : index
    %c9_533 = arith.constant 9 : index
    %1137 = memref.load %arg10[%c12_532, %c9_533] : memref<16x16xf32, #tpu.memory_space<smem>>
    %1138 = vector.broadcast %1137 : f32 to vector<32x32xf32>
    %1139 = arith.mulf %1138, %129 : vector<32x32xf32>
    %1140 = arith.addf %1136, %1139 : vector<32x32xf32>
    %c12_534 = arith.constant 12 : index
    %c10_535 = arith.constant 10 : index
    %1141 = memref.load %arg10[%c12_534, %c10_535] : memref<16x16xf32, #tpu.memory_space<smem>>
    %1142 = vector.broadcast %1141 : f32 to vector<32x32xf32>
    %1143 = arith.mulf %1142, %130 : vector<32x32xf32>
    %1144 = arith.addf %1140, %1143 : vector<32x32xf32>
    %c12_536 = arith.constant 12 : index
    %c11_537 = arith.constant 11 : index
    %1145 = memref.load %arg10[%c12_536, %c11_537] : memref<16x16xf32, #tpu.memory_space<smem>>
    %1146 = vector.broadcast %1145 : f32 to vector<32x32xf32>
    %1147 = arith.mulf %1146, %131 : vector<32x32xf32>
    %1148 = arith.addf %1144, %1147 : vector<32x32xf32>
    %c12_538 = arith.constant 12 : index
    %c12_539 = arith.constant 12 : index
    %1149 = memref.load %arg10[%c12_538, %c12_539] : memref<16x16xf32, #tpu.memory_space<smem>>
    %1150 = vector.broadcast %1149 : f32 to vector<32x32xf32>
    %1151 = arith.mulf %1150, %132 : vector<32x32xf32>
    %1152 = arith.addf %1148, %1151 : vector<32x32xf32>
    %c12_540 = arith.constant 12 : index
    %c13_541 = arith.constant 13 : index
    %1153 = memref.load %arg10[%c12_540, %c13_541] : memref<16x16xf32, #tpu.memory_space<smem>>
    %1154 = vector.broadcast %1153 : f32 to vector<32x32xf32>
    %1155 = arith.mulf %1154, %133 : vector<32x32xf32>
    %1156 = arith.addf %1152, %1155 : vector<32x32xf32>
    %c12_542 = arith.constant 12 : index
    %c14_543 = arith.constant 14 : index
    %1157 = memref.load %arg10[%c12_542, %c14_543] : memref<16x16xf32, #tpu.memory_space<smem>>
    %1158 = vector.broadcast %1157 : f32 to vector<32x32xf32>
    %1159 = arith.mulf %1158, %134 : vector<32x32xf32>
    %1160 = arith.addf %1156, %1159 : vector<32x32xf32>
    %c12_544 = arith.constant 12 : index
    %c15_545 = arith.constant 15 : index
    %1161 = memref.load %arg10[%c12_544, %c15_545] : memref<16x16xf32, #tpu.memory_space<smem>>
    %1162 = vector.broadcast %1161 : f32 to vector<32x32xf32>
    %1163 = arith.mulf %1162, %135 : vector<32x32xf32>
    %1164 = arith.addf %1160, %1163 : vector<32x32xf32>
    %cst_546 = arith.constant 0.000000e+00 : f32
    %1165 = vector.broadcast %cst_546 : f32 to vector<32x32xf32>
    %1166 = arith.subf %1165, %1164 : vector<32x32xf32>
    %1167 = math.exp %1166 : vector<32x32xf32>
    %cst_547 = arith.constant 1.000000e+00 : f32
    %1168 = vector.broadcast %cst_547 : f32 to vector<32x32xf32>
    %1169 = arith.addf %1168, %1167 : vector<32x32xf32>
    %cst_548 = arith.constant 1.000000e+00 : f32
    %1170 = vector.broadcast %cst_548 : f32 to vector<32x32xf32>
    %1171 = arith.divf %1170, %1169 : vector<32x32xf32>
    %1172 = arith.mulf %132, %1171 : vector<32x32xf32>
    %c0_549 = arith.constant 0 : index
    %c384 = arith.constant 384 : index
    %c0_550 = arith.constant 0 : index
    %1173 = vector.load %arg12[%c0_549, %c384, %c0_550] : memref<1x512x32xf32, #tpu.memory_space<vmem>>, vector<1x32x32xf32>
    %1174 = vector.shape_cast %1173 : vector<1x32x32xf32> to vector<32x32xf32>
    %1175 = vector.shape_cast %1172 : vector<32x32xf32> to vector<1x32x32xf32>
    tpu.vector_store %arg12[%c0_549, %c384, %c0_550], %1175 {strides = array<i32>} : memref<1x512x32xf32, #tpu.memory_space<vmem>>, vector<1x32x32xf32>,
    %1176 = vector.extract_strided_slice %118 {offsets = [39, 0], sizes = [3, 32], strides = [1, 1]} : vector<48x32xf32> to vector<3x32xf32>
    %cst_551 = arith.constant dense<0.000000e+00> : vector<32x32xf32>
    %1177 = tpu.matmul %119, %1176, %cst_551 {dimension_numbers = #tpu.dot_dimension_numbers<[1], [0], [0], [1], [0, 0, 1, 1], [], []>} : vector<32x3xf32>, vector<3x32xf32>, vector<32x32xf32> -> vector<32x32xf32>
    %c13_552 = arith.constant 13 : index
    %1178 = memref.load %arg11[%c13_552] : memref<16xf32, #tpu.memory_space<smem>>
    %1179 = vector.broadcast %1178 : f32 to vector<32x32xf32>
    %1180 = arith.addf %1177, %1179 : vector<32x32xf32>
    %c13_553 = arith.constant 13 : index
    %c0_554 = arith.constant 0 : index
    %1181 = memref.load %arg10[%c13_553, %c0_554] : memref<16x16xf32, #tpu.memory_space<smem>>
    %1182 = vector.broadcast %1181 : f32 to vector<32x32xf32>
    %1183 = arith.mulf %1182, %120 : vector<32x32xf32>
    %1184 = arith.addf %1180, %1183 : vector<32x32xf32>
    %c13_555 = arith.constant 13 : index
    %c1_556 = arith.constant 1 : index
    %1185 = memref.load %arg10[%c13_555, %c1_556] : memref<16x16xf32, #tpu.memory_space<smem>>
    %1186 = vector.broadcast %1185 : f32 to vector<32x32xf32>
    %1187 = arith.mulf %1186, %121 : vector<32x32xf32>
    %1188 = arith.addf %1184, %1187 : vector<32x32xf32>
    %c13_557 = arith.constant 13 : index
    %c2_558 = arith.constant 2 : index
    %1189 = memref.load %arg10[%c13_557, %c2_558] : memref<16x16xf32, #tpu.memory_space<smem>>
    %1190 = vector.broadcast %1189 : f32 to vector<32x32xf32>
    %1191 = arith.mulf %1190, %122 : vector<32x32xf32>
    %1192 = arith.addf %1188, %1191 : vector<32x32xf32>
    %c13_559 = arith.constant 13 : index
    %c3_560 = arith.constant 3 : index
    %1193 = memref.load %arg10[%c13_559, %c3_560] : memref<16x16xf32, #tpu.memory_space<smem>>
    %1194 = vector.broadcast %1193 : f32 to vector<32x32xf32>
    %1195 = arith.mulf %1194, %123 : vector<32x32xf32>
    %1196 = arith.addf %1192, %1195 : vector<32x32xf32>
    %c13_561 = arith.constant 13 : index
    %c4_562 = arith.constant 4 : index
    %1197 = memref.load %arg10[%c13_561, %c4_562] : memref<16x16xf32, #tpu.memory_space<smem>>
    %1198 = vector.broadcast %1197 : f32 to vector<32x32xf32>
    %1199 = arith.mulf %1198, %124 : vector<32x32xf32>
    %1200 = arith.addf %1196, %1199 : vector<32x32xf32>
    %c13_563 = arith.constant 13 : index
    %c5_564 = arith.constant 5 : index
    %1201 = memref.load %arg10[%c13_563, %c5_564] : memref<16x16xf32, #tpu.memory_space<smem>>
    %1202 = vector.broadcast %1201 : f32 to vector<32x32xf32>
    %1203 = arith.mulf %1202, %125 : vector<32x32xf32>
    %1204 = arith.addf %1200, %1203 : vector<32x32xf32>
    %c13_565 = arith.constant 13 : index
    %c6_566 = arith.constant 6 : index
    %1205 = memref.load %arg10[%c13_565, %c6_566] : memref<16x16xf32, #tpu.memory_space<smem>>
    %1206 = vector.broadcast %1205 : f32 to vector<32x32xf32>
    %1207 = arith.mulf %1206, %126 : vector<32x32xf32>
    %1208 = arith.addf %1204, %1207 : vector<32x32xf32>
    %c13_567 = arith.constant 13 : index
    %c7_568 = arith.constant 7 : index
    %1209 = memref.load %arg10[%c13_567, %c7_568] : memref<16x16xf32, #tpu.memory_space<smem>>
    %1210 = vector.broadcast %1209 : f32 to vector<32x32xf32>
    %1211 = arith.mulf %1210, %127 : vector<32x32xf32>
    %1212 = arith.addf %1208, %1211 : vector<32x32xf32>
    %c13_569 = arith.constant 13 : index
    %c8_570 = arith.constant 8 : index
    %1213 = memref.load %arg10[%c13_569, %c8_570] : memref<16x16xf32, #tpu.memory_space<smem>>
    %1214 = vector.broadcast %1213 : f32 to vector<32x32xf32>
    %1215 = arith.mulf %1214, %128 : vector<32x32xf32>
    %1216 = arith.addf %1212, %1215 : vector<32x32xf32>
    %c13_571 = arith.constant 13 : index
    %c9_572 = arith.constant 9 : index
    %1217 = memref.load %arg10[%c13_571, %c9_572] : memref<16x16xf32, #tpu.memory_space<smem>>
    %1218 = vector.broadcast %1217 : f32 to vector<32x32xf32>
    %1219 = arith.mulf %1218, %129 : vector<32x32xf32>
    %1220 = arith.addf %1216, %1219 : vector<32x32xf32>
    %c13_573 = arith.constant 13 : index
    %c10_574 = arith.constant 10 : index
    %1221 = memref.load %arg10[%c13_573, %c10_574] : memref<16x16xf32, #tpu.memory_space<smem>>
    %1222 = vector.broadcast %1221 : f32 to vector<32x32xf32>
    %1223 = arith.mulf %1222, %130 : vector<32x32xf32>
    %1224 = arith.addf %1220, %1223 : vector<32x32xf32>
    %c13_575 = arith.constant 13 : index
    %c11_576 = arith.constant 11 : index
    %1225 = memref.load %arg10[%c13_575, %c11_576] : memref<16x16xf32, #tpu.memory_space<smem>>
    %1226 = vector.broadcast %1225 : f32 to vector<32x32xf32>
    %1227 = arith.mulf %1226, %131 : vector<32x32xf32>
    %1228 = arith.addf %1224, %1227 : vector<32x32xf32>
    %c13_577 = arith.constant 13 : index
    %c12_578 = arith.constant 12 : index
    %1229 = memref.load %arg10[%c13_577, %c12_578] : memref<16x16xf32, #tpu.memory_space<smem>>
    %1230 = vector.broadcast %1229 : f32 to vector<32x32xf32>
    %1231 = arith.mulf %1230, %132 : vector<32x32xf32>
    %1232 = arith.addf %1228, %1231 : vector<32x32xf32>
    %c13_579 = arith.constant 13 : index
    %c13_580 = arith.constant 13 : index
    %1233 = memref.load %arg10[%c13_579, %c13_580] : memref<16x16xf32, #tpu.memory_space<smem>>
    %1234 = vector.broadcast %1233 : f32 to vector<32x32xf32>
    %1235 = arith.mulf %1234, %133 : vector<32x32xf32>
    %1236 = arith.addf %1232, %1235 : vector<32x32xf32>
    %c13_581 = arith.constant 13 : index
    %c14_582 = arith.constant 14 : index
    %1237 = memref.load %arg10[%c13_581, %c14_582] : memref<16x16xf32, #tpu.memory_space<smem>>
    %1238 = vector.broadcast %1237 : f32 to vector<32x32xf32>
    %1239 = arith.mulf %1238, %134 : vector<32x32xf32>
    %1240 = arith.addf %1236, %1239 : vector<32x32xf32>
    %c13_583 = arith.constant 13 : index
    %c15_584 = arith.constant 15 : index
    %1241 = memref.load %arg10[%c13_583, %c15_584] : memref<16x16xf32, #tpu.memory_space<smem>>
    %1242 = vector.broadcast %1241 : f32 to vector<32x32xf32>
    %1243 = arith.mulf %1242, %135 : vector<32x32xf32>
    %1244 = arith.addf %1240, %1243 : vector<32x32xf32>
    %cst_585 = arith.constant 0.000000e+00 : f32
    %1245 = vector.broadcast %cst_585 : f32 to vector<32x32xf32>
    %1246 = arith.subf %1245, %1244 : vector<32x32xf32>
    %1247 = math.exp %1246 : vector<32x32xf32>
    %cst_586 = arith.constant 1.000000e+00 : f32
    %1248 = vector.broadcast %cst_586 : f32 to vector<32x32xf32>
    %1249 = arith.addf %1248, %1247 : vector<32x32xf32>
    %cst_587 = arith.constant 1.000000e+00 : f32
    %1250 = vector.broadcast %cst_587 : f32 to vector<32x32xf32>
    %1251 = arith.divf %1250, %1249 : vector<32x32xf32>
    %1252 = arith.mulf %133, %1251 : vector<32x32xf32>
    %c0_588 = arith.constant 0 : index
    %c416 = arith.constant 416 : index
    %c0_589 = arith.constant 0 : index
    %1253 = vector.load %arg12[%c0_588, %c416, %c0_589] : memref<1x512x32xf32, #tpu.memory_space<vmem>>, vector<1x32x32xf32>
    %1254 = vector.shape_cast %1253 : vector<1x32x32xf32> to vector<32x32xf32>
    %1255 = vector.shape_cast %1252 : vector<32x32xf32> to vector<1x32x32xf32>
    tpu.vector_store %arg12[%c0_588, %c416, %c0_589], %1255 {strides = array<i32>} : memref<1x512x32xf32, #tpu.memory_space<vmem>>, vector<1x32x32xf32>,
    %1256 = vector.extract_strided_slice %118 {offsets = [42, 0], sizes = [3, 32], strides = [1, 1]} : vector<48x32xf32> to vector<3x32xf32>
    %cst_590 = arith.constant dense<0.000000e+00> : vector<32x32xf32>
    %1257 = tpu.matmul %119, %1256, %cst_590 {dimension_numbers = #tpu.dot_dimension_numbers<[1], [0], [0], [1], [0, 0, 1, 1], [], []>} : vector<32x3xf32>, vector<3x32xf32>, vector<32x32xf32> -> vector<32x32xf32>
    %c14_591 = arith.constant 14 : index
    %1258 = memref.load %arg11[%c14_591] : memref<16xf32, #tpu.memory_space<smem>>
    %1259 = vector.broadcast %1258 : f32 to vector<32x32xf32>
    %1260 = arith.addf %1257, %1259 : vector<32x32xf32>
    %c14_592 = arith.constant 14 : index
    %c0_593 = arith.constant 0 : index
    %1261 = memref.load %arg10[%c14_592, %c0_593] : memref<16x16xf32, #tpu.memory_space<smem>>
    %1262 = vector.broadcast %1261 : f32 to vector<32x32xf32>
    %1263 = arith.mulf %1262, %120 : vector<32x32xf32>
    %1264 = arith.addf %1260, %1263 : vector<32x32xf32>
    %c14_594 = arith.constant 14 : index
    %c1_595 = arith.constant 1 : index
    %1265 = memref.load %arg10[%c14_594, %c1_595] : memref<16x16xf32, #tpu.memory_space<smem>>
    %1266 = vector.broadcast %1265 : f32 to vector<32x32xf32>
    %1267 = arith.mulf %1266, %121 : vector<32x32xf32>
    %1268 = arith.addf %1264, %1267 : vector<32x32xf32>
    %c14_596 = arith.constant 14 : index
    %c2_597 = arith.constant 2 : index
    %1269 = memref.load %arg10[%c14_596, %c2_597] : memref<16x16xf32, #tpu.memory_space<smem>>
    %1270 = vector.broadcast %1269 : f32 to vector<32x32xf32>
    %1271 = arith.mulf %1270, %122 : vector<32x32xf32>
    %1272 = arith.addf %1268, %1271 : vector<32x32xf32>
    %c14_598 = arith.constant 14 : index
    %c3_599 = arith.constant 3 : index
    %1273 = memref.load %arg10[%c14_598, %c3_599] : memref<16x16xf32, #tpu.memory_space<smem>>
    %1274 = vector.broadcast %1273 : f32 to vector<32x32xf32>
    %1275 = arith.mulf %1274, %123 : vector<32x32xf32>
    %1276 = arith.addf %1272, %1275 : vector<32x32xf32>
    %c14_600 = arith.constant 14 : index
    %c4_601 = arith.constant 4 : index
    %1277 = memref.load %arg10[%c14_600, %c4_601] : memref<16x16xf32, #tpu.memory_space<smem>>
    %1278 = vector.broadcast %1277 : f32 to vector<32x32xf32>
    %1279 = arith.mulf %1278, %124 : vector<32x32xf32>
    %1280 = arith.addf %1276, %1279 : vector<32x32xf32>
    %c14_602 = arith.constant 14 : index
    %c5_603 = arith.constant 5 : index
    %1281 = memref.load %arg10[%c14_602, %c5_603] : memref<16x16xf32, #tpu.memory_space<smem>>
    %1282 = vector.broadcast %1281 : f32 to vector<32x32xf32>
    %1283 = arith.mulf %1282, %125 : vector<32x32xf32>
    %1284 = arith.addf %1280, %1283 : vector<32x32xf32>
    %c14_604 = arith.constant 14 : index
    %c6_605 = arith.constant 6 : index
    %1285 = memref.load %arg10[%c14_604, %c6_605] : memref<16x16xf32, #tpu.memory_space<smem>>
    %1286 = vector.broadcast %1285 : f32 to vector<32x32xf32>
    %1287 = arith.mulf %1286, %126 : vector<32x32xf32>
    %1288 = arith.addf %1284, %1287 : vector<32x32xf32>
    %c14_606 = arith.constant 14 : index
    %c7_607 = arith.constant 7 : index
    %1289 = memref.load %arg10[%c14_606, %c7_607] : memref<16x16xf32, #tpu.memory_space<smem>>
    %1290 = vector.broadcast %1289 : f32 to vector<32x32xf32>
    %1291 = arith.mulf %1290, %127 : vector<32x32xf32>
    %1292 = arith.addf %1288, %1291 : vector<32x32xf32>
    %c14_608 = arith.constant 14 : index
    %c8_609 = arith.constant 8 : index
    %1293 = memref.load %arg10[%c14_608, %c8_609] : memref<16x16xf32, #tpu.memory_space<smem>>
    %1294 = vector.broadcast %1293 : f32 to vector<32x32xf32>
    %1295 = arith.mulf %1294, %128 : vector<32x32xf32>
    %1296 = arith.addf %1292, %1295 : vector<32x32xf32>
    %c14_610 = arith.constant 14 : index
    %c9_611 = arith.constant 9 : index
    %1297 = memref.load %arg10[%c14_610, %c9_611] : memref<16x16xf32, #tpu.memory_space<smem>>
    %1298 = vector.broadcast %1297 : f32 to vector<32x32xf32>
    %1299 = arith.mulf %1298, %129 : vector<32x32xf32>
    %1300 = arith.addf %1296, %1299 : vector<32x32xf32>
    %c14_612 = arith.constant 14 : index
    %c10_613 = arith.constant 10 : index
    %1301 = memref.load %arg10[%c14_612, %c10_613] : memref<16x16xf32, #tpu.memory_space<smem>>
    %1302 = vector.broadcast %1301 : f32 to vector<32x32xf32>
    %1303 = arith.mulf %1302, %130 : vector<32x32xf32>
    %1304 = arith.addf %1300, %1303 : vector<32x32xf32>
    %c14_614 = arith.constant 14 : index
    %c11_615 = arith.constant 11 : index
    %1305 = memref.load %arg10[%c14_614, %c11_615] : memref<16x16xf32, #tpu.memory_space<smem>>
    %1306 = vector.broadcast %1305 : f32 to vector<32x32xf32>
    %1307 = arith.mulf %1306, %131 : vector<32x32xf32>
    %1308 = arith.addf %1304, %1307 : vector<32x32xf32>
    %c14_616 = arith.constant 14 : index
    %c12_617 = arith.constant 12 : index
    %1309 = memref.load %arg10[%c14_616, %c12_617] : memref<16x16xf32, #tpu.memory_space<smem>>
    %1310 = vector.broadcast %1309 : f32 to vector<32x32xf32>
    %1311 = arith.mulf %1310, %132 : vector<32x32xf32>
    %1312 = arith.addf %1308, %1311 : vector<32x32xf32>
    %c14_618 = arith.constant 14 : index
    %c13_619 = arith.constant 13 : index
    %1313 = memref.load %arg10[%c14_618, %c13_619] : memref<16x16xf32, #tpu.memory_space<smem>>
    %1314 = vector.broadcast %1313 : f32 to vector<32x32xf32>
    %1315 = arith.mulf %1314, %133 : vector<32x32xf32>
    %1316 = arith.addf %1312, %1315 : vector<32x32xf32>
    %c14_620 = arith.constant 14 : index
    %c14_621 = arith.constant 14 : index
    %1317 = memref.load %arg10[%c14_620, %c14_621] : memref<16x16xf32, #tpu.memory_space<smem>>
    %1318 = vector.broadcast %1317 : f32 to vector<32x32xf32>
    %1319 = arith.mulf %1318, %134 : vector<32x32xf32>
    %1320 = arith.addf %1316, %1319 : vector<32x32xf32>
    %c14_622 = arith.constant 14 : index
    %c15_623 = arith.constant 15 : index
    %1321 = memref.load %arg10[%c14_622, %c15_623] : memref<16x16xf32, #tpu.memory_space<smem>>
    %1322 = vector.broadcast %1321 : f32 to vector<32x32xf32>
    %1323 = arith.mulf %1322, %135 : vector<32x32xf32>
    %1324 = arith.addf %1320, %1323 : vector<32x32xf32>
    %cst_624 = arith.constant 0.000000e+00 : f32
    %1325 = vector.broadcast %cst_624 : f32 to vector<32x32xf32>
    %1326 = arith.subf %1325, %1324 : vector<32x32xf32>
    %1327 = math.exp %1326 : vector<32x32xf32>
    %cst_625 = arith.constant 1.000000e+00 : f32
    %1328 = vector.broadcast %cst_625 : f32 to vector<32x32xf32>
    %1329 = arith.addf %1328, %1327 : vector<32x32xf32>
    %cst_626 = arith.constant 1.000000e+00 : f32
    %1330 = vector.broadcast %cst_626 : f32 to vector<32x32xf32>
    %1331 = arith.divf %1330, %1329 : vector<32x32xf32>
    %1332 = arith.mulf %134, %1331 : vector<32x32xf32>
    %c0_627 = arith.constant 0 : index
    %c448 = arith.constant 448 : index
    %c0_628 = arith.constant 0 : index
    %1333 = vector.load %arg12[%c0_627, %c448, %c0_628] : memref<1x512x32xf32, #tpu.memory_space<vmem>>, vector<1x32x32xf32>
    %1334 = vector.shape_cast %1333 : vector<1x32x32xf32> to vector<32x32xf32>
    %1335 = vector.shape_cast %1332 : vector<32x32xf32> to vector<1x32x32xf32>
    tpu.vector_store %arg12[%c0_627, %c448, %c0_628], %1335 {strides = array<i32>} : memref<1x512x32xf32, #tpu.memory_space<vmem>>, vector<1x32x32xf32>,
    %1336 = vector.extract_strided_slice %118 {offsets = [45, 0], sizes = [3, 32], strides = [1, 1]} : vector<48x32xf32> to vector<3x32xf32>
    %cst_629 = arith.constant dense<0.000000e+00> : vector<32x32xf32>
    %1337 = tpu.matmul %119, %1336, %cst_629 {dimension_numbers = #tpu.dot_dimension_numbers<[1], [0], [0], [1], [0, 0, 1, 1], [], []>} : vector<32x3xf32>, vector<3x32xf32>, vector<32x32xf32> -> vector<32x32xf32>
    %c15_630 = arith.constant 15 : index
    %1338 = memref.load %arg11[%c15_630] : memref<16xf32, #tpu.memory_space<smem>>
    %1339 = vector.broadcast %1338 : f32 to vector<32x32xf32>
    %1340 = arith.addf %1337, %1339 : vector<32x32xf32>
    %c15_631 = arith.constant 15 : index
    %c0_632 = arith.constant 0 : index
    %1341 = memref.load %arg10[%c15_631, %c0_632] : memref<16x16xf32, #tpu.memory_space<smem>>
    %1342 = vector.broadcast %1341 : f32 to vector<32x32xf32>
    %1343 = arith.mulf %1342, %120 : vector<32x32xf32>
    %1344 = arith.addf %1340, %1343 : vector<32x32xf32>
    %c15_633 = arith.constant 15 : index
    %c1_634 = arith.constant 1 : index
    %1345 = memref.load %arg10[%c15_633, %c1_634] : memref<16x16xf32, #tpu.memory_space<smem>>
    %1346 = vector.broadcast %1345 : f32 to vector<32x32xf32>
    %1347 = arith.mulf %1346, %121 : vector<32x32xf32>
    %1348 = arith.addf %1344, %1347 : vector<32x32xf32>
    %c15_635 = arith.constant 15 : index
    %c2_636 = arith.constant 2 : index
    %1349 = memref.load %arg10[%c15_635, %c2_636] : memref<16x16xf32, #tpu.memory_space<smem>>
    %1350 = vector.broadcast %1349 : f32 to vector<32x32xf32>
    %1351 = arith.mulf %1350, %122 : vector<32x32xf32>
    %1352 = arith.addf %1348, %1351 : vector<32x32xf32>
    %c15_637 = arith.constant 15 : index
    %c3_638 = arith.constant 3 : index
    %1353 = memref.load %arg10[%c15_637, %c3_638] : memref<16x16xf32, #tpu.memory_space<smem>>
    %1354 = vector.broadcast %1353 : f32 to vector<32x32xf32>
    %1355 = arith.mulf %1354, %123 : vector<32x32xf32>
    %1356 = arith.addf %1352, %1355 : vector<32x32xf32>
    %c15_639 = arith.constant 15 : index
    %c4_640 = arith.constant 4 : index
    %1357 = memref.load %arg10[%c15_639, %c4_640] : memref<16x16xf32, #tpu.memory_space<smem>>
    %1358 = vector.broadcast %1357 : f32 to vector<32x32xf32>
    %1359 = arith.mulf %1358, %124 : vector<32x32xf32>
    %1360 = arith.addf %1356, %1359 : vector<32x32xf32>
    %c15_641 = arith.constant 15 : index
    %c5_642 = arith.constant 5 : index
    %1361 = memref.load %arg10[%c15_641, %c5_642] : memref<16x16xf32, #tpu.memory_space<smem>>
    %1362 = vector.broadcast %1361 : f32 to vector<32x32xf32>
    %1363 = arith.mulf %1362, %125 : vector<32x32xf32>
    %1364 = arith.addf %1360, %1363 : vector<32x32xf32>
    %c15_643 = arith.constant 15 : index
    %c6_644 = arith.constant 6 : index
    %1365 = memref.load %arg10[%c15_643, %c6_644] : memref<16x16xf32, #tpu.memory_space<smem>>
    %1366 = vector.broadcast %1365 : f32 to vector<32x32xf32>
    %1367 = arith.mulf %1366, %126 : vector<32x32xf32>
    %1368 = arith.addf %1364, %1367 : vector<32x32xf32>
    %c15_645 = arith.constant 15 : index
    %c7_646 = arith.constant 7 : index
    %1369 = memref.load %arg10[%c15_645, %c7_646] : memref<16x16xf32, #tpu.memory_space<smem>>
    %1370 = vector.broadcast %1369 : f32 to vector<32x32xf32>
    %1371 = arith.mulf %1370, %127 : vector<32x32xf32>
    %1372 = arith.addf %1368, %1371 : vector<32x32xf32>
    %c15_647 = arith.constant 15 : index
    %c8_648 = arith.constant 8 : index
    %1373 = memref.load %arg10[%c15_647, %c8_648] : memref<16x16xf32, #tpu.memory_space<smem>>
    %1374 = vector.broadcast %1373 : f32 to vector<32x32xf32>
    %1375 = arith.mulf %1374, %128 : vector<32x32xf32>
    %1376 = arith.addf %1372, %1375 : vector<32x32xf32>
    %c15_649 = arith.constant 15 : index
    %c9_650 = arith.constant 9 : index
    %1377 = memref.load %arg10[%c15_649, %c9_650] : memref<16x16xf32, #tpu.memory_space<smem>>
    %1378 = vector.broadcast %1377 : f32 to vector<32x32xf32>
    %1379 = arith.mulf %1378, %129 : vector<32x32xf32>
    %1380 = arith.addf %1376, %1379 : vector<32x32xf32>
    %c15_651 = arith.constant 15 : index
    %c10_652 = arith.constant 10 : index
    %1381 = memref.load %arg10[%c15_651, %c10_652] : memref<16x16xf32, #tpu.memory_space<smem>>
    %1382 = vector.broadcast %1381 : f32 to vector<32x32xf32>
    %1383 = arith.mulf %1382, %130 : vector<32x32xf32>
    %1384 = arith.addf %1380, %1383 : vector<32x32xf32>
    %c15_653 = arith.constant 15 : index
    %c11_654 = arith.constant 11 : index
    %1385 = memref.load %arg10[%c15_653, %c11_654] : memref<16x16xf32, #tpu.memory_space<smem>>
    %1386 = vector.broadcast %1385 : f32 to vector<32x32xf32>
    %1387 = arith.mulf %1386, %131 : vector<32x32xf32>
    %1388 = arith.addf %1384, %1387 : vector<32x32xf32>
    %c15_655 = arith.constant 15 : index
    %c12_656 = arith.constant 12 : index
    %1389 = memref.load %arg10[%c15_655, %c12_656] : memref<16x16xf32, #tpu.memory_space<smem>>
    %1390 = vector.broadcast %1389 : f32 to vector<32x32xf32>
    %1391 = arith.mulf %1390, %132 : vector<32x32xf32>
    %1392 = arith.addf %1388, %1391 : vector<32x32xf32>
    %c15_657 = arith.constant 15 : index
    %c13_658 = arith.constant 13 : index
    %1393 = memref.load %arg10[%c15_657, %c13_658] : memref<16x16xf32, #tpu.memory_space<smem>>
    %1394 = vector.broadcast %1393 : f32 to vector<32x32xf32>
    %1395 = arith.mulf %1394, %133 : vector<32x32xf32>
    %1396 = arith.addf %1392, %1395 : vector<32x32xf32>
    %c15_659 = arith.constant 15 : index
    %c14_660 = arith.constant 14 : index
    %1397 = memref.load %arg10[%c15_659, %c14_660] : memref<16x16xf32, #tpu.memory_space<smem>>
    %1398 = vector.broadcast %1397 : f32 to vector<32x32xf32>
    %1399 = arith.mulf %1398, %134 : vector<32x32xf32>
    %1400 = arith.addf %1396, %1399 : vector<32x32xf32>
    %c15_661 = arith.constant 15 : index
    %c15_662 = arith.constant 15 : index
    %1401 = memref.load %arg10[%c15_661, %c15_662] : memref<16x16xf32, #tpu.memory_space<smem>>
    %1402 = vector.broadcast %1401 : f32 to vector<32x32xf32>
    %1403 = arith.mulf %1402, %135 : vector<32x32xf32>
    %1404 = arith.addf %1400, %1403 : vector<32x32xf32>
    %cst_663 = arith.constant 0.000000e+00 : f32
    %1405 = vector.broadcast %cst_663 : f32 to vector<32x32xf32>
    %1406 = arith.subf %1405, %1404 : vector<32x32xf32>
    %1407 = math.exp %1406 : vector<32x32xf32>
    %cst_664 = arith.constant 1.000000e+00 : f32
    %1408 = vector.broadcast %cst_664 : f32 to vector<32x32xf32>
    %1409 = arith.addf %1408, %1407 : vector<32x32xf32>
    %cst_665 = arith.constant 1.000000e+00 : f32
    %1410 = vector.broadcast %cst_665 : f32 to vector<32x32xf32>
    %1411 = arith.divf %1410, %1409 : vector<32x32xf32>
    %1412 = arith.mulf %135, %1411 : vector<32x32xf32>
    %c0_666 = arith.constant 0 : index
    %c480 = arith.constant 480 : index
    %c0_667 = arith.constant 0 : index
    %1413 = vector.load %arg12[%c0_666, %c480, %c0_667] : memref<1x512x32xf32, #tpu.memory_space<vmem>>, vector<1x32x32xf32>
    %1414 = vector.shape_cast %1413 : vector<1x32x32xf32> to vector<32x32xf32>
    %1415 = vector.shape_cast %1412 : vector<32x32xf32> to vector<1x32x32xf32>
    tpu.vector_store %arg12[%c0_666, %c480, %c0_667], %1415 {strides = array<i32>} : memref<1x512x32xf32, #tpu.memory_space<vmem>>, vector<1x32x32xf32>,
    return
  }
  func.func @transform_0(%arg0: i32) -> (i32, i32, i32) {
    %c0_i32 = arith.constant 0 : i32
    %c0_i32_0 = arith.constant 0 : i32
    %c0_i32_1 = arith.constant 0 : i32
    return %arg0, %c0_i32, %c0_i32_0 : i32, i32, i32
  }
  func.func @transform_1(%arg0: i32) -> (i32, i32) {
    %c0_i32 = arith.constant 0 : i32
    %c0_i32_0 = arith.constant 0 : i32
    %c0_i32_1 = arith.constant 0 : i32
    return %c0_i32, %c0_i32_0 : i32, i32
  }
  func.func @transform_2(%arg0: i32) -> (i32, i32, i32) {
    %c0_i32 = arith.constant 0 : i32
    %c0_i32_0 = arith.constant 0 : i32
    %c0_i32_1 = arith.constant 0 : i32
    %c0_i32_2 = arith.constant 0 : i32
    return %c0_i32, %c0_i32_0, %c0_i32_1 : i32, i32, i32
  }
  func.func @transform_3(%arg0: i32) -> (i32, i32) {
    %c0_i32 = arith.constant 0 : i32
    %c0_i32_0 = arith.constant 0 : i32
    %c0_i32_1 = arith.constant 0 : i32
    return %c0_i32, %c0_i32_0 : i32, i32
  }
  func.func @transform_4(%arg0: i32) -> (i32, i32) {
    %c0_i32 = arith.constant 0 : i32
    %c0_i32_0 = arith.constant 0 : i32
    %c0_i32_1 = arith.constant 0 : i32
    return %c0_i32, %c0_i32_0 : i32, i32
  }
  func.func @transform_5(%arg0: i32) -> (i32, i32) {
    %c0_i32 = arith.constant 0 : i32
    %c0_i32_0 = arith.constant 0 : i32
    %c0_i32_1 = arith.constant 0 : i32
    return %c0_i32, %c0_i32_0 : i32, i32
  }
  func.func @transform_6(%arg0: i32) -> (i32, i32) {
    %c0_i32 = arith.constant 0 : i32
    %c0_i32_0 = arith.constant 0 : i32
    %c0_i32_1 = arith.constant 0 : i32
    return %c0_i32, %c0_i32_0 : i32, i32
  }
  func.func @transform_7(%arg0: i32) -> (i32, i32) {
    %c0_i32 = arith.constant 0 : i32
    %c0_i32_0 = arith.constant 0 : i32
    %c0_i32_1 = arith.constant 0 : i32
    return %c0_i32, %c0_i32_0 : i32, i32
  }
  func.func @transform_8(%arg0: i32) -> (i32, i32) {
    %c0_i32 = arith.constant 0 : i32
    %c0_i32_0 = arith.constant 0 : i32
    %c0_i32_1 = arith.constant 0 : i32
    return %c0_i32, %c0_i32_0 : i32, i32
  }
  func.func @transform_9(%arg0: i32) -> (i32, i32) {
    %c0_i32 = arith.constant 0 : i32
    %c0_i32_0 = arith.constant 0 : i32
    %c0_i32_1 = arith.constant 0 : i32
    return %c0_i32, %c0_i32_0 : i32, i32
  }
  func.func @transform_10(%arg0: i32) -> i32 {
    %c0_i32 = arith.constant 0 : i32
    %c0_i32_0 = arith.constant 0 : i32
    return %c0_i32 : i32
  }
  func.func @transform_11(%arg0: i32) -> (i32, i32, i32) {
    %c0_i32 = arith.constant 0 : i32
    %c0_i32_0 = arith.constant 0 : i32
    %c0_i32_1 = arith.constant 0 : i32
    return %arg0, %c0_i32, %c0_i32_0 : i32, i32, i32
  }
}

</mosaic_0001>

<llo_original>
// kernel: esa_forward.1
$region0: #{esa_forward.1}
  #allocation0 [shape = 'u32[]', space=smem, size = 0x4, offset = 0x4, fixed_abs, tag = 'smem constant byte address 0x4 - core index']
  #allocation1 [shape = 'u32[144,128]{1,0:T(1,128)}', space=vmem, size = 0x12000, scoped, tag = 'internal scratch']
  %s0 = inlined_call_operand.vmem [shape: f32[2,512,32], index: 0, kind: input, shape index: {}]
  %s1 = inlined_call_operand.vmem [shape: f32[32,45], index: 1, kind: input, shape index: {}]
  %s2 = inlined_call_operand.vmem [shape: f32[3,120,512], index: 2, kind: input, shape index: {}]
  %s3 = inlined_call_operand.vmem [shape: f32[120,1], index: 3, kind: input, shape index: {}]
  %s4 = inlined_call_operand.vmem [shape: f32[3,9], index: 4, kind: input, shape index: {}]
  %s5 = inlined_call_operand.vmem [shape: f32[48,72], index: 5, kind: input, shape index: {}]
  %s6 = inlined_call_operand.vmem [shape: f32[48,1], index: 6, kind: input, shape index: {}]
  %s7 = inlined_call_operand.vmem [shape: f32[3,32], index: 7, kind: input, shape index: {}]
  %s8 = inlined_call_operand.vmem [shape: f32[32,3], index: 8, kind: input, shape index: {}]
  %s9 = inlined_call_operand.vmem [shape: f32[16,16], index: 9, kind: input, shape index: {}]
  %s10 = inlined_call_operand.vmem [shape: f32[16], index: 10, kind: input, shape index: {}]
  %s11 = inlined_call_operand.hbm [shape: f32[2,512,32], index: 11, kind: output, shape index: {}]
  %s12 = sld [smem:[#allocation0]]
  $region85: #{esa_forward.1} parent=0
    _
  %s14 = ssub.s32 1, %s12
  %s15 = scalar_select 0, %s14, %s12
  $region1: #{esa_forward.1} parent=0
    #allocation2 [shape = 'u8[8192]{0}', space=smem, size = 0x2000, scoped, tag = 'input window, operand 9, single buffered']
    #allocation3 [shape = 's32[2]{0}', space=sflag, size = 0x8, scoped, tag = 'scoped memory for esa_forward.1']
    #allocation4 [shape = 's32[2]{0}', space=sflag, size = 0x8, scoped, tag = 'scoped memory for esa_forward.1']
    #allocation5 [shape = 'u8[512]{0}', space=smem, size = 0x200, scoped, tag = 'input window, operand 10, single buffered']
    #allocation6 [shape = 's32[1]{0}', space=sflag, size = 0x4, scoped, tag = 'scoped memory for esa_forward.1']
    #allocation7 [shape = 'u8[524288]{0}', space=vmem, size = 0x80000, scoped, tag = 'output window, operand 0']
    %16 = vsyncpa [#allocation4], 0
    %17 = vsyncpa [#allocation6], 0
    %18 = vsyncpa [#allocation3], 0
    %s19 = scalar_lea.sflag [#allocation3], 1
    %20 = vsyncpa %s19, 0
    loop: start=0, step=1, limit=4
    $region2: #{esa_forward.1} parent=1 // loop_pre_header
      _
    $region3: #{esa_forward.1} parent=1 // loop_header
      %s22 = sphi 0, %s26
      %p23 = scmp.ge.s32.totalorder %s22, 4
      %s32 = sphi 0, %s34
      %s35 = sphi 0, %s32
      %s36 = sphi 0, %s35
      %s52 = sphi 0, %s36
      %s56 = sphi 0, %s56
      %s58 = sphi 0, %s56
      %s59 = sphi 0, %s58
      %s73 = sphi 0, %s59
      %s77 = sphi 0, %s77
      %s79 = sphi 0, %s77
      %s80 = sphi 0, %s79
      %s94 = sphi 0, %s80
      %s98 = sphi 0, %s98
      %s100 = sphi 0, %s98
      %s101 = sphi 0, %s100
      %s115 = sphi 0, %s101
      %s119 = sphi 0, %s119
      %s121 = sphi 0, %s119
      %s122 = sphi 0, %s121
      %s136 = sphi 0, %s122
      %s140 = sphi 0, %s140
      %s142 = sphi 0, %s140
      %s143 = sphi 0, %s142
      %s157 = sphi 0, %s143
      %s161 = sphi 0, %s161
      %s163 = sphi 0, %s161
      %s164 = sphi 0, %s163
      %s178 = sphi 0, %s164
      %s182 = sphi 0, %s182
      %s184 = sphi 0, %s182
      %s185 = sphi 0, %s184
      %s199 = sphi 0, %s185
      %s203 = sphi 0, %s203
      %s205 = sphi 0, %s203
      %s206 = sphi 0, %s205
      %s220 = sphi 0, %s206
      %s224 = sphi 0, %s224
      %s226 = sphi 0, %s224
      %s227 = sphi 0, %s226
      %s241 = sphi 0, %s227
      %s245 = sphi 0, %s245
      %s247 = sphi 0, %s245
      %s248 = sphi 0, %s247
      %s262 = sphi 0, %s248
      %s268 = sphi 0, %s270
      %s271 = sphi 0, %s268
      %s272 = sphi 0, %s271
      %s288 = sphi 0, %s272
    $region4: #{esa_forward.1} parent=1 // loop_header_branch
      %25 = sbr.rel (%p23) target = $region8
    $region5: #{esa_forward.1} parent=1 // loop_body
      %s27 = ssub.s32 %s22, 1
      %s28 = ssub.s32 %s22, 2
      %s29 = sadd.s32 %s22, 1
      %s30 = ssub.s32 %s22, %s29
      %p31 = scmp.eq.s32.totalorder %s30, 0
      %s33 = sadd.s32 %s32, 1
      %s34 = scalar_select %p31, %s32, %s33
      %p37 = pneg %p31
      %p38 = scmp.eq.s32.totalorder %s22, 1
      %p39 = por %p37, %p38
      %p40 = scmp.ne.s32.totalorder %s32, %s35
      %p41 = scmp.eq.s32.totalorder %s22, 0
      %p42 = por %p40, %p41
      %p43 = scmp.ne.s32.totalorder %s32, %s35
      %p44 = scmp.eq.s32.totalorder %s27, 1
      %p45 = por %p43, %p44
      %p46 = scmp.ne.s32.totalorder %s35, %s36
      %p47 = scmp.eq.s32.totalorder %s27, 0
      %p48 = por %p46, %p47
      %p49 = scmp.ne.s32.totalorder %s35, %s36
      %p50 = scmp.eq.s32.totalorder %s28, 1
      %p51 = por %p49, %p50
      %p53 = scmp.ne.s32.totalorder %s36, %s52
      %p54 = scmp.eq.s32.totalorder %s28, 0
      %p55 = por %p53, %p54
      %s57 = sadd.s32 %s56, 1
      %p60 = scmp.eq.s32.totalorder %s22, 1
      %p61 = scmp.ne.s32.totalorder %s56, %s58
      %p62 = scmp.eq.s32.totalorder %s22, 0
      %p63 = por %p61, %p62
      %p64 = scmp.ne.s32.totalorder %s56, %s58
      %p65 = scmp.eq.s32.totalorder %s27, 1
      %p66 = por %p64, %p65
      %p67 = scmp.ne.s32.totalorder %s58, %s59
      %p68 = scmp.eq.s32.totalorder %s27, 0
      %p69 = por %p67, %p68
      %p70 = scmp.ne.s32.totalorder %s58, %s59
      %p71 = scmp.eq.s32.totalorder %s28, 1
      %p72 = por %p70, %p71
      %p74 = scmp.ne.s32.totalorder %s59, %s73
      %p75 = scmp.eq.s32.totalorder %s28, 0
      %p76 = por %p74, %p75
      %s78 = sadd.s32 %s77, 1
      %p81 = scmp.eq.s32.totalorder %s22, 1
      %p82 = scmp.ne.s32.totalorder %s77, %s79
      %p83 = scmp.eq.s32.totalorder %s22, 0
      %p84 = por %p82, %p83
      %p85 = scmp.ne.s32.totalorder %s77, %s79
      %p86 = scmp.eq.s32.totalorder %s27, 1
      %p87 = por %p85, %p86
      %p88 = scmp.ne.s32.totalorder %s79, %s80
      %p89 = scmp.eq.s32.totalorder %s27, 0
      %p90 = por %p88, %p89
      %p91 = scmp.ne.s32.totalorder %s79, %s80
      %p92 = scmp.eq.s32.totalorder %s28, 1
      %p93 = por %p91, %p92
      %p95 = scmp.ne.s32.totalorder %s80, %s94
      %p96 = scmp.eq.s32.totalorder %s28, 0
      %p97 = por %p95, %p96
      %s99 = sadd.s32 %s98, 1
      %p102 = scmp.eq.s32.totalorder %s22, 1
      %p103 = scmp.ne.s32.totalorder %s98, %s100
      %p104 = scmp.eq.s32.totalorder %s22, 0
      %p105 = por %p103, %p104
      %p106 = scmp.ne.s32.totalorder %s98, %s100
      %p107 = scmp.eq.s32.totalorder %s27, 1
      %p108 = por %p106, %p107
      %p109 = scmp.ne.s32.totalorder %s100, %s101
      %p110 = scmp.eq.s32.totalorder %s27, 0
      %p111 = por %p109, %p110
      %p112 = scmp.ne.s32.totalorder %s100, %s101
      %p113 = scmp.eq.s32.totalorder %s28, 1
      %p114 = por %p112, %p113
      %p116 = scmp.ne.s32.totalorder %s101, %s115
      %p117 = scmp.eq.s32.totalorder %s28, 0
      %p118 = por %p116, %p117
      %s120 = sadd.s32 %s119, 1
      %p123 = scmp.eq.s32.totalorder %s22, 1
      %p124 = scmp.ne.s32.totalorder %s119, %s121
      %p125 = scmp.eq.s32.totalorder %s22, 0
      %p126 = por %p124, %p125
      %p127 = scmp.ne.s32.totalorder %s119, %s121
      %p128 = scmp.eq.s32.totalorder %s27, 1
      %p129 = por %p127, %p128
      %p130 = scmp.ne.s32.totalorder %s121, %s122
      %p131 = scmp.eq.s32.totalorder %s27, 0
      %p132 = por %p130, %p131
      %p133 = scmp.ne.s32.totalorder %s121, %s122
      %p134 = scmp.eq.s32.totalorder %s28, 1
      %p135 = por %p133, %p134
      %p137 = scmp.ne.s32.totalorder %s122, %s136
      %p138 = scmp.eq.s32.totalorder %s28, 0
      %p139 = por %p137, %p138
      %s141 = sadd.s32 %s140, 1
      %p144 = scmp.eq.s32.totalorder %s22, 1
      %p145 = scmp.ne.s32.totalorder %s140, %s142
      %p146 = scmp.eq.s32.totalorder %s22, 0
      %p147 = por %p145, %p146
      %p148 = scmp.ne.s32.totalorder %s140, %s142
      %p149 = scmp.eq.s32.totalorder %s27, 1
      %p150 = por %p148, %p149
      %p151 = scmp.ne.s32.totalorder %s142, %s143
      %p152 = scmp.eq.s32.totalorder %s27, 0
      %p153 = por %p151, %p152
      %p154 = scmp.ne.s32.totalorder %s142, %s143
      %p155 = scmp.eq.s32.totalorder %s28, 1
      %p156 = por %p154, %p155
      %p158 = scmp.ne.s32.totalorder %s143, %s157
      %p159 = scmp.eq.s32.totalorder %s28, 0
      %p160 = por %p158, %p159
      %s162 = sadd.s32 %s161, 1
      %p165 = scmp.eq.s32.totalorder %s22, 1
      %p166 = scmp.ne.s32.totalorder %s161, %s163
      %p167 = scmp.eq.s32.totalorder %s22, 0
      %p168 = por %p166, %p167
      %p169 = scmp.ne.s32.totalorder %s161, %s163
      %p170 = scmp.eq.s32.totalorder %s27, 1
      %p171 = por %p169, %p170
      %p172 = scmp.ne.s32.totalorder %s163, %s164
      %p173 = scmp.eq.s32.totalorder %s27, 0
      %p174 = por %p172, %p173
      %p175 = scmp.ne.s32.totalorder %s163, %s164
      %p176 = scmp.eq.s32.totalorder %s28, 1
      %p177 = por %p175, %p176
      %p179 = scmp.ne.s32.totalorder %s164, %s178
      %p180 = scmp.eq.s32.totalorder %s28, 0
      %p181 = por %p179, %p180
      %s183 = sadd.s32 %s182, 1
      %p186 = scmp.eq.s32.totalorder %s22, 1
      %p187 = scmp.ne.s32.totalorder %s182, %s184
      %p188 = scmp.eq.s32.totalorder %s22, 0
      %p189 = por %p187, %p188
      %p190 = scmp.ne.s32.totalorder %s182, %s184
      %p191 = scmp.eq.s32.totalorder %s27, 1
      %p192 = por %p190, %p191
      %p193 = scmp.ne.s32.totalorder %s184, %s185
      %p194 = scmp.eq.s32.totalorder %s27, 0
      %p195 = por %p193, %p194
      %p196 = scmp.ne.s32.totalorder %s184, %s185
      %p197 = scmp.eq.s32.totalorder %s28, 1
      %p198 = por %p196, %p197
      %p200 = scmp.ne.s32.totalorder %s185, %s199
      %p201 = scmp.eq.s32.totalorder %s28, 0
      %p202 = por %p200, %p201
      %s204 = sadd.s32 %s203, 1
      %p207 = scmp.eq.s32.totalorder %s22, 1
      %p208 = scmp.ne.s32.totalorder %s203, %s205
      %p209 = scmp.eq.s32.totalorder %s22, 0
      %p210 = por %p208, %p209
      %p211 = scmp.ne.s32.totalorder %s203, %s205
      %p212 = scmp.eq.s32.totalorder %s27, 1
      %p213 = por %p211, %p212
      %p214 = scmp.ne.s32.totalorder %s205, %s206
      %p215 = scmp.eq.s32.totalorder %s27, 0
      %p216 = por %p214, %p215
      %p217 = scmp.ne.s32.totalorder %s205, %s206
      %p218 = scmp.eq.s32.totalorder %s28, 1
      %p219 = por %p217, %p218
      %p221 = scmp.ne.s32.totalorder %s206, %s220
      %p222 = scmp.eq.s32.totalorder %s28, 0
      %p223 = por %p221, %p222
      %s225 = sadd.s32 %s224, 1
      %p228 = scmp.eq.s32.totalorder %s22, 1
      %p229 = scmp.ne.s32.totalorder %s224, %s226
      %p230 = scmp.eq.s32.totalorder %s22, 0
      %p231 = por %p229, %p230
      %p232 = scmp.ne.s32.totalorder %s224, %s226
      %p233 = scmp.eq.s32.totalorder %s27, 1
      %p234 = por %p232, %p233
      %p235 = scmp.ne.s32.totalorder %s226, %s227
      %p236 = scmp.eq.s32.totalorder %s27, 0
      %p237 = por %p235, %p236
      %p238 = scmp.ne.s32.totalorder %s226, %s227
      %p239 = scmp.eq.s32.totalorder %s28, 1
      %p240 = por %p238, %p239
      %p242 = scmp.ne.s32.totalorder %s227, %s241
      %p243 = scmp.eq.s32.totalorder %s28, 0
      %p244 = por %p242, %p243
      %s246 = sadd.s32 %s245, 1
      %p249 = scmp.eq.s32.totalorder %s22, 1
      %p250 = scmp.ne.s32.totalorder %s245, %s247
      %p251 = scmp.eq.s32.totalorder %s22, 0
      %p252 = por %p250, %p251
      %p253 = scmp.ne.s32.totalorder %s245, %s247
      %p254 = scmp.eq.s32.totalorder %s27, 1
      %p255 = por %p253, %p254
      %p256 = scmp.ne.s32.totalorder %s247, %s248
      %p257 = scmp.eq.s32.totalorder %s27, 0
      %p258 = por %p256, %p257
      %p259 = scmp.ne.s32.totalorder %s247, %s248
      %p260 = scmp.eq.s32.totalorder %s28, 1
      %p261 = por %p259, %p260
      %p263 = scmp.ne.s32.totalorder %s248, %s262
      %p264 = scmp.eq.s32.totalorder %s28, 0
      %p265 = por %p263, %p264
      %s266 = ssub.s32 %s22, %s29
      %p267 = scmp.eq.s32.totalorder %s266, 0
      %s269 = sadd.s32 %s268, 1
      %s270 = scalar_select %p267, %s268, %s269
      %p273 = pneg %p267
      %p274 = scmp.eq.s32.totalorder %s22, 1
      %p275 = por %p273, %p274
      %p276 = scmp.ne.s32.totalorder %s268, %s271
      %p277 = scmp.eq.s32.totalorder %s22, 0
      %p278 = por %p276, %p277
      %p279 = scmp.ne.s32.totalorder %s268, %s271
      %p280 = scmp.eq.s32.totalorder %s27, 1
      %p281 = por %p279, %p280
      %p282 = scmp.ne.s32.totalorder %s271, %s272
      %p283 = scmp.eq.s32.totalorder %s27, 0
      %p284 = por %p282, %p283
      %p285 = scmp.ne.s32.totalorder %s271, %s272
      %p286 = scmp.eq.s32.totalorder %s28, 1
      %p287 = por %p285, %p286
      %p289 = scmp.ne.s32.totalorder %s272, %s288
      %p290 = scmp.eq.s32.totalorder %s28, 0
      %p291 = por %p289, %p290
      %p292 = scmp.le.s32.totalorder 1, %s22
      %p293 = scmp.lt.s32.totalorder %s22, 3
      %p294 = pnand %p292, %p293
      %p295 = pneg %p294
      // Predicated region
      $region9: #{esa_forward.1} parent=5 // pred_check
        _
      $region10: #{esa_forward.1} parent=5 // pred_check_branch
        %297 = sbr.rel (%p294) target = $region12
      $region11: #{esa_forward.1} parent=5 // pred_region
        %s298 = ssub.s32 %s22, 1
        // Predicated region
        $region13: #{esa_forward.1} parent=11 // pred_check
          %p299 = pneg %p69
        $region14: #{esa_forward.1} parent=11 // pred_check_branch
          %301 = sbr.rel (%p299) target = $region16
        $region15: #{esa_forward.1} parent=11 // pred_region
          _
        $region16: #{esa_forward.1} parent=11 // pred_fallthru
          _
        // Predicated region
        $region17: #{esa_forward.1} parent=11 // pred_check
          %p302 = pneg %p90
        $region18: #{esa_forward.1} parent=11 // pred_check_branch
          %304 = sbr.rel (%p302) target = $region20
        $region19: #{esa_forward.1} parent=11 // pred_region
          _
        $region20: #{esa_forward.1} parent=11 // pred_fallthru
          _
        // Predicated region
        $region21: #{esa_forward.1} parent=11 // pred_check
          %p305 = pneg %p111
        $region22: #{esa_forward.1} parent=11 // pred_check_branch
          %307 = sbr.rel (%p305) target = $region24
        $region23: #{esa_forward.1} parent=11 // pred_region
          _
        $region24: #{esa_forward.1} parent=11 // pred_fallthru
          _
        // Predicated region
        $region25: #{esa_forward.1} parent=11 // pred_check
          %p308 = pneg %p132
        $region26: #{esa_forward.1} parent=11 // pred_check_branch
          %310 = sbr.rel (%p308) target = $region28
        $region27: #{esa_forward.1} parent=11 // pred_region
          _
        $region28: #{esa_forward.1} parent=11 // pred_fallthru
          _
        // Predicated region
        $region29: #{esa_forward.1} parent=11 // pred_check
          %p311 = pneg %p153
        $region30: #{esa_forward.1} parent=11 // pred_check_branch
          %313 = sbr.rel (%p311) target = $region32
        $region31: #{esa_forward.1} parent=11 // pred_region
          _
        $region32: #{esa_forward.1} parent=11 // pred_fallthru
          _
        // Predicated region
        $region33: #{esa_forward.1} parent=11 // pred_check
          %p314 = pneg %p174
        $region34: #{esa_forward.1} parent=11 // pred_check_branch
          %316 = sbr.rel (%p314) target = $region36
        $region35: #{esa_forward.1} parent=11 // pred_region
          _
        $region36: #{esa_forward.1} parent=11 // pred_fallthru
          _
        // Predicated region
        $region37: #{esa_forward.1} parent=11 // pred_check
          %p317 = pneg %p195
        $region38: #{esa_forward.1} parent=11 // pred_check_branch
          %319 = sbr.rel (%p317) target = $region40
        $region39: #{esa_forward.1} parent=11 // pred_region
          _
        $region40: #{esa_forward.1} parent=11 // pred_fallthru
          _
        // Predicated region
        $region41: #{esa_forward.1} parent=11 // pred_check
          %p320 = pneg %p216
        $region42: #{esa_forward.1} parent=11 // pred_check_branch
          %322 = sbr.rel (%p320) target = $region44
        $region43: #{esa_forward.1} parent=11 // pred_region
          _
        $region44: #{esa_forward.1} parent=11 // pred_fallthru
          _
        // Predicated region
        $region45: #{esa_forward.1} parent=11 // pred_check
          %p323 = pneg %p237
        $region46: #{esa_forward.1} parent=11 // pred_check_branch
          %325 = sbr.rel (%p323) target = $region48
        $region47: #{esa_forward.1} parent=11 // pred_region
          %s327 = ssub.s32 256, 256
          %328 = vsyncadd [#allocation4], %s327
          %s329 = sshll.u32 %s9, 4
          %s330 = int_to_ptr.vmem [resolvable:$true] %s329
          %335 = dma.vmem_to_smem %s330, 256, [#allocation2], [#allocation4], 128, 128, 8
        $region48: #{esa_forward.1} parent=11 // pred_fallthru
          _
        // Predicated region
        $region49: #{esa_forward.1} parent=11 // pred_check
          %p336 = pneg %p258
        $region50: #{esa_forward.1} parent=11 // pred_check_branch
          %338 = sbr.rel (%p336) target = $region52
        $region51: #{esa_forward.1} parent=11 // pred_region
          %s340 = ssub.s32 16, 16
          %341 = vsyncadd [#allocation6], %s340
          %s343 = sshll.u32 %s10, 4
          %s344 = int_to_ptr.vmem [resolvable:$true] %s343
          %346 = dma.vmem_to_smem %s344, 16, [#allocation5], [#allocation6]
        $region52: #{esa_forward.1} parent=11 // pred_fallthru
          _
      $region12: #{esa_forward.1} parent=5 // pred_fallthru
        _
      %p347 = scmp.lt.s32.totalorder %s22, 2
      // Predicated region
      $region53: #{esa_forward.1} parent=5 // pred_check
        %p348 = pneg %p347
      $region54: #{esa_forward.1} parent=5 // pred_check_branch
        %350 = sbr.rel (%p348) target = $region56
      $region55: #{esa_forward.1} parent=5 // pred_region
        // Predicated region
        $region57: #{esa_forward.1} parent=55 // pred_check
          %p351 = pneg %p42
        $region58: #{esa_forward.1} parent=55 // pred_check_branch
          %353 = sbr.rel (%p351) target = $region60
        $region59: #{esa_forward.1} parent=55 // pred_region
          %p354 = scmp.lt.s32.totalorder %s22, 1
          %s355 = scalar_select %p354, %s22, 1
          %s356 = smul.addr %s355, 64
          %s357 = smul.addr %s356, 8
          %s358 = scalar_lea.vmem %s0, %s357
        $region60: #{esa_forward.1} parent=55 // pred_fallthru
          _
      $region56: #{esa_forward.1} parent=5 // pred_fallthru
        _
      %p359 = scmp.le.s32.totalorder 1, %s22
      %p360 = scmp.lt.s32.totalorder %s22, 3
      %p361 = pnand %p359, %p360
      %p362 = pneg %p361
      // Predicated region
      $region61: #{esa_forward.1} parent=5 // pred_check
        _
      $region62: #{esa_forward.1} parent=5 // pred_check_branch
        %364 = sbr.rel (%p361) target = $region64
      $region63: #{esa_forward.1} parent=5 // pred_region
        %s365 = ssub.s32 %s22, 1
        // Predicated region
        $region65: #{esa_forward.1} parent=63 // pred_check
          %p366 = pneg %p237
        $region66: #{esa_forward.1} parent=63 // pred_check_branch
          %368 = sbr.rel (%p366) target = $region68
        $region67: #{esa_forward.1} parent=63 // pred_region
          %369 = dma.done [#allocation4], 256
        $region68: #{esa_forward.1} parent=63 // pred_fallthru
          _
        // Predicated region
        $region69: #{esa_forward.1} parent=63 // pred_check
          %p370 = pneg %p258
        $region70: #{esa_forward.1} parent=63 // pred_check_branch
          %372 = sbr.rel (%p370) target = $region72
        $region71: #{esa_forward.1} parent=63 // pred_region
          %373 = dma.done [#allocation6], 16
        $region72: #{esa_forward.1} parent=63 // pred_fallthru
          _
        %374 = sfence
        %p375 = scmp.lt.s32.totalorder %s27, 1
        %s376 = scalar_select %p375, %s27, 1
        %s377 = smul.addr %s376, 64
        %s378 = smul.addr %s377, 8
        %s379 = scalar_lea.vmem %s0, %s378
        %p380 = pneg %p48
        %p381 = pneg %p45
        %p382 = pneg %p69
        %p383 = pneg %p66
        %p384 = pneg %p90
        %p385 = pneg %p87
        %p386 = pneg %p111
        %p387 = pneg %p108
        %p388 = pneg %p132
        %p389 = pneg %p129
        %p390 = pneg %p153
        %p391 = pneg %p150
        %p392 = pneg %p174
        %p393 = pneg %p171
        %p394 = pneg %p195
        %p395 = pneg %p192
        %p396 = pneg %p216
        %p397 = pneg %p213
        %p398 = pneg %p237
        %p399 = pneg %p234
        %p400 = pneg %p258
        %p401 = pneg %p255
        %p402 = pneg %p284
        %p403 = pneg %p281
        %s404 = sand.u32 %s271, 1
        %s405 = scalar_lea.sflag [#allocation3], %s404
        %s406 = sand.u32 %s271, 1
        %s407 = smul.addr %s406, 512
        %s408 = scalar_lea.vmem [#allocation7], %s407
        %p409 = scmp.lt.s32.totalorder %s27, 1
        %s410 = scalar_select %p409, %s27, 1
        %s411 = smul.addr %s410, 64
        %s412 = smul.addr %s411, 8
        %s413 = scalar_lea.vmem %s0, %s412
        %v414 = vld [vmem:[%s413] sm:$0xff]
        %v415 = vld [vmem:[%s413 + $0x8] sm:$0xff]
        %v416 = vld [vmem:[%s413 + $0x10] sm:$0xff]
        %v417 = vld [vmem:[%s413 + $0x18] sm:$0xff]
        %v418 = vld [vmem:[%s413 + $0x20] sm:$0xff]
        %v419 = vld [vmem:[%s413 + $0x28] sm:$0xff]
        %v420 = vld [vmem:[%s413 + $0x30] sm:$0xff]
        %v421 = vld [vmem:[%s413 + $0x38] sm:$0xff]
        %v422 = vld [vmem:[%s413 + $0x40] sm:$0xff]
        %v423 = vld [vmem:[%s413 + $0x48] sm:$0xff]
        %v424 = vld [vmem:[%s413 + $0x50] sm:$0xff]
        %v425 = vld [vmem:[%s413 + $0x58] sm:$0xff]
        %v426 = vld [vmem:[%s413 + $0x60] sm:$0xff]
        %v427 = vld [vmem:[%s413 + $0x68] sm:$0xff]
        %v428 = vld [vmem:[%s413 + $0x70] sm:$0xff]
        %v429 = vld [vmem:[%s413 + $0x78] sm:$0xff]
        %v430 = vld [vmem:[%s413 + $0x80] sm:$0xff]
        %v431 = vld [vmem:[%s413 + $0x88] sm:$0xff]
        %v432 = vld [vmem:[%s413 + $0x90] sm:$0xff]
        %v433 = vld [vmem:[%s413 + $0x98] sm:$0xff]
        %v434 = vld [vmem:[%s413 + $0xa0] sm:$0xff]
        %v435 = vld [vmem:[%s413 + $0xa8] sm:$0xff]
        %v436 = vld [vmem:[%s413 + $0xb0] sm:$0xff]
        %v437 = vld [vmem:[%s413 + $0xb8] sm:$0xff]
        %v438 = vld [vmem:[%s413 + $0xc0] sm:$0xff]
        %v439 = vld [vmem:[%s413 + $0xc8] sm:$0xff]
        %v440 = vld [vmem:[%s413 + $0xd0] sm:$0xff]
        %v441 = vld [vmem:[%s413 + $0xd8] sm:$0xff]
        %v442 = vld [vmem:[%s413 + $0xe0] sm:$0xff]
        %v443 = vld [vmem:[%s413 + $0xe8] sm:$0xff]
        %v444 = vld [vmem:[%s413 + $0xf0] sm:$0xff]
        %v445 = vld [vmem:[%s413 + $0xf8] sm:$0xff]
        %v446 = vld [vmem:[%s413 + $0x100] sm:$0xff]
        %v447 = vld [vmem:[%s413 + $0x108] sm:$0xff]
        %v448 = vld [vmem:[%s413 + $0x110] sm:$0xff]
        %v449 = vld [vmem:[%s413 + $0x118] sm:$0xff]
        %v450 = vld [vmem:[%s413 + $0x120] sm:$0xff]
        %v451 = vld [vmem:[%s413 + $0x128] sm:$0xff]
        %v452 = vld [vmem:[%s413 + $0x130] sm:$0xff]
        %v453 = vld [vmem:[%s413 + $0x138] sm:$0xff]
        %v454 = vld [vmem:[%s413 + $0x140] sm:$0xff]
        %v455 = vld [vmem:[%s413 + $0x148] sm:$0xff]
        %v456 = vld [vmem:[%s413 + $0x150] sm:$0xff]
        %v457 = vld [vmem:[%s413 + $0x158] sm:$0xff]
        %v458 = vld [vmem:[%s413 + $0x160] sm:$0xff]
        %v459 = vld [vmem:[%s413 + $0x168] sm:$0xff]
        %v460 = vld [vmem:[%s413 + $0x170] sm:$0xff]
        %v461 = vld [vmem:[%s413 + $0x178] sm:$0xff]
        %v462 = vld [vmem:[%s413 + $0x180] sm:$0xff]
        %v463 = vld [vmem:[%s413 + $0x188] sm:$0xff]
        %v464 = vld [vmem:[%s413 + $0x190] sm:$0xff]
        %v465 = vld [vmem:[%s413 + $0x198] sm:$0xff]
        %v466 = vld [vmem:[%s413 + $0x1a0] sm:$0xff]
        %v467 = vld [vmem:[%s413 + $0x1a8] sm:$0xff]
        %v468 = vld [vmem:[%s413 + $0x1b0] sm:$0xff]
        %v469 = vld [vmem:[%s413 + $0x1b8] sm:$0xff]
        %v470 = vld [vmem:[%s413 + $0x1c0] sm:$0xff]
        %v471 = vld [vmem:[%s413 + $0x1c8] sm:$0xff]
        %v472 = vld [vmem:[%s413 + $0x1d0] sm:$0xff]
        %v473 = vld [vmem:[%s413 + $0x1d8] sm:$0xff]
        %v474 = vld [vmem:[%s413 + $0x1e0] sm:$0xff]
        %v475 = vld [vmem:[%s413 + $0x1e8] sm:$0xff]
        %v476 = vld [vmem:[%s413 + $0x1f0] sm:$0xff]
        %v477 = vld [vmem:[%s413 + $0x1f8] sm:$0xff]
        %v478 = vld [vmem:[%s1] sm:$0xff]
        %v479 = vld [vmem:[%s1 + $0x8] sm:$0xff]
        %v480 = vld [vmem:[%s1 + $0x10] sm:$0xff]
        %v481 = vld [vmem:[%s1 + $0x18] sm:$0xff]
        %vm482 = vcmask 261120
        %v484 = vsel %vm482, %v414, 0
        %v487 = vsel %vm482, %v415, 0
        %v490 = vsel %vm482, %v416, 0
        %v493 = vsel %vm482, %v417, 0
        %v496 = vsel %vm482, %v418, 0
        %v499 = vsel %vm482, %v419, 0
        %v502 = vsel %vm482, %v420, 0
        %v505 = vsel %vm482, %v421, 0
        %v508 = vsel %vm482, %v422, 0
        %v511 = vsel %vm482, %v423, 0
        %v514 = vsel %vm482, %v424, 0
        %v517 = vsel %vm482, %v425, 0
        %v520 = vsel %vm482, %v426, 0
        %v523 = vsel %vm482, %v427, 0
        %v526 = vsel %vm482, %v428, 0
        %v529 = vsel %vm482, %v429, 0
        %v532 = vsel %vm482, %v430, 0
        %v535 = vsel %vm482, %v431, 0
        %v538 = vsel %vm482, %v432, 0
        %v541 = vsel %vm482, %v433, 0
        %v544 = vsel %vm482, %v434, 0
        %v547 = vsel %vm482, %v435, 0
        %v550 = vsel %vm482, %v436, 0
        %v553 = vsel %vm482, %v437, 0
        %v556 = vsel %vm482, %v438, 0
        %v559 = vsel %vm482, %v439, 0
        %v562 = vsel %vm482, %v440, 0
        %v565 = vsel %vm482, %v441, 0
        %v568 = vsel %vm482, %v442, 0
        %v571 = vsel %vm482, %v443, 0
        %v574 = vsel %vm482, %v444, 0
        %v577 = vsel %vm482, %v445, 0
        %v580 = vsel %vm482, %v446, 0
        %v583 = vsel %vm482, %v447, 0
        %v586 = vsel %vm482, %v448, 0
        %v589 = vsel %vm482, %v449, 0
        %v592 = vsel %vm482, %v450, 0
        %v595 = vsel %vm482, %v451, 0
        %v598 = vsel %vm482, %v452, 0
        %v601 = vsel %vm482, %v453, 0
        %v604 = vsel %vm482, %v454, 0
        %v607 = vsel %vm482, %v455, 0
        %v610 = vsel %vm482, %v456, 0
        %v613 = vsel %vm482, %v457, 0
        %v616 = vsel %vm482, %v458, 0
        %v619 = vsel %vm482, %v459, 0
        %v622 = vsel %vm482, %v460, 0
        %v625 = vsel %vm482, %v461, 0
        %v628 = vsel %vm482, %v462, 0
        %v631 = vsel %vm482, %v463, 0
        %v634 = vsel %vm482, %v464, 0
        %v637 = vsel %vm482, %v465, 0
        %v640 = vsel %vm482, %v466, 0
        %v643 = vsel %vm482, %v467, 0
        %v646 = vsel %vm482, %v468, 0
        %v649 = vsel %vm482, %v469, 0
        %v652 = vsel %vm482, %v470, 0
        %v655 = vsel %vm482, %v471, 0
        %v658 = vsel %vm482, %v472, 0
        %v661 = vsel %vm482, %v473, 0
        %v664 = vsel %vm482, %v474, 0
        %v667 = vsel %vm482, %v475, 0
        %v670 = vsel %vm482, %v476, 0
        %v673 = vsel %vm482, %v477, 0
        %675 = vmatprep.subr.mxu0 0.0
        %676 = vmatpush1.msra.mxu0 %v478
        %677 = vmatprep.subr.mxu0 0.0
        %678 = vmatpush1.msra.mxu0 %v479
        %679 = vmatprep.subr.mxu0 0.0
        %680 = vmatpush1.msra.mxu0 %v480
        %681 = vmatprep.subr.mxu0 0.0
        %682 = vmatpush1.msra.mxu0 %v481
        %683 = vmatprep.subr.mxu0 0.0
        %684 = vmatpush1.msra.mxu0 0.0
        %685 = vmatprep.subr.mxu0 0.0
        %686 = vmatpush1.msra.mxu0 0.0
        %687 = vmatprep.subr.mxu0 0.0
        %688 = vmatpush1.msra.mxu0 0.0
        %689 = vmatprep.subr.mxu0 0.0
        %690 = vmatpush1.msra.mxu0 0.0
        %691 = vmatprep.subr.mxu0 0.0
        %692 = vmatpush1.msra.mxu0 0.0
        %693 = vmatprep.subr.mxu0 0.0
        %694 = vmatpush1.msra.mxu0 0.0
        %695 = vmatprep.subr.mxu0 0.0
        %696 = vmatpush1.msra.mxu0 0.0
        %697 = vmatprep.subr.mxu0 0.0
        %698 = vmatpush1.msra.mxu0 0.0
        %699 = vmatprep.subr.mxu0 0.0
        %700 = vmatpush1.msra.mxu0 0.0
        %701 = vmatprep.subr.mxu0 0.0
        %702 = vmatpush1.msra.mxu0 0.0
        %703 = vmatprep.subr.mxu0 0.0
        %704 = vmatpush1.msra.mxu0 0.0
        %705 = vmatprep.subr.mxu0 0.0
        %706 = vmatpush1.msra.mxu0 0.0
        %707 = vmatprep.subr.mxu0 0.0
        %708 = vmatpush1.msra.mxu0 0.0
        %709 = vmatprep.subr.mxu0 0.0
        %710 = vmatpush1.msra.mxu0 0.0
        %711 = vmatprep.subr.mxu0 0.0
        %712 = vmatpush1.msra.mxu0 0.0
        %713 = vmatprep.subr.mxu0 0.0
        %714 = vmatpush1.msra.mxu0 0.0
        %715 = vmatprep.subr.mxu0 0.0
        %716 = vmatpush1.msra.mxu0 0.0
        %717 = vmatprep.subr.mxu0 0.0
        %718 = vmatpush1.msra.mxu0 0.0
        %719 = vmatprep.subr.mxu0 0.0
        %720 = vmatpush1.msra.mxu0 0.0
        %721 = vmatprep.subr.mxu0 0.0
        %722 = vmatpush1.msra.mxu0 0.0
        %723 = vmatprep.subr.mxu0 0.0
        %724 = vmatpush1.msra.mxu0 0.0
        %725 = vmatprep.subr.mxu0 0.0
        %726 = vmatpush1.msra.mxu0 0.0
        %727 = vmatprep.subr.mxu0 0.0
        %728 = vmatpush1.msra.mxu0 0.0
        %729 = vmatprep.subr.mxu0 0.0
        %730 = vmatpush1.msra.mxu0 0.0
        %731 = vmatprep.subr.mxu0 0.0
        %732 = vmatpush1.msra.mxu0 0.0
        %733 = vmatprep.subr.mxu0 0.0
        %734 = vmatpush1.msra.mxu0 0.0
        %735 = vmatprep.subr.mxu0 0.0
        %736 = vmatpush1.msra.mxu0 0.0
        %737 = vmatprep.subr.mxu0 0.0
        %738 = vmatpush1.msra.mxu0 0.0
        %739 = vmatprep.mubr.f32.mxu0 0.0
        %740 = vmatmul.mubr.f32.gmra.mrb[0].mxu0 %v484
        %v741 = vpop.f32.mrb[0].mxu0
        %v742 = vadd.f32 0.0, %v741
        %v743 = vpop.f32.mrb[0].mxu0
        %744 = vmatprep.mubr.f32.mxu0 0.0
        %745 = vmatmul.mubr.f32.gmra.mrb[0].mxu0 %v487
        %v746 = vpop.f32.mrb[0].mxu0
        %v747 = vadd.f32 0.0, %v746
        %v748 = vpop.f32.mrb[0].mxu0
        %749 = vmatprep.mubr.f32.mxu0 0.0
        %750 = vmatmul.mubr.f32.gmra.mrb[0].mxu0 %v490
        %v751 = vpop.f32.mrb[0].mxu0
        %v752 = vadd.f32 0.0, %v751
        %v753 = vpop.f32.mrb[0].mxu0
        %754 = vmatprep.mubr.f32.mxu0 0.0
        %755 = vmatmul.mubr.f32.gmra.mrb[0].mxu0 %v493
        %v756 = vpop.f32.mrb[0].mxu0
        %v757 = vadd.f32 0.0, %v756
        %v758 = vpop.f32.mrb[0].mxu0
        %759 = vmatprep.mubr.f32.mxu0 0.0
        %760 = vmatmul.mubr.f32.gmra.mrb[0].mxu0 %v496
        %v761 = vpop.f32.mrb[0].mxu0
        %v762 = vadd.f32 0.0, %v761
        %v763 = vpop.f32.mrb[0].mxu0
        %764 = vmatprep.mubr.f32.mxu0 0.0
        %765 = vmatmul.mubr.f32.gmra.mrb[0].mxu0 %v499
        %v766 = vpop.f32.mrb[0].mxu0
        %v767 = vadd.f32 0.0, %v766
        %v768 = vpop.f32.mrb[0].mxu0
        %769 = vmatprep.mubr.f32.mxu0 0.0
        %770 = vmatmul.mubr.f32.gmra.mrb[0].mxu0 %v502
        %v771 = vpop.f32.mrb[0].mxu0
        %v772 = vadd.f32 0.0, %v771
        %v773 = vpop.f32.mrb[0].mxu0
        %774 = vmatprep.mubr.f32.mxu0 0.0
        %775 = vmatmul.mubr.f32.gmra.mrb[0].mxu0 %v505
        %v776 = vpop.f32.mrb[0].mxu0
        %v777 = vadd.f32 0.0, %v776
        %v778 = vpop.f32.mrb[0].mxu0
        %779 = vmatprep.mubr.f32.mxu0 0.0
        %780 = vmatmul.mubr.f32.gmra.mrb[0].mxu0 %v508
        %v781 = vpop.f32.mrb[0].mxu0
        %v782 = vadd.f32 0.0, %v781
        %v783 = vpop.f32.mrb[0].mxu0
        %784 = vmatprep.mubr.f32.mxu0 0.0
        %785 = vmatmul.mubr.f32.gmra.mrb[0].mxu0 %v511
        %v786 = vpop.f32.mrb[0].mxu0
        %v787 = vadd.f32 0.0, %v786
        %v788 = vpop.f32.mrb[0].mxu0
        %789 = vmatprep.mubr.f32.mxu0 0.0
        %790 = vmatmul.mubr.f32.gmra.mrb[0].mxu0 %v514
        %v791 = vpop.f32.mrb[0].mxu0
        %v792 = vadd.f32 0.0, %v791
        %v793 = vpop.f32.mrb[0].mxu0
        %794 = vmatprep.mubr.f32.mxu0 0.0
        %795 = vmatmul.mubr.f32.gmra.mrb[0].mxu0 %v517
        %v796 = vpop.f32.mrb[0].mxu0
        %v797 = vadd.f32 0.0, %v796
        %v798 = vpop.f32.mrb[0].mxu0
        %799 = vmatprep.mubr.f32.mxu0 0.0
        %800 = vmatmul.mubr.f32.gmra.mrb[0].mxu0 %v520
        %v801 = vpop.f32.mrb[0].mxu0
        %v802 = vadd.f32 0.0, %v801
        %v803 = vpop.f32.mrb[0].mxu0
        %804 = vmatprep.mubr.f32.mxu0 0.0
        %805 = vmatmul.mubr.f32.gmra.mrb[0].mxu0 %v523
        %v806 = vpop.f32.mrb[0].mxu0
        %v807 = vadd.f32 0.0, %v806
        %v808 = vpop.f32.mrb[0].mxu0
        %809 = vmatprep.mubr.f32.mxu0 0.0
        %810 = vmatmul.mubr.f32.gmra.mrb[0].mxu0 %v526
        %v811 = vpop.f32.mrb[0].mxu0
        %v812 = vadd.f32 0.0, %v811
        %v813 = vpop.f32.mrb[0].mxu0
        %814 = vmatprep.mubr.f32.mxu0 0.0
        %815 = vmatmul.mubr.f32.gmra.mrb[0].mxu0 %v529
        %v816 = vpop.f32.mrb[0].mxu0
        %v817 = vadd.f32 0.0, %v816
        %v818 = vpop.f32.mrb[0].mxu0
        %819 = vmatprep.mubr.f32.mxu0 0.0
        %820 = vmatmul.mubr.f32.gmra.mrb[0].mxu0 %v532
        %v821 = vpop.f32.mrb[0].mxu0
        %v822 = vadd.f32 0.0, %v821
        %v823 = vpop.f32.mrb[0].mxu0
        %824 = vmatprep.mubr.f32.mxu0 0.0
        %825 = vmatmul.mubr.f32.gmra.mrb[0].mxu0 %v535
        %v826 = vpop.f32.mrb[0].mxu0
        %v827 = vadd.f32 0.0, %v826
        %v828 = vpop.f32.mrb[0].mxu0
        %829 = vmatprep.mubr.f32.mxu0 0.0
        %830 = vmatmul.mubr.f32.gmra.mrb[0].mxu0 %v538
        %v831 = vpop.f32.mrb[0].mxu0
        %v832 = vadd.f32 0.0, %v831
        %v833 = vpop.f32.mrb[0].mxu0
        %834 = vmatprep.mubr.f32.mxu0 0.0
        %835 = vmatmul.mubr.f32.gmra.mrb[0].mxu0 %v541
        %v836 = vpop.f32.mrb[0].mxu0
        %v837 = vadd.f32 0.0, %v836
        %v838 = vpop.f32.mrb[0].mxu0
        %839 = vmatprep.mubr.f32.mxu0 0.0
        %840 = vmatmul.mubr.f32.gmra.mrb[0].mxu0 %v544
        %v841 = vpop.f32.mrb[0].mxu0
        %v842 = vadd.f32 0.0, %v841
        %v843 = vpop.f32.mrb[0].mxu0
        %844 = vmatprep.mubr.f32.mxu0 0.0
        %845 = vmatmul.mubr.f32.gmra.mrb[0].mxu0 %v547
        %v846 = vpop.f32.mrb[0].mxu0
        %v847 = vadd.f32 0.0, %v846
        %v848 = vpop.f32.mrb[0].mxu0
        %849 = vmatprep.mubr.f32.mxu0 0.0
        %850 = vmatmul.mubr.f32.gmra.mrb[0].mxu0 %v550
        %v851 = vpop.f32.mrb[0].mxu0
        %v852 = vadd.f32 0.0, %v851
        %v853 = vpop.f32.mrb[0].mxu0
        %854 = vmatprep.mubr.f32.mxu0 0.0
        %855 = vmatmul.mubr.f32.gmra.mrb[0].mxu0 %v553
        %v856 = vpop.f32.mrb[0].mxu0
        %v857 = vadd.f32 0.0, %v856
        %v858 = vpop.f32.mrb[0].mxu0
        %859 = vmatprep.mubr.f32.mxu0 0.0
        %860 = vmatmul.mubr.f32.gmra.mrb[0].mxu0 %v556
        %v861 = vpop.f32.mrb[0].mxu0
        %v862 = vadd.f32 0.0, %v861
        %v863 = vpop.f32.mrb[0].mxu0
        %864 = vmatprep.mubr.f32.mxu0 0.0
        %865 = vmatmul.mubr.f32.gmra.mrb[0].mxu0 %v559
        %v866 = vpop.f32.mrb[0].mxu0
        %v867 = vadd.f32 0.0, %v866
        %v868 = vpop.f32.mrb[0].mxu0
        %869 = vmatprep.mubr.f32.mxu0 0.0
        %870 = vmatmul.mubr.f32.gmra.mrb[0].mxu0 %v562
        %v871 = vpop.f32.mrb[0].mxu0
        %v872 = vadd.f32 0.0, %v871
        %v873 = vpop.f32.mrb[0].mxu0
        %874 = vmatprep.mubr.f32.mxu0 0.0
        %875 = vmatmul.mubr.f32.gmra.mrb[0].mxu0 %v565
        %v876 = vpop.f32.mrb[0].mxu0
        %v877 = vadd.f32 0.0, %v876
        %v878 = vpop.f32.mrb[0].mxu0
        %879 = vmatprep.mubr.f32.mxu0 0.0
        %880 = vmatmul.mubr.f32.gmra.mrb[0].mxu0 %v568
        %v881 = vpop.f32.mrb[0].mxu0
        %v882 = vadd.f32 0.0, %v881
        %v883 = vpop.f32.mrb[0].mxu0
        %884 = vmatprep.mubr.f32.mxu0 0.0
        %885 = vmatmul.mubr.f32.gmra.mrb[0].mxu0 %v571
        %v886 = vpop.f32.mrb[0].mxu0
        %v887 = vadd.f32 0.0, %v886
        %v888 = vpop.f32.mrb[0].mxu0
        %889 = vmatprep.mubr.f32.mxu0 0.0
        %890 = vmatmul.mubr.f32.gmra.mrb[0].mxu0 %v574
        %v891 = vpop.f32.mrb[0].mxu0
        %v892 = vadd.f32 0.0, %v891
        %v893 = vpop.f32.mrb[0].mxu0
        %894 = vmatprep.mubr.f32.mxu0 0.0
        %895 = vmatmul.mubr.f32.gmra.mrb[0].mxu0 %v577
        %v896 = vpop.f32.mrb[0].mxu0
        %v897 = vadd.f32 0.0, %v896
        %v898 = vpop.f32.mrb[0].mxu0
        %899 = vmatprep.mubr.f32.mxu0 0.0
        %900 = vmatmul.mubr.f32.gmra.mrb[0].mxu0 %v580
        %v901 = vpop.f32.mrb[0].mxu0
        %v902 = vadd.f32 0.0, %v901
        %v903 = vpop.f32.mrb[0].mxu0
        %904 = vmatprep.mubr.f32.mxu0 0.0
        %905 = vmatmul.mubr.f32.gmra.mrb[0].mxu0 %v583
        %v906 = vpop.f32.mrb[0].mxu0
        %v907 = vadd.f32 0.0, %v906
        %v908 = vpop.f32.mrb[0].mxu0
        %909 = vmatprep.mubr.f32.mxu0 0.0
        %910 = vmatmul.mubr.f32.gmra.mrb[0].mxu0 %v586
        %v911 = vpop.f32.mrb[0].mxu0
        %v912 = vadd.f32 0.0, %v911
        %v913 = vpop.f32.mrb[0].mxu0
        %914 = vmatprep.mubr.f32.mxu0 0.0
        %915 = vmatmul.mubr.f32.gmra.mrb[0].mxu0 %v589
        %v916 = vpop.f32.mrb[0].mxu0
        %v917 = vadd.f32 0.0, %v916
        %v918 = vpop.f32.mrb[0].mxu0
        %919 = vmatprep.mubr.f32.mxu0 0.0
        %920 = vmatmul.mubr.f32.gmra.mrb[0].mxu0 %v592
        %v921 = vpop.f32.mrb[0].mxu0
        %v922 = vadd.f32 0.0, %v921
        %v923 = vpop.f32.mrb[0].mxu0
        %924 = vmatprep.mubr.f32.mxu0 0.0
        %925 = vmatmul.mubr.f32.gmra.mrb[0].mxu0 %v595
        %v926 = vpop.f32.mrb[0].mxu0
        %v927 = vadd.f32 0.0, %v926
        %v928 = vpop.f32.mrb[0].mxu0
        %929 = vmatprep.mubr.f32.mxu0 0.0
        %930 = vmatmul.mubr.f32.gmra.mrb[0].mxu0 %v598
        %v931 = vpop.f32.mrb[0].mxu0
        %v932 = vadd.f32 0.0, %v931
        %v933 = vpop.f32.mrb[0].mxu0
        %934 = vmatprep.mubr.f32.mxu0 0.0
        %935 = vmatmul.mubr.f32.gmra.mrb[0].mxu0 %v601
        %v936 = vpop.f32.mrb[0].mxu0
        %v937 = vadd.f32 0.0, %v936
        %v938 = vpop.f32.mrb[0].mxu0
        %939 = vmatprep.mubr.f32.mxu0 0.0
        %940 = vmatmul.mubr.f32.gmra.mrb[0].mxu0 %v604
        %v941 = vpop.f32.mrb[0].mxu0
        %v942 = vadd.f32 0.0, %v941
        %v943 = vpop.f32.mrb[0].mxu0
        %944 = vmatprep.mubr.f32.mxu0 0.0
        %945 = vmatmul.mubr.f32.gmra.mrb[0].mxu0 %v607
        %v946 = vpop.f32.mrb[0].mxu0
        %v947 = vadd.f32 0.0, %v946
        %v948 = vpop.f32.mrb[0].mxu0
        %949 = vmatprep.mubr.f32.mxu0 0.0
        %950 = vmatmul.mubr.f32.gmra.mrb[0].mxu0 %v610
        %v951 = vpop.f32.mrb[0].mxu0
        %v952 = vadd.f32 0.0, %v951
        %v953 = vpop.f32.mrb[0].mxu0
        %954 = vmatprep.mubr.f32.mxu0 0.0
        %955 = vmatmul.mubr.f32.gmra.mrb[0].mxu0 %v613
        %v956 = vpop.f32.mrb[0].mxu0
        %v957 = vadd.f32 0.0, %v956
        %v958 = vpop.f32.mrb[0].mxu0
        %959 = vmatprep.mubr.f32.mxu0 0.0
        %960 = vmatmul.mubr.f32.gmra.mrb[0].mxu0 %v616
        %v961 = vpop.f32.mrb[0].mxu0
        %v962 = vadd.f32 0.0, %v961
        %v963 = vpop.f32.mrb[0].mxu0
        %964 = vmatprep.mubr.f32.mxu0 0.0
        %965 = vmatmul.mubr.f32.gmra.mrb[0].mxu0 %v619
        %v966 = vpop.f32.mrb[0].mxu0
        %v967 = vadd.f32 0.0, %v966
        %v968 = vpop.f32.mrb[0].mxu0
        %969 = vmatprep.mubr.f32.mxu0 0.0
        %970 = vmatmul.mubr.f32.gmra.mrb[0].mxu0 %v622
        %v971 = vpop.f32.mrb[0].mxu0
        %v972 = vadd.f32 0.0, %v971
        %v973 = vpop.f32.mrb[0].mxu0
        %974 = vmatprep.mubr.f32.mxu0 0.0
        %975 = vmatmul.mubr.f32.gmra.mrb[0].mxu0 %v625
        %v976 = vpop.f32.mrb[0].mxu0
        %v977 = vadd.f32 0.0, %v976
        %v978 = vpop.f32.mrb[0].mxu0
        %979 = vmatprep.mubr.f32.mxu0 0.0
        %980 = vmatmul.mubr.f32.gmra.mrb[0].mxu0 %v628
        %v981 = vpop.f32.mrb[0].mxu0
        %v982 = vadd.f32 0.0, %v981
        %v983 = vpop.f32.mrb[0].mxu0
        %984 = vmatprep.mubr.f32.mxu0 0.0
        %985 = vmatmul.mubr.f32.gmra.mrb[0].mxu0 %v631
        %v986 = vpop.f32.mrb[0].mxu0
        %v987 = vadd.f32 0.0, %v986
        %v988 = vpop.f32.mrb[0].mxu0
        %989 = vmatprep.mubr.f32.mxu0 0.0
        %990 = vmatmul.mubr.f32.gmra.mrb[0].mxu0 %v634
        %v991 = vpop.f32.mrb[0].mxu0
        %v992 = vadd.f32 0.0, %v991
        %v993 = vpop.f32.mrb[0].mxu0
        %994 = vmatprep.mubr.f32.mxu0 0.0
        %995 = vmatmul.mubr.f32.gmra.mrb[0].mxu0 %v637
        %v996 = vpop.f32.mrb[0].mxu0
        %v997 = vadd.f32 0.0, %v996
        %v998 = vpop.f32.mrb[0].mxu0
        %999 = vmatprep.mubr.f32.mxu0 0.0
        %1000 = vmatmul.mubr.f32.gmra.mrb[0].mxu0 %v640
        %v1001 = vpop.f32.mrb[0].mxu0
        %v1002 = vadd.f32 0.0, %v1001
        %v1003 = vpop.f32.mrb[0].mxu0
        %1004 = vmatprep.mubr.f32.mxu0 0.0
        %1005 = vmatmul.mubr.f32.gmra.mrb[0].mxu0 %v643
        %v1006 = vpop.f32.mrb[0].mxu0
        %v1007 = vadd.f32 0.0, %v1006
        %v1008 = vpop.f32.mrb[0].mxu0
        %1009 = vmatprep.mubr.f32.mxu0 0.0
        %1010 = vmatmul.mubr.f32.gmra.mrb[0].mxu0 %v646
        %v1011 = vpop.f32.mrb[0].mxu0
        %v1012 = vadd.f32 0.0, %v1011
        %v1013 = vpop.f32.mrb[0].mxu0
        %1014 = vmatprep.mubr.f32.mxu0 0.0
        %1015 = vmatmul.mubr.f32.gmra.mrb[0].mxu0 %v649
        %v1016 = vpop.f32.mrb[0].mxu0
        %v1017 = vadd.f32 0.0, %v1016
        %v1018 = vpop.f32.mrb[0].mxu0
        %1019 = vmatprep.mubr.f32.mxu0 0.0
        %1020 = vmatmul.mubr.f32.gmra.mrb[0].mxu0 %v652
        %v1021 = vpop.f32.mrb[0].mxu0
        %v1022 = vadd.f32 0.0, %v1021
        %v1023 = vpop.f32.mrb[0].mxu0
        %1024 = vmatprep.mubr.f32.mxu0 0.0
        %1025 = vmatmul.mubr.f32.gmra.mrb[0].mxu0 %v655
        %v1026 = vpop.f32.mrb[0].mxu0
        %v1027 = vadd.f32 0.0, %v1026
        %v1028 = vpop.f32.mrb[0].mxu0
        %1029 = vmatprep.mubr.f32.mxu0 0.0
        %1030 = vmatmul.mubr.f32.gmra.mrb[0].mxu0 %v658
        %v1031 = vpop.f32.mrb[0].mxu0
        %v1032 = vadd.f32 0.0, %v1031
        %v1033 = vpop.f32.mrb[0].mxu0
        %1034 = vmatprep.mubr.f32.mxu0 0.0
        %1035 = vmatmul.mubr.f32.gmra.mrb[0].mxu0 %v661
        %v1036 = vpop.f32.mrb[0].mxu0
        %v1037 = vadd.f32 0.0, %v1036
        %v1038 = vpop.f32.mrb[0].mxu0
        %1039 = vmatprep.mubr.f32.mxu0 0.0
        %1040 = vmatmul.mubr.f32.gmra.mrb[0].mxu0 %v664
        %v1041 = vpop.f32.mrb[0].mxu0
        %v1042 = vadd.f32 0.0, %v1041
        %v1043 = vpop.f32.mrb[0].mxu0
        %1044 = vmatprep.mubr.f32.mxu0 0.0
        %1045 = vmatmul.mubr.f32.gmra.mrb[0].mxu0 %v667
        %v1046 = vpop.f32.mrb[0].mxu0
        %v1047 = vadd.f32 0.0, %v1046
        %v1048 = vpop.f32.mrb[0].mxu0
        %1049 = vmatprep.mubr.f32.mxu0 0.0
        %1050 = vmatmul.mubr.f32.gmra.mrb[0].mxu0 %v670
        %v1051 = vpop.f32.mrb[0].mxu0
        %v1052 = vadd.f32 0.0, %v1051
        %v1053 = vpop.f32.mrb[0].mxu0
        %1054 = vmatprep.mubr.f32.mxu0 0.0
        %1055 = vmatmul.mubr.f32.gmra.mrb[0].mxu0 %v673
        %v1056 = vpop.f32.mrb[0].mxu0
        %v1057 = vadd.f32 0.0, %v1056
        %v1058 = vpop.f32.mrb[0].mxu0
        %1059 = vdwg.mxu0
        %v1060 = vld [vmem:[%s2] sm:$0xff]
        %v1061 = vld [vmem:[%s2 + $0x8] sm:$0xff]
        %v1062 = vld [vmem:[%s2 + $0x10] sm:$0xff]
        %v1063 = vld [vmem:[%s2 + $0x18] sm:$0xff]
        %v1064 = vld [vmem:[%s2 + $0x20] sm:$0xff]
        %v1065 = vld [vmem:[%s2 + $0x28] sm:$0xff]
        %v1066 = vld [vmem:[%s2 + $0x30] sm:$0xff]
        %v1067 = vld [vmem:[%s2 + $0x38] sm:$0xff]
        %v1068 = vld [vmem:[%s2 + $0x40] sm:$0xff]
        %v1069 = vld [vmem:[%s2 + $0x48] sm:$0xff]
        %v1070 = vld [vmem:[%s2 + $0x50] sm:$0xff]
        %v1071 = vld [vmem:[%s2 + $0x58] sm:$0xff]
        %v1072 = vld [vmem:[%s2 + $0x60] sm:$0xff]
        %v1073 = vld [vmem:[%s2 + $0x68] sm:$0xff]
        %v1074 = vld [vmem:[%s2 + $0x70] sm:$0xff]
        %v1075 = vld [vmem:[%s2 + $0x78] sm:$0xff]
        %v1076 = vld [vmem:[%s2 + $0x80] sm:$0xff]
        %v1077 = vld [vmem:[%s2 + $0x88] sm:$0xff]
        %v1078 = vld [vmem:[%s2 + $0x90] sm:$0xff]
        %v1079 = vld [vmem:[%s2 + $0x98] sm:$0xff]
        %v1080 = vld [vmem:[%s2 + $0xa0] sm:$0xff]
        %v1081 = vld [vmem:[%s2 + $0xa8] sm:$0xff]
        %v1082 = vld [vmem:[%s2 + $0xb0] sm:$0xff]
        %v1083 = vld [vmem:[%s2 + $0xb8] sm:$0xff]
        %v1084 = vld [vmem:[%s2 + $0xc0] sm:$0xff]
        %v1085 = vld [vmem:[%s2 + $0xc8] sm:$0xff]
        %v1086 = vld [vmem:[%s2 + $0xd0] sm:$0xff]
        %v1087 = vld [vmem:[%s2 + $0xd8] sm:$0xff]
        %v1088 = vld [vmem:[%s2 + $0xe0] sm:$0xff]
        %v1089 = vld [vmem:[%s2 + $0xe8] sm:$0xff]
        %v1090 = vld [vmem:[%s2 + $0xf0] sm:$0xff]
        %v1091 = vld [vmem:[%s2 + $0xf8] sm:$0xff]
        %v1092 = vld [vmem:[%s2 + $0x100] sm:$0xff]
        %v1093 = vld [vmem:[%s2 + $0x108] sm:$0xff]
        %v1094 = vld [vmem:[%s2 + $0x110] sm:$0xff]
        %v1095 = vld [vmem:[%s2 + $0x118] sm:$0xff]
        %v1096 = vld [vmem:[%s2 + $0x120] sm:$0xff]
        %v1097 = vld [vmem:[%s2 + $0x128] sm:$0xff]
        %v1098 = vld [vmem:[%s2 + $0x130] sm:$0xff]
        %v1099 = vld [vmem:[%s2 + $0x138] sm:$0xff]
        %v1100 = vld [vmem:[%s2 + $0x140] sm:$0xff]
        %v1101 = vld [vmem:[%s2 + $0x148] sm:$0xff]
        %v1102 = vld [vmem:[%s2 + $0x150] sm:$0xff]
        %v1103 = vld [vmem:[%s2 + $0x158] sm:$0xff]
        %v1104 = vld [vmem:[%s2 + $0x160] sm:$0xff]
        %v1105 = vld [vmem:[%s2 + $0x168] sm:$0xff]
        %v1106 = vld [vmem:[%s2 + $0x170] sm:$0xff]
        %v1107 = vld [vmem:[%s2 + $0x178] sm:$0xff]
        %v1108 = vld [vmem:[%s2 + $0x180] sm:$0xff]
        %v1109 = vld [vmem:[%s2 + $0x188] sm:$0xff]
        %v1110 = vld [vmem:[%s2 + $0x190] sm:$0xff]
        %v1111 = vld [vmem:[%s2 + $0x198] sm:$0xff]
        %v1112 = vld [vmem:[%s2 + $0x1a0] sm:$0xff]
        %v1113 = vld [vmem:[%s2 + $0x1a8] sm:$0xff]
        %v1114 = vld [vmem:[%s2 + $0x1b0] sm:$0xff]
        %v1115 = vld [vmem:[%s2 + $0x1b8] sm:$0xff]
        %v1116 = vld [vmem:[%s2 + $0x1c0] sm:$0xff]
        %v1117 = vld [vmem:[%s2 + $0x1c8] sm:$0xff]
        %v1118 = vld [vmem:[%s2 + $0x1d0] sm:$0xff]
        %v1119 = vld [vmem:[%s2 + $0x1d8] sm:$0xff]
        %s1120 = scalar_lea.vmem %s2, 480
        %v1121 = vld [vmem:[%s1120] sm:$0xff]
        %v1122 = vld [vmem:[%s1120 + $0x8] sm:$0xff]
        %v1123 = vld [vmem:[%s1120 + $0x10] sm:$0xff]
        %v1124 = vld [vmem:[%s1120 + $0x18] sm:$0xff]
        %v1125 = vld [vmem:[%s1120 + $0x20] sm:$0xff]
        %v1126 = vld [vmem:[%s1120 + $0x28] sm:$0xff]
        %v1127 = vld [vmem:[%s1120 + $0x30] sm:$0xff]
        %v1128 = vld [vmem:[%s1120 + $0x38] sm:$0xff]
        %v1129 = vld [vmem:[%s1120 + $0x40] sm:$0xff]
        %v1130 = vld [vmem:[%s1120 + $0x48] sm:$0xff]
        %v1131 = vld [vmem:[%s1120 + $0x50] sm:$0xff]
        %v1132 = vld [vmem:[%s1120 + $0x58] sm:$0xff]
        %v1133 = vld [vmem:[%s1120 + $0x60] sm:$0xff]
        %v1134 = vld [vmem:[%s1120 + $0x68] sm:$0xff]
        %v1135 = vld [vmem:[%s1120 + $0x70] sm:$0xff]
        %v1136 = vld [vmem:[%s1120 + $0x78] sm:$0xff]
        %v1137 = vld [vmem:[%s1120 + $0x80] sm:$0xff]
        %v1138 = vld [vmem:[%s1120 + $0x88] sm:$0xff]
        %v1139 = vld [vmem:[%s1120 + $0x90] sm:$0xff]
        %v1140 = vld [vmem:[%s1120 + $0x98] sm:$0xff]
        %v1141 = vld [vmem:[%s1120 + $0xa0] sm:$0xff]
        %v1142 = vld [vmem:[%s1120 + $0xa8] sm:$0xff]
        %v1143 = vld [vmem:[%s1120 + $0xb0] sm:$0xff]
        %v1144 = vld [vmem:[%s1120 + $0xb8] sm:$0xff]
        %v1145 = vld [vmem:[%s1120 + $0xc0] sm:$0xff]
        %v1146 = vld [vmem:[%s1120 + $0xc8] sm:$0xff]
        %v1147 = vld [vmem:[%s1120 + $0xd0] sm:$0xff]
        %v1148 = vld [vmem:[%s1120 + $0xd8] sm:$0xff]
        %v1149 = vld [vmem:[%s1120 + $0xe0] sm:$0xff]
        %v1150 = vld [vmem:[%s1120 + $0xe8] sm:$0xff]
        %v1151 = vld [vmem:[%s1120 + $0xf0] sm:$0xff]
        %v1152 = vld [vmem:[%s1120 + $0xf8] sm:$0xff]
        %v1153 = vld [vmem:[%s1120 + $0x100] sm:$0xff]
        %v1154 = vld [vmem:[%s1120 + $0x108] sm:$0xff]
        %v1155 = vld [vmem:[%s1120 + $0x110] sm:$0xff]
        %v1156 = vld [vmem:[%s1120 + $0x118] sm:$0xff]
        %v1157 = vld [vmem:[%s1120 + $0x120] sm:$0xff]
        %v1158 = vld [vmem:[%s1120 + $0x128] sm:$0xff]
        %v1159 = vld [vmem:[%s1120 + $0x130] sm:$0xff]
        %v1160 = vld [vmem:[%s1120 + $0x138] sm:$0xff]
        %v1161 = vld [vmem:[%s1120 + $0x140] sm:$0xff]
        %v1162 = vld [vmem:[%s1120 + $0x148] sm:$0xff]
        %v1163 = vld [vmem:[%s1120 + $0x150] sm:$0xff]
        %v1164 = vld [vmem:[%s1120 + $0x158] sm:$0xff]
        %v1165 = vld [vmem:[%s1120 + $0x160] sm:$0xff]
        %v1166 = vld [vmem:[%s1120 + $0x168] sm:$0xff]
        %v1167 = vld [vmem:[%s1120 + $0x170] sm:$0xff]
        %v1168 = vld [vmem:[%s1120 + $0x178] sm:$0xff]
        %v1169 = vld [vmem:[%s1120 + $0x180] sm:$0xff]
        %v1170 = vld [vmem:[%s1120 + $0x188] sm:$0xff]
        %v1171 = vld [vmem:[%s1120 + $0x190] sm:$0xff]
        %v1172 = vld [vmem:[%s1120 + $0x198] sm:$0xff]
        %v1173 = vld [vmem:[%s1120 + $0x1a0] sm:$0xff]
        %v1174 = vld [vmem:[%s1120 + $0x1a8] sm:$0xff]
        %v1175 = vld [vmem:[%s1120 + $0x1b0] sm:$0xff]
        %v1176 = vld [vmem:[%s1120 + $0x1b8] sm:$0xff]
        %v1177 = vld [vmem:[%s1120 + $0x1c0] sm:$0xff]
        %v1178 = vld [vmem:[%s1120 + $0x1c8] sm:$0xff]
        %v1179 = vld [vmem:[%s1120 + $0x1d0] sm:$0xff]
        %v1180 = vld [vmem:[%s1120 + $0x1d8] sm:$0xff]
        %1245 = vrot.lane.b32.xlu0 %v742, 113
        %v1246 = vpop.permute.xlu0 %1245
        %1247 = vrot.lane.b32.xlu0 %v747, 113
        %v1248 = vpop.permute.xlu0 %1247
        %1249 = vrot.lane.b32.xlu0 %v752, 113
        %v1250 = vpop.permute.xlu0 %1249
        %1251 = vrot.lane.b32.xlu0 %v757, 113
        %v1252 = vpop.permute.xlu0 %1251
        %1253 = vrot.lane.b32.xlu0 %v762, 113
        %v1254 = vpop.permute.xlu0 %1253
        %1255 = vrot.lane.b32.xlu0 %v767, 113
        %v1256 = vpop.permute.xlu0 %1255
        %1257 = vrot.lane.b32.xlu0 %v772, 113
        %v1258 = vpop.permute.xlu0 %1257
        %1259 = vrot.lane.b32.xlu0 %v777, 113
        %v1260 = vpop.permute.xlu0 %1259
        %1261 = vrot.lane.b32.xlu0 %v782, 113
        %v1262 = vpop.permute.xlu0 %1261
        %1263 = vrot.lane.b32.xlu0 %v787, 113
        %v1264 = vpop.permute.xlu0 %1263
        %1265 = vrot.lane.b32.xlu0 %v792, 113
        %v1266 = vpop.permute.xlu0 %1265
        %1267 = vrot.lane.b32.xlu0 %v797, 113
        %v1268 = vpop.permute.xlu0 %1267
        %1269 = vrot.lane.b32.xlu0 %v802, 113
        %v1270 = vpop.permute.xlu0 %1269
        %1271 = vrot.lane.b32.xlu0 %v807, 113
        %v1272 = vpop.permute.xlu0 %1271
        %1273 = vrot.lane.b32.xlu0 %v812, 113
        %v1274 = vpop.permute.xlu0 %1273
        %1275 = vrot.lane.b32.xlu0 %v817, 113
        %v1276 = vpop.permute.xlu0 %1275
        %1277 = vrot.lane.b32.xlu0 %v822, 113
        %v1278 = vpop.permute.xlu0 %1277
        %1279 = vrot.lane.b32.xlu0 %v827, 113
        %v1280 = vpop.permute.xlu0 %1279
        %1281 = vrot.lane.b32.xlu0 %v832, 113
        %v1282 = vpop.permute.xlu0 %1281
        %1283 = vrot.lane.b32.xlu0 %v837, 113
        %v1284 = vpop.permute.xlu0 %1283
        %1285 = vrot.lane.b32.xlu0 %v842, 113
        %v1286 = vpop.permute.xlu0 %1285
        %1287 = vrot.lane.b32.xlu0 %v847, 113
        %v1288 = vpop.permute.xlu0 %1287
        %1289 = vrot.lane.b32.xlu0 %v852, 113
        %v1290 = vpop.permute.xlu0 %1289
        %1291 = vrot.lane.b32.xlu0 %v857, 113
        %v1292 = vpop.permute.xlu0 %1291
        %1293 = vrot.lane.b32.xlu0 %v862, 113
        %v1294 = vpop.permute.xlu0 %1293
        %1295 = vrot.lane.b32.xlu0 %v867, 113
        %v1296 = vpop.permute.xlu0 %1295
        %1297 = vrot.lane.b32.xlu0 %v872, 113
        %v1298 = vpop.permute.xlu0 %1297
        %1299 = vrot.lane.b32.xlu0 %v877, 113
        %v1300 = vpop.permute.xlu0 %1299
        %1301 = vrot.lane.b32.xlu0 %v882, 113
        %v1302 = vpop.permute.xlu0 %1301
        %1303 = vrot.lane.b32.xlu0 %v887, 113
        %v1304 = vpop.permute.xlu0 %1303
        %1305 = vrot.lane.b32.xlu0 %v892, 113
        %v1306 = vpop.permute.xlu0 %1305
        %1307 = vrot.lane.b32.xlu0 %v897, 113
        %v1308 = vpop.permute.xlu0 %1307
        %1309 = vrot.lane.b32.xlu0 %v902, 113
        %v1310 = vpop.permute.xlu0 %1309
        %1311 = vrot.lane.b32.xlu0 %v907, 113
        %v1312 = vpop.permute.xlu0 %1311
        %1313 = vrot.lane.b32.xlu0 %v912, 113
        %v1314 = vpop.permute.xlu0 %1313
        %1315 = vrot.lane.b32.xlu0 %v917, 113
        %v1316 = vpop.permute.xlu0 %1315
        %1317 = vrot.lane.b32.xlu0 %v922, 113
        %v1318 = vpop.permute.xlu0 %1317
        %1319 = vrot.lane.b32.xlu0 %v927, 113
        %v1320 = vpop.permute.xlu0 %1319
        %1321 = vrot.lane.b32.xlu0 %v932, 113
        %v1322 = vpop.permute.xlu0 %1321
        %1323 = vrot.lane.b32.xlu0 %v937, 113
        %v1324 = vpop.permute.xlu0 %1323
        %1325 = vrot.lane.b32.xlu0 %v942, 113
        %v1326 = vpop.permute.xlu0 %1325
        %1327 = vrot.lane.b32.xlu0 %v947, 113
        %v1328 = vpop.permute.xlu0 %1327
        %1329 = vrot.lane.b32.xlu0 %v952, 113
        %v1330 = vpop.permute.xlu0 %1329
        %1331 = vrot.lane.b32.xlu0 %v957, 113
        %v1332 = vpop.permute.xlu0 %1331
        %1333 = vrot.lane.b32.xlu0 %v962, 113
        %v1334 = vpop.permute.xlu0 %1333
        %1335 = vrot.lane.b32.xlu0 %v967, 113
        %v1336 = vpop.permute.xlu0 %1335
        %1337 = vrot.lane.b32.xlu0 %v972, 113
        %v1338 = vpop.permute.xlu0 %1337
        %1339 = vrot.lane.b32.xlu0 %v977, 113
        %v1340 = vpop.permute.xlu0 %1339
        %1341 = vrot.lane.b32.xlu0 %v982, 113
        %v1342 = vpop.permute.xlu0 %1341
        %1343 = vrot.lane.b32.xlu0 %v987, 113
        %v1344 = vpop.permute.xlu0 %1343
        %1345 = vrot.lane.b32.xlu0 %v992, 113
        %v1346 = vpop.permute.xlu0 %1345
        %1347 = vrot.lane.b32.xlu0 %v997, 113
        %v1348 = vpop.permute.xlu0 %1347
        %1349 = vrot.lane.b32.xlu0 %v1002, 113
        %v1350 = vpop.permute.xlu0 %1349
        %1351 = vrot.lane.b32.xlu0 %v1007, 113
        %v1352 = vpop.permute.xlu0 %1351
        %1353 = vrot.lane.b32.xlu0 %v1012, 113
        %v1354 = vpop.permute.xlu0 %1353
        %1355 = vrot.lane.b32.xlu0 %v1017, 113
        %v1356 = vpop.permute.xlu0 %1355
        %1357 = vrot.lane.b32.xlu0 %v1022, 113
        %v1358 = vpop.permute.xlu0 %1357
        %1359 = vrot.lane.b32.xlu0 %v1027, 113
        %v1360 = vpop.permute.xlu0 %1359
        %1361 = vrot.lane.b32.xlu0 %v1032, 113
        %v1362 = vpop.permute.xlu0 %1361
        %1363 = vrot.lane.b32.xlu0 %v1037, 113
        %v1364 = vpop.permute.xlu0 %1363
        %1365 = vrot.lane.b32.xlu0 %v1042, 113
        %v1366 = vpop.permute.xlu0 %1365
        %1367 = vrot.lane.b32.xlu0 %v1047, 113
        %v1368 = vpop.permute.xlu0 %1367
        %1369 = vrot.lane.b32.xlu0 %v1052, 113
        %v1370 = vpop.permute.xlu0 %1369
        %1371 = vrot.lane.b32.xlu0 %v1057, 113
        %v1372 = vpop.permute.xlu0 %1371
        %1437 = vmatprep.subr.mxu0 0.0
        %1438 = vmatpush1.msra.mxu0 %v1246
        %1439 = vmatprep.subr.mxu0 0.0
        %1440 = vmatpush1.msra.mxu0 %v1248
        %1441 = vmatprep.subr.mxu0 0.0
        %1442 = vmatpush1.msra.mxu0 %v1250
        %1443 = vmatprep.subr.mxu0 0.0
        %1444 = vmatpush1.msra.mxu0 %v1252
        %1445 = vmatprep.subr.mxu0 0.0
        %1446 = vmatpush1.msra.mxu0 %v1254
        %1447 = vmatprep.subr.mxu0 0.0
        %1448 = vmatpush1.msra.mxu0 %v1256
        %1449 = vmatprep.subr.mxu0 0.0
        %1450 = vmatpush1.msra.mxu0 %v1258
        %1451 = vmatprep.subr.mxu0 0.0
        %1452 = vmatpush1.msra.mxu0 %v1260
        %1453 = vmatprep.subr.mxu0 0.0
        %1454 = vmatpush1.msra.mxu0 %v1262
        %1455 = vmatprep.subr.mxu0 0.0
        %1456 = vmatpush1.msra.mxu0 %v1264
        %1457 = vmatprep.subr.mxu0 0.0
        %1458 = vmatpush1.msra.mxu0 %v1266
        %1459 = vmatprep.subr.mxu0 0.0
        %1460 = vmatpush1.msra.mxu0 %v1268
        %1461 = vmatprep.subr.mxu0 0.0
        %1462 = vmatpush1.msra.mxu0 %v1270
        %1463 = vmatprep.subr.mxu0 0.0
        %1464 = vmatpush1.msra.mxu0 %v1272
        %1465 = vmatprep.subr.mxu0 0.0
        %1466 = vmatpush1.msra.mxu0 %v1274
        %1467 = vmatprep.subr.mxu0 0.0
        %1468 = vmatpush1.msra.mxu0 %v1276
        %1469 = vmatprep.subr.mxu0 0.0
        %1470 = vmatpush1.msra.mxu0 %v1278
        %1471 = vmatprep.subr.mxu0 0.0
        %1472 = vmatpush1.msra.mxu0 %v1280
        %1473 = vmatprep.subr.mxu0 0.0
        %1474 = vmatpush1.msra.mxu0 %v1282
        %1475 = vmatprep.subr.mxu0 0.0
        %1476 = vmatpush1.msra.mxu0 %v1284
        %1477 = vmatprep.subr.mxu0 0.0
        %1478 = vmatpush1.msra.mxu0 %v1286
        %1479 = vmatprep.subr.mxu0 0.0
        %1480 = vmatpush1.msra.mxu0 %v1288
        %1481 = vmatprep.subr.mxu0 0.0
        %1482 = vmatpush1.msra.mxu0 %v1290
        %1483 = vmatprep.subr.mxu0 0.0
        %1484 = vmatpush1.msra.mxu0 %v1292
        %1485 = vmatprep.subr.mxu0 0.0
        %1486 = vmatpush1.msra.mxu0 %v1294
        %1487 = vmatprep.subr.mxu0 0.0
        %1488 = vmatpush1.msra.mxu0 %v1296
        %1489 = vmatprep.subr.mxu0 0.0
        %1490 = vmatpush1.msra.mxu0 %v1298
        %1491 = vmatprep.subr.mxu0 0.0
        %1492 = vmatpush1.msra.mxu0 %v1300
        %1493 = vmatprep.subr.mxu0 0.0
        %1494 = vmatpush1.msra.mxu0 %v1302
        %1495 = vmatprep.subr.mxu0 0.0
        %1496 = vmatpush1.msra.mxu0 %v1304
        %1497 = vmatprep.subr.mxu0 0.0
        %1498 = vmatpush1.msra.mxu0 %v1306
        %1499 = vmatprep.subr.mxu0 0.0
        %1500 = vmatpush1.msra.mxu0 %v1308
        %1501 = vmatprep.mubr.f32.mxu0 %v1122
        %1502 = vmatmul.mubr.f32.gmra.mrb[0].mxu0 %v1121
        %v1503 = vpop.f32.mrb[0].mxu0
        %v1504 = vadd.f32 0.0, %v1503
        %v1505 = vpop.f32.mrb[0].mxu0
        %1506 = vmatprep.mubr.f32.mxu0 %v1126
        %1507 = vmatmul.mubr.f32.gmra.mrb[0].mxu0 %v1125
        %v1508 = vpop.f32.mrb[0].mxu0
        %v1509 = vadd.f32 0.0, %v1508
        %v1510 = vpop.f32.mrb[0].mxu0
        %1511 = vmatprep.mubr.f32.mxu0 %v1130
        %1512 = vmatmul.mubr.f32.gmra.mrb[0].mxu0 %v1129
        %v1513 = vpop.f32.mrb[0].mxu0
        %v1514 = vadd.f32 0.0, %v1513
        %v1515 = vpop.f32.mrb[0].mxu0
        %1516 = vmatprep.mubr.f32.mxu0 %v1134
        %1517 = vmatmul.mubr.f32.gmra.mrb[0].mxu0 %v1133
        %v1518 = vpop.f32.mrb[0].mxu0
        %v1519 = vadd.f32 0.0, %v1518
        %v1520 = vpop.f32.mrb[0].mxu0
        %1521 = vmatprep.mubr.f32.mxu0 %v1138
        %1522 = vmatmul.mubr.f32.gmra.mrb[0].mxu0 %v1137
        %v1523 = vpop.f32.mrb[0].mxu0
        %v1524 = vadd.f32 0.0, %v1523
        %v1525 = vpop.f32.mrb[0].mxu0
        %1526 = vmatprep.mubr.f32.mxu0 %v1142
        %1527 = vmatmul.mubr.f32.gmra.mrb[0].mxu0 %v1141
        %v1528 = vpop.f32.mrb[0].mxu0
        %v1529 = vadd.f32 0.0, %v1528
        %v1530 = vpop.f32.mrb[0].mxu0
        %1531 = vmatprep.mubr.f32.mxu0 %v1146
        %1532 = vmatmul.mubr.f32.gmra.mrb[0].mxu0 %v1145
        %v1533 = vpop.f32.mrb[0].mxu0
        %v1534 = vadd.f32 0.0, %v1533
        %v1535 = vpop.f32.mrb[0].mxu0
        %1536 = vmatprep.mubr.f32.mxu0 %v1150
        %1537 = vmatmul.mubr.f32.gmra.mrb[0].mxu0 %v1149
        %v1538 = vpop.f32.mrb[0].mxu0
        %v1539 = vadd.f32 0.0, %v1538
        %v1540 = vpop.f32.mrb[0].mxu0
        %1541 = vmatprep.mubr.f32.mxu0 %v1154
        %1542 = vmatmul.mubr.f32.gmra.mrb[0].mxu0 %v1153
        %v1543 = vpop.f32.mrb[0].mxu0
        %v1544 = vadd.f32 0.0, %v1543
        %v1545 = vpop.f32.mrb[0].mxu0
        %1546 = vmatprep.mubr.f32.mxu0 %v1158
        %1547 = vmatmul.mubr.f32.gmra.mrb[0].mxu0 %v1157
        %v1548 = vpop.f32.mrb[0].mxu0
        %v1549 = vadd.f32 0.0, %v1548
        %v1550 = vpop.f32.mrb[0].mxu0
        %1551 = vmatprep.mubr.f32.mxu0 %v1162
        %1552 = vmatmul.mubr.f32.gmra.mrb[0].mxu0 %v1161
        %v1553 = vpop.f32.mrb[0].mxu0
        %v1554 = vadd.f32 0.0, %v1553
        %v1555 = vpop.f32.mrb[0].mxu0
        %1556 = vmatprep.mubr.f32.mxu0 %v1166
        %1557 = vmatmul.mubr.f32.gmra.mrb[0].mxu0 %v1165
        %v1558 = vpop.f32.mrb[0].mxu0
        %v1559 = vadd.f32 0.0, %v1558
        %v1560 = vpop.f32.mrb[0].mxu0
        %1561 = vmatprep.mubr.f32.mxu0 %v1170
        %1562 = vmatmul.mubr.f32.gmra.mrb[0].mxu0 %v1169
        %v1563 = vpop.f32.mrb[0].mxu0
        %v1564 = vadd.f32 0.0, %v1563
        %v1565 = vpop.f32.mrb[0].mxu0
        %1566 = vmatprep.mubr.f32.mxu0 %v1174
        %1567 = vmatmul.mubr.f32.gmra.mrb[0].mxu0 %v1173
        %v1568 = vpop.f32.mrb[0].mxu0
        %v1569 = vadd.f32 0.0, %v1568
        %v1570 = vpop.f32.mrb[0].mxu0
        %1571 = vmatprep.mubr.f32.mxu0 %v1178
        %1572 = vmatmul.mubr.f32.gmra.mrb[0].mxu0 %v1177
        %v1573 = vpop.f32.mrb[0].mxu0
        %v1574 = vadd.f32 0.0, %v1573
        %v1575 = vpop.f32.mrb[0].mxu0
        %1576 = vdwg.mxu0
        %1577 = vmatprep.subr.mxu0 0.0
        %1578 = vmatpush1.msra.mxu0 %v1310
        %1579 = vmatprep.subr.mxu0 0.0
        %1580 = vmatpush1.msra.mxu0 %v1312
        %1581 = vmatprep.subr.mxu0 0.0
        %1582 = vmatpush1.msra.mxu0 %v1314
        %1583 = vmatprep.subr.mxu0 0.0
        %1584 = vmatpush1.msra.mxu0 %v1316
        %1585 = vmatprep.subr.mxu0 0.0
        %1586 = vmatpush1.msra.mxu0 %v1318
        %1587 = vmatprep.subr.mxu0 0.0
        %1588 = vmatpush1.msra.mxu0 %v1320
        %1589 = vmatprep.subr.mxu0 0.0
        %1590 = vmatpush1.msra.mxu0 %v1322
        %1591 = vmatprep.subr.mxu0 0.0
        %1592 = vmatpush1.msra.mxu0 %v1324
        %1593 = vmatprep.subr.mxu0 0.0
        %1594 = vmatpush1.msra.mxu0 %v1326
        %1595 = vmatprep.subr.mxu0 0.0
        %1596 = vmatpush1.msra.mxu0 %v1328
        %1597 = vmatprep.subr.mxu0 0.0
        %1598 = vmatpush1.msra.mxu0 %v1330
        %1599 = vmatprep.subr.mxu0 0.0
        %1600 = vmatpush1.msra.mxu0 %v1332
        %1601 = vmatprep.subr.mxu0 0.0
        %1602 = vmatpush1.msra.mxu0 %v1334
        %1603 = vmatprep.subr.mxu0 0.0
        %1604 = vmatpush1.msra.mxu0 %v1336
        %1605 = vmatprep.subr.mxu0 0.0
        %1606 = vmatpush1.msra.mxu0 %v1338
        %1607 = vmatprep.subr.mxu0 0.0
        %1608 = vmatpush1.msra.mxu0 %v1340
        %1609 = vmatprep.subr.mxu0 0.0
        %1610 = vmatpush1.msra.mxu0 %v1342
        %1611 = vmatprep.subr.mxu0 0.0
        %1612 = vmatpush1.msra.mxu0 %v1344
        %1613 = vmatprep.subr.mxu0 0.0
        %1614 = vmatpush1.msra.mxu0 %v1346
        %1615 = vmatprep.subr.mxu0 0.0
        %1616 = vmatpush1.msra.mxu0 %v1348
        %1617 = vmatprep.subr.mxu0 0.0
        %1618 = vmatpush1.msra.mxu0 %v1350
        %1619 = vmatprep.subr.mxu0 0.0
        %1620 = vmatpush1.msra.mxu0 %v1352
        %1621 = vmatprep.subr.mxu0 0.0
        %1622 = vmatpush1.msra.mxu0 %v1354
        %1623 = vmatprep.subr.mxu0 0.0
        %1624 = vmatpush1.msra.mxu0 %v1356
        %1625 = vmatprep.subr.mxu0 0.0
        %1626 = vmatpush1.msra.mxu0 %v1358
        %1627 = vmatprep.subr.mxu0 0.0
        %1628 = vmatpush1.msra.mxu0 %v1360
        %1629 = vmatprep.subr.mxu0 0.0
        %1630 = vmatpush1.msra.mxu0 %v1362
        %1631 = vmatprep.subr.mxu0 0.0
        %1632 = vmatpush1.msra.mxu0 %v1364
        %1633 = vmatprep.subr.mxu0 0.0
        %1634 = vmatpush1.msra.mxu0 %v1366
        %1635 = vmatprep.subr.mxu0 0.0
        %1636 = vmatpush1.msra.mxu0 %v1368
        %1637 = vmatprep.subr.mxu0 0.0
        %1638 = vmatpush1.msra.mxu0 %v1370
        %1639 = vmatprep.subr.mxu0 0.0
        %1640 = vmatpush1.msra.mxu0 %v1372
        %1641 = vmatprep.mubr.f32.mxu0 %v1124
        %1642 = vmatmul.mubr.f32.gmra.mrb[0].mxu0 %v1123
        %v1643 = vpop.f32.mrb[0].mxu0
        %v1644 = vadd.f32 %v1504, %v1643
        %v1645 = vpop.f32.mrb[0].mxu0
        %1646 = vmatprep.mubr.f32.mxu0 %v1128
        %1647 = vmatmul.mubr.f32.gmra.mrb[0].mxu0 %v1127
        %v1648 = vpop.f32.mrb[0].mxu0
        %v1649 = vadd.f32 %v1509, %v1648
        %v1650 = vpop.f32.mrb[0].mxu0
        %1651 = vmatprep.mubr.f32.mxu0 %v1132
        %1652 = vmatmul.mubr.f32.gmra.mrb[0].mxu0 %v1131
        %v1653 = vpop.f32.mrb[0].mxu0
        %v1654 = vadd.f32 %v1514, %v1653
        %v1655 = vpop.f32.mrb[0].mxu0
        %1656 = vmatprep.mubr.f32.mxu0 %v1136
        %1657 = vmatmul.mubr.f32.gmra.mrb[0].mxu0 %v1135
        %v1658 = vpop.f32.mrb[0].mxu0
        %v1659 = vadd.f32 %v1519, %v1658
        %v1660 = vpop.f32.mrb[0].mxu0
        %1661 = vmatprep.mubr.f32.mxu0 %v1140
        %1662 = vmatmul.mubr.f32.gmra.mrb[0].mxu0 %v1139
        %v1663 = vpop.f32.mrb[0].mxu0
        %v1664 = vadd.f32 %v1524, %v1663
        %v1665 = vpop.f32.mrb[0].mxu0
        %1666 = vmatprep.mubr.f32.mxu0 %v1144
        %1667 = vmatmul.mubr.f32.gmra.mrb[0].mxu0 %v1143
        %v1668 = vpop.f32.mrb[0].mxu0
        %v1669 = vadd.f32 %v1529, %v1668
        %v1670 = vpop.f32.mrb[0].mxu0
        %1671 = vmatprep.mubr.f32.mxu0 %v1148
        %1672 = vmatmul.mubr.f32.gmra.mrb[0].mxu0 %v1147
        %v1673 = vpop.f32.mrb[0].mxu0
        %v1674 = vadd.f32 %v1534, %v1673
        %v1675 = vpop.f32.mrb[0].mxu0
        %1676 = vmatprep.mubr.f32.mxu0 %v1152
        %1677 = vmatmul.mubr.f32.gmra.mrb[0].mxu0 %v1151
        %v1678 = vpop.f32.mrb[0].mxu0
        %v1679 = vadd.f32 %v1539, %v1678
        %v1680 = vpop.f32.mrb[0].mxu0
        %1681 = vmatprep.mubr.f32.mxu0 %v1156
        %1682 = vmatmul.mubr.f32.gmra.mrb[0].mxu0 %v1155
        %v1683 = vpop.f32.mrb[0].mxu0
        %v1684 = vadd.f32 %v1544, %v1683
        %v1685 = vpop.f32.mrb[0].mxu0
        %1686 = vmatprep.mubr.f32.mxu0 %v1160
        %1687 = vmatmul.mubr.f32.gmra.mrb[0].mxu0 %v1159
        %v1688 = vpop.f32.mrb[0].mxu0
        %v1689 = vadd.f32 %v1549, %v1688
        %v1690 = vpop.f32.mrb[0].mxu0
        %1691 = vmatprep.mubr.f32.mxu0 %v1164
        %1692 = vmatmul.mubr.f32.gmra.mrb[0].mxu0 %v1163
        %v1693 = vpop.f32.mrb[0].mxu0
        %v1694 = vadd.f32 %v1554, %v1693
        %v1695 = vpop.f32.mrb[0].mxu0
        %1696 = vmatprep.mubr.f32.mxu0 %v1168
        %1697 = vmatmul.mubr.f32.gmra.mrb[0].mxu0 %v1167
        %v1698 = vpop.f32.mrb[0].mxu0
        %v1699 = vadd.f32 %v1559, %v1698
        %v1700 = vpop.f32.mrb[0].mxu0
        %1701 = vmatprep.mubr.f32.mxu0 %v1172
        %1702 = vmatmul.mubr.f32.gmra.mrb[0].mxu0 %v1171
        %v1703 = vpop.f32.mrb[0].mxu0
        %v1704 = vadd.f32 %v1564, %v1703
        %v1705 = vpop.f32.mrb[0].mxu0
        %1706 = vmatprep.mubr.f32.mxu0 %v1176
        %1707 = vmatmul.mubr.f32.gmra.mrb[0].mxu0 %v1175
        %v1708 = vpop.f32.mrb[0].mxu0
        %v1709 = vadd.f32 %v1569, %v1708
        %v1710 = vpop.f32.mrb[0].mxu0
        %1711 = vmatprep.mubr.f32.mxu0 %v1180
        %1712 = vmatmul.mubr.f32.gmra.mrb[0].mxu0 %v1179
        %v1713 = vpop.f32.mrb[0].mxu0
        %v1714 = vadd.f32 %v1574, %v1713
        %v1715 = vpop.f32.mrb[0].mxu0
        %1716 = vdwg.mxu0
        %1717 = vmatprep.subr.mxu0 0.0
        %1718 = vmatpush1.msra.mxu0 %v742
        %1719 = vmatprep.subr.mxu0 0.0
        %1720 = vmatpush1.msra.mxu0 %v747
        %1721 = vmatprep.subr.mxu0 0.0
        %1722 = vmatpush1.msra.mxu0 %v752
        %1723 = vmatprep.subr.mxu0 0.0
        %1724 = vmatpush1.msra.mxu0 %v757
        %1725 = vmatprep.subr.mxu0 0.0
        %1726 = vmatpush1.msra.mxu0 %v762
        %1727 = vmatprep.subr.mxu0 0.0
        %1728 = vmatpush1.msra.mxu0 %v767
        %1729 = vmatprep.subr.mxu0 0.0
        %1730 = vmatpush1.msra.mxu0 %v772
        %1731 = vmatprep.subr.mxu0 0.0
        %1732 = vmatpush1.msra.mxu0 %v777
        %1733 = vmatprep.subr.mxu0 0.0
        %1734 = vmatpush1.msra.mxu0 %v782
        %1735 = vmatprep.subr.mxu0 0.0
        %1736 = vmatpush1.msra.mxu0 %v787
        %1737 = vmatprep.subr.mxu0 0.0
        %1738 = vmatpush1.msra.mxu0 %v792
        %1739 = vmatprep.subr.mxu0 0.0
        %1740 = vmatpush1.msra.mxu0 %v797
        %1741 = vmatprep.subr.mxu0 0.0
        %1742 = vmatpush1.msra.mxu0 %v802
        %1743 = vmatprep.subr.mxu0 0.0
        %1744 = vmatpush1.msra.mxu0 %v807
        %1745 = vmatprep.subr.mxu0 0.0
        %1746 = vmatpush1.msra.mxu0 %v812
        %1747 = vmatprep.subr.mxu0 0.0
        %1748 = vmatpush1.msra.mxu0 %v817
        %1749 = vmatprep.subr.mxu0 0.0
        %1750 = vmatpush1.msra.mxu0 %v822
        %1751 = vmatprep.subr.mxu0 0.0
        %1752 = vmatpush1.msra.mxu0 %v827
        %1753 = vmatprep.subr.mxu0 0.0
        %1754 = vmatpush1.msra.mxu0 %v832
        %1755 = vmatprep.subr.mxu0 0.0
        %1756 = vmatpush1.msra.mxu0 %v837
        %1757 = vmatprep.subr.mxu0 0.0
        %1758 = vmatpush1.msra.mxu0 %v842
        %1759 = vmatprep.subr.mxu0 0.0
        %1760 = vmatpush1.msra.mxu0 %v847
        %1761 = vmatprep.subr.mxu0 0.0
        %1762 = vmatpush1.msra.mxu0 %v852
        %1763 = vmatprep.subr.mxu0 0.0
        %1764 = vmatpush1.msra.mxu0 %v857
        %1765 = vmatprep.subr.mxu0 0.0
        %1766 = vmatpush1.msra.mxu0 %v862
        %1767 = vmatprep.subr.mxu0 0.0
        %1768 = vmatpush1.msra.mxu0 %v867
        %1769 = vmatprep.subr.mxu0 0.0
        %1770 = vmatpush1.msra.mxu0 %v872
        %1771 = vmatprep.subr.mxu0 0.0
        %1772 = vmatpush1.msra.mxu0 %v877
        %1773 = vmatprep.subr.mxu0 0.0
        %1774 = vmatpush1.msra.mxu0 %v882
        %1775 = vmatprep.subr.mxu0 0.0
        %1776 = vmatpush1.msra.mxu0 %v887
        %1777 = vmatprep.subr.mxu0 0.0
        %1778 = vmatpush1.msra.mxu0 %v892
        %1779 = vmatprep.subr.mxu0 0.0
        %1780 = vmatpush1.msra.mxu0 %v897
        %1781 = vmatprep.mubr.f32.mxu0 %v1061
        %1782 = vmatmul.mubr.f32.gmra.mrb[0].mxu0 %v1060
        %v1783 = vpop.f32.mrb[0].mxu0
        %v1784 = vadd.f32 %v1644, %v1783
        %v1785 = vpop.f32.mrb[0].mxu0
        %1786 = vmatprep.mubr.f32.mxu0 %v1065
        %1787 = vmatmul.mubr.f32.gmra.mrb[0].mxu0 %v1064
        %v1788 = vpop.f32.mrb[0].mxu0
        %v1789 = vadd.f32 %v1649, %v1788
        %v1790 = vpop.f32.mrb[0].mxu0
        %1791 = vmatprep.mubr.f32.mxu0 %v1069
        %1792 = vmatmul.mubr.f32.gmra.mrb[0].mxu0 %v1068
        %v1793 = vpop.f32.mrb[0].mxu0
        %v1794 = vadd.f32 %v1654, %v1793
        %v1795 = vpop.f32.mrb[0].mxu0
        %1796 = vmatprep.mubr.f32.mxu0 %v1073
        %1797 = vmatmul.mubr.f32.gmra.mrb[0].mxu0 %v1072
        %v1798 = vpop.f32.mrb[0].mxu0
        %v1799 = vadd.f32 %v1659, %v1798
        %v1800 = vpop.f32.mrb[0].mxu0
        %1801 = vmatprep.mubr.f32.mxu0 %v1077
        %1802 = vmatmul.mubr.f32.gmra.mrb[0].mxu0 %v1076
        %v1803 = vpop.f32.mrb[0].mxu0
        %v1804 = vadd.f32 %v1664, %v1803
        %v1805 = vpop.f32.mrb[0].mxu0
        %1806 = vmatprep.mubr.f32.mxu0 %v1081
        %1807 = vmatmul.mubr.f32.gmra.mrb[0].mxu0 %v1080
        %v1808 = vpop.f32.mrb[0].mxu0
        %v1809 = vadd.f32 %v1669, %v1808
        %v1810 = vpop.f32.mrb[0].mxu0
        %1811 = vmatprep.mubr.f32.mxu0 %v1085
        %1812 = vmatmul.mubr.f32.gmra.mrb[0].mxu0 %v1084
        %v1813 = vpop.f32.mrb[0].mxu0
        %v1814 = vadd.f32 %v1674, %v1813
        %v1815 = vpop.f32.mrb[0].mxu0
        %1816 = vmatprep.mubr.f32.mxu0 %v1089
        %1817 = vmatmul.mubr.f32.gmra.mrb[0].mxu0 %v1088
        %v1818 = vpop.f32.mrb[0].mxu0
        %v1819 = vadd.f32 %v1679, %v1818
        %v1820 = vpop.f32.mrb[0].mxu0
        %1821 = vmatprep.mubr.f32.mxu0 %v1093
        %1822 = vmatmul.mubr.f32.gmra.mrb[0].mxu0 %v1092
        %v1823 = vpop.f32.mrb[0].mxu0
        %v1824 = vadd.f32 %v1684, %v1823
        %v1825 = vpop.f32.mrb[0].mxu0
        %1826 = vmatprep.mubr.f32.mxu0 %v1097
        %1827 = vmatmul.mubr.f32.gmra.mrb[0].mxu0 %v1096
        %v1828 = vpop.f32.mrb[0].mxu0
        %v1829 = vadd.f32 %v1689, %v1828
        %v1830 = vpop.f32.mrb[0].mxu0
        %1831 = vmatprep.mubr.f32.mxu0 %v1101
        %1832 = vmatmul.mubr.f32.gmra.mrb[0].mxu0 %v1100
        %v1833 = vpop.f32.mrb[0].mxu0
        %v1834 = vadd.f32 %v1694, %v1833
        %v1835 = vpop.f32.mrb[0].mxu0
        %1836 = vmatprep.mubr.f32.mxu0 %v1105
        %1837 = vmatmul.mubr.f32.gmra.mrb[0].mxu0 %v1104
        %v1838 = vpop.f32.mrb[0].mxu0
        %v1839 = vadd.f32 %v1699, %v1838
        %v1840 = vpop.f32.mrb[0].mxu0
        %1841 = vmatprep.mubr.f32.mxu0 %v1109
        %1842 = vmatmul.mubr.f32.gmra.mrb[0].mxu0 %v1108
        %v1843 = vpop.f32.mrb[0].mxu0
        %v1844 = vadd.f32 %v1704, %v1843
        %v1845 = vpop.f32.mrb[0].mxu0
        %1846 = vmatprep.mubr.f32.mxu0 %v1113
        %1847 = vmatmul.mubr.f32.gmra.mrb[0].mxu0 %v1112
        %v1848 = vpop.f32.mrb[0].mxu0
        %v1849 = vadd.f32 %v1709, %v1848
        %v1850 = vpop.f32.mrb[0].mxu0
        %1851 = vmatprep.mubr.f32.mxu0 %v1117
        %1852 = vmatmul.mubr.f32.gmra.mrb[0].mxu0 %v1116
        %v1853 = vpop.f32.mrb[0].mxu0
        %v1854 = vadd.f32 %v1714, %v1853
        %v1855 = vpop.f32.mrb[0].mxu0
        %1856 = vdwg.mxu0
        %1857 = vmatprep.subr.mxu0 0.0
        %1858 = vmatpush1.msra.mxu0 %v902
        %1859 = vmatprep.subr.mxu0 0.0
        %1860 = vmatpush1.msra.mxu0 %v907
        %1861 = vmatprep.subr.mxu0 0.0
        %1862 = vmatpush1.msra.mxu0 %v912
        %1863 = vmatprep.subr.mxu0 0.0
        %1864 = vmatpush1.msra.mxu0 %v917
        %1865 = vmatprep.subr.mxu0 0.0
        %1866 = vmatpush1.msra.mxu0 %v922
        %1867 = vmatprep.subr.mxu0 0.0
        %1868 = vmatpush1.msra.mxu0 %v927
        %1869 = vmatprep.subr.mxu0 0.0
        %1870 = vmatpush1.msra.mxu0 %v932
        %1871 = vmatprep.subr.mxu0 0.0
        %1872 = vmatpush1.msra.mxu0 %v937
        %1873 = vmatprep.subr.mxu0 0.0
        %1874 = vmatpush1.msra.mxu0 %v942
        %1875 = vmatprep.subr.mxu0 0.0
        %1876 = vmatpush1.msra.mxu0 %v947
        %1877 = vmatprep.subr.mxu0 0.0
        %1878 = vmatpush1.msra.mxu0 %v952
        %1879 = vmatprep.subr.mxu0 0.0
        %1880 = vmatpush1.msra.mxu0 %v957
        %1881 = vmatprep.subr.mxu0 0.0
        %1882 = vmatpush1.msra.mxu0 %v962
        %1883 = vmatprep.subr.mxu0 0.0
        %1884 = vmatpush1.msra.mxu0 %v967
        %1885 = vmatprep.subr.mxu0 0.0
        %1886 = vmatpush1.msra.mxu0 %v972
        %1887 = vmatprep.subr.mxu0 0.0
        %1888 = vmatpush1.msra.mxu0 %v977
        %1889 = vmatprep.subr.mxu0 0.0
        %1890 = vmatpush1.msra.mxu0 %v982
        %1891 = vmatprep.subr.mxu0 0.0
        %1892 = vmatpush1.msra.mxu0 %v987
        %1893 = vmatprep.subr.mxu0 0.0
        %1894 = vmatpush1.msra.mxu0 %v992
        %1895 = vmatprep.subr.mxu0 0.0
        %1896 = vmatpush1.msra.mxu0 %v997
        %1897 = vmatprep.subr.mxu0 0.0
        %1898 = vmatpush1.msra.mxu0 %v1002
        %1899 = vmatprep.subr.mxu0 0.0
        %1900 = vmatpush1.msra.mxu0 %v1007
        %1901 = vmatprep.subr.mxu0 0.0
        %1902 = vmatpush1.msra.mxu0 %v1012
        %1903 = vmatprep.subr.mxu0 0.0
        %1904 = vmatpush1.msra.mxu0 %v1017
        %1905 = vmatprep.subr.mxu0 0.0
        %1906 = vmatpush1.msra.mxu0 %v1022
        %1907 = vmatprep.subr.mxu0 0.0
        %1908 = vmatpush1.msra.mxu0 %v1027
        %1909 = vmatprep.subr.mxu0 0.0
        %1910 = vmatpush1.msra.mxu0 %v1032
        %1911 = vmatprep.subr.mxu0 0.0
        %1912 = vmatpush1.msra.mxu0 %v1037
        %1913 = vmatprep.subr.mxu0 0.0
        %1914 = vmatpush1.msra.mxu0 %v1042
        %1915 = vmatprep.subr.mxu0 0.0
        %1916 = vmatpush1.msra.mxu0 %v1047
        %1917 = vmatprep.subr.mxu0 0.0
        %1918 = vmatpush1.msra.mxu0 %v1052
        %1919 = vmatprep.subr.mxu0 0.0
        %1920 = vmatpush1.msra.mxu0 %v1057
        %1921 = vmatprep.mubr.f32.mxu0 %v1063
        %1922 = vmatmul.mubr.f32.gmra.mrb[0].mxu0 %v1062
        %v1923 = vpop.f32.mrb[0].mxu0
        %v1924 = vadd.f32 %v1784, %v1923
        %v1925 = vpop.f32.mrb[0].mxu0
        %1926 = vmatprep.mubr.f32.mxu0 %v1067
        %1927 = vmatmul.mubr.f32.gmra.mrb[0].mxu0 %v1066
        %v1928 = vpop.f32.mrb[0].mxu0
        %v1929 = vadd.f32 %v1789, %v1928
        %v1930 = vpop.f32.mrb[0].mxu0
        %1931 = vmatprep.mubr.f32.mxu0 %v1071
        %1932 = vmatmul.mubr.f32.gmra.mrb[0].mxu0 %v1070
        %v1933 = vpop.f32.mrb[0].mxu0
        %v1934 = vadd.f32 %v1794, %v1933
        %v1935 = vpop.f32.mrb[0].mxu0
        %1936 = vmatprep.mubr.f32.mxu0 %v1075
        %1937 = vmatmul.mubr.f32.gmra.mrb[0].mxu0 %v1074
        %v1938 = vpop.f32.mrb[0].mxu0
        %v1939 = vadd.f32 %v1799, %v1938
        %v1940 = vpop.f32.mrb[0].mxu0
        %1941 = vmatprep.mubr.f32.mxu0 %v1079
        %1942 = vmatmul.mubr.f32.gmra.mrb[0].mxu0 %v1078
        %v1943 = vpop.f32.mrb[0].mxu0
        %v1944 = vadd.f32 %v1804, %v1943
        %v1945 = vpop.f32.mrb[0].mxu0
        %1946 = vmatprep.mubr.f32.mxu0 %v1083
        %1947 = vmatmul.mubr.f32.gmra.mrb[0].mxu0 %v1082
        %v1948 = vpop.f32.mrb[0].mxu0
        %v1949 = vadd.f32 %v1809, %v1948
        %v1950 = vpop.f32.mrb[0].mxu0
        %1951 = vmatprep.mubr.f32.mxu0 %v1087
        %1952 = vmatmul.mubr.f32.gmra.mrb[0].mxu0 %v1086
        %v1953 = vpop.f32.mrb[0].mxu0
        %v1954 = vadd.f32 %v1814, %v1953
        %v1955 = vpop.f32.mrb[0].mxu0
        %1956 = vmatprep.mubr.f32.mxu0 %v1091
        %1957 = vmatmul.mubr.f32.gmra.mrb[0].mxu0 %v1090
        %v1958 = vpop.f32.mrb[0].mxu0
        %v1959 = vadd.f32 %v1819, %v1958
        %v1960 = vpop.f32.mrb[0].mxu0
        %1961 = vmatprep.mubr.f32.mxu0 %v1095
        %1962 = vmatmul.mubr.f32.gmra.mrb[0].mxu0 %v1094
        %v1963 = vpop.f32.mrb[0].mxu0
        %v1964 = vadd.f32 %v1824, %v1963
        %v1965 = vpop.f32.mrb[0].mxu0
        %1966 = vmatprep.mubr.f32.mxu0 %v1099
        %1967 = vmatmul.mubr.f32.gmra.mrb[0].mxu0 %v1098
        %v1968 = vpop.f32.mrb[0].mxu0
        %v1969 = vadd.f32 %v1829, %v1968
        %v1970 = vpop.f32.mrb[0].mxu0
        %1971 = vmatprep.mubr.f32.mxu0 %v1103
        %1972 = vmatmul.mubr.f32.gmra.mrb[0].mxu0 %v1102
        %v1973 = vpop.f32.mrb[0].mxu0
        %v1974 = vadd.f32 %v1834, %v1973
        %v1975 = vpop.f32.mrb[0].mxu0
        %1976 = vmatprep.mubr.f32.mxu0 %v1107
        %1977 = vmatmul.mubr.f32.gmra.mrb[0].mxu0 %v1106
        %v1978 = vpop.f32.mrb[0].mxu0
        %v1979 = vadd.f32 %v1839, %v1978
        %v1980 = vpop.f32.mrb[0].mxu0
        %1981 = vmatprep.mubr.f32.mxu0 %v1111
        %1982 = vmatmul.mubr.f32.gmra.mrb[0].mxu0 %v1110
        %v1983 = vpop.f32.mrb[0].mxu0
        %v1984 = vadd.f32 %v1844, %v1983
        %v1985 = vpop.f32.mrb[0].mxu0
        %1986 = vmatprep.mubr.f32.mxu0 %v1115
        %1987 = vmatmul.mubr.f32.gmra.mrb[0].mxu0 %v1114
        %v1988 = vpop.f32.mrb[0].mxu0
        %v1989 = vadd.f32 %v1849, %v1988
        %v1990 = vpop.f32.mrb[0].mxu0
        %1991 = vmatprep.mubr.f32.mxu0 %v1119
        %1992 = vmatmul.mubr.f32.gmra.mrb[0].mxu0 %v1118
        %v1993 = vpop.f32.mrb[0].mxu0
        %v1994 = vadd.f32 %v1854, %v1993
        %v1995 = vpop.f32.mrb[0].mxu0
        %1996 = vdwg.mxu0
        %s1997 = scalar_lea.vmem %s2, 960
        %v1998 = vld [vmem:[%s1997] sm:$0xff]
        %v1999 = vld [vmem:[%s1997 + $0x8] sm:$0xff]
        %v2000 = vld [vmem:[%s1997 + $0x10] sm:$0xff]
        %v2001 = vld [vmem:[%s1997 + $0x18] sm:$0xff]
        %v2002 = vld [vmem:[%s1997 + $0x20] sm:$0xff]
        %v2003 = vld [vmem:[%s1997 + $0x28] sm:$0xff]
        %v2004 = vld [vmem:[%s1997 + $0x30] sm:$0xff]
        %v2005 = vld [vmem:[%s1997 + $0x38] sm:$0xff]
        %v2006 = vld [vmem:[%s1997 + $0x40] sm:$0xff]
        %v2007 = vld [vmem:[%s1997 + $0x48] sm:$0xff]
        %v2008 = vld [vmem:[%s1997 + $0x50] sm:$0xff]
        %v2009 = vld [vmem:[%s1997 + $0x58] sm:$0xff]
        %v2010 = vld [vmem:[%s1997 + $0x60] sm:$0xff]
        %v2011 = vld [vmem:[%s1997 + $0x68] sm:$0xff]
        %v2012 = vld [vmem:[%s1997 + $0x70] sm:$0xff]
        %v2013 = vld [vmem:[%s1997 + $0x78] sm:$0xff]
        %v2014 = vld [vmem:[%s1997 + $0x80] sm:$0xff]
        %v2015 = vld [vmem:[%s1997 + $0x88] sm:$0xff]
        %v2016 = vld [vmem:[%s1997 + $0x90] sm:$0xff]
        %v2017 = vld [vmem:[%s1997 + $0x98] sm:$0xff]
        %v2018 = vld [vmem:[%s1997 + $0xa0] sm:$0xff]
        %v2019 = vld [vmem:[%s1997 + $0xa8] sm:$0xff]
        %v2020 = vld [vmem:[%s1997 + $0xb0] sm:$0xff]
        %v2021 = vld [vmem:[%s1997 + $0xb8] sm:$0xff]
        %v2022 = vld [vmem:[%s1997 + $0xc0] sm:$0xff]
        %v2023 = vld [vmem:[%s1997 + $0xc8] sm:$0xff]
        %v2024 = vld [vmem:[%s1997 + $0xd0] sm:$0xff]
        %v2025 = vld [vmem:[%s1997 + $0xd8] sm:$0xff]
        %v2026 = vld [vmem:[%s1997 + $0xe0] sm:$0xff]
        %v2027 = vld [vmem:[%s1997 + $0xe8] sm:$0xff]
        %v2028 = vld [vmem:[%s1997 + $0xf0] sm:$0xff]
        %v2029 = vld [vmem:[%s1997 + $0xf8] sm:$0xff]
        %v2030 = vld [vmem:[%s1997 + $0x100] sm:$0xff]
        %v2031 = vld [vmem:[%s1997 + $0x108] sm:$0xff]
        %v2032 = vld [vmem:[%s1997 + $0x110] sm:$0xff]
        %v2033 = vld [vmem:[%s1997 + $0x118] sm:$0xff]
        %v2034 = vld [vmem:[%s1997 + $0x120] sm:$0xff]
        %v2035 = vld [vmem:[%s1997 + $0x128] sm:$0xff]
        %v2036 = vld [vmem:[%s1997 + $0x130] sm:$0xff]
        %v2037 = vld [vmem:[%s1997 + $0x138] sm:$0xff]
        %v2038 = vld [vmem:[%s1997 + $0x140] sm:$0xff]
        %v2039 = vld [vmem:[%s1997 + $0x148] sm:$0xff]
        %v2040 = vld [vmem:[%s1997 + $0x150] sm:$0xff]
        %v2041 = vld [vmem:[%s1997 + $0x158] sm:$0xff]
        %v2042 = vld [vmem:[%s1997 + $0x160] sm:$0xff]
        %v2043 = vld [vmem:[%s1997 + $0x168] sm:$0xff]
        %v2044 = vld [vmem:[%s1997 + $0x170] sm:$0xff]
        %v2045 = vld [vmem:[%s1997 + $0x178] sm:$0xff]
        %v2046 = vld [vmem:[%s1997 + $0x180] sm:$0xff]
        %v2047 = vld [vmem:[%s1997 + $0x188] sm:$0xff]
        %v2048 = vld [vmem:[%s1997 + $0x190] sm:$0xff]
        %v2049 = vld [vmem:[%s1997 + $0x198] sm:$0xff]
        %v2050 = vld [vmem:[%s1997 + $0x1a0] sm:$0xff]
        %v2051 = vld [vmem:[%s1997 + $0x1a8] sm:$0xff]
        %v2052 = vld [vmem:[%s1997 + $0x1b0] sm:$0xff]
        %v2053 = vld [vmem:[%s1997 + $0x1b8] sm:$0xff]
        %v2054 = vld [vmem:[%s1997 + $0x1c0] sm:$0xff]
        %v2055 = vld [vmem:[%s1997 + $0x1c8] sm:$0xff]
        %v2056 = vld [vmem:[%s1997 + $0x1d0] sm:$0xff]
        %v2057 = vld [vmem:[%s1997 + $0x1d8] sm:$0xff]
        %2058 = vrot.lane.b32.xlu0 %v742, 98
        %v2059 = vpop.permute.xlu0 %2058
        %2060 = vrot.lane.b32.xlu0 %v747, 98
        %v2061 = vpop.permute.xlu0 %2060
        %2062 = vrot.lane.b32.xlu0 %v752, 98
        %v2063 = vpop.permute.xlu0 %2062
        %2064 = vrot.lane.b32.xlu0 %v757, 98
        %v2065 = vpop.permute.xlu0 %2064
        %2066 = vrot.lane.b32.xlu0 %v762, 98
        %v2067 = vpop.permute.xlu0 %2066
        %2068 = vrot.lane.b32.xlu0 %v767, 98
        %v2069 = vpop.permute.xlu0 %2068
        %2070 = vrot.lane.b32.xlu0 %v772, 98
        %v2071 = vpop.permute.xlu0 %2070
        %2072 = vrot.lane.b32.xlu0 %v777, 98
        %v2073 = vpop.permute.xlu0 %2072
        %2074 = vrot.lane.b32.xlu0 %v782, 98
        %v2075 = vpop.permute.xlu0 %2074
        %2076 = vrot.lane.b32.xlu0 %v787, 98
        %v2077 = vpop.permute.xlu0 %2076
        %2078 = vrot.lane.b32.xlu0 %v792, 98
        %v2079 = vpop.permute.xlu0 %2078
        %2080 = vrot.lane.b32.xlu0 %v797, 98
        %v2081 = vpop.permute.xlu0 %2080
        %2082 = vrot.lane.b32.xlu0 %v802, 98
        %v2083 = vpop.permute.xlu0 %2082
        %2084 = vrot.lane.b32.xlu0 %v807, 98
        %v2085 = vpop.permute.xlu0 %2084
        %2086 = vrot.lane.b32.xlu0 %v812, 98
        %v2087 = vpop.permute.xlu0 %2086
        %2088 = vrot.lane.b32.xlu0 %v817, 98
        %v2089 = vpop.permute.xlu0 %2088
        %2090 = vrot.lane.b32.xlu0 %v822, 98
        %v2091 = vpop.permute.xlu0 %2090
        %2092 = vrot.lane.b32.xlu0 %v827, 98
        %v2093 = vpop.permute.xlu0 %2092
        %2094 = vrot.lane.b32.xlu0 %v832, 98
        %v2095 = vpop.permute.xlu0 %2094
        %2096 = vrot.lane.b32.xlu0 %v837, 98
        %v2097 = vpop.permute.xlu0 %2096
        %2098 = vrot.lane.b32.xlu0 %v842, 98
        %v2099 = vpop.permute.xlu0 %2098
        %2100 = vrot.lane.b32.xlu0 %v847, 98
        %v2101 = vpop.permute.xlu0 %2100
        %2102 = vrot.lane.b32.xlu0 %v852, 98
        %v2103 = vpop.permute.xlu0 %2102
        %2104 = vrot.lane.b32.xlu0 %v857, 98
        %v2105 = vpop.permute.xlu0 %2104
        %2106 = vrot.lane.b32.xlu0 %v862, 98
        %v2107 = vpop.permute.xlu0 %2106
        %2108 = vrot.lane.b32.xlu0 %v867, 98
        %v2109 = vpop.permute.xlu0 %2108
        %2110 = vrot.lane.b32.xlu0 %v872, 98
        %v2111 = vpop.permute.xlu0 %2110
        %2112 = vrot.lane.b32.xlu0 %v877, 98
        %v2113 = vpop.permute.xlu0 %2112
        %2114 = vrot.lane.b32.xlu0 %v882, 98
        %v2115 = vpop.permute.xlu0 %2114
        %2116 = vrot.lane.b32.xlu0 %v887, 98
        %v2117 = vpop.permute.xlu0 %2116
        %2118 = vrot.lane.b32.xlu0 %v892, 98
        %v2119 = vpop.permute.xlu0 %2118
        %2120 = vrot.lane.b32.xlu0 %v897, 98
        %v2121 = vpop.permute.xlu0 %2120
        %2122 = vrot.lane.b32.xlu0 %v902, 98
        %v2123 = vpop.permute.xlu0 %2122
        %2124 = vrot.lane.b32.xlu0 %v907, 98
        %v2125 = vpop.permute.xlu0 %2124
        %2126 = vrot.lane.b32.xlu0 %v912, 98
        %v2127 = vpop.permute.xlu0 %2126
        %2128 = vrot.lane.b32.xlu0 %v917, 98
        %v2129 = vpop.permute.xlu0 %2128
        %2130 = vrot.lane.b32.xlu0 %v922, 98
        %v2131 = vpop.permute.xlu0 %2130
        %2132 = vrot.lane.b32.xlu0 %v927, 98
        %v2133 = vpop.permute.xlu0 %2132
        %2134 = vrot.lane.b32.xlu0 %v932, 98
        %v2135 = vpop.permute.xlu0 %2134
        %2136 = vrot.lane.b32.xlu0 %v937, 98
        %v2137 = vpop.permute.xlu0 %2136
        %2138 = vrot.lane.b32.xlu0 %v942, 98
        %v2139 = vpop.permute.xlu0 %2138
        %2140 = vrot.lane.b32.xlu0 %v947, 98
        %v2141 = vpop.permute.xlu0 %2140
        %2142 = vrot.lane.b32.xlu0 %v952, 98
        %v2143 = vpop.permute.xlu0 %2142
        %2144 = vrot.lane.b32.xlu0 %v957, 98
        %v2145 = vpop.permute.xlu0 %2144
        %2146 = vrot.lane.b32.xlu0 %v962, 98
        %v2147 = vpop.permute.xlu0 %2146
        %2148 = vrot.lane.b32.xlu0 %v967, 98
        %v2149 = vpop.permute.xlu0 %2148
        %2150 = vrot.lane.b32.xlu0 %v972, 98
        %v2151 = vpop.permute.xlu0 %2150
        %2152 = vrot.lane.b32.xlu0 %v977, 98
        %v2153 = vpop.permute.xlu0 %2152
        %2154 = vrot.lane.b32.xlu0 %v982, 98
        %v2155 = vpop.permute.xlu0 %2154
        %2156 = vrot.lane.b32.xlu0 %v987, 98
        %v2157 = vpop.permute.xlu0 %2156
        %2158 = vrot.lane.b32.xlu0 %v992, 98
        %v2159 = vpop.permute.xlu0 %2158
        %2160 = vrot.lane.b32.xlu0 %v997, 98
        %v2161 = vpop.permute.xlu0 %2160
        %2162 = vrot.lane.b32.xlu0 %v1002, 98
        %v2163 = vpop.permute.xlu0 %2162
        %2164 = vrot.lane.b32.xlu0 %v1007, 98
        %v2165 = vpop.permute.xlu0 %2164
        %2166 = vrot.lane.b32.xlu0 %v1012, 98
        %v2167 = vpop.permute.xlu0 %2166
        %2168 = vrot.lane.b32.xlu0 %v1017, 98
        %v2169 = vpop.permute.xlu0 %2168
        %2170 = vrot.lane.b32.xlu0 %v1022, 98
        %v2171 = vpop.permute.xlu0 %2170
        %2172 = vrot.lane.b32.xlu0 %v1027, 98
        %v2173 = vpop.permute.xlu0 %2172
        %2174 = vrot.lane.b32.xlu0 %v1032, 98
        %v2175 = vpop.permute.xlu0 %2174
        %2176 = vrot.lane.b32.xlu0 %v1037, 98
        %v2177 = vpop.permute.xlu0 %2176
        %2178 = vrot.lane.b32.xlu0 %v1042, 98
        %v2179 = vpop.permute.xlu0 %2178
        %2180 = vrot.lane.b32.xlu0 %v1047, 98
        %v2181 = vpop.permute.xlu0 %2180
        %2182 = vrot.lane.b32.xlu0 %v1052, 98
        %v2183 = vpop.permute.xlu0 %2182
        %2184 = vrot.lane.b32.xlu0 %v1057, 98
        %v2185 = vpop.permute.xlu0 %2184
        %2250 = vmatprep.subr.mxu0 0.0
        %2251 = vmatpush1.msra.mxu0 %v2059
        %2252 = vmatprep.subr.mxu0 0.0
        %2253 = vmatpush1.msra.mxu0 %v2061
        %2254 = vmatprep.subr.mxu0 0.0
        %2255 = vmatpush1.msra.mxu0 %v2063
        %2256 = vmatprep.subr.mxu0 0.0
        %2257 = vmatpush1.msra.mxu0 %v2065
        %2258 = vmatprep.subr.mxu0 0.0
        %2259 = vmatpush1.msra.mxu0 %v2067
        %2260 = vmatprep.subr.mxu0 0.0
        %2261 = vmatpush1.msra.mxu0 %v2069
        %2262 = vmatprep.subr.mxu0 0.0
        %2263 = vmatpush1.msra.mxu0 %v2071
        %2264 = vmatprep.subr.mxu0 0.0
        %2265 = vmatpush1.msra.mxu0 %v2073
        %2266 = vmatprep.subr.mxu0 0.0
        %2267 = vmatpush1.msra.mxu0 %v2075
        %2268 = vmatprep.subr.mxu0 0.0
        %2269 = vmatpush1.msra.mxu0 %v2077
        %2270 = vmatprep.subr.mxu0 0.0
        %2271 = vmatpush1.msra.mxu0 %v2079
        %2272 = vmatprep.subr.mxu0 0.0
        %2273 = vmatpush1.msra.mxu0 %v2081
        %2274 = vmatprep.subr.mxu0 0.0
        %2275 = vmatpush1.msra.mxu0 %v2083
        %2276 = vmatprep.subr.mxu0 0.0
        %2277 = vmatpush1.msra.mxu0 %v2085
        %2278 = vmatprep.subr.mxu0 0.0
        %2279 = vmatpush1.msra.mxu0 %v2087
        %2280 = vmatprep.subr.mxu0 0.0
        %2281 = vmatpush1.msra.mxu0 %v2089
        %2282 = vmatprep.subr.mxu0 0.0
        %2283 = vmatpush1.msra.mxu0 %v2091
        %2284 = vmatprep.subr.mxu0 0.0
        %2285 = vmatpush1.msra.mxu0 %v2093
        %2286 = vmatprep.subr.mxu0 0.0
        %2287 = vmatpush1.msra.mxu0 %v2095
        %2288 = vmatprep.subr.mxu0 0.0
        %2289 = vmatpush1.msra.mxu0 %v2097
        %2290 = vmatprep.subr.mxu0 0.0
        %2291 = vmatpush1.msra.mxu0 %v2099
        %2292 = vmatprep.subr.mxu0 0.0
        %2293 = vmatpush1.msra.mxu0 %v2101
        %2294 = vmatprep.subr.mxu0 0.0
        %2295 = vmatpush1.msra.mxu0 %v2103
        %2296 = vmatprep.subr.mxu0 0.0
        %2297 = vmatpush1.msra.mxu0 %v2105
        %2298 = vmatprep.subr.mxu0 0.0
        %2299 = vmatpush1.msra.mxu0 %v2107
        %2300 = vmatprep.subr.mxu0 0.0
        %2301 = vmatpush1.msra.mxu0 %v2109
        %2302 = vmatprep.subr.mxu0 0.0
        %2303 = vmatpush1.msra.mxu0 %v2111
        %2304 = vmatprep.subr.mxu0 0.0
        %2305 = vmatpush1.msra.mxu0 %v2113
        %2306 = vmatprep.subr.mxu0 0.0
        %2307 = vmatpush1.msra.mxu0 %v2115
        %2308 = vmatprep.subr.mxu0 0.0
        %2309 = vmatpush1.msra.mxu0 %v2117
        %2310 = vmatprep.subr.mxu0 0.0
        %2311 = vmatpush1.msra.mxu0 %v2119
        %2312 = vmatprep.subr.mxu0 0.0
        %2313 = vmatpush1.msra.mxu0 %v2121
        %2314 = vmatprep.mubr.f32.mxu0 %v1999
        %2315 = vmatmul.mubr.f32.gmra.mrb[0].mxu0 %v1998
        %v2316 = vpop.f32.mrb[0].mxu0
        %v2317 = vadd.f32 0.0, %v2316
        %v2318 = vpop.f32.mrb[0].mxu0
        %2319 = vmatprep.mubr.f32.mxu0 %v2003
        %2320 = vmatmul.mubr.f32.gmra.mrb[0].mxu0 %v2002
        %v2321 = vpop.f32.mrb[0].mxu0
        %v2322 = vadd.f32 0.0, %v2321
        %v2323 = vpop.f32.mrb[0].mxu0
        %2324 = vmatprep.mubr.f32.mxu0 %v2007
        %2325 = vmatmul.mubr.f32.gmra.mrb[0].mxu0 %v2006
        %v2326 = vpop.f32.mrb[0].mxu0
        %v2327 = vadd.f32 0.0, %v2326
        %v2328 = vpop.f32.mrb[0].mxu0
        %2329 = vmatprep.mubr.f32.mxu0 %v2011
        %2330 = vmatmul.mubr.f32.gmra.mrb[0].mxu0 %v2010
        %v2331 = vpop.f32.mrb[0].mxu0
        %v2332 = vadd.f32 0.0, %v2331
        %v2333 = vpop.f32.mrb[0].mxu0
        %2334 = vmatprep.mubr.f32.mxu0 %v2015
        %2335 = vmatmul.mubr.f32.gmra.mrb[0].mxu0 %v2014
        %v2336 = vpop.f32.mrb[0].mxu0
        %v2337 = vadd.f32 0.0, %v2336
        %v2338 = vpop.f32.mrb[0].mxu0
        %2339 = vmatprep.mubr.f32.mxu0 %v2019
        %2340 = vmatmul.mubr.f32.gmra.mrb[0].mxu0 %v2018
        %v2341 = vpop.f32.mrb[0].mxu0
        %v2342 = vadd.f32 0.0, %v2341
        %v2343 = vpop.f32.mrb[0].mxu0
        %2344 = vmatprep.mubr.f32.mxu0 %v2023
        %2345 = vmatmul.mubr.f32.gmra.mrb[0].mxu0 %v2022
        %v2346 = vpop.f32.mrb[0].mxu0
        %v2347 = vadd.f32 0.0, %v2346
        %v2348 = vpop.f32.mrb[0].mxu0
        %2349 = vmatprep.mubr.f32.mxu0 %v2027
        %2350 = vmatmul.mubr.f32.gmra.mrb[0].mxu0 %v2026
        %v2351 = vpop.f32.mrb[0].mxu0
        %v2352 = vadd.f32 0.0, %v2351
        %v2353 = vpop.f32.mrb[0].mxu0
        %2354 = vmatprep.mubr.f32.mxu0 %v2031
        %2355 = vmatmul.mubr.f32.gmra.mrb[0].mxu0 %v2030
        %v2356 = vpop.f32.mrb[0].mxu0
        %v2357 = vadd.f32 0.0, %v2356
        %v2358 = vpop.f32.mrb[0].mxu0
        %2359 = vmatprep.mubr.f32.mxu0 %v2035
        %2360 = vmatmul.mubr.f32.gmra.mrb[0].mxu0 %v2034
        %v2361 = vpop.f32.mrb[0].mxu0
        %v2362 = vadd.f32 0.0, %v2361
        %v2363 = vpop.f32.mrb[0].mxu0
        %2364 = vmatprep.mubr.f32.mxu0 %v2039
        %2365 = vmatmul.mubr.f32.gmra.mrb[0].mxu0 %v2038
        %v2366 = vpop.f32.mrb[0].mxu0
        %v2367 = vadd.f32 0.0, %v2366
        %v2368 = vpop.f32.mrb[0].mxu0
        %2369 = vmatprep.mubr.f32.mxu0 %v2043
        %2370 = vmatmul.mubr.f32.gmra.mrb[0].mxu0 %v2042
        %v2371 = vpop.f32.mrb[0].mxu0
        %v2372 = vadd.f32 0.0, %v2371
        %v2373 = vpop.f32.mrb[0].mxu0
        %2374 = vmatprep.mubr.f32.mxu0 %v2047
        %2375 = vmatmul.mubr.f32.gmra.mrb[0].mxu0 %v2046
        %v2376 = vpop.f32.mrb[0].mxu0
        %v2377 = vadd.f32 0.0, %v2376
        %v2378 = vpop.f32.mrb[0].mxu0
        %2379 = vmatprep.mubr.f32.mxu0 %v2051
        %2380 = vmatmul.mubr.f32.gmra.mrb[0].mxu0 %v2050
        %v2381 = vpop.f32.mrb[0].mxu0
        %v2382 = vadd.f32 0.0, %v2381
        %v2383 = vpop.f32.mrb[0].mxu0
        %2384 = vmatprep.mubr.f32.mxu0 %v2055
        %2385 = vmatmul.mubr.f32.gmra.mrb[0].mxu0 %v2054
        %v2386 = vpop.f32.mrb[0].mxu0
        %v2387 = vadd.f32 0.0, %v2386
        %v2388 = vpop.f32.mrb[0].mxu0
        %2389 = vdwg.mxu0
        %2390 = vmatprep.subr.mxu0 0.0
        %2391 = vmatpush1.msra.mxu0 %v2123
        %2392 = vmatprep.subr.mxu0 0.0
        %2393 = vmatpush1.msra.mxu0 %v2125
        %2394 = vmatprep.subr.mxu0 0.0
        %2395 = vmatpush1.msra.mxu0 %v2127
        %2396 = vmatprep.subr.mxu0 0.0
        %2397 = vmatpush1.msra.mxu0 %v2129
        %2398 = vmatprep.subr.mxu0 0.0
        %2399 = vmatpush1.msra.mxu0 %v2131
        %2400 = vmatprep.subr.mxu0 0.0
        %2401 = vmatpush1.msra.mxu0 %v2133
        %2402 = vmatprep.subr.mxu0 0.0
        %2403 = vmatpush1.msra.mxu0 %v2135
        %2404 = vmatprep.subr.mxu0 0.0
        %2405 = vmatpush1.msra.mxu0 %v2137
        %2406 = vmatprep.subr.mxu0 0.0
        %2407 = vmatpush1.msra.mxu0 %v2139
        %2408 = vmatprep.subr.mxu0 0.0
        %2409 = vmatpush1.msra.mxu0 %v2141
        %2410 = vmatprep.subr.mxu0 0.0
        %2411 = vmatpush1.msra.mxu0 %v2143
        %2412 = vmatprep.subr.mxu0 0.0
        %2413 = vmatpush1.msra.mxu0 %v2145
        %2414 = vmatprep.subr.mxu0 0.0
        %2415 = vmatpush1.msra.mxu0 %v2147
        %2416 = vmatprep.subr.mxu0 0.0
        %2417 = vmatpush1.msra.mxu0 %v2149
        %2418 = vmatprep.subr.mxu0 0.0
        %2419 = vmatpush1.msra.mxu0 %v2151
        %2420 = vmatprep.subr.mxu0 0.0
        %2421 = vmatpush1.msra.mxu0 %v2153
        %2422 = vmatprep.subr.mxu0 0.0
        %2423 = vmatpush1.msra.mxu0 %v2155
        %2424 = vmatprep.subr.mxu0 0.0
        %2425 = vmatpush1.msra.mxu0 %v2157
        %2426 = vmatprep.subr.mxu0 0.0
        %2427 = vmatpush1.msra.mxu0 %v2159
        %2428 = vmatprep.subr.mxu0 0.0
        %2429 = vmatpush1.msra.mxu0 %v2161
        %2430 = vmatprep.subr.mxu0 0.0
        %2431 = vmatpush1.msra.mxu0 %v2163
        %2432 = vmatprep.subr.mxu0 0.0
        %2433 = vmatpush1.msra.mxu0 %v2165
        %2434 = vmatprep.subr.mxu0 0.0
        %2435 = vmatpush1.msra.mxu0 %v2167
        %2436 = vmatprep.subr.mxu0 0.0
        %2437 = vmatpush1.msra.mxu0 %v2169
        %2438 = vmatprep.subr.mxu0 0.0
        %2439 = vmatpush1.msra.mxu0 %v2171
        %2440 = vmatprep.subr.mxu0 0.0
        %2441 = vmatpush1.msra.mxu0 %v2173
        %2442 = vmatprep.subr.mxu0 0.0
        %2443 = vmatpush1.msra.mxu0 %v2175
        %2444 = vmatprep.subr.mxu0 0.0
        %2445 = vmatpush1.msra.mxu0 %v2177
        %2446 = vmatprep.subr.mxu0 0.0
        %2447 = vmatpush1.msra.mxu0 %v2179
        %2448 = vmatprep.subr.mxu0 0.0
        %2449 = vmatpush1.msra.mxu0 %v2181
        %2450 = vmatprep.subr.mxu0 0.0
        %2451 = vmatpush1.msra.mxu0 %v2183
        %2452 = vmatprep.subr.mxu0 0.0
        %2453 = vmatpush1.msra.mxu0 %v2185
        %2454 = vmatprep.mubr.f32.mxu0 %v2001
        %2455 = vmatmul.mubr.f32.gmra.mrb[0].mxu0 %v2000
        %v2456 = vpop.f32.mrb[0].mxu0
        %v2457 = vadd.f32 %v2317, %v2456
        %v2458 = vpop.f32.mrb[0].mxu0
        %2459 = vmatprep.mubr.f32.mxu0 %v2005
        %2460 = vmatmul.mubr.f32.gmra.mrb[0].mxu0 %v2004
        %v2461 = vpop.f32.mrb[0].mxu0
        %v2462 = vadd.f32 %v2322, %v2461
        %v2463 = vpop.f32.mrb[0].mxu0
        %2464 = vmatprep.mubr.f32.mxu0 %v2009
        %2465 = vmatmul.mubr.f32.gmra.mrb[0].mxu0 %v2008
        %v2466 = vpop.f32.mrb[0].mxu0
        %v2467 = vadd.f32 %v2327, %v2466
        %v2468 = vpop.f32.mrb[0].mxu0
        %2469 = vmatprep.mubr.f32.mxu0 %v2013
        %2470 = vmatmul.mubr.f32.gmra.mrb[0].mxu0 %v2012
        %v2471 = vpop.f32.mrb[0].mxu0
        %v2472 = vadd.f32 %v2332, %v2471
        %v2473 = vpop.f32.mrb[0].mxu0
        %2474 = vmatprep.mubr.f32.mxu0 %v2017
        %2475 = vmatmul.mubr.f32.gmra.mrb[0].mxu0 %v2016
        %v2476 = vpop.f32.mrb[0].mxu0
        %v2477 = vadd.f32 %v2337, %v2476
        %v2478 = vpop.f32.mrb[0].mxu0
        %2479 = vmatprep.mubr.f32.mxu0 %v2021
        %2480 = vmatmul.mubr.f32.gmra.mrb[0].mxu0 %v2020
        %v2481 = vpop.f32.mrb[0].mxu0
        %v2482 = vadd.f32 %v2342, %v2481
        %v2483 = vpop.f32.mrb[0].mxu0
        %2484 = vmatprep.mubr.f32.mxu0 %v2025
        %2485 = vmatmul.mubr.f32.gmra.mrb[0].mxu0 %v2024
        %v2486 = vpop.f32.mrb[0].mxu0
        %v2487 = vadd.f32 %v2347, %v2486
        %v2488 = vpop.f32.mrb[0].mxu0
        %2489 = vmatprep.mubr.f32.mxu0 %v2029
        %2490 = vmatmul.mubr.f32.gmra.mrb[0].mxu0 %v2028
        %v2491 = vpop.f32.mrb[0].mxu0
        %v2492 = vadd.f32 %v2352, %v2491
        %v2493 = vpop.f32.mrb[0].mxu0
        %2494 = vmatprep.mubr.f32.mxu0 %v2033
        %2495 = vmatmul.mubr.f32.gmra.mrb[0].mxu0 %v2032
        %v2496 = vpop.f32.mrb[0].mxu0
        %v2497 = vadd.f32 %v2357, %v2496
        %v2498 = vpop.f32.mrb[0].mxu0
        %2499 = vmatprep.mubr.f32.mxu0 %v2037
        %2500 = vmatmul.mubr.f32.gmra.mrb[0].mxu0 %v2036
        %v2501 = vpop.f32.mrb[0].mxu0
        %v2502 = vadd.f32 %v2362, %v2501
        %v2503 = vpop.f32.mrb[0].mxu0
        %2504 = vmatprep.mubr.f32.mxu0 %v2041
        %2505 = vmatmul.mubr.f32.gmra.mrb[0].mxu0 %v2040
        %v2506 = vpop.f32.mrb[0].mxu0
        %v2507 = vadd.f32 %v2367, %v2506
        %v2508 = vpop.f32.mrb[0].mxu0
        %2509 = vmatprep.mubr.f32.mxu0 %v2045
        %2510 = vmatmul.mubr.f32.gmra.mrb[0].mxu0 %v2044
        %v2511 = vpop.f32.mrb[0].mxu0
        %v2512 = vadd.f32 %v2372, %v2511
        %v2513 = vpop.f32.mrb[0].mxu0
        %2514 = vmatprep.mubr.f32.mxu0 %v2049
        %2515 = vmatmul.mubr.f32.gmra.mrb[0].mxu0 %v2048
        %v2516 = vpop.f32.mrb[0].mxu0
        %v2517 = vadd.f32 %v2377, %v2516
        %v2518 = vpop.f32.mrb[0].mxu0
        %2519 = vmatprep.mubr.f32.mxu0 %v2053
        %2520 = vmatmul.mubr.f32.gmra.mrb[0].mxu0 %v2052
        %v2521 = vpop.f32.mrb[0].mxu0
        %v2522 = vadd.f32 %v2382, %v2521
        %v2523 = vpop.f32.mrb[0].mxu0
        %2524 = vmatprep.mubr.f32.mxu0 %v2057
        %2525 = vmatmul.mubr.f32.gmra.mrb[0].mxu0 %v2056
        %v2526 = vpop.f32.mrb[0].mxu0
        %v2527 = vadd.f32 %v2387, %v2526
        %v2528 = vpop.f32.mrb[0].mxu0
        %2529 = vdwg.mxu0
        %v2530 = vadd.f32 %v1924, %v2457
        %v2531 = vadd.f32 %v1929, %v2462
        %v2532 = vadd.f32 %v1934, %v2467
        %v2533 = vadd.f32 %v1939, %v2472
        %v2534 = vadd.f32 %v1944, %v2477
        %v2535 = vadd.f32 %v1949, %v2482
        %v2536 = vadd.f32 %v1954, %v2487
        %v2537 = vadd.f32 %v1959, %v2492
        %v2538 = vadd.f32 %v1964, %v2497
        %v2539 = vadd.f32 %v1969, %v2502
        %v2540 = vadd.f32 %v1974, %v2507
        %v2541 = vadd.f32 %v1979, %v2512
        %v2542 = vadd.f32 %v1984, %v2517
        %v2543 = vadd.f32 %v1989, %v2522
        %v2544 = vadd.f32 %v1994, %v2527
        %v2545 = vld [vmem:[%s3] sm:$0xff]
        %v2546 = vld [vmem:[%s3 + $0x8] sm:$0xff]
        %v2547 = vld [vmem:[%s3 + $0x10] sm:$0xff]
        %v2548 = vld [vmem:[%s3 + $0x18] sm:$0xff]
        %v2549 = vld [vmem:[%s3 + $0x20] sm:$0xff]
        %v2550 = vld [vmem:[%s3 + $0x28] sm:$0xff]
        %v2551 = vld [vmem:[%s3 + $0x30] sm:$0xff]
        %v2552 = vld [vmem:[%s3 + $0x38] sm:$0xff]
        %v2553 = vld [vmem:[%s3 + $0x40] sm:$0xff]
        %v2554 = vld [vmem:[%s3 + $0x48] sm:$0xff]
        %v2555 = vld [vmem:[%s3 + $0x50] sm:$0xff]
        %v2556 = vld [vmem:[%s3 + $0x58] sm:$0xff]
        %v2557 = vld [vmem:[%s3 + $0x60] sm:$0xff]
        %v2558 = vld [vmem:[%s3 + $0x68] sm:$0xff]
        %v2559 = vld [vmem:[%s3 + $0x70] sm:$0xff]
        %2561 = vset.pattern.permute.xlu0 0
        %2562 = vperm.xlu0 %2561, %v2545
        %v2563 = vpop.permute.xlu0 %2562
        %2566 = vset.pattern.permute.xlu0 0
        %2567 = vperm.xlu0 %2566, %v2546
        %v2568 = vpop.permute.xlu0 %2567
        %2571 = vset.pattern.permute.xlu0 0
        %2572 = vperm.xlu0 %2571, %v2547
        %v2573 = vpop.permute.xlu0 %2572
        %2576 = vset.pattern.permute.xlu0 0
        %2577 = vperm.xlu0 %2576, %v2548
        %v2578 = vpop.permute.xlu0 %2577
        %2581 = vset.pattern.permute.xlu0 0
        %2582 = vperm.xlu0 %2581, %v2549
        %v2583 = vpop.permute.xlu0 %2582
        %2586 = vset.pattern.permute.xlu0 0
        %2587 = vperm.xlu0 %2586, %v2550
        %v2588 = vpop.permute.xlu0 %2587
        %2591 = vset.pattern.permute.xlu0 0
        %2592 = vperm.xlu0 %2591, %v2551
        %v2593 = vpop.permute.xlu0 %2592
        %2596 = vset.pattern.permute.xlu0 0
        %2597 = vperm.xlu0 %2596, %v2552
        %v2598 = vpop.permute.xlu0 %2597
        %2601 = vset.pattern.permute.xlu0 0
        %2602 = vperm.xlu0 %2601, %v2553
        %v2603 = vpop.permute.xlu0 %2602
        %2606 = vset.pattern.permute.xlu0 0
        %2607 = vperm.xlu0 %2606, %v2554
        %v2608 = vpop.permute.xlu0 %2607
        %2611 = vset.pattern.permute.xlu0 0
        %2612 = vperm.xlu0 %2611, %v2555
        %v2613 = vpop.permute.xlu0 %2612
        %2616 = vset.pattern.permute.xlu0 0
        %2617 = vperm.xlu0 %2616, %v2556
        %v2618 = vpop.permute.xlu0 %2617
        %2621 = vset.pattern.permute.xlu0 0
        %2622 = vperm.xlu0 %2621, %v2557
        %v2623 = vpop.permute.xlu0 %2622
        %2626 = vset.pattern.permute.xlu0 0
        %2627 = vperm.xlu0 %2626, %v2558
        %v2628 = vpop.permute.xlu0 %2627
        %2631 = vset.pattern.permute.xlu0 0
        %2632 = vperm.xlu0 %2631, %v2559
        %v2633 = vpop.permute.xlu0 %2632
        %v2635 = vadd.f32 %v2530, %v2563
        %v2636 = vadd.f32 %v2531, %v2568
        %v2637 = vadd.f32 %v2532, %v2573
        %v2638 = vadd.f32 %v2533, %v2578
        %v2639 = vadd.f32 %v2534, %v2583
        %v2640 = vadd.f32 %v2535, %v2588
        %v2641 = vadd.f32 %v2536, %v2593
        %v2642 = vadd.f32 %v2537, %v2598
        %v2643 = vadd.f32 %v2538, %v2603
        %v2644 = vadd.f32 %v2539, %v2608
        %v2645 = vadd.f32 %v2540, %v2613
        %v2646 = vadd.f32 %v2541, %v2618
        %v2647 = vadd.f32 %v2542, %v2623
        %v2648 = vadd.f32 %v2543, %v2628
        %v2649 = vadd.f32 %v2544, %v2633
        %vm2650 = vcmask 56320
        %v2651 = vsel %vm2650, %v2635, -inf
        %2652 = vmax.xlane.f32.xlu0 %v2651
        %v2653 = vpop.xlane.xlu0 %2652
        %v2654 = vsel %vm2650, %v2636, -inf
        %2655 = vmax.xlane.f32.xlu0 %v2654
        %v2656 = vpop.xlane.xlu0 %2655
        %v2657 = vsel %vm2650, %v2637, -inf
        %2658 = vmax.xlane.f32.xlu0 %v2657
        %v2659 = vpop.xlane.xlu0 %2658
        %v2660 = vsel %vm2650, %v2638, -inf
        %2661 = vmax.xlane.f32.xlu0 %v2660
        %v2662 = vpop.xlane.xlu0 %2661
        %v2663 = vsel %vm2650, %v2639, -inf
        %2664 = vmax.xlane.f32.xlu0 %v2663
        %v2665 = vpop.xlane.xlu0 %2664
        %v2666 = vsel %vm2650, %v2640, -inf
        %2667 = vmax.xlane.f32.xlu0 %v2666
        %v2668 = vpop.xlane.xlu0 %2667
        %v2669 = vsel %vm2650, %v2641, -inf
        %2670 = vmax.xlane.f32.xlu0 %v2669
        %v2671 = vpop.xlane.xlu0 %2670
        %v2672 = vsel %vm2650, %v2642, -inf
        %2673 = vmax.xlane.f32.xlu0 %v2672
        %v2674 = vpop.xlane.xlu0 %2673
        %v2675 = vsel %vm2650, %v2643, -inf
        %2676 = vmax.xlane.f32.xlu0 %v2675
        %v2677 = vpop.xlane.xlu0 %2676
        %v2678 = vsel %vm2650, %v2644, -inf
        %2679 = vmax.xlane.f32.xlu0 %v2678
        %v2680 = vpop.xlane.xlu0 %2679
        %v2681 = vsel %vm2650, %v2645, -inf
        %2682 = vmax.xlane.f32.xlu0 %v2681
        %v2683 = vpop.xlane.xlu0 %2682
        %v2684 = vsel %vm2650, %v2646, -inf
        %2685 = vmax.xlane.f32.xlu0 %v2684
        %v2686 = vpop.xlane.xlu0 %2685
        %v2687 = vsel %vm2650, %v2647, -inf
        %2688 = vmax.xlane.f32.xlu0 %v2687
        %v2689 = vpop.xlane.xlu0 %2688
        %v2690 = vsel %vm2650, %v2648, -inf
        %2691 = vmax.xlane.f32.xlu0 %v2690
        %v2692 = vpop.xlane.xlu0 %2691
        %v2693 = vsel %vm2650, %v2649, -inf
        %2694 = vmax.xlane.f32.xlu0 %v2693
        %v2695 = vpop.xlane.xlu0 %2694
        %vm2696 = vcmask 80920
        %v2697 = vsel %vm2696, %v2635, -inf
        %2698 = vmax.xlane.f32.xlu0 %v2697
        %v2699 = vpop.xlane.xlu0 %2698
        %v2700 = vsel %vm2696, %v2636, -inf
        %2701 = vmax.xlane.f32.xlu0 %v2700
        %v2702 = vpop.xlane.xlu0 %2701
        %v2703 = vsel %vm2696, %v2637, -inf
        %2704 = vmax.xlane.f32.xlu0 %v2703
        %v2705 = vpop.xlane.xlu0 %2704
        %v2706 = vsel %vm2696, %v2638, -inf
        %2707 = vmax.xlane.f32.xlu0 %v2706
        %v2708 = vpop.xlane.xlu0 %2707
        %v2709 = vsel %vm2696, %v2639, -inf
        %2710 = vmax.xlane.f32.xlu0 %v2709
        %v2711 = vpop.xlane.xlu0 %2710
        %v2712 = vsel %vm2696, %v2640, -inf
        %2713 = vmax.xlane.f32.xlu0 %v2712
        %v2714 = vpop.xlane.xlu0 %2713
        %v2715 = vsel %vm2696, %v2641, -inf
        %2716 = vmax.xlane.f32.xlu0 %v2715
        %v2717 = vpop.xlane.xlu0 %2716
        %v2718 = vsel %vm2696, %v2642, -inf
        %2719 = vmax.xlane.f32.xlu0 %v2718
        %v2720 = vpop.xlane.xlu0 %2719
        %v2721 = vsel %vm2696, %v2643, -inf
        %2722 = vmax.xlane.f32.xlu0 %v2721
        %v2723 = vpop.xlane.xlu0 %2722
        %v2724 = vsel %vm2696, %v2644, -inf
        %2725 = vmax.xlane.f32.xlu0 %v2724
        %v2726 = vpop.xlane.xlu0 %2725
        %v2727 = vsel %vm2696, %v2645, -inf
        %2728 = vmax.xlane.f32.xlu0 %v2727
        %v2729 = vpop.xlane.xlu0 %2728
        %v2730 = vsel %vm2696, %v2646, -inf
        %2731 = vmax.xlane.f32.xlu0 %v2730
        %v2732 = vpop.xlane.xlu0 %2731
        %v2733 = vsel %vm2696, %v2647, -inf
        %2734 = vmax.xlane.f32.xlu0 %v2733
        %v2735 = vpop.xlane.xlu0 %2734
        %v2736 = vsel %vm2696, %v2648, -inf
        %2737 = vmax.xlane.f32.xlu0 %v2736
        %v2738 = vpop.xlane.xlu0 %2737
        %v2739 = vsel %vm2696, %v2649, -inf
        %2740 = vmax.xlane.f32.xlu0 %v2739
        %v2741 = vpop.xlane.xlu0 %2740
        %vm2742 = vcmask 105520
        %v2743 = vsel %vm2742, %v2635, -inf
        %2744 = vmax.xlane.f32.xlu0 %v2743
        %v2745 = vpop.xlane.xlu0 %2744
        %v2746 = vsel %vm2742, %v2636, -inf
        %2747 = vmax.xlane.f32.xlu0 %v2746
        %v2748 = vpop.xlane.xlu0 %2747
        %v2749 = vsel %vm2742, %v2637, -inf
        %2750 = vmax.xlane.f32.xlu0 %v2749
        %v2751 = vpop.xlane.xlu0 %2750
        %v2752 = vsel %vm2742, %v2638, -inf
        %2753 = vmax.xlane.f32.xlu0 %v2752
        %v2754 = vpop.xlane.xlu0 %2753
        %v2755 = vsel %vm2742, %v2639, -inf
        %2756 = vmax.xlane.f32.xlu0 %v2755
        %v2757 = vpop.xlane.xlu0 %2756
        %v2758 = vsel %vm2742, %v2640, -inf
        %2759 = vmax.xlane.f32.xlu0 %v2758
        %v2760 = vpop.xlane.xlu0 %2759
        %v2761 = vsel %vm2742, %v2641, -inf
        %2762 = vmax.xlane.f32.xlu0 %v2761
        %v2763 = vpop.xlane.xlu0 %2762
        %v2764 = vsel %vm2742, %v2642, -inf
        %2765 = vmax.xlane.f32.xlu0 %v2764
        %v2766 = vpop.xlane.xlu0 %2765
        %v2767 = vsel %vm2742, %v2643, -inf
        %2768 = vmax.xlane.f32.xlu0 %v2767
        %v2769 = vpop.xlane.xlu0 %2768
        %v2770 = vsel %vm2742, %v2644, -inf
        %2771 = vmax.xlane.f32.xlu0 %v2770
        %v2772 = vpop.xlane.xlu0 %2771
        %v2773 = vsel %vm2742, %v2645, -inf
        %2774 = vmax.xlane.f32.xlu0 %v2773
        %v2775 = vpop.xlane.xlu0 %2774
        %v2776 = vsel %vm2742, %v2646, -inf
        %2777 = vmax.xlane.f32.xlu0 %v2776
        %v2778 = vpop.xlane.xlu0 %2777
        %v2779 = vsel %vm2742, %v2647, -inf
        %2780 = vmax.xlane.f32.xlu0 %v2779
        %v2781 = vpop.xlane.xlu0 %2780
        %v2782 = vsel %vm2742, %v2648, -inf
        %2783 = vmax.xlane.f32.xlu0 %v2782
        %v2784 = vpop.xlane.xlu0 %2783
        %v2785 = vsel %vm2742, %v2649, -inf
        %2786 = vmax.xlane.f32.xlu0 %v2785
        %v2787 = vpop.xlane.xlu0 %2786
        %vm2788 = vcmask 7168
        %v2789 = vsel %vm2788, %v2653, %v2699
        %v2790 = vsel %vm2788, %v2656, %v2702
        %v2791 = vsel %vm2788, %v2659, %v2705
        %v2792 = vsel %vm2788, %v2662, %v2708
        %v2793 = vsel %vm2788, %v2665, %v2711
        %v2794 = vsel %vm2788, %v2668, %v2714
        %v2795 = vsel %vm2788, %v2671, %v2717
        %v2796 = vsel %vm2788, %v2674, %v2720
        %v2797 = vsel %vm2788, %v2677, %v2723
        %v2798 = vsel %vm2788, %v2680, %v2726
        %v2799 = vsel %vm2788, %v2683, %v2729
        %v2800 = vsel %vm2788, %v2686, %v2732
        %v2801 = vsel %vm2788, %v2689, %v2735
        %v2802 = vsel %vm2788, %v2692, %v2738
        %v2803 = vsel %vm2788, %v2695, %v2741
        %vm2804 = vcmask 15360
        %v2805 = vsel %vm2804, %v2789, %v2745
        %v2806 = vsel %vm2804, %v2790, %v2748
        %v2807 = vsel %vm2804, %v2791, %v2751
        %v2808 = vsel %vm2804, %v2792, %v2754
        %v2809 = vsel %vm2804, %v2793, %v2757
        %v2810 = vsel %vm2804, %v2794, %v2760
        %v2811 = vsel %vm2804, %v2795, %v2763
        %v2812 = vsel %vm2804, %v2796, %v2766
        %v2813 = vsel %vm2804, %v2797, %v2769
        %v2814 = vsel %vm2804, %v2798, %v2772
        %v2815 = vsel %vm2804, %v2799, %v2775
        %v2816 = vsel %vm2804, %v2800, %v2778
        %v2817 = vsel %vm2804, %v2801, %v2781
        %v2818 = vsel %vm2804, %v2802, %v2784
        %v2819 = vsel %vm2804, %v2803, %v2787
        %vm2820 = vcmask 22528
        %v2821 = vsel %vm2820, %v2805, -inf
        %v2822 = vrot.slane %v2821, 4
        %v2823 = vmax.f32 %v2821, %v2822
        %v2824 = vrot.slane %v2823, 2
        %v2825 = vmax.f32 %v2823, %v2824
        %v2826 = vrot.slane %v2825, 1
        %v2827 = vmax.f32 %v2825, %v2826
        %vm2828 = vcmask 23555
        %v2829 = vsel %vm2828, %v2805, -inf
        %vm2830 = vcmask 17408
        %v2831 = vsel %vm2830, %v2806, -inf
        %v2832 = vmax.f32 %v2829, %v2831
        %v2833 = vrot.slane %v2832, 4
        %v2834 = vmax.f32 %v2832, %v2833
        %v2835 = vrot.slane %v2834, 2
        %v2836 = vmax.f32 %v2834, %v2835
        %v2837 = vrot.slane %v2836, 1
        %v2838 = vmax.f32 %v2836, %v2837
        %vm2839 = vcmask 23558
        %v2840 = vsel %vm2839, %v2805, -inf
        %vm2841 = vcmask 20480
        %v2842 = vsel %vm2841, %v2806, -inf
        %v2843 = vmax.f32 %v2840, %v2842
        %v2844 = vrot.slane %v2843, 4
        %v2845 = vmax.f32 %v2843, %v2844
        %v2846 = vrot.slane %v2845, 2
        %v2847 = vmax.f32 %v2845, %v2846
        %v2848 = vrot.slane %v2847, 1
        %v2849 = vmax.f32 %v2847, %v2848
        %vm2850 = vcmask 23559
        %v2851 = vsel %vm2850, %v2806, -inf
        %vm2852 = vcmask 21504
        %v2853 = vsel %vm2852, %v2807, -inf
        %v2854 = vmax.f32 %v2851, %v2853
        %v2855 = vrot.slane %v2854, 4
        %v2856 = vmax.f32 %v2854, %v2855
        %v2857 = vrot.slane %v2856, 2
        %v2858 = vmax.f32 %v2856, %v2857
        %v2859 = vrot.slane %v2858, 1
        %v2860 = vmax.f32 %v2858, %v2859
        %vm2861 = vcmask 23554
        %v2862 = vsel %vm2861, %v2807, -inf
        %vm2863 = vcmask 16384
        %v2864 = vsel %vm2863, %v2808, -inf
        %v2865 = vmax.f32 %v2862, %v2864
        %v2866 = vrot.slane %v2865, 4
        %v2867 = vmax.f32 %v2865, %v2866
        %v2868 = vrot.slane %v2867, 2
        %v2869 = vmax.f32 %v2867, %v2868
        %v2870 = vrot.slane %v2869, 1
        %v2871 = vmax.f32 %v2869, %v2870
        %vm2872 = vcmask 23557
        %v2873 = vsel %vm2872, %v2807, -inf
        %vm2874 = vcmask 19456
        %v2875 = vsel %vm2874, %v2808, -inf
        %v2876 = vmax.f32 %v2873, %v2875
        %v2877 = vrot.slane %v2876, 4
        %v2878 = vmax.f32 %v2876, %v2877
        %v2879 = vrot.slane %v2878, 2
        %v2880 = vmax.f32 %v2878, %v2879
        %v2881 = vrot.slane %v2880, 1
        %v2882 = vmax.f32 %v2880, %v2881
        %v2883 = vsel %vm2839, %v2808, -inf
        %v2884 = vsel %vm2841, %v2809, -inf
        %v2885 = vmax.f32 %v2883, %v2884
        %v2886 = vrot.slane %v2885, 4
        %v2887 = vmax.f32 %v2885, %v2886
        %v2888 = vrot.slane %v2887, 2
        %v2889 = vmax.f32 %v2887, %v2888
        %v2890 = vrot.slane %v2889, 1
        %v2891 = vmax.f32 %v2889, %v2890
        %vm2892 = vcmask 23553
        %v2893 = vsel %vm2892, %v2809, -inf
        %v2894 = vrot.slane %v2893, 4
        %v2895 = vmax.f32 %v2893, %v2894
        %v2896 = vrot.slane %v2895, 2
        %v2897 = vmax.f32 %v2895, %v2896
        %v2898 = vrot.slane %v2897, 1
        %v2899 = vmax.f32 %v2897, %v2898
        %vm2900 = vcmask 23556
        %v2901 = vsel %vm2900, %v2809, -inf
        %vm2902 = vcmask 18432
        %v2903 = vsel %vm2902, %v2810, -inf
        %v2904 = vmax.f32 %v2901, %v2903
        %v2905 = vrot.slane %v2904, 4
        %v2906 = vmax.f32 %v2904, %v2905
        %v2907 = vrot.slane %v2906, 2
        %v2908 = vmax.f32 %v2906, %v2907
        %v2909 = vrot.slane %v2908, 1
        %v2910 = vmax.f32 %v2908, %v2909
        %v2911 = vsel %vm2872, %v2810, -inf
        %v2912 = vsel %vm2874, %v2811, -inf
        %v2913 = vmax.f32 %v2911, %v2912
        %v2914 = vrot.slane %v2913, 4
        %v2915 = vmax.f32 %v2913, %v2914
        %v2916 = vrot.slane %v2915, 2
        %v2917 = vmax.f32 %v2915, %v2916
        %v2918 = vrot.slane %v2917, 1
        %v2919 = vmax.f32 %v2917, %v2918
        %v2920 = vsel %vm2820, %v2811, -inf
        %v2921 = vrot.slane %v2920, 4
        %v2922 = vmax.f32 %v2920, %v2921
        %v2923 = vrot.slane %v2922, 2
        %v2924 = vmax.f32 %v2922, %v2923
        %v2925 = vrot.slane %v2924, 1
        %v2926 = vmax.f32 %v2924, %v2925
        %v2927 = vsel %vm2828, %v2811, -inf
        %v2928 = vsel %vm2830, %v2812, -inf
        %v2929 = vmax.f32 %v2927, %v2928
        %v2930 = vrot.slane %v2929, 4
        %v2931 = vmax.f32 %v2929, %v2930
        %v2932 = vrot.slane %v2931, 2
        %v2933 = vmax.f32 %v2931, %v2932
        %v2934 = vrot.slane %v2933, 1
        %v2935 = vmax.f32 %v2933, %v2934
        %v2936 = vsel %vm2900, %v2812, -inf
        %v2937 = vsel %vm2902, %v2813, -inf
        %v2938 = vmax.f32 %v2936, %v2937
        %v2939 = vrot.slane %v2938, 4
        %v2940 = vmax.f32 %v2938, %v2939
        %v2941 = vrot.slane %v2940, 2
        %v2942 = vmax.f32 %v2940, %v2941
        %v2943 = vrot.slane %v2942, 1
        %v2944 = vmax.f32 %v2942, %v2943
        %v2945 = vsel %vm2850, %v2812, -inf
        %v2946 = vsel %vm2852, %v2813, -inf
        %v2947 = vmax.f32 %v2945, %v2946
        %v2948 = vrot.slane %v2947, 4
        %v2949 = vmax.f32 %v2947, %v2948
        %v2950 = vrot.slane %v2949, 2
        %v2951 = vmax.f32 %v2949, %v2950
        %v2952 = vrot.slane %v2951, 1
        %v2953 = vmax.f32 %v2951, %v2952
        %v2954 = vsel %vm2861, %v2813, -inf
        %v2955 = vsel %vm2863, %v2814, -inf
        %v2956 = vmax.f32 %v2954, %v2955
        %v2957 = vrot.slane %v2956, 4
        %v2958 = vmax.f32 %v2956, %v2957
        %v2959 = vrot.slane %v2958, 2
        %v2960 = vmax.f32 %v2958, %v2959
        %v2961 = vrot.slane %v2960, 1
        %v2962 = vmax.f32 %v2960, %v2961
        %v2963 = vsel %vm2828, %v2814, -inf
        %v2964 = vsel %vm2830, %v2815, -inf
        %v2965 = vmax.f32 %v2963, %v2964
        %v2966 = vrot.slane %v2965, 4
        %v2967 = vmax.f32 %v2965, %v2966
        %v2968 = vrot.slane %v2967, 2
        %v2969 = vmax.f32 %v2967, %v2968
        %v2970 = vrot.slane %v2969, 1
        %v2971 = vmax.f32 %v2969, %v2970
        %v2972 = vsel %vm2839, %v2814, -inf
        %v2973 = vsel %vm2841, %v2815, -inf
        %v2974 = vmax.f32 %v2972, %v2973
        %v2975 = vrot.slane %v2974, 4
        %v2976 = vmax.f32 %v2974, %v2975
        %v2977 = vrot.slane %v2976, 2
        %v2978 = vmax.f32 %v2976, %v2977
        %v2979 = vrot.slane %v2978, 1
        %v2980 = vmax.f32 %v2978, %v2979
        %v2981 = vsel %vm2892, %v2815, -inf
        %v2982 = vrot.slane %v2981, 4
        %v2983 = vmax.f32 %v2981, %v2982
        %v2984 = vrot.slane %v2983, 2
        %v2985 = vmax.f32 %v2983, %v2984
        %v2986 = vrot.slane %v2985, 1
        %v2987 = vmax.f32 %v2985, %v2986
        %v2988 = vsel %vm2861, %v2816, -inf
        %v2989 = vsel %vm2863, %v2817, -inf
        %v2990 = vmax.f32 %v2988, %v2989
        %v2991 = vrot.slane %v2990, 4
        %v2992 = vmax.f32 %v2990, %v2991
        %v2993 = vrot.slane %v2992, 2
        %v2994 = vmax.f32 %v2992, %v2993
        %v2995 = vrot.slane %v2994, 1
        %v2996 = vmax.f32 %v2994, %v2995
        %v2997 = vsel %vm2872, %v2816, -inf
        %v2998 = vsel %vm2874, %v2817, -inf
        %v2999 = vmax.f32 %v2997, %v2998
        %v3000 = vrot.slane %v2999, 4
        %v3001 = vmax.f32 %v2999, %v3000
        %v3002 = vrot.slane %v3001, 2
        %v3003 = vmax.f32 %v3001, %v3002
        %v3004 = vrot.slane %v3003, 1
        %v3005 = vmax.f32 %v3003, %v3004
        %v3006 = vsel %vm2820, %v2817, -inf
        %v3007 = vrot.slane %v3006, 4
        %v3008 = vmax.f32 %v3006, %v3007
        %v3009 = vrot.slane %v3008, 2
        %v3010 = vmax.f32 %v3008, %v3009
        %v3011 = vrot.slane %v3010, 1
        %v3012 = vmax.f32 %v3010, %v3011
        %v3013 = vsel %vm2892, %v2818, -inf
        %v3014 = vrot.slane %v3013, 4
        %v3015 = vmax.f32 %v3013, %v3014
        %v3016 = vrot.slane %v3015, 2
        %v3017 = vmax.f32 %v3015, %v3016
        %v3018 = vrot.slane %v3017, 1
        %v3019 = vmax.f32 %v3017, %v3018
        %v3020 = vsel %vm2900, %v2818, -inf
        %v3021 = vsel %vm2902, %v2819, -inf
        %v3022 = vmax.f32 %v3020, %v3021
        %v3023 = vrot.slane %v3022, 4
        %v3024 = vmax.f32 %v3022, %v3023
        %v3025 = vrot.slane %v3024, 2
        %v3026 = vmax.f32 %v3024, %v3025
        %v3027 = vrot.slane %v3026, 1
        %v3028 = vmax.f32 %v3026, %v3027
        %v3029 = vsel %vm2850, %v2818, -inf
        %v3030 = vsel %vm2852, %v2819, -inf
        %v3031 = vmax.f32 %v3029, %v3030
        %v3032 = vrot.slane %v3031, 4
        %v3033 = vmax.f32 %v3031, %v3032
        %v3034 = vrot.slane %v3033, 2
        %v3035 = vmax.f32 %v3033, %v3034
        %v3036 = vrot.slane %v3035, 1
        %v3037 = vmax.f32 %v3035, %v3036
        %vm3038 = vcmask 1040384
        %v3039 = vsel %vm3038, %v2827, %v2838
        %vm3040 = vcmask 1041408
        %v3041 = vsel %vm3040, %v3039, %v2849
        %vm3042 = vcmask 1042432
        %v3043 = vsel %vm3042, %v3041, %v2860
        %vm3044 = vcmask 1043456
        %v3045 = vsel %vm3044, %v3043, %v2871
        %vm3046 = vcmask 1044480
        %v3047 = vsel %vm3046, %v3045, %v2882
        %vm3048 = vcmask 1045504
        %v3049 = vsel %vm3048, %v3047, %v2891
        %vm3050 = vcmask 1046528
        %v3051 = vsel %vm3050, %v3049, %v2899
        %v3052 = vsel %vm3038, %v2910, %v2919
        %v3053 = vsel %vm3040, %v3052, %v2926
        %v3054 = vsel %vm3042, %v3053, %v2935
        %v3055 = vsel %vm3044, %v3054, %v2944
        %v3056 = vsel %vm3046, %v3055, %v2953
        %v3057 = vsel %vm3048, %v3056, %v2962
        %v3058 = vsel %vm3050, %v3057, %v2971
        %v3059 = vsel %vm3038, %v2980, %v2987
        %v3060 = vsel %vm3040, %v3059, %v2996
        %v3061 = vsel %vm3042, %v3060, %v3005
        %v3062 = vsel %vm3044, %v3061, %v3012
        %v3063 = vsel %vm3046, %v3062, %v3019
        %v3064 = vsel %vm3048, %v3063, %v3028
        %v3065 = vsel %vm3050, %v3064, %v3037
        %v3066 = vld [vmem:[%s4] sm:$0x7]
        %vm3067 = vcmask 23552
        %v3069 = vsel %vm3067, %v3051, 0
        %v3072 = vsel %vm3067, %v3058, 0
        %v3075 = vsel %vm3067, %v3065, 0
        %v3078 = vsel %vm3042, %v3066, 0
        %3080 = vmatprep.subr.mxu0 0.0
        %3081 = vmatpush1.msra.mxu0 %v3078
        %3082 = vmatprep.subr.mxu0 0.0
        %3083 = vmatpush1.msra.mxu0 0.0
        %3084 = vmatprep.subr.mxu0 0.0
        %3085 = vmatpush1.msra.mxu0 0.0
        %3086 = vmatprep.subr.mxu0 0.0
        %3087 = vmatpush1.msra.mxu0 0.0
        %3088 = vmatprep.subr.mxu0 0.0
        %3089 = vmatpush1.msra.mxu0 0.0
        %3090 = vmatprep.subr.mxu0 0.0
        %3091 = vmatpush1.msra.mxu0 0.0
        %3092 = vmatprep.subr.mxu0 0.0
        %3093 = vmatpush1.msra.mxu0 0.0
        %3094 = vmatprep.subr.mxu0 0.0
        %3095 = vmatpush1.msra.mxu0 0.0
        %3096 = vmatprep.subr.mxu0 0.0
        %3097 = vmatpush1.msra.mxu0 0.0
        %3098 = vmatprep.subr.mxu0 0.0
        %3099 = vmatpush1.msra.mxu0 0.0
        %3100 = vmatprep.subr.mxu0 0.0
        %3101 = vmatpush1.msra.mxu0 0.0
        %3102 = vmatprep.subr.mxu0 0.0
        %3103 = vmatpush1.msra.mxu0 0.0
        %3104 = vmatprep.subr.mxu0 0.0
        %3105 = vmatpush1.msra.mxu0 0.0
        %3106 = vmatprep.subr.mxu0 0.0
        %3107 = vmatpush1.msra.mxu0 0.0
        %3108 = vmatprep.subr.mxu0 0.0
        %3109 = vmatpush1.msra.mxu0 0.0
        %3110 = vmatprep.subr.mxu0 0.0
        %3111 = vmatpush1.msra.mxu0 0.0
        %3112 = vmatprep.subr.mxu0 0.0
        %3113 = vmatpush1.msra.mxu0 0.0
        %3114 = vmatprep.subr.mxu0 0.0
        %3115 = vmatpush1.msra.mxu0 0.0
        %3116 = vmatprep.subr.mxu0 0.0
        %3117 = vmatpush1.msra.mxu0 0.0
        %3118 = vmatprep.subr.mxu0 0.0
        %3119 = vmatpush1.msra.mxu0 0.0
        %3120 = vmatprep.subr.mxu0 0.0
        %3121 = vmatpush1.msra.mxu0 0.0
        %3122 = vmatprep.subr.mxu0 0.0
        %3123 = vmatpush1.msra.mxu0 0.0
        %3124 = vmatprep.subr.mxu0 0.0
        %3125 = vmatpush1.msra.mxu0 0.0
        %3126 = vmatprep.subr.mxu0 0.0
        %3127 = vmatpush1.msra.mxu0 0.0
        %3128 = vmatprep.subr.mxu0 0.0
        %3129 = vmatpush1.msra.mxu0 0.0
        %3130 = vmatprep.subr.mxu0 0.0
        %3131 = vmatpush1.msra.mxu0 0.0
        %3132 = vmatprep.subr.mxu0 0.0
        %3133 = vmatpush1.msra.mxu0 0.0
        %3134 = vmatprep.subr.mxu0 0.0
        %3135 = vmatpush1.msra.mxu0 0.0
        %3136 = vmatprep.subr.mxu0 0.0
        %3137 = vmatpush1.msra.mxu0 0.0
        %3138 = vmatprep.subr.mxu0 0.0
        %3139 = vmatpush1.msra.mxu0 0.0
        %3140 = vmatprep.subr.mxu0 0.0
        %3141 = vmatpush1.msra.mxu0 0.0
        %3142 = vmatprep.subr.mxu0 0.0
        %3143 = vmatpush1.msra.mxu0 0.0
        %3144 = vmatprep.mubr.f32.mxu0 0.0
        %3145 = vmatmul.mubr.f32.gmra.mrb[0].mxu0 %v3069
        %v3146 = vpop.f32.mrb[0].mxu0
        %v3147 = vadd.f32 0.0, %v3146
        %v3148 = vpop.f32.mrb[0].mxu0
        %3149 = vmatprep.mubr.f32.mxu0 0.0
        %3150 = vmatmul.mubr.f32.gmra.mrb[0].mxu0 %v3072
        %v3151 = vpop.f32.mrb[0].mxu0
        %v3152 = vadd.f32 0.0, %v3151
        %v3153 = vpop.f32.mrb[0].mxu0
        %3154 = vmatprep.mubr.f32.mxu0 0.0
        %3155 = vmatmul.mubr.f32.gmra.mrb[0].mxu0 %v3075
        %v3156 = vpop.f32.mrb[0].mxu0
        %v3157 = vadd.f32 0.0, %v3156
        %v3158 = vpop.f32.mrb[0].mxu0
        %3159 = vdwg.mxu0
        %3163 = vrot.lane.b32.xlu0 %v3147, 125
        %v3164 = vpop.permute.xlu0 %3163
        %3165 = vrot.lane.b32.xlu0 %v3152, 125
        %v3166 = vpop.permute.xlu0 %3165
        %3167 = vrot.lane.b32.xlu0 %v3157, 125
        %v3168 = vpop.permute.xlu0 %3167
        %3172 = vrot.lane.b32.xlu0 %v3147, 122
        %v3173 = vpop.permute.xlu0 %3172
        %3174 = vrot.lane.b32.xlu0 %v3152, 122
        %v3175 = vpop.permute.xlu0 %3174
        %3176 = vrot.lane.b32.xlu0 %v3157, 122
        %v3177 = vpop.permute.xlu0 %3176
        %v3181 = vld [vmem:[%s5] sm:$0xff]
        %v3182 = vld [vmem:[%s5 + $0x8] sm:$0xff]
        %v3183 = vld [vmem:[%s5 + $0x10] sm:$0xff]
        %v3184 = vld [vmem:[%s5 + $0x18] sm:$0xff]
        %v3185 = vld [vmem:[%s5 + $0x20] sm:$0xff]
        %v3186 = vld [vmem:[%s5 + $0x28] sm:$0xff]
        %v3187 = vld [vmem:[%s6] sm:$0xff]
        %v3188 = vld [vmem:[%s6 + $0x8] sm:$0xff]
        %v3189 = vld [vmem:[%s6 + $0x10] sm:$0xff]
        %v3190 = vld [vmem:[%s6 + $0x18] sm:$0xff]
        %v3191 = vld [vmem:[%s6 + $0x20] sm:$0xff]
        %v3192 = vld [vmem:[%s6 + $0x28] sm:$0xff]
        %3194 = vset.pattern.permute.xlu0 0
        %3195 = vperm.xlu0 %3194, %v3187
        %v3196 = vpop.permute.xlu0 %3195
        %3199 = vset.pattern.permute.xlu0 0
        %3200 = vperm.xlu0 %3199, %v3188
        %v3201 = vpop.permute.xlu0 %3200
        %3204 = vset.pattern.permute.xlu0 0
        %3205 = vperm.xlu0 %3204, %v3189
        %v3206 = vpop.permute.xlu0 %3205
        %3209 = vset.pattern.permute.xlu0 0
        %3210 = vperm.xlu0 %3209, %v3190
        %v3211 = vpop.permute.xlu0 %3210
        %3214 = vset.pattern.permute.xlu0 0
        %3215 = vperm.xlu0 %3214, %v3191
        %v3216 = vpop.permute.xlu0 %3215
        %3219 = vset.pattern.permute.xlu0 0
        %3220 = vperm.xlu0 %3219, %v3192
        %v3221 = vpop.permute.xlu0 %3220
        %vm3223 = vcmask 588800
        %v3225 = vsel %vm3223, %v3181, 0
        %v3228 = vsel %vm3223, %v3182, 0
        %v3231 = vsel %vm3223, %v3183, 0
        %v3234 = vsel %vm3223, %v3184, 0
        %v3237 = vsel %vm3223, %v3185, 0
        %v3240 = vsel %vm3223, %v3186, 0
        %3242 = vmatprep.subr.mxu0 0.0
        %3243 = vmatpush1.msra.mxu0 %v3147
        %3244 = vmatprep.subr.mxu0 0.0
        %3245 = vmatpush1.msra.mxu0 %v3152
        %3246 = vmatprep.subr.mxu0 0.0
        %3247 = vmatpush1.msra.mxu0 %v3157
        %3248 = vmatprep.subr.mxu0 0.0
        %3249 = vmatpush1.msra.mxu0 %v3164
        %3250 = vmatprep.subr.mxu0 0.0
        %3251 = vmatpush1.msra.mxu0 %v3166
        %3252 = vmatprep.subr.mxu0 0.0
        %3253 = vmatpush1.msra.mxu0 %v3168
        %3254 = vmatprep.subr.mxu0 0.0
        %3255 = vmatpush1.msra.mxu0 %v3173
        %3256 = vmatprep.subr.mxu0 0.0
        %3257 = vmatpush1.msra.mxu0 %v3175
        %3258 = vmatprep.subr.mxu0 0.0
        %3259 = vmatpush1.msra.mxu0 %v3177
        %3260 = vmatprep.subr.mxu0 0.0
        %3261 = vmatpush1.msra.mxu0 0.0
        %3262 = vmatprep.subr.mxu0 0.0
        %3263 = vmatpush1.msra.mxu0 0.0
        %3264 = vmatprep.subr.mxu0 0.0
        %3265 = vmatpush1.msra.mxu0 0.0
        %3266 = vmatprep.subr.mxu0 0.0
        %3267 = vmatpush1.msra.mxu0 0.0
        %3268 = vmatprep.subr.mxu0 0.0
        %3269 = vmatpush1.msra.mxu0 0.0
        %3270 = vmatprep.subr.mxu0 0.0
        %3271 = vmatpush1.msra.mxu0 0.0
        %3272 = vmatprep.subr.mxu0 0.0
        %3273 = vmatpush1.msra.mxu0 0.0
        %3274 = vmatprep.subr.mxu0 0.0
        %3275 = vmatpush1.msra.mxu0 0.0
        %3276 = vmatprep.subr.mxu0 0.0
        %3277 = vmatpush1.msra.mxu0 0.0
        %3278 = vmatprep.subr.mxu0 0.0
        %3279 = vmatpush1.msra.mxu0 0.0
        %3280 = vmatprep.subr.mxu0 0.0
        %3281 = vmatpush1.msra.mxu0 0.0
        %3282 = vmatprep.subr.mxu0 0.0
        %3283 = vmatpush1.msra.mxu0 0.0
        %3284 = vmatprep.subr.mxu0 0.0
        %3285 = vmatpush1.msra.mxu0 0.0
        %3286 = vmatprep.subr.mxu0 0.0
        %3287 = vmatpush1.msra.mxu0 0.0
        %3288 = vmatprep.subr.mxu0 0.0
        %3289 = vmatpush1.msra.mxu0 0.0
        %3290 = vmatprep.subr.mxu0 0.0
        %3291 = vmatpush1.msra.mxu0 0.0
        %3292 = vmatprep.subr.mxu0 0.0
        %3293 = vmatpush1.msra.mxu0 0.0
        %3294 = vmatprep.subr.mxu0 0.0
        %3295 = vmatpush1.msra.mxu0 0.0
        %3296 = vmatprep.subr.mxu0 0.0
        %3297 = vmatpush1.msra.mxu0 0.0
        %3298 = vmatprep.subr.mxu0 0.0
        %3299 = vmatpush1.msra.mxu0 0.0
        %3300 = vmatprep.subr.mxu0 0.0
        %3301 = vmatpush1.msra.mxu0 0.0
        %3302 = vmatprep.subr.mxu0 0.0
        %3303 = vmatpush1.msra.mxu0 0.0
        %3304 = vmatprep.subr.mxu0 0.0
        %3305 = vmatpush1.msra.mxu0 0.0
        %3306 = vmatprep.mubr.f32.mxu0 0.0
        %3307 = vmatmul.mubr.f32.gmra.mrb[0].mxu0 %v3225
        %v3308 = vpop.f32.mrb[0].mxu0
        %v3309 = vadd.f32 %v3196, %v3308
        %v3310 = vpop.f32.mrb[0].mxu0
        %3311 = vmatprep.mubr.f32.mxu0 0.0
        %3312 = vmatmul.mubr.f32.gmra.mrb[0].mxu0 %v3228
        %v3313 = vpop.f32.mrb[0].mxu0
        %v3314 = vadd.f32 %v3201, %v3313
        %v3315 = vpop.f32.mrb[0].mxu0
        %3316 = vmatprep.mubr.f32.mxu0 0.0
        %3317 = vmatmul.mubr.f32.gmra.mrb[0].mxu0 %v3231
        %v3318 = vpop.f32.mrb[0].mxu0
        %v3319 = vadd.f32 %v3206, %v3318
        %v3320 = vpop.f32.mrb[0].mxu0
        %3321 = vmatprep.mubr.f32.mxu0 0.0
        %3322 = vmatmul.mubr.f32.gmra.mrb[0].mxu0 %v3234
        %v3323 = vpop.f32.mrb[0].mxu0
        %v3324 = vadd.f32 %v3211, %v3323
        %v3325 = vpop.f32.mrb[0].mxu0
        %3326 = vmatprep.mubr.f32.mxu0 0.0
        %3327 = vmatmul.mubr.f32.gmra.mrb[0].mxu0 %v3237
        %v3328 = vpop.f32.mrb[0].mxu0
        %v3329 = vadd.f32 %v3216, %v3328
        %v3330 = vpop.f32.mrb[0].mxu0
        %3331 = vmatprep.mubr.f32.mxu0 0.0
        %3332 = vmatmul.mubr.f32.gmra.mrb[0].mxu0 %v3240
        %v3333 = vpop.f32.mrb[0].mxu0
        %v3334 = vadd.f32 %v3221, %v3333
        %v3335 = vpop.f32.mrb[0].mxu0
        %3336 = vdwg.mxu0
        %v3337 = vld [vmem:[%s7] sm:$0x7]
        %v3339 = vsel %vm3067, %v3309, 0
        %v3342 = vsel %vm3067, %v3314, 0
        %v3345 = vsel %vm3067, %v3319, 0
        %v3348 = vsel %vm3067, %v3324, 0
        %v3351 = vsel %vm3067, %v3329, 0
        %v3354 = vsel %vm3067, %v3334, 0
        %v3357 = vsel %vm3042, %v3337, 0
        %3359 = vmatprep.subr.mxu0 0.0
        %3360 = vmatpush1.msra.mxu0 %v3357
        %3361 = vmatprep.subr.mxu0 0.0
        %3362 = vmatpush1.msra.mxu0 0.0
        %3363 = vmatprep.subr.mxu0 0.0
        %3364 = vmatpush1.msra.mxu0 0.0
        %3365 = vmatprep.subr.mxu0 0.0
        %3366 = vmatpush1.msra.mxu0 0.0
        %3367 = vmatprep.subr.mxu0 0.0
        %3368 = vmatpush1.msra.mxu0 0.0
        %3369 = vmatprep.subr.mxu0 0.0
        %3370 = vmatpush1.msra.mxu0 0.0
        %3371 = vmatprep.subr.mxu0 0.0
        %3372 = vmatpush1.msra.mxu0 0.0
        %3373 = vmatprep.subr.mxu0 0.0
        %3374 = vmatpush1.msra.mxu0 0.0
        %3375 = vmatprep.subr.mxu0 0.0
        %3376 = vmatpush1.msra.mxu0 0.0
        %3377 = vmatprep.subr.mxu0 0.0
        %3378 = vmatpush1.msra.mxu0 0.0
        %3379 = vmatprep.subr.mxu0 0.0
        %3380 = vmatpush1.msra.mxu0 0.0
        %3381 = vmatprep.subr.mxu0 0.0
        %3382 = vmatpush1.msra.mxu0 0.0
        %3383 = vmatprep.subr.mxu0 0.0
        %3384 = vmatpush1.msra.mxu0 0.0
        %3385 = vmatprep.subr.mxu0 0.0
        %3386 = vmatpush1.msra.mxu0 0.0
        %3387 = vmatprep.subr.mxu0 0.0
        %3388 = vmatpush1.msra.mxu0 0.0
        %3389 = vmatprep.subr.mxu0 0.0
        %3390 = vmatpush1.msra.mxu0 0.0
        %3391 = vmatprep.subr.mxu0 0.0
        %3392 = vmatpush1.msra.mxu0 0.0
        %3393 = vmatprep.subr.mxu0 0.0
        %3394 = vmatpush1.msra.mxu0 0.0
        %3395 = vmatprep.subr.mxu0 0.0
        %3396 = vmatpush1.msra.mxu0 0.0
        %3397 = vmatprep.subr.mxu0 0.0
        %3398 = vmatpush1.msra.mxu0 0.0
        %3399 = vmatprep.subr.mxu0 0.0
        %3400 = vmatpush1.msra.mxu0 0.0
        %3401 = vmatprep.subr.mxu0 0.0
        %3402 = vmatpush1.msra.mxu0 0.0
        %3403 = vmatprep.subr.mxu0 0.0
        %3404 = vmatpush1.msra.mxu0 0.0
        %3405 = vmatprep.subr.mxu0 0.0
        %3406 = vmatpush1.msra.mxu0 0.0
        %3407 = vmatprep.subr.mxu0 0.0
        %3408 = vmatpush1.msra.mxu0 0.0
        %3409 = vmatprep.subr.mxu0 0.0
        %3410 = vmatpush1.msra.mxu0 0.0
        %3411 = vmatprep.subr.mxu0 0.0
        %3412 = vmatpush1.msra.mxu0 0.0
        %3413 = vmatprep.subr.mxu0 0.0
        %3414 = vmatpush1.msra.mxu0 0.0
        %3415 = vmatprep.subr.mxu0 0.0
        %3416 = vmatpush1.msra.mxu0 0.0
        %3417 = vmatprep.subr.mxu0 0.0
        %3418 = vmatpush1.msra.mxu0 0.0
        %3419 = vmatprep.subr.mxu0 0.0
        %3420 = vmatpush1.msra.mxu0 0.0
        %3421 = vmatprep.subr.mxu0 0.0
        %3422 = vmatpush1.msra.mxu0 0.0
        %3423 = vmatprep.mubr.f32.mxu0 0.0
        %3424 = vmatmul.mubr.f32.gmra.mrb[0].mxu0 %v3339
        %v3425 = vpop.f32.mrb[0].mxu0
        %v3426 = vadd.f32 0.0, %v3425
        %v3427 = vpop.f32.mrb[0].mxu0
        %3428 = vmatprep.mubr.f32.mxu0 0.0
        %3429 = vmatmul.mubr.f32.gmra.mrb[0].mxu0 %v3342
        %v3430 = vpop.f32.mrb[0].mxu0
        %v3431 = vadd.f32 0.0, %v3430
        %v3432 = vpop.f32.mrb[0].mxu0
        %3433 = vmatprep.mubr.f32.mxu0 0.0
        %3434 = vmatmul.mubr.f32.gmra.mrb[0].mxu0 %v3345
        %v3435 = vpop.f32.mrb[0].mxu0
        %v3436 = vadd.f32 0.0, %v3435
        %v3437 = vpop.f32.mrb[0].mxu0
        %3438 = vmatprep.mubr.f32.mxu0 0.0
        %3439 = vmatmul.mubr.f32.gmra.mrb[0].mxu0 %v3348
        %v3440 = vpop.f32.mrb[0].mxu0
        %v3441 = vadd.f32 0.0, %v3440
        %v3442 = vpop.f32.mrb[0].mxu0
        %3443 = vmatprep.mubr.f32.mxu0 0.0
        %3444 = vmatmul.mubr.f32.gmra.mrb[0].mxu0 %v3351
        %v3445 = vpop.f32.mrb[0].mxu0
        %v3446 = vadd.f32 0.0, %v3445
        %v3447 = vpop.f32.mrb[0].mxu0
        %3448 = vmatprep.mubr.f32.mxu0 0.0
        %3449 = vmatmul.mubr.f32.gmra.mrb[0].mxu0 %v3354
        %v3450 = vpop.f32.mrb[0].mxu0
        %v3451 = vadd.f32 0.0, %v3450
        %v3452 = vpop.f32.mrb[0].mxu0
        %3453 = vdwg.mxu0
        %v3454 = vld [vmem:[%s8] sm:$0xff]
        %v3455 = vld [vmem:[%s8 + $0x8] sm:$0xff]
        %v3456 = vld [vmem:[%s8 + $0x10] sm:$0xff]
        %v3457 = vld [vmem:[%s8 + $0x18] sm:$0xff]
        %s3458 = sld [smem:[#allocation5]]
        %v3459 = vstv %s3458
        %v3461 = vsel %vm3067, %v3454, 0
        %v3464 = vsel %vm3067, %v3455, 0
        %v3467 = vsel %vm3067, %v3456, 0
        %v3470 = vsel %vm3067, %v3457, 0
        %v3473 = vsel %vm3042, %v3426, 0
        %3475 = vmatprep.subr.mxu0 0.0
        %3476 = vmatpush1.msra.mxu0 %v3473
        %3477 = vmatprep.subr.mxu0 0.0
        %3478 = vmatpush1.msra.mxu0 0.0
        %3479 = vmatprep.subr.mxu0 0.0
        %3480 = vmatpush1.msra.mxu0 0.0
        %3481 = vmatprep.subr.mxu0 0.0
        %3482 = vmatpush1.msra.mxu0 0.0
        %3483 = vmatprep.subr.mxu0 0.0
        %3484 = vmatpush1.msra.mxu0 0.0
        %3485 = vmatprep.subr.mxu0 0.0
        %3486 = vmatpush1.msra.mxu0 0.0
        %3487 = vmatprep.subr.mxu0 0.0
        %3488 = vmatpush1.msra.mxu0 0.0
        %3489 = vmatprep.subr.mxu0 0.0
        %3490 = vmatpush1.msra.mxu0 0.0
        %3491 = vmatprep.subr.mxu0 0.0
        %3492 = vmatpush1.msra.mxu0 0.0
        %3493 = vmatprep.subr.mxu0 0.0
        %3494 = vmatpush1.msra.mxu0 0.0
        %3495 = vmatprep.subr.mxu0 0.0
        %3496 = vmatpush1.msra.mxu0 0.0
        %3497 = vmatprep.subr.mxu0 0.0
        %3498 = vmatpush1.msra.mxu0 0.0
        %3499 = vmatprep.subr.mxu0 0.0
        %3500 = vmatpush1.msra.mxu0 0.0
        %3501 = vmatprep.subr.mxu0 0.0
        %3502 = vmatpush1.msra.mxu0 0.0
        %3503 = vmatprep.subr.mxu0 0.0
        %3504 = vmatpush1.msra.mxu0 0.0
        %3505 = vmatprep.subr.mxu0 0.0
        %3506 = vmatpush1.msra.mxu0 0.0
        %3507 = vmatprep.subr.mxu0 0.0
        %3508 = vmatpush1.msra.mxu0 0.0
        %3509 = vmatprep.subr.mxu0 0.0
        %3510 = vmatpush1.msra.mxu0 0.0
        %3511 = vmatprep.subr.mxu0 0.0
        %3512 = vmatpush1.msra.mxu0 0.0
        %3513 = vmatprep.subr.mxu0 0.0
        %3514 = vmatpush1.msra.mxu0 0.0
        %3515 = vmatprep.subr.mxu0 0.0
        %3516 = vmatpush1.msra.mxu0 0.0
        %3517 = vmatprep.subr.mxu0 0.0
        %3518 = vmatpush1.msra.mxu0 0.0
        %3519 = vmatprep.subr.mxu0 0.0
        %3520 = vmatpush1.msra.mxu0 0.0
        %3521 = vmatprep.subr.mxu0 0.0
        %3522 = vmatpush1.msra.mxu0 0.0
        %3523 = vmatprep.subr.mxu0 0.0
        %3524 = vmatpush1.msra.mxu0 0.0
        %3525 = vmatprep.subr.mxu0 0.0
        %3526 = vmatpush1.msra.mxu0 0.0
        %3527 = vmatprep.subr.mxu0 0.0
        %3528 = vmatpush1.msra.mxu0 0.0
        %3529 = vmatprep.subr.mxu0 0.0
        %3530 = vmatpush1.msra.mxu0 0.0
        %3531 = vmatprep.subr.mxu0 0.0
        %3532 = vmatpush1.msra.mxu0 0.0
        %3533 = vmatprep.subr.mxu0 0.0
        %3534 = vmatpush1.msra.mxu0 0.0
        %3535 = vmatprep.subr.mxu0 0.0
        %3536 = vmatpush1.msra.mxu0 0.0
        %3537 = vmatprep.subr.mxu0 0.0
        %3538 = vmatpush1.msra.mxu0 0.0
        %3539 = vmatprep.mubr.f32.mxu0 0.0
        %3540 = vmatmul.mubr.f32.gmra.mrb[0].mxu0 %v3461
        %v3541 = vpop.f32.mrb[0].mxu0
        %v3542 = vadd.f32 %v3459, %v3541
        %v3543 = vpop.f32.mrb[0].mxu0
        %3544 = vmatprep.mubr.f32.mxu0 0.0
        %3545 = vmatmul.mubr.f32.gmra.mrb[0].mxu0 %v3464
        %v3546 = vpop.f32.mrb[0].mxu0
        %v3547 = vadd.f32 %v3459, %v3546
        %v3548 = vpop.f32.mrb[0].mxu0
        %3549 = vmatprep.mubr.f32.mxu0 0.0
        %3550 = vmatmul.mubr.f32.gmra.mrb[0].mxu0 %v3467
        %v3551 = vpop.f32.mrb[0].mxu0
        %v3552 = vadd.f32 %v3459, %v3551
        %v3553 = vpop.f32.mrb[0].mxu0
        %3554 = vmatprep.mubr.f32.mxu0 0.0
        %3555 = vmatmul.mubr.f32.gmra.mrb[0].mxu0 %v3470
        %v3556 = vpop.f32.mrb[0].mxu0
        %v3557 = vadd.f32 %v3459, %v3556
        %v3558 = vpop.f32.mrb[0].mxu0
        %3559 = vdwg.mxu0
        %s3560 = sld [smem:[#allocation2]]
        %v3561 = vstv %s3560
        %v3562 = vmul.f32 %v3561, %v414
        %v3563 = vmul.f32 %v3561, %v415
        %v3564 = vmul.f32 %v3561, %v416
        %v3565 = vmul.f32 %v3561, %v417
        %v3566 = vadd.f32 %v3542, %v3562
        %v3567 = vadd.f32 %v3547, %v3563
        %v3568 = vadd.f32 %v3552, %v3564
        %v3569 = vadd.f32 %v3557, %v3565
        %s3570 = sld [smem:[#allocation2 + $0x1]]
        %v3571 = vstv %s3570
        %v3572 = vmul.f32 %v3571, %v418
        %v3573 = vmul.f32 %v3571, %v419
        %v3574 = vmul.f32 %v3571, %v420
        %v3575 = vmul.f32 %v3571, %v421
        %v3576 = vadd.f32 %v3566, %v3572
        %v3577 = vadd.f32 %v3567, %v3573
        %v3578 = vadd.f32 %v3568, %v3574
        %v3579 = vadd.f32 %v3569, %v3575
        %s3580 = sld [smem:[#allocation2 + $0x2]]
        %v3581 = vstv %s3580
        %v3582 = vmul.f32 %v3581, %v422
        %v3583 = vmul.f32 %v3581, %v423
        %v3584 = vmul.f32 %v3581, %v424
        %v3585 = vmul.f32 %v3581, %v425
        %v3586 = vadd.f32 %v3576, %v3582
        %v3587 = vadd.f32 %v3577, %v3583
        %v3588 = vadd.f32 %v3578, %v3584
        %v3589 = vadd.f32 %v3579, %v3585
        %s3590 = sld [smem:[#allocation2 + $0x3]]
        %v3591 = vstv %s3590
        %v3592 = vmul.f32 %v3591, %v426
        %v3593 = vmul.f32 %v3591, %v427
        %v3594 = vmul.f32 %v3591, %v428
        %v3595 = vmul.f32 %v3591, %v429
        %v3596 = vadd.f32 %v3586, %v3592
        %v3597 = vadd.f32 %v3587, %v3593
        %v3598 = vadd.f32 %v3588, %v3594
        %v3599 = vadd.f32 %v3589, %v3595
        %s3600 = sld [smem:[#allocation2 + $0x4]]
        %v3601 = vstv %s3600
        %v3602 = vmul.f32 %v3601, %v430
        %v3603 = vmul.f32 %v3601, %v431
        %v3604 = vmul.f32 %v3601, %v432
        %v3605 = vmul.f32 %v3601, %v433
        %v3606 = vadd.f32 %v3596, %v3602
        %v3607 = vadd.f32 %v3597, %v3603
        %v3608 = vadd.f32 %v3598, %v3604
        %v3609 = vadd.f32 %v3599, %v3605
        %s3610 = sld [smem:[#allocation2 + $0x5]]
        %v3611 = vstv %s3610
        %v3612 = vmul.f32 %v3611, %v434
        %v3613 = vmul.f32 %v3611, %v435
        %v3614 = vmul.f32 %v3611, %v436
        %v3615 = vmul.f32 %v3611, %v437
        %v3616 = vadd.f32 %v3606, %v3612
        %v3617 = vadd.f32 %v3607, %v3613
        %v3618 = vadd.f32 %v3608, %v3614
        %v3619 = vadd.f32 %v3609, %v3615
        %s3620 = sld [smem:[#allocation2 + $0x6]]
        %v3621 = vstv %s3620
        %v3622 = vmul.f32 %v3621, %v438
        %v3623 = vmul.f32 %v3621, %v439
        %v3624 = vmul.f32 %v3621, %v440
        %v3625 = vmul.f32 %v3621, %v441
        %v3626 = vadd.f32 %v3616, %v3622
        %v3627 = vadd.f32 %v3617, %v3623
        %v3628 = vadd.f32 %v3618, %v3624
        %v3629 = vadd.f32 %v3619, %v3625
        %s3630 = sld [smem:[#allocation2 + $0x7]]
        %v3631 = vstv %s3630
        %v3632 = vmul.f32 %v3631, %v442
        %v3633 = vmul.f32 %v3631, %v443
        %v3634 = vmul.f32 %v3631, %v444
        %v3635 = vmul.f32 %v3631, %v445
        %v3636 = vadd.f32 %v3626, %v3632
        %v3637 = vadd.f32 %v3627, %v3633
        %v3638 = vadd.f32 %v3628, %v3634
        %v3639 = vadd.f32 %v3629, %v3635
        %s3640 = sld [smem:[#allocation2 + $0x8]]
        %v3641 = vstv %s3640
        %v3642 = vmul.f32 %v3641, %v446
        %v3643 = vmul.f32 %v3641, %v447
        %v3644 = vmul.f32 %v3641, %v448
        %v3645 = vmul.f32 %v3641, %v449
        %v3646 = vadd.f32 %v3636, %v3642
        %v3647 = vadd.f32 %v3637, %v3643
        %v3648 = vadd.f32 %v3638, %v3644
        %v3649 = vadd.f32 %v3639, %v3645
        %s3650 = sld [smem:[#allocation2 + $0x9]]
        %v3651 = vstv %s3650
        %v3652 = vmul.f32 %v3651, %v450
        %v3653 = vmul.f32 %v3651, %v451
        %v3654 = vmul.f32 %v3651, %v452
        %v3655 = vmul.f32 %v3651, %v453
        %v3656 = vadd.f32 %v3646, %v3652
        %v3657 = vadd.f32 %v3647, %v3653
        %v3658 = vadd.f32 %v3648, %v3654
        %v3659 = vadd.f32 %v3649, %v3655
        %s3660 = sld [smem:[#allocation2 + $0xa]]
        %v3661 = vstv %s3660
        %v3662 = vmul.f32 %v3661, %v454
        %v3663 = vmul.f32 %v3661, %v455
        %v3664 = vmul.f32 %v3661, %v456
        %v3665 = vmul.f32 %v3661, %v457
        %v3666 = vadd.f32 %v3656, %v3662
        %v3667 = vadd.f32 %v3657, %v3663
        %v3668 = vadd.f32 %v3658, %v3664
        %v3669 = vadd.f32 %v3659, %v3665
        %s3670 = sld [smem:[#allocation2 + $0xb]]
        %v3671 = vstv %s3670
        %v3672 = vmul.f32 %v3671, %v458
        %v3673 = vmul.f32 %v3671, %v459
        %v3674 = vmul.f32 %v3671, %v460
        %v3675 = vmul.f32 %v3671, %v461
        %v3676 = vadd.f32 %v3666, %v3672
        %v3677 = vadd.f32 %v3667, %v3673
        %v3678 = vadd.f32 %v3668, %v3674
        %v3679 = vadd.f32 %v3669, %v3675
        %s3680 = sld [smem:[#allocation2 + $0xc]]
        %v3681 = vstv %s3680
        %v3682 = vmul.f32 %v3681, %v462
        %v3683 = vmul.f32 %v3681, %v463
        %v3684 = vmul.f32 %v3681, %v464
        %v3685 = vmul.f32 %v3681, %v465
        %v3686 = vadd.f32 %v3676, %v3682
        %v3687 = vadd.f32 %v3677, %v3683
        %v3688 = vadd.f32 %v3678, %v3684
        %v3689 = vadd.f32 %v3679, %v3685
        %s3690 = sld [smem:[#allocation2 + $0xd]]
        %v3691 = vstv %s3690
        %v3692 = vmul.f32 %v3691, %v466
        %v3693 = vmul.f32 %v3691, %v467
        %v3694 = vmul.f32 %v3691, %v468
        %v3695 = vmul.f32 %v3691, %v469
        %v3696 = vadd.f32 %v3686, %v3692
        %v3697 = vadd.f32 %v3687, %v3693
        %v3698 = vadd.f32 %v3688, %v3694
        %v3699 = vadd.f32 %v3689, %v3695
        %s3700 = sld [smem:[#allocation2 + $0xe]]
        %v3701 = vstv %s3700
        %v3702 = vmul.f32 %v3701, %v470
        %v3703 = vmul.f32 %v3701, %v471
        %v3704 = vmul.f32 %v3701, %v472
        %v3705 = vmul.f32 %v3701, %v473
        %v3706 = vadd.f32 %v3696, %v3702
        %v3707 = vadd.f32 %v3697, %v3703
        %v3708 = vadd.f32 %v3698, %v3704
        %v3709 = vadd.f32 %v3699, %v3705
        %s3710 = sld [smem:[#allocation2 + $0xf]]
        %v3711 = vstv %s3710
        %v3712 = vmul.f32 %v3711, %v474
        %v3713 = vmul.f32 %v3711, %v475
        %v3714 = vmul.f32 %v3711, %v476
        %v3715 = vmul.f32 %v3711, %v477
        %v3716 = vadd.f32 %v3706, %v3712
        %v3717 = vadd.f32 %v3707, %v3713
        %v3718 = vadd.f32 %v3708, %v3714
        %v3719 = vadd.f32 %v3709, %v3715
        %v3720 = vsub.f32 0.0, %v3716
        %v3721 = vsub.f32 0.0, %v3717
        %v3722 = vsub.f32 0.0, %v3718
        %v3723 = vsub.f32 0.0, %v3719
        %v3724 = vmul.f32 %v3720, 1.442695
        %v3725 = vpow.pop %v3724
        %v3726 = vmul.f32 %v3721, 1.442695
        %v3727 = vpow.pop %v3726
        %v3728 = vmul.f32 %v3722, 1.442695
        %v3729 = vpow.pop %v3728
        %v3730 = vmul.f32 %v3723, 1.442695
        %v3731 = vpow.pop %v3730
        %v3732 = vadd.f32 %v3725, 1.0
        %v3733 = vadd.f32 %v3727, 1.0
        %v3734 = vadd.f32 %v3729, 1.0
        %v3735 = vadd.f32 %v3731, 1.0
        %v3736 = vrcp.pop %v3732
        %v3737 = vmul.f32 1.0, %v3736
        %v3738 = vrcp.pop %v3733
        %v3739 = vmul.f32 1.0, %v3738
        %v3740 = vrcp.pop %v3734
        %v3741 = vmul.f32 1.0, %v3740
        %v3742 = vrcp.pop %v3735
        %v3743 = vmul.f32 1.0, %v3742
        %v3744 = vmul.f32 %v414, %v3737
        %v3745 = vmul.f32 %v415, %v3739
        %v3746 = vmul.f32 %v416, %v3741
        %v3747 = vmul.f32 %v417, %v3743
        %3748 = vst.msk [vmem:[%s408] sm:$0xff] %vm482, %v3744
        %3749 = vst.msk [vmem:[%s408 + $0x8] sm:$0xff] %vm482, %v3745
        %3750 = vst.msk [vmem:[%s408 + $0x10] sm:$0xff] %vm482, %v3746
        %3751 = vst.msk [vmem:[%s408 + $0x18] sm:$0xff] %vm482, %v3747
        %s3752 = sld [smem:[#allocation5 + $0x1]]
        %v3753 = vstv %s3752
        %v3754 = vrot.slane %v3426, 3
        %v3755 = vsel %vm3042, %v3754, 0
        %3757 = vmatprep.subr.mxu0 0.0
        %3758 = vmatpush1.msra.mxu0 %v3755
        %3759 = vmatprep.subr.mxu0 0.0
        %3760 = vmatpush1.msra.mxu0 0.0
        %3761 = vmatprep.subr.mxu0 0.0
        %3762 = vmatpush1.msra.mxu0 0.0
        %3763 = vmatprep.subr.mxu0 0.0
        %3764 = vmatpush1.msra.mxu0 0.0
        %3765 = vmatprep.subr.mxu0 0.0
        %3766 = vmatpush1.msra.mxu0 0.0
        %3767 = vmatprep.subr.mxu0 0.0
        %3768 = vmatpush1.msra.mxu0 0.0
        %3769 = vmatprep.subr.mxu0 0.0
        %3770 = vmatpush1.msra.mxu0 0.0
        %3771 = vmatprep.subr.mxu0 0.0
        %3772 = vmatpush1.msra.mxu0 0.0
        %3773 = vmatprep.subr.mxu0 0.0
        %3774 = vmatpush1.msra.mxu0 0.0
        %3775 = vmatprep.subr.mxu0 0.0
        %3776 = vmatpush1.msra.mxu0 0.0
        %3777 = vmatprep.subr.mxu0 0.0
        %3778 = vmatpush1.msra.mxu0 0.0
        %3779 = vmatprep.subr.mxu0 0.0
        %3780 = vmatpush1.msra.mxu0 0.0
        %3781 = vmatprep.subr.mxu0 0.0
        %3782 = vmatpush1.msra.mxu0 0.0
        %3783 = vmatprep.subr.mxu0 0.0
        %3784 = vmatpush1.msra.mxu0 0.0
        %3785 = vmatprep.subr.mxu0 0.0
        %3786 = vmatpush1.msra.mxu0 0.0
        %3787 = vmatprep.subr.mxu0 0.0
        %3788 = vmatpush1.msra.mxu0 0.0
        %3789 = vmatprep.subr.mxu0 0.0
        %3790 = vmatpush1.msra.mxu0 0.0
        %3791 = vmatprep.subr.mxu0 0.0
        %3792 = vmatpush1.msra.mxu0 0.0
        %3793 = vmatprep.subr.mxu0 0.0
        %3794 = vmatpush1.msra.mxu0 0.0
        %3795 = vmatprep.subr.mxu0 0.0
        %3796 = vmatpush1.msra.mxu0 0.0
        %3797 = vmatprep.subr.mxu0 0.0
        %3798 = vmatpush1.msra.mxu0 0.0
        %3799 = vmatprep.subr.mxu0 0.0
        %3800 = vmatpush1.msra.mxu0 0.0
        %3801 = vmatprep.subr.mxu0 0.0
        %3802 = vmatpush1.msra.mxu0 0.0
        %3803 = vmatprep.subr.mxu0 0.0
        %3804 = vmatpush1.msra.mxu0 0.0
        %3805 = vmatprep.subr.mxu0 0.0
        %3806 = vmatpush1.msra.mxu0 0.0
        %3807 = vmatprep.subr.mxu0 0.0
        %3808 = vmatpush1.msra.mxu0 0.0
        %3809 = vmatprep.subr.mxu0 0.0
        %3810 = vmatpush1.msra.mxu0 0.0
        %3811 = vmatprep.subr.mxu0 0.0
        %3812 = vmatpush1.msra.mxu0 0.0
        %3813 = vmatprep.subr.mxu0 0.0
        %3814 = vmatpush1.msra.mxu0 0.0
        %3815 = vmatprep.subr.mxu0 0.0
        %3816 = vmatpush1.msra.mxu0 0.0
        %3817 = vmatprep.subr.mxu0 0.0
        %3818 = vmatpush1.msra.mxu0 0.0
        %3819 = vmatprep.subr.mxu0 0.0
        %3820 = vmatpush1.msra.mxu0 0.0
        %3821 = vmatprep.mubr.f32.mxu0 0.0
        %3822 = vmatmul.mubr.f32.gmra.mrb[0].mxu0 %v3461
        %v3823 = vpop.f32.mrb[0].mxu0
        %v3824 = vadd.f32 %v3753, %v3823
        %v3825 = vpop.f32.mrb[0].mxu0
        %3826 = vmatprep.mubr.f32.mxu0 0.0
        %3827 = vmatmul.mubr.f32.gmra.mrb[0].mxu0 %v3464
        %v3828 = vpop.f32.mrb[0].mxu0
        %v3829 = vadd.f32 %v3753, %v3828
        %v3830 = vpop.f32.mrb[0].mxu0
        %3831 = vmatprep.mubr.f32.mxu0 0.0
        %3832 = vmatmul.mubr.f32.gmra.mrb[0].mxu0 %v3467
        %v3833 = vpop.f32.mrb[0].mxu0
        %v3834 = vadd.f32 %v3753, %v3833
        %v3835 = vpop.f32.mrb[0].mxu0
        %3836 = vmatprep.mubr.f32.mxu0 0.0
        %3837 = vmatmul.mubr.f32.gmra.mrb[0].mxu0 %v3470
        %v3838 = vpop.f32.mrb[0].mxu0
        %v3839 = vadd.f32 %v3753, %v3838
        %v3840 = vpop.f32.mrb[0].mxu0
        %3841 = vdwg.mxu0
        %s3842 = sld [smem:[#allocation2 + $0x80]]
        %v3843 = vstv %s3842
        %v3844 = vmul.f32 %v3843, %v414
        %v3845 = vmul.f32 %v3843, %v415
        %v3846 = vmul.f32 %v3843, %v416
        %v3847 = vmul.f32 %v3843, %v417
        %v3848 = vadd.f32 %v3824, %v3844
        %v3849 = vadd.f32 %v3829, %v3845
        %v3850 = vadd.f32 %v3834, %v3846
        %v3851 = vadd.f32 %v3839, %v3847
        %s3852 = sld [smem:[#allocation2 + $0x81]]
        %v3853 = vstv %s3852
        %v3854 = vmul.f32 %v3853, %v418
        %v3855 = vmul.f32 %v3853, %v419
        %v3856 = vmul.f32 %v3853, %v420
        %v3857 = vmul.f32 %v3853, %v421
        %v3858 = vadd.f32 %v3848, %v3854
        %v3859 = vadd.f32 %v3849, %v3855
        %v3860 = vadd.f32 %v3850, %v3856
        %v3861 = vadd.f32 %v3851, %v3857
        %s3862 = sld [smem:[#allocation2 + $0x82]]
        %v3863 = vstv %s3862
        %v3864 = vmul.f32 %v3863, %v422
        %v3865 = vmul.f32 %v3863, %v423
        %v3866 = vmul.f32 %v3863, %v424
        %v3867 = vmul.f32 %v3863, %v425
        %v3868 = vadd.f32 %v3858, %v3864
        %v3869 = vadd.f32 %v3859, %v3865
        %v3870 = vadd.f32 %v3860, %v3866
        %v3871 = vadd.f32 %v3861, %v3867
        %s3872 = sld [smem:[#allocation2 + $0x83]]
        %v3873 = vstv %s3872
        %v3874 = vmul.f32 %v3873, %v426
        %v3875 = vmul.f32 %v3873, %v427
        %v3876 = vmul.f32 %v3873, %v428
        %v3877 = vmul.f32 %v3873, %v429
        %v3878 = vadd.f32 %v3868, %v3874
        %v3879 = vadd.f32 %v3869, %v3875
        %v3880 = vadd.f32 %v3870, %v3876
        %v3881 = vadd.f32 %v3871, %v3877
        %s3882 = sld [smem:[#allocation2 + $0x84]]
        %v3883 = vstv %s3882
        %v3884 = vmul.f32 %v3883, %v430
        %v3885 = vmul.f32 %v3883, %v431
        %v3886 = vmul.f32 %v3883, %v432
        %v3887 = vmul.f32 %v3883, %v433
        %v3888 = vadd.f32 %v3878, %v3884
        %v3889 = vadd.f32 %v3879, %v3885
        %v3890 = vadd.f32 %v3880, %v3886
        %v3891 = vadd.f32 %v3881, %v3887
        %s3892 = sld [smem:[#allocation2 + $0x85]]
        %v3893 = vstv %s3892
        %v3894 = vmul.f32 %v3893, %v434
        %v3895 = vmul.f32 %v3893, %v435
        %v3896 = vmul.f32 %v3893, %v436
        %v3897 = vmul.f32 %v3893, %v437
        %v3898 = vadd.f32 %v3888, %v3894
        %v3899 = vadd.f32 %v3889, %v3895
        %v3900 = vadd.f32 %v3890, %v3896
        %v3901 = vadd.f32 %v3891, %v3897
        %s3902 = sld [smem:[#allocation2 + $0x86]]
        %v3903 = vstv %s3902
        %v3904 = vmul.f32 %v3903, %v438
        %v3905 = vmul.f32 %v3903, %v439
        %v3906 = vmul.f32 %v3903, %v440
        %v3907 = vmul.f32 %v3903, %v441
        %v3908 = vadd.f32 %v3898, %v3904
        %v3909 = vadd.f32 %v3899, %v3905
        %v3910 = vadd.f32 %v3900, %v3906
        %v3911 = vadd.f32 %v3901, %v3907
        %s3912 = sld [smem:[#allocation2 + $0x87]]
        %v3913 = vstv %s3912
        %v3914 = vmul.f32 %v3913, %v442
        %v3915 = vmul.f32 %v3913, %v443
        %v3916 = vmul.f32 %v3913, %v444
        %v3917 = vmul.f32 %v3913, %v445
        %v3918 = vadd.f32 %v3908, %v3914
        %v3919 = vadd.f32 %v3909, %v3915
        %v3920 = vadd.f32 %v3910, %v3916
        %v3921 = vadd.f32 %v3911, %v3917
        %s3922 = sld [smem:[#allocation2 + $0x88]]
        %v3923 = vstv %s3922
        %v3924 = vmul.f32 %v3923, %v446
        %v3925 = vmul.f32 %v3923, %v447
        %v3926 = vmul.f32 %v3923, %v448
        %v3927 = vmul.f32 %v3923, %v449
        %v3928 = vadd.f32 %v3918, %v3924
        %v3929 = vadd.f32 %v3919, %v3925
        %v3930 = vadd.f32 %v3920, %v3926
        %v3931 = vadd.f32 %v3921, %v3927
        %s3932 = sld [smem:[#allocation2 + $0x89]]
        %v3933 = vstv %s3932
        %v3934 = vmul.f32 %v3933, %v450
        %v3935 = vmul.f32 %v3933, %v451
        %v3936 = vmul.f32 %v3933, %v452
        %v3937 = vmul.f32 %v3933, %v453
        %v3938 = vadd.f32 %v3928, %v3934
        %v3939 = vadd.f32 %v3929, %v3935
        %v3940 = vadd.f32 %v3930, %v3936
        %v3941 = vadd.f32 %v3931, %v3937
        %s3942 = sld [smem:[#allocation2 + $0x8a]]
        %v3943 = vstv %s3942
        %v3944 = vmul.f32 %v3943, %v454
        %v3945 = vmul.f32 %v3943, %v455
        %v3946 = vmul.f32 %v3943, %v456
        %v3947 = vmul.f32 %v3943, %v457
        %v3948 = vadd.f32 %v3938, %v3944
        %v3949 = vadd.f32 %v3939, %v3945
        %v3950 = vadd.f32 %v3940, %v3946
        %v3951 = vadd.f32 %v3941, %v3947
        %s3952 = sld [smem:[#allocation2 + $0x8b]]
        %v3953 = vstv %s3952
        %v3954 = vmul.f32 %v3953, %v458
        %v3955 = vmul.f32 %v3953, %v459
        %v3956 = vmul.f32 %v3953, %v460
        %v3957 = vmul.f32 %v3953, %v461
        %v3958 = vadd.f32 %v3948, %v3954
        %v3959 = vadd.f32 %v3949, %v3955
        %v3960 = vadd.f32 %v3950, %v3956
        %v3961 = vadd.f32 %v3951, %v3957
        %s3962 = sld [smem:[#allocation2 + $0x8c]]
        %v3963 = vstv %s3962
        %v3964 = vmul.f32 %v3963, %v462
        %v3965 = vmul.f32 %v3963, %v463
        %v3966 = vmul.f32 %v3963, %v464
        %v3967 = vmul.f32 %v3963, %v465
        %v3968 = vadd.f32 %v3958, %v3964
        %v3969 = vadd.f32 %v3959, %v3965
        %v3970 = vadd.f32 %v3960, %v3966
        %v3971 = vadd.f32 %v3961, %v3967
        %s3972 = sld [smem:[#allocation2 + $0x8d]]
        %v3973 = vstv %s3972
        %v3974 = vmul.f32 %v3973, %v466
        %v3975 = vmul.f32 %v3973, %v467
        %v3976 = vmul.f32 %v3973, %v468
        %v3977 = vmul.f32 %v3973, %v469
        %v3978 = vadd.f32 %v3968, %v3974
        %v3979 = vadd.f32 %v3969, %v3975
        %v3980 = vadd.f32 %v3970, %v3976
        %v3981 = vadd.f32 %v3971, %v3977
        %s3982 = sld [smem:[#allocation2 + $0x8e]]
        %v3983 = vstv %s3982
        %v3984 = vmul.f32 %v3983, %v470
        %v3985 = vmul.f32 %v3983, %v471
        %v3986 = vmul.f32 %v3983, %v472
        %v3987 = vmul.f32 %v3983, %v473
        %v3988 = vadd.f32 %v3978, %v3984
        %v3989 = vadd.f32 %v3979, %v3985
        %v3990 = vadd.f32 %v3980, %v3986
        %v3991 = vadd.f32 %v3981, %v3987
        %s3992 = sld [smem:[#allocation2 + $0x8f]]
        %v3993 = vstv %s3992
        %v3994 = vmul.f32 %v3993, %v474
        %v3995 = vmul.f32 %v3993, %v475
        %v3996 = vmul.f32 %v3993, %v476
        %v3997 = vmul.f32 %v3993, %v477
        %v3998 = vadd.f32 %v3988, %v3994
        %v3999 = vadd.f32 %v3989, %v3995
        %v4000 = vadd.f32 %v3990, %v3996
        %v4001 = vadd.f32 %v3991, %v3997
        %v4002 = vsub.f32 0.0, %v3998
        %v4003 = vsub.f32 0.0, %v3999
        %v4004 = vsub.f32 0.0, %v4000
        %v4005 = vsub.f32 0.0, %v4001
        %v4006 = vmul.f32 %v4002, 1.442695
        %v4007 = vpow.pop %v4006
        %v4008 = vmul.f32 %v4003, 1.442695
        %v4009 = vpow.pop %v4008
        %v4010 = vmul.f32 %v4004, 1.442695
        %v4011 = vpow.pop %v4010
        %v4012 = vmul.f32 %v4005, 1.442695
        %v4013 = vpow.pop %v4012
        %v4014 = vadd.f32 %v4007, 1.0
        %v4015 = vadd.f32 %v4009, 1.0
        %v4016 = vadd.f32 %v4011, 1.0
        %v4017 = vadd.f32 %v4013, 1.0
        %v4018 = vrcp.pop %v4014
        %v4019 = vmul.f32 1.0, %v4018
        %v4020 = vrcp.pop %v4015
        %v4021 = vmul.f32 1.0, %v4020
        %v4022 = vrcp.pop %v4016
        %v4023 = vmul.f32 1.0, %v4022
        %v4024 = vrcp.pop %v4017
        %v4025 = vmul.f32 1.0, %v4024
        %v4026 = vmul.f32 %v418, %v4019
        %v4027 = vmul.f32 %v419, %v4021
        %v4028 = vmul.f32 %v420, %v4023
        %v4029 = vmul.f32 %v421, %v4025
        %4030 = vst.msk [vmem:[%s408 + $0x20] sm:$0xff] %vm482, %v4026
        %4031 = vst.msk [vmem:[%s408 + $0x28] sm:$0xff] %vm482, %v4027
        %4032 = vst.msk [vmem:[%s408 + $0x30] sm:$0xff] %vm482, %v4028
        %4033 = vst.msk [vmem:[%s408 + $0x38] sm:$0xff] %vm482, %v4029
        %s4034 = sld [smem:[#allocation5 + $0x2]]
        %v4035 = vstv %s4034
        %v4037 = vrot.slane %v3426, 6
        %v4038 = vrot.slane %v3431, 6
        %v4039 = vsel %vm3040, %v4037, %v4038
        %v4040 = vsel %vm3042, %v4039, 0
        %4042 = vmatprep.subr.mxu0 0.0
        %4043 = vmatpush1.msra.mxu0 %v4040
        %4044 = vmatprep.subr.mxu0 0.0
        %4045 = vmatpush1.msra.mxu0 0.0
        %4046 = vmatprep.subr.mxu0 0.0
        %4047 = vmatpush1.msra.mxu0 0.0
        %4048 = vmatprep.subr.mxu0 0.0
        %4049 = vmatpush1.msra.mxu0 0.0
        %4050 = vmatprep.subr.mxu0 0.0
        %4051 = vmatpush1.msra.mxu0 0.0
        %4052 = vmatprep.subr.mxu0 0.0
        %4053 = vmatpush1.msra.mxu0 0.0
        %4054 = vmatprep.subr.mxu0 0.0
        %4055 = vmatpush1.msra.mxu0 0.0
        %4056 = vmatprep.subr.mxu0 0.0
        %4057 = vmatpush1.msra.mxu0 0.0
        %4058 = vmatprep.subr.mxu0 0.0
        %4059 = vmatpush1.msra.mxu0 0.0
        %4060 = vmatprep.subr.mxu0 0.0
        %4061 = vmatpush1.msra.mxu0 0.0
        %4062 = vmatprep.subr.mxu0 0.0
        %4063 = vmatpush1.msra.mxu0 0.0
        %4064 = vmatprep.subr.mxu0 0.0
        %4065 = vmatpush1.msra.mxu0 0.0
        %4066 = vmatprep.subr.mxu0 0.0
        %4067 = vmatpush1.msra.mxu0 0.0
        %4068 = vmatprep.subr.mxu0 0.0
        %4069 = vmatpush1.msra.mxu0 0.0
        %4070 = vmatprep.subr.mxu0 0.0
        %4071 = vmatpush1.msra.mxu0 0.0
        %4072 = vmatprep.subr.mxu0 0.0
        %4073 = vmatpush1.msra.mxu0 0.0
        %4074 = vmatprep.subr.mxu0 0.0
        %4075 = vmatpush1.msra.mxu0 0.0
        %4076 = vmatprep.subr.mxu0 0.0
        %4077 = vmatpush1.msra.mxu0 0.0
        %4078 = vmatprep.subr.mxu0 0.0
        %4079 = vmatpush1.msra.mxu0 0.0
        %4080 = vmatprep.subr.mxu0 0.0
        %4081 = vmatpush1.msra.mxu0 0.0
        %4082 = vmatprep.subr.mxu0 0.0
        %4083 = vmatpush1.msra.mxu0 0.0
        %4084 = vmatprep.subr.mxu0 0.0
        %4085 = vmatpush1.msra.mxu0 0.0
        %4086 = vmatprep.subr.mxu0 0.0
        %4087 = vmatpush1.msra.mxu0 0.0
        %4088 = vmatprep.subr.mxu0 0.0
        %4089 = vmatpush1.msra.mxu0 0.0
        %4090 = vmatprep.subr.mxu0 0.0
        %4091 = vmatpush1.msra.mxu0 0.0
        %4092 = vmatprep.subr.mxu0 0.0
        %4093 = vmatpush1.msra.mxu0 0.0
        %4094 = vmatprep.subr.mxu0 0.0
        %4095 = vmatpush1.msra.mxu0 0.0
        %4096 = vmatprep.subr.mxu0 0.0
        %4097 = vmatpush1.msra.mxu0 0.0
        %4098 = vmatprep.subr.mxu0 0.0
        %4099 = vmatpush1.msra.mxu0 0.0
        %4100 = vmatprep.subr.mxu0 0.0
        %4101 = vmatpush1.msra.mxu0 0.0
        %4102 = vmatprep.subr.mxu0 0.0
        %4103 = vmatpush1.msra.mxu0 0.0
        %4104 = vmatprep.subr.mxu0 0.0
        %4105 = vmatpush1.msra.mxu0 0.0
        %4106 = vmatprep.mubr.f32.mxu0 0.0
        %4107 = vmatmul.mubr.f32.gmra.mrb[0].mxu0 %v3461
        %v4108 = vpop.f32.mrb[0].mxu0
        %v4109 = vadd.f32 %v4035, %v4108
        %v4110 = vpop.f32.mrb[0].mxu0
        %4111 = vmatprep.mubr.f32.mxu0 0.0
        %4112 = vmatmul.mubr.f32.gmra.mrb[0].mxu0 %v3464
        %v4113 = vpop.f32.mrb[0].mxu0
        %v4114 = vadd.f32 %v4035, %v4113
        %v4115 = vpop.f32.mrb[0].mxu0
        %4116 = vmatprep.mubr.f32.mxu0 0.0
        %4117 = vmatmul.mubr.f32.gmra.mrb[0].mxu0 %v3467
        %v4118 = vpop.f32.mrb[0].mxu0
        %v4119 = vadd.f32 %v4035, %v4118
        %v4120 = vpop.f32.mrb[0].mxu0
        %4121 = vmatprep.mubr.f32.mxu0 0.0
        %4122 = vmatmul.mubr.f32.gmra.mrb[0].mxu0 %v3470
        %v4123 = vpop.f32.mrb[0].mxu0
        %v4124 = vadd.f32 %v4035, %v4123
        %v4125 = vpop.f32.mrb[0].mxu0
        %4126 = vdwg.mxu0
        %s4127 = sld [smem:[#allocation2 + $0x100]]
        %v4128 = vstv %s4127
        %v4129 = vmul.f32 %v4128, %v414
        %v4130 = vmul.f32 %v4128, %v415
        %v4131 = vmul.f32 %v4128, %v416
        %v4132 = vmul.f32 %v4128, %v417
        %v4133 = vadd.f32 %v4109, %v4129
        %v4134 = vadd.f32 %v4114, %v4130
        %v4135 = vadd.f32 %v4119, %v4131
        %v4136 = vadd.f32 %v4124, %v4132
        %s4137 = sld [smem:[#allocation2 + $0x101]]
        %v4138 = vstv %s4137
        %v4139 = vmul.f32 %v4138, %v418
        %v4140 = vmul.f32 %v4138, %v419
        %v4141 = vmul.f32 %v4138, %v420
        %v4142 = vmul.f32 %v4138, %v421
        %v4143 = vadd.f32 %v4133, %v4139
        %v4144 = vadd.f32 %v4134, %v4140
        %v4145 = vadd.f32 %v4135, %v4141
        %v4146 = vadd.f32 %v4136, %v4142
        %s4147 = sld [smem:[#allocation2 + $0x102]]
        %v4148 = vstv %s4147
        %v4149 = vmul.f32 %v4148, %v422
        %v4150 = vmul.f32 %v4148, %v423
        %v4151 = vmul.f32 %v4148, %v424
        %v4152 = vmul.f32 %v4148, %v425
        %v4153 = vadd.f32 %v4143, %v4149
        %v4154 = vadd.f32 %v4144, %v4150
        %v4155 = vadd.f32 %v4145, %v4151
        %v4156 = vadd.f32 %v4146, %v4152
        %s4157 = sld [smem:[#allocation2 + $0x103]]
        %v4158 = vstv %s4157
        %v4159 = vmul.f32 %v4158, %v426
        %v4160 = vmul.f32 %v4158, %v427
        %v4161 = vmul.f32 %v4158, %v428
        %v4162 = vmul.f32 %v4158, %v429
        %v4163 = vadd.f32 %v4153, %v4159
        %v4164 = vadd.f32 %v4154, %v4160
        %v4165 = vadd.f32 %v4155, %v4161
        %v4166 = vadd.f32 %v4156, %v4162
        %s4167 = sld [smem:[#allocation2 + $0x104]]
        %v4168 = vstv %s4167
        %v4169 = vmul.f32 %v4168, %v430
        %v4170 = vmul.f32 %v4168, %v431
        %v4171 = vmul.f32 %v4168, %v432
        %v4172 = vmul.f32 %v4168, %v433
        %v4173 = vadd.f32 %v4163, %v4169
        %v4174 = vadd.f32 %v4164, %v4170
        %v4175 = vadd.f32 %v4165, %v4171
        %v4176 = vadd.f32 %v4166, %v4172
        %s4177 = sld [smem:[#allocation2 + $0x105]]
        %v4178 = vstv %s4177
        %v4179 = vmul.f32 %v4178, %v434
        %v4180 = vmul.f32 %v4178, %v435
        %v4181 = vmul.f32 %v4178, %v436
        %v4182 = vmul.f32 %v4178, %v437
        %v4183 = vadd.f32 %v4173, %v4179
        %v4184 = vadd.f32 %v4174, %v4180
        %v4185 = vadd.f32 %v4175, %v4181
        %v4186 = vadd.f32 %v4176, %v4182
        %s4187 = sld [smem:[#allocation2 + $0x106]]
        %v4188 = vstv %s4187
        %v4189 = vmul.f32 %v4188, %v438
        %v4190 = vmul.f32 %v4188, %v439
        %v4191 = vmul.f32 %v4188, %v440
        %v4192 = vmul.f32 %v4188, %v441
        %v4193 = vadd.f32 %v4183, %v4189
        %v4194 = vadd.f32 %v4184, %v4190
        %v4195 = vadd.f32 %v4185, %v4191
        %v4196 = vadd.f32 %v4186, %v4192
        %s4197 = sld [smem:[#allocation2 + $0x107]]
        %v4198 = vstv %s4197
        %v4199 = vmul.f32 %v4198, %v442
        %v4200 = vmul.f32 %v4198, %v443
        %v4201 = vmul.f32 %v4198, %v444
        %v4202 = vmul.f32 %v4198, %v445
        %v4203 = vadd.f32 %v4193, %v4199
        %v4204 = vadd.f32 %v4194, %v4200
        %v4205 = vadd.f32 %v4195, %v4201
        %v4206 = vadd.f32 %v4196, %v4202
        %s4207 = sld [smem:[#allocation2 + $0x108]]
        %v4208 = vstv %s4207
        %v4209 = vmul.f32 %v4208, %v446
        %v4210 = vmul.f32 %v4208, %v447
        %v4211 = vmul.f32 %v4208, %v448
        %v4212 = vmul.f32 %v4208, %v449
        %v4213 = vadd.f32 %v4203, %v4209
        %v4214 = vadd.f32 %v4204, %v4210
        %v4215 = vadd.f32 %v4205, %v4211
        %v4216 = vadd.f32 %v4206, %v4212
        %s4217 = sld [smem:[#allocation2 + $0x109]]
        %v4218 = vstv %s4217
        %v4219 = vmul.f32 %v4218, %v450
        %v4220 = vmul.f32 %v4218, %v451
        %v4221 = vmul.f32 %v4218, %v452
        %v4222 = vmul.f32 %v4218, %v453
        %v4223 = vadd.f32 %v4213, %v4219
        %v4224 = vadd.f32 %v4214, %v4220
        %v4225 = vadd.f32 %v4215, %v4221
        %v4226 = vadd.f32 %v4216, %v4222
        %s4227 = sld [smem:[#allocation2 + $0x10a]]
        %v4228 = vstv %s4227
        %v4229 = vmul.f32 %v4228, %v454
        %v4230 = vmul.f32 %v4228, %v455
        %v4231 = vmul.f32 %v4228, %v456
        %v4232 = vmul.f32 %v4228, %v457
        %v4233 = vadd.f32 %v4223, %v4229
        %v4234 = vadd.f32 %v4224, %v4230
        %v4235 = vadd.f32 %v4225, %v4231
        %v4236 = vadd.f32 %v4226, %v4232
        %s4237 = sld [smem:[#allocation2 + $0x10b]]
        %v4238 = vstv %s4237
        %v4239 = vmul.f32 %v4238, %v458
        %v4240 = vmul.f32 %v4238, %v459
        %v4241 = vmul.f32 %v4238, %v460
        %v4242 = vmul.f32 %v4238, %v461
        %v4243 = vadd.f32 %v4233, %v4239
        %v4244 = vadd.f32 %v4234, %v4240
        %v4245 = vadd.f32 %v4235, %v4241
        %v4246 = vadd.f32 %v4236, %v4242
        %s4247 = sld [smem:[#allocation2 + $0x10c]]
        %v4248 = vstv %s4247
        %v4249 = vmul.f32 %v4248, %v462
        %v4250 = vmul.f32 %v4248, %v463
        %v4251 = vmul.f32 %v4248, %v464
        %v4252 = vmul.f32 %v4248, %v465
        %v4253 = vadd.f32 %v4243, %v4249
        %v4254 = vadd.f32 %v4244, %v4250
        %v4255 = vadd.f32 %v4245, %v4251
        %v4256 = vadd.f32 %v4246, %v4252
        %s4257 = sld [smem:[#allocation2 + $0x10d]]
        %v4258 = vstv %s4257
        %v4259 = vmul.f32 %v4258, %v466
        %v4260 = vmul.f32 %v4258, %v467
        %v4261 = vmul.f32 %v4258, %v468
        %v4262 = vmul.f32 %v4258, %v469
        %v4263 = vadd.f32 %v4253, %v4259
        %v4264 = vadd.f32 %v4254, %v4260
        %v4265 = vadd.f32 %v4255, %v4261
        %v4266 = vadd.f32 %v4256, %v4262
        %s4267 = sld [smem:[#allocation2 + $0x10e]]
        %v4268 = vstv %s4267
        %v4269 = vmul.f32 %v4268, %v470
        %v4270 = vmul.f32 %v4268, %v471
        %v4271 = vmul.f32 %v4268, %v472
        %v4272 = vmul.f32 %v4268, %v473
        %v4273 = vadd.f32 %v4263, %v4269
        %v4274 = vadd.f32 %v4264, %v4270
        %v4275 = vadd.f32 %v4265, %v4271
        %v4276 = vadd.f32 %v4266, %v4272
        %s4277 = sld [smem:[#allocation2 + $0x10f]]
        %v4278 = vstv %s4277
        %v4279 = vmul.f32 %v4278, %v474
        %v4280 = vmul.f32 %v4278, %v475
        %v4281 = vmul.f32 %v4278, %v476
        %v4282 = vmul.f32 %v4278, %v477
        %v4283 = vadd.f32 %v4273, %v4279
        %v4284 = vadd.f32 %v4274, %v4280
        %v4285 = vadd.f32 %v4275, %v4281
        %v4286 = vadd.f32 %v4276, %v4282
        %v4287 = vsub.f32 0.0, %v4283
        %v4288 = vsub.f32 0.0, %v4284
        %v4289 = vsub.f32 0.0, %v4285
        %v4290 = vsub.f32 0.0, %v4286
        %v4291 = vmul.f32 %v4287, 1.442695
        %v4292 = vpow.pop %v4291
        %v4293 = vmul.f32 %v4288, 1.442695
        %v4294 = vpow.pop %v4293
        %v4295 = vmul.f32 %v4289, 1.442695
        %v4296 = vpow.pop %v4295
        %v4297 = vmul.f32 %v4290, 1.442695
        %v4298 = vpow.pop %v4297
        %v4299 = vadd.f32 %v4292, 1.0
        %v4300 = vadd.f32 %v4294, 1.0
        %v4301 = vadd.f32 %v4296, 1.0
        %v4302 = vadd.f32 %v4298, 1.0
        %v4303 = vrcp.pop %v4299
        %v4304 = vmul.f32 1.0, %v4303
        %v4305 = vrcp.pop %v4300
        %v4306 = vmul.f32 1.0, %v4305
        %v4307 = vrcp.pop %v4301
        %v4308 = vmul.f32 1.0, %v4307
        %v4309 = vrcp.pop %v4302
        %v4310 = vmul.f32 1.0, %v4309
        %v4311 = vmul.f32 %v422, %v4304
        %v4312 = vmul.f32 %v423, %v4306
        %v4313 = vmul.f32 %v424, %v4308
        %v4314 = vmul.f32 %v425, %v4310
        %4315 = vst.msk [vmem:[%s408 + $0x40] sm:$0xff] %vm482, %v4311
        %4316 = vst.msk [vmem:[%s408 + $0x48] sm:$0xff] %vm482, %v4312
        %4317 = vst.msk [vmem:[%s408 + $0x50] sm:$0xff] %vm482, %v4313
        %4318 = vst.msk [vmem:[%s408 + $0x58] sm:$0xff] %vm482, %v4314
        %s4319 = sld [smem:[#allocation5 + $0x3]]
        %v4320 = vstv %s4319
        %v4321 = vrot.slane %v3431, 1
        %v4322 = vsel %vm3042, %v4321, 0
        %4324 = vmatprep.subr.mxu0 0.0
        %4325 = vmatpush1.msra.mxu0 %v4322
        %4326 = vmatprep.subr.mxu0 0.0
        %4327 = vmatpush1.msra.mxu0 0.0
        %4328 = vmatprep.subr.mxu0 0.0
        %4329 = vmatpush1.msra.mxu0 0.0
        %4330 = vmatprep.subr.mxu0 0.0
        %4331 = vmatpush1.msra.mxu0 0.0
        %4332 = vmatprep.subr.mxu0 0.0
        %4333 = vmatpush1.msra.mxu0 0.0
        %4334 = vmatprep.subr.mxu0 0.0
        %4335 = vmatpush1.msra.mxu0 0.0
        %4336 = vmatprep.subr.mxu0 0.0
        %4337 = vmatpush1.msra.mxu0 0.0
        %4338 = vmatprep.subr.mxu0 0.0
        %4339 = vmatpush1.msra.mxu0 0.0
        %4340 = vmatprep.subr.mxu0 0.0
        %4341 = vmatpush1.msra.mxu0 0.0
        %4342 = vmatprep.subr.mxu0 0.0
        %4343 = vmatpush1.msra.mxu0 0.0
        %4344 = vmatprep.subr.mxu0 0.0
        %4345 = vmatpush1.msra.mxu0 0.0
        %4346 = vmatprep.subr.mxu0 0.0
        %4347 = vmatpush1.msra.mxu0 0.0
        %4348 = vmatprep.subr.mxu0 0.0
        %4349 = vmatpush1.msra.mxu0 0.0
        %4350 = vmatprep.subr.mxu0 0.0
        %4351 = vmatpush1.msra.mxu0 0.0
        %4352 = vmatprep.subr.mxu0 0.0
        %4353 = vmatpush1.msra.mxu0 0.0
        %4354 = vmatprep.subr.mxu0 0.0
        %4355 = vmatpush1.msra.mxu0 0.0
        %4356 = vmatprep.subr.mxu0 0.0
        %4357 = vmatpush1.msra.mxu0 0.0
        %4358 = vmatprep.subr.mxu0 0.0
        %4359 = vmatpush1.msra.mxu0 0.0
        %4360 = vmatprep.subr.mxu0 0.0
        %4361 = vmatpush1.msra.mxu0 0.0
        %4362 = vmatprep.subr.mxu0 0.0
        %4363 = vmatpush1.msra.mxu0 0.0
        %4364 = vmatprep.subr.mxu0 0.0
        %4365 = vmatpush1.msra.mxu0 0.0
        %4366 = vmatprep.subr.mxu0 0.0
        %4367 = vmatpush1.msra.mxu0 0.0
        %4368 = vmatprep.subr.mxu0 0.0
        %4369 = vmatpush1.msra.mxu0 0.0
        %4370 = vmatprep.subr.mxu0 0.0
        %4371 = vmatpush1.msra.mxu0 0.0
        %4372 = vmatprep.subr.mxu0 0.0
        %4373 = vmatpush1.msra.mxu0 0.0
        %4374 = vmatprep.subr.mxu0 0.0
        %4375 = vmatpush1.msra.mxu0 0.0
        %4376 = vmatprep.subr.mxu0 0.0
        %4377 = vmatpush1.msra.mxu0 0.0
        %4378 = vmatprep.subr.mxu0 0.0
        %4379 = vmatpush1.msra.mxu0 0.0
        %4380 = vmatprep.subr.mxu0 0.0
        %4381 = vmatpush1.msra.mxu0 0.0
        %4382 = vmatprep.subr.mxu0 0.0
        %4383 = vmatpush1.msra.mxu0 0.0
        %4384 = vmatprep.subr.mxu0 0.0
        %4385 = vmatpush1.msra.mxu0 0.0
        %4386 = vmatprep.subr.mxu0 0.0
        %4387 = vmatpush1.msra.mxu0 0.0
        %4388 = vmatprep.mubr.f32.mxu0 0.0
        %4389 = vmatmul.mubr.f32.gmra.mrb[0].mxu0 %v3461
        %v4390 = vpop.f32.mrb[0].mxu0
        %v4391 = vadd.f32 %v4320, %v4390
        %v4392 = vpop.f32.mrb[0].mxu0
        %4393 = vmatprep.mubr.f32.mxu0 0.0
        %4394 = vmatmul.mubr.f32.gmra.mrb[0].mxu0 %v3464
        %v4395 = vpop.f32.mrb[0].mxu0
        %v4396 = vadd.f32 %v4320, %v4395
        %v4397 = vpop.f32.mrb[0].mxu0
        %4398 = vmatprep.mubr.f32.mxu0 0.0
        %4399 = vmatmul.mubr.f32.gmra.mrb[0].mxu0 %v3467
        %v4400 = vpop.f32.mrb[0].mxu0
        %v4401 = vadd.f32 %v4320, %v4400
        %v4402 = vpop.f32.mrb[0].mxu0
        %4403 = vmatprep.mubr.f32.mxu0 0.0
        %4404 = vmatmul.mubr.f32.gmra.mrb[0].mxu0 %v3470
        %v4405 = vpop.f32.mrb[0].mxu0
        %v4406 = vadd.f32 %v4320, %v4405
        %v4407 = vpop.f32.mrb[0].mxu0
        %4408 = vdwg.mxu0
        %s4409 = sld [smem:[#allocation2 + $0x180]]
        %v4410 = vstv %s4409
        %v4411 = vmul.f32 %v4410, %v414
        %v4412 = vmul.f32 %v4410, %v415
        %v4413 = vmul.f32 %v4410, %v416
        %v4414 = vmul.f32 %v4410, %v417
        %v4415 = vadd.f32 %v4391, %v4411
        %v4416 = vadd.f32 %v4396, %v4412
        %v4417 = vadd.f32 %v4401, %v4413
        %v4418 = vadd.f32 %v4406, %v4414
        %s4419 = sld [smem:[#allocation2 + $0x181]]
        %v4420 = vstv %s4419
        %v4421 = vmul.f32 %v4420, %v418
        %v4422 = vmul.f32 %v4420, %v419
        %v4423 = vmul.f32 %v4420, %v420
        %v4424 = vmul.f32 %v4420, %v421
        %v4425 = vadd.f32 %v4415, %v4421
        %v4426 = vadd.f32 %v4416, %v4422
        %v4427 = vadd.f32 %v4417, %v4423
        %v4428 = vadd.f32 %v4418, %v4424
        %s4429 = sld [smem:[#allocation2 + $0x182]]
        %v4430 = vstv %s4429
        %v4431 = vmul.f32 %v4430, %v422
        %v4432 = vmul.f32 %v4430, %v423
        %v4433 = vmul.f32 %v4430, %v424
        %v4434 = vmul.f32 %v4430, %v425
        %v4435 = vadd.f32 %v4425, %v4431
        %v4436 = vadd.f32 %v4426, %v4432
        %v4437 = vadd.f32 %v4427, %v4433
        %v4438 = vadd.f32 %v4428, %v4434
        %s4439 = sld [smem:[#allocation2 + $0x183]]
        %v4440 = vstv %s4439
        %v4441 = vmul.f32 %v4440, %v426
        %v4442 = vmul.f32 %v4440, %v427
        %v4443 = vmul.f32 %v4440, %v428
        %v4444 = vmul.f32 %v4440, %v429
        %v4445 = vadd.f32 %v4435, %v4441
        %v4446 = vadd.f32 %v4436, %v4442
        %v4447 = vadd.f32 %v4437, %v4443
        %v4448 = vadd.f32 %v4438, %v4444
        %s4449 = sld [smem:[#allocation2 + $0x184]]
        %v4450 = vstv %s4449
        %v4451 = vmul.f32 %v4450, %v430
        %v4452 = vmul.f32 %v4450, %v431
        %v4453 = vmul.f32 %v4450, %v432
        %v4454 = vmul.f32 %v4450, %v433
        %v4455 = vadd.f32 %v4445, %v4451
        %v4456 = vadd.f32 %v4446, %v4452
        %v4457 = vadd.f32 %v4447, %v4453
        %v4458 = vadd.f32 %v4448, %v4454
        %s4459 = sld [smem:[#allocation2 + $0x185]]
        %v4460 = vstv %s4459
        %v4461 = vmul.f32 %v4460, %v434
        %v4462 = vmul.f32 %v4460, %v435
        %v4463 = vmul.f32 %v4460, %v436
        %v4464 = vmul.f32 %v4460, %v437
        %v4465 = vadd.f32 %v4455, %v4461
        %v4466 = vadd.f32 %v4456, %v4462
        %v4467 = vadd.f32 %v4457, %v4463
        %v4468 = vadd.f32 %v4458, %v4464
        %s4469 = sld [smem:[#allocation2 + $0x186]]
        %v4470 = vstv %s4469
        %v4471 = vmul.f32 %v4470, %v438
        %v4472 = vmul.f32 %v4470, %v439
        %v4473 = vmul.f32 %v4470, %v440
        %v4474 = vmul.f32 %v4470, %v441
        %v4475 = vadd.f32 %v4465, %v4471
        %v4476 = vadd.f32 %v4466, %v4472
        %v4477 = vadd.f32 %v4467, %v4473
        %v4478 = vadd.f32 %v4468, %v4474
        %s4479 = sld [smem:[#allocation2 + $0x187]]
        %v4480 = vstv %s4479
        %v4481 = vmul.f32 %v4480, %v442
        %v4482 = vmul.f32 %v4480, %v443
        %v4483 = vmul.f32 %v4480, %v444
        %v4484 = vmul.f32 %v4480, %v445
        %v4485 = vadd.f32 %v4475, %v4481
        %v4486 = vadd.f32 %v4476, %v4482
        %v4487 = vadd.f32 %v4477, %v4483
        %v4488 = vadd.f32 %v4478, %v4484
        %s4489 = sld [smem:[#allocation2 + $0x188]]
        %v4490 = vstv %s4489
        %v4491 = vmul.f32 %v4490, %v446
        %v4492 = vmul.f32 %v4490, %v447
        %v4493 = vmul.f32 %v4490, %v448
        %v4494 = vmul.f32 %v4490, %v449
        %v4495 = vadd.f32 %v4485, %v4491
        %v4496 = vadd.f32 %v4486, %v4492
        %v4497 = vadd.f32 %v4487, %v4493
        %v4498 = vadd.f32 %v4488, %v4494
        %s4499 = sld [smem:[#allocation2 + $0x189]]
        %v4500 = vstv %s4499
        %v4501 = vmul.f32 %v4500, %v450
        %v4502 = vmul.f32 %v4500, %v451
        %v4503 = vmul.f32 %v4500, %v452
        %v4504 = vmul.f32 %v4500, %v453
        %v4505 = vadd.f32 %v4495, %v4501
        %v4506 = vadd.f32 %v4496, %v4502
        %v4507 = vadd.f32 %v4497, %v4503
        %v4508 = vadd.f32 %v4498, %v4504
        %s4509 = sld [smem:[#allocation2 + $0x18a]]
        %v4510 = vstv %s4509
        %v4511 = vmul.f32 %v4510, %v454
        %v4512 = vmul.f32 %v4510, %v455
        %v4513 = vmul.f32 %v4510, %v456
        %v4514 = vmul.f32 %v4510, %v457
        %v4515 = vadd.f32 %v4505, %v4511
        %v4516 = vadd.f32 %v4506, %v4512
        %v4517 = vadd.f32 %v4507, %v4513
        %v4518 = vadd.f32 %v4508, %v4514
        %s4519 = sld [smem:[#allocation2 + $0x18b]]
        %v4520 = vstv %s4519
        %v4521 = vmul.f32 %v4520, %v458
        %v4522 = vmul.f32 %v4520, %v459
        %v4523 = vmul.f32 %v4520, %v460
        %v4524 = vmul.f32 %v4520, %v461
        %v4525 = vadd.f32 %v4515, %v4521
        %v4526 = vadd.f32 %v4516, %v4522
        %v4527 = vadd.f32 %v4517, %v4523
        %v4528 = vadd.f32 %v4518, %v4524
        %s4529 = sld [smem:[#allocation2 + $0x18c]]
        %v4530 = vstv %s4529
        %v4531 = vmul.f32 %v4530, %v462
        %v4532 = vmul.f32 %v4530, %v463
        %v4533 = vmul.f32 %v4530, %v464
        %v4534 = vmul.f32 %v4530, %v465
        %v4535 = vadd.f32 %v4525, %v4531
        %v4536 = vadd.f32 %v4526, %v4532
        %v4537 = vadd.f32 %v4527, %v4533
        %v4538 = vadd.f32 %v4528, %v4534
        %s4539 = sld [smem:[#allocation2 + $0x18d]]
        %v4540 = vstv %s4539
        %v4541 = vmul.f32 %v4540, %v466
        %v4542 = vmul.f32 %v4540, %v467
        %v4543 = vmul.f32 %v4540, %v468
        %v4544 = vmul.f32 %v4540, %v469
        %v4545 = vadd.f32 %v4535, %v4541
        %v4546 = vadd.f32 %v4536, %v4542
        %v4547 = vadd.f32 %v4537, %v4543
        %v4548 = vadd.f32 %v4538, %v4544
        %s4549 = sld [smem:[#allocation2 + $0x18e]]
        %v4550 = vstv %s4549
        %v4551 = vmul.f32 %v4550, %v470
        %v4552 = vmul.f32 %v4550, %v471
        %v4553 = vmul.f32 %v4550, %v472
        %v4554 = vmul.f32 %v4550, %v473
        %v4555 = vadd.f32 %v4545, %v4551
        %v4556 = vadd.f32 %v4546, %v4552
        %v4557 = vadd.f32 %v4547, %v4553
        %v4558 = vadd.f32 %v4548, %v4554
        %s4559 = sld [smem:[#allocation2 + $0x18f]]
        %v4560 = vstv %s4559
        %v4561 = vmul.f32 %v4560, %v474
        %v4562 = vmul.f32 %v4560, %v475
        %v4563 = vmul.f32 %v4560, %v476
        %v4564 = vmul.f32 %v4560, %v477
        %v4565 = vadd.f32 %v4555, %v4561
        %v4566 = vadd.f32 %v4556, %v4562
        %v4567 = vadd.f32 %v4557, %v4563
        %v4568 = vadd.f32 %v4558, %v4564
        %v4569 = vsub.f32 0.0, %v4565
        %v4570 = vsub.f32 0.0, %v4566
        %v4571 = vsub.f32 0.0, %v4567
        %v4572 = vsub.f32 0.0, %v4568
        %v4573 = vmul.f32 %v4569, 1.442695
        %v4574 = vpow.pop %v4573
        %v4575 = vmul.f32 %v4570, 1.442695
        %v4576 = vpow.pop %v4575
        %v4577 = vmul.f32 %v4571, 1.442695
        %v4578 = vpow.pop %v4577
        %v4579 = vmul.f32 %v4572, 1.442695
        %v4580 = vpow.pop %v4579
        %v4581 = vadd.f32 %v4574, 1.0
        %v4582 = vadd.f32 %v4576, 1.0
        %v4583 = vadd.f32 %v4578, 1.0
        %v4584 = vadd.f32 %v4580, 1.0
        %v4585 = vrcp.pop %v4581
        %v4586 = vmul.f32 1.0, %v4585
        %v4587 = vrcp.pop %v4582
        %v4588 = vmul.f32 1.0, %v4587
        %v4589 = vrcp.pop %v4583
        %v4590 = vmul.f32 1.0, %v4589
        %v4591 = vrcp.pop %v4584
        %v4592 = vmul.f32 1.0, %v4591
        %v4593 = vmul.f32 %v426, %v4586
        %v4594 = vmul.f32 %v427, %v4588
        %v4595 = vmul.f32 %v428, %v4590
        %v4596 = vmul.f32 %v429, %v4592
        %4597 = vst.msk [vmem:[%s408 + $0x60] sm:$0xff] %vm482, %v4593
        %4598 = vst.msk [vmem:[%s408 + $0x68] sm:$0xff] %vm482, %v4594
        %4599 = vst.msk [vmem:[%s408 + $0x70] sm:$0xff] %vm482, %v4595
        %4600 = vst.msk [vmem:[%s408 + $0x78] sm:$0xff] %vm482, %v4596
        %s4601 = sld [smem:[#allocation5 + $0x4]]
        %v4602 = vstv %s4601
        %v4603 = vrot.slane %v3431, 4
        %v4604 = vsel %vm3042, %v4603, 0
        %4606 = vmatprep.subr.mxu0 0.0
        %4607 = vmatpush1.msra.mxu0 %v4604
        %4608 = vmatprep.subr.mxu0 0.0
        %4609 = vmatpush1.msra.mxu0 0.0
        %4610 = vmatprep.subr.mxu0 0.0
        %4611 = vmatpush1.msra.mxu0 0.0
        %4612 = vmatprep.subr.mxu0 0.0
        %4613 = vmatpush1.msra.mxu0 0.0
        %4614 = vmatprep.subr.mxu0 0.0
        %4615 = vmatpush1.msra.mxu0 0.0
        %4616 = vmatprep.subr.mxu0 0.0
        %4617 = vmatpush1.msra.mxu0 0.0
        %4618 = vmatprep.subr.mxu0 0.0
        %4619 = vmatpush1.msra.mxu0 0.0
        %4620 = vmatprep.subr.mxu0 0.0
        %4621 = vmatpush1.msra.mxu0 0.0
        %4622 = vmatprep.subr.mxu0 0.0
        %4623 = vmatpush1.msra.mxu0 0.0
        %4624 = vmatprep.subr.mxu0 0.0
        %4625 = vmatpush1.msra.mxu0 0.0
        %4626 = vmatprep.subr.mxu0 0.0
        %4627 = vmatpush1.msra.mxu0 0.0
        %4628 = vmatprep.subr.mxu0 0.0
        %4629 = vmatpush1.msra.mxu0 0.0
        %4630 = vmatprep.subr.mxu0 0.0
        %4631 = vmatpush1.msra.mxu0 0.0
        %4632 = vmatprep.subr.mxu0 0.0
        %4633 = vmatpush1.msra.mxu0 0.0
        %4634 = vmatprep.subr.mxu0 0.0
        %4635 = vmatpush1.msra.mxu0 0.0
        %4636 = vmatprep.subr.mxu0 0.0
        %4637 = vmatpush1.msra.mxu0 0.0
        %4638 = vmatprep.subr.mxu0 0.0
        %4639 = vmatpush1.msra.mxu0 0.0
        %4640 = vmatprep.subr.mxu0 0.0
        %4641 = vmatpush1.msra.mxu0 0.0
        %4642 = vmatprep.subr.mxu0 0.0
        %4643 = vmatpush1.msra.mxu0 0.0
        %4644 = vmatprep.subr.mxu0 0.0
        %4645 = vmatpush1.msra.mxu0 0.0
        %4646 = vmatprep.subr.mxu0 0.0
        %4647 = vmatpush1.msra.mxu0 0.0
        %4648 = vmatprep.subr.mxu0 0.0
        %4649 = vmatpush1.msra.mxu0 0.0
        %4650 = vmatprep.subr.mxu0 0.0
        %4651 = vmatpush1.msra.mxu0 0.0
        %4652 = vmatprep.subr.mxu0 0.0
        %4653 = vmatpush1.msra.mxu0 0.0
        %4654 = vmatprep.subr.mxu0 0.0
        %4655 = vmatpush1.msra.mxu0 0.0
        %4656 = vmatprep.subr.mxu0 0.0
        %4657 = vmatpush1.msra.mxu0 0.0
        %4658 = vmatprep.subr.mxu0 0.0
        %4659 = vmatpush1.msra.mxu0 0.0
        %4660 = vmatprep.subr.mxu0 0.0
        %4661 = vmatpush1.msra.mxu0 0.0
        %4662 = vmatprep.subr.mxu0 0.0
        %4663 = vmatpush1.msra.mxu0 0.0
        %4664 = vmatprep.subr.mxu0 0.0
        %4665 = vmatpush1.msra.mxu0 0.0
        %4666 = vmatprep.subr.mxu0 0.0
        %4667 = vmatpush1.msra.mxu0 0.0
        %4668 = vmatprep.subr.mxu0 0.0
        %4669 = vmatpush1.msra.mxu0 0.0
        %4670 = vmatprep.mubr.f32.mxu0 0.0
        %4671 = vmatmul.mubr.f32.gmra.mrb[0].mxu0 %v3461
        %v4672 = vpop.f32.mrb[0].mxu0
        %v4673 = vadd.f32 %v4602, %v4672
        %v4674 = vpop.f32.mrb[0].mxu0
        %4675 = vmatprep.mubr.f32.mxu0 0.0
        %4676 = vmatmul.mubr.f32.gmra.mrb[0].mxu0 %v3464
        %v4677 = vpop.f32.mrb[0].mxu0
        %v4678 = vadd.f32 %v4602, %v4677
        %v4679 = vpop.f32.mrb[0].mxu0
        %4680 = vmatprep.mubr.f32.mxu0 0.0
        %4681 = vmatmul.mubr.f32.gmra.mrb[0].mxu0 %v3467
        %v4682 = vpop.f32.mrb[0].mxu0
        %v4683 = vadd.f32 %v4602, %v4682
        %v4684 = vpop.f32.mrb[0].mxu0
        %4685 = vmatprep.mubr.f32.mxu0 0.0
        %4686 = vmatmul.mubr.f32.gmra.mrb[0].mxu0 %v3470
        %v4687 = vpop.f32.mrb[0].mxu0
        %v4688 = vadd.f32 %v4602, %v4687
        %v4689 = vpop.f32.mrb[0].mxu0
        %4690 = vdwg.mxu0
        %s4691 = sld [smem:[#allocation2 + $0x200]]
        %v4692 = vstv %s4691
        %v4693 = vmul.f32 %v4692, %v414
        %v4694 = vmul.f32 %v4692, %v415
        %v4695 = vmul.f32 %v4692, %v416
        %v4696 = vmul.f32 %v4692, %v417
        %v4697 = vadd.f32 %v4673, %v4693
        %v4698 = vadd.f32 %v4678, %v4694
        %v4699 = vadd.f32 %v4683, %v4695
        %v4700 = vadd.f32 %v4688, %v4696
        %s4701 = sld [smem:[#allocation2 + $0x201]]
        %v4702 = vstv %s4701
        %v4703 = vmul.f32 %v4702, %v418
        %v4704 = vmul.f32 %v4702, %v419
        %v4705 = vmul.f32 %v4702, %v420
        %v4706 = vmul.f32 %v4702, %v421
        %v4707 = vadd.f32 %v4697, %v4703
        %v4708 = vadd.f32 %v4698, %v4704
        %v4709 = vadd.f32 %v4699, %v4705
        %v4710 = vadd.f32 %v4700, %v4706
        %s4711 = sld [smem:[#allocation2 + $0x202]]
        %v4712 = vstv %s4711
        %v4713 = vmul.f32 %v4712, %v422
        %v4714 = vmul.f32 %v4712, %v423
        %v4715 = vmul.f32 %v4712, %v424
        %v4716 = vmul.f32 %v4712, %v425
        %v4717 = vadd.f32 %v4707, %v4713
        %v4718 = vadd.f32 %v4708, %v4714
        %v4719 = vadd.f32 %v4709, %v4715
        %v4720 = vadd.f32 %v4710, %v4716
        %s4721 = sld [smem:[#allocation2 + $0x203]]
        %v4722 = vstv %s4721
        %v4723 = vmul.f32 %v4722, %v426
        %v4724 = vmul.f32 %v4722, %v427
        %v4725 = vmul.f32 %v4722, %v428
        %v4726 = vmul.f32 %v4722, %v429
        %v4727 = vadd.f32 %v4717, %v4723
        %v4728 = vadd.f32 %v4718, %v4724
        %v4729 = vadd.f32 %v4719, %v4725
        %v4730 = vadd.f32 %v4720, %v4726
        %s4731 = sld [smem:[#allocation2 + $0x204]]
        %v4732 = vstv %s4731
        %v4733 = vmul.f32 %v4732, %v430
        %v4734 = vmul.f32 %v4732, %v431
        %v4735 = vmul.f32 %v4732, %v432
        %v4736 = vmul.f32 %v4732, %v433
        %v4737 = vadd.f32 %v4727, %v4733
        %v4738 = vadd.f32 %v4728, %v4734
        %v4739 = vadd.f32 %v4729, %v4735
        %v4740 = vadd.f32 %v4730, %v4736
        %s4741 = sld [smem:[#allocation2 + $0x205]]
        %v4742 = vstv %s4741
        %v4743 = vmul.f32 %v4742, %v434
        %v4744 = vmul.f32 %v4742, %v435
        %v4745 = vmul.f32 %v4742, %v436
        %v4746 = vmul.f32 %v4742, %v437
        %v4747 = vadd.f32 %v4737, %v4743
        %v4748 = vadd.f32 %v4738, %v4744
        %v4749 = vadd.f32 %v4739, %v4745
        %v4750 = vadd.f32 %v4740, %v4746
        %s4751 = sld [smem:[#allocation2 + $0x206]]
        %v4752 = vstv %s4751
        %v4753 = vmul.f32 %v4752, %v438
        %v4754 = vmul.f32 %v4752, %v439
        %v4755 = vmul.f32 %v4752, %v440
        %v4756 = vmul.f32 %v4752, %v441
        %v4757 = vadd.f32 %v4747, %v4753
        %v4758 = vadd.f32 %v4748, %v4754
        %v4759 = vadd.f32 %v4749, %v4755
        %v4760 = vadd.f32 %v4750, %v4756
        %s4761 = sld [smem:[#allocation2 + $0x207]]
        %v4762 = vstv %s4761
        %v4763 = vmul.f32 %v4762, %v442
        %v4764 = vmul.f32 %v4762, %v443
        %v4765 = vmul.f32 %v4762, %v444
        %v4766 = vmul.f32 %v4762, %v445
        %v4767 = vadd.f32 %v4757, %v4763
        %v4768 = vadd.f32 %v4758, %v4764
        %v4769 = vadd.f32 %v4759, %v4765
        %v4770 = vadd.f32 %v4760, %v4766
        %s4771 = sld [smem:[#allocation2 + $0x208]]
        %v4772 = vstv %s4771
        %v4773 = vmul.f32 %v4772, %v446
        %v4774 = vmul.f32 %v4772, %v447
        %v4775 = vmul.f32 %v4772, %v448
        %v4776 = vmul.f32 %v4772, %v449
        %v4777 = vadd.f32 %v4767, %v4773
        %v4778 = vadd.f32 %v4768, %v4774
        %v4779 = vadd.f32 %v4769, %v4775
        %v4780 = vadd.f32 %v4770, %v4776
        %s4781 = sld [smem:[#allocation2 + $0x209]]
        %v4782 = vstv %s4781
        %v4783 = vmul.f32 %v4782, %v450
        %v4784 = vmul.f32 %v4782, %v451
        %v4785 = vmul.f32 %v4782, %v452
        %v4786 = vmul.f32 %v4782, %v453
        %v4787 = vadd.f32 %v4777, %v4783
        %v4788 = vadd.f32 %v4778, %v4784
        %v4789 = vadd.f32 %v4779, %v4785
        %v4790 = vadd.f32 %v4780, %v4786
        %s4791 = sld [smem:[#allocation2 + $0x20a]]
        %v4792 = vstv %s4791
        %v4793 = vmul.f32 %v4792, %v454
        %v4794 = vmul.f32 %v4792, %v455
        %v4795 = vmul.f32 %v4792, %v456
        %v4796 = vmul.f32 %v4792, %v457
        %v4797 = vadd.f32 %v4787, %v4793
        %v4798 = vadd.f32 %v4788, %v4794
        %v4799 = vadd.f32 %v4789, %v4795
        %v4800 = vadd.f32 %v4790, %v4796
        %s4801 = sld [smem:[#allocation2 + $0x20b]]
        %v4802 = vstv %s4801
        %v4803 = vmul.f32 %v4802, %v458
        %v4804 = vmul.f32 %v4802, %v459
        %v4805 = vmul.f32 %v4802, %v460
        %v4806 = vmul.f32 %v4802, %v461
        %v4807 = vadd.f32 %v4797, %v4803
        %v4808 = vadd.f32 %v4798, %v4804
        %v4809 = vadd.f32 %v4799, %v4805
        %v4810 = vadd.f32 %v4800, %v4806
        %s4811 = sld [smem:[#allocation2 + $0x20c]]
        %v4812 = vstv %s4811
        %v4813 = vmul.f32 %v4812, %v462
        %v4814 = vmul.f32 %v4812, %v463
        %v4815 = vmul.f32 %v4812, %v464
        %v4816 = vmul.f32 %v4812, %v465
        %v4817 = vadd.f32 %v4807, %v4813
        %v4818 = vadd.f32 %v4808, %v4814
        %v4819 = vadd.f32 %v4809, %v4815
        %v4820 = vadd.f32 %v4810, %v4816
        %s4821 = sld [smem:[#allocation2 + $0x20d]]
        %v4822 = vstv %s4821
        %v4823 = vmul.f32 %v4822, %v466
        %v4824 = vmul.f32 %v4822, %v467
        %v4825 = vmul.f32 %v4822, %v468
        %v4826 = vmul.f32 %v4822, %v469
        %v4827 = vadd.f32 %v4817, %v4823
        %v4828 = vadd.f32 %v4818, %v4824
        %v4829 = vadd.f32 %v4819, %v4825
        %v4830 = vadd.f32 %v4820, %v4826
        %s4831 = sld [smem:[#allocation2 + $0x20e]]
        %v4832 = vstv %s4831
        %v4833 = vmul.f32 %v4832, %v470
        %v4834 = vmul.f32 %v4832, %v471
        %v4835 = vmul.f32 %v4832, %v472
        %v4836 = vmul.f32 %v4832, %v473
        %v4837 = vadd.f32 %v4827, %v4833
        %v4838 = vadd.f32 %v4828, %v4834
        %v4839 = vadd.f32 %v4829, %v4835
        %v4840 = vadd.f32 %v4830, %v4836
        %s4841 = sld [smem:[#allocation2 + $0x20f]]
        %v4842 = vstv %s4841
        %v4843 = vmul.f32 %v4842, %v474
        %v4844 = vmul.f32 %v4842, %v475
        %v4845 = vmul.f32 %v4842, %v476
        %v4846 = vmul.f32 %v4842, %v477
        %v4847 = vadd.f32 %v4837, %v4843
        %v4848 = vadd.f32 %v4838, %v4844
        %v4849 = vadd.f32 %v4839, %v4845
        %v4850 = vadd.f32 %v4840, %v4846
        %v4851 = vsub.f32 0.0, %v4847
        %v4852 = vsub.f32 0.0, %v4848
        %v4853 = vsub.f32 0.0, %v4849
        %v4854 = vsub.f32 0.0, %v4850
        %v4855 = vmul.f32 %v4851, 1.442695
        %v4856 = vpow.pop %v4855
        %v4857 = vmul.f32 %v4852, 1.442695
        %v4858 = vpow.pop %v4857
        %v4859 = vmul.f32 %v4853, 1.442695
        %v4860 = vpow.pop %v4859
        %v4861 = vmul.f32 %v4854, 1.442695
        %v4862 = vpow.pop %v4861
        %v4863 = vadd.f32 %v4856, 1.0
        %v4864 = vadd.f32 %v4858, 1.0
        %v4865 = vadd.f32 %v4860, 1.0
        %v4866 = vadd.f32 %v4862, 1.0
        %v4867 = vrcp.pop %v4863
        %v4868 = vmul.f32 1.0, %v4867
        %v4869 = vrcp.pop %v4864
        %v4870 = vmul.f32 1.0, %v4869
        %v4871 = vrcp.pop %v4865
        %v4872 = vmul.f32 1.0, %v4871
        %v4873 = vrcp.pop %v4866
        %v4874 = vmul.f32 1.0, %v4873
        %v4875 = vmul.f32 %v430, %v4868
        %v4876 = vmul.f32 %v431, %v4870
        %v4877 = vmul.f32 %v432, %v4872
        %v4878 = vmul.f32 %v433, %v4874
        %4879 = vst.msk [vmem:[%s408 + $0x80] sm:$0xff] %vm482, %v4875
        %4880 = vst.msk [vmem:[%s408 + $0x88] sm:$0xff] %vm482, %v4876
        %4881 = vst.msk [vmem:[%s408 + $0x90] sm:$0xff] %vm482, %v4877
        %4882 = vst.msk [vmem:[%s408 + $0x98] sm:$0xff] %vm482, %v4878
        %s4883 = sld [smem:[#allocation5 + $0x5]]
        %v4884 = vstv %s4883
        %v4886 = vrot.slane %v3431, 7
        %v4887 = vrot.slane %v3436, 7
        %v4888 = vsel %vm3038, %v4886, %v4887
        %v4889 = vsel %vm3042, %v4888, 0
        %4891 = vmatprep.subr.mxu0 0.0
        %4892 = vmatpush1.msra.mxu0 %v4889
        %4893 = vmatprep.subr.mxu0 0.0
        %4894 = vmatpush1.msra.mxu0 0.0
        %4895 = vmatprep.subr.mxu0 0.0
        %4896 = vmatpush1.msra.mxu0 0.0
        %4897 = vmatprep.subr.mxu0 0.0
        %4898 = vmatpush1.msra.mxu0 0.0
        %4899 = vmatprep.subr.mxu0 0.0
        %4900 = vmatpush1.msra.mxu0 0.0
        %4901 = vmatprep.subr.mxu0 0.0
        %4902 = vmatpush1.msra.mxu0 0.0
        %4903 = vmatprep.subr.mxu0 0.0
        %4904 = vmatpush1.msra.mxu0 0.0
        %4905 = vmatprep.subr.mxu0 0.0
        %4906 = vmatpush1.msra.mxu0 0.0
        %4907 = vmatprep.subr.mxu0 0.0
        %4908 = vmatpush1.msra.mxu0 0.0
        %4909 = vmatprep.subr.mxu0 0.0
        %4910 = vmatpush1.msra.mxu0 0.0
        %4911 = vmatprep.subr.mxu0 0.0
        %4912 = vmatpush1.msra.mxu0 0.0
        %4913 = vmatprep.subr.mxu0 0.0
        %4914 = vmatpush1.msra.mxu0 0.0
        %4915 = vmatprep.subr.mxu0 0.0
        %4916 = vmatpush1.msra.mxu0 0.0
        %4917 = vmatprep.subr.mxu0 0.0
        %4918 = vmatpush1.msra.mxu0 0.0
        %4919 = vmatprep.subr.mxu0 0.0
        %4920 = vmatpush1.msra.mxu0 0.0
        %4921 = vmatprep.subr.mxu0 0.0
        %4922 = vmatpush1.msra.mxu0 0.0
        %4923 = vmatprep.subr.mxu0 0.0
        %4924 = vmatpush1.msra.mxu0 0.0
        %4925 = vmatprep.subr.mxu0 0.0
        %4926 = vmatpush1.msra.mxu0 0.0
        %4927 = vmatprep.subr.mxu0 0.0
        %4928 = vmatpush1.msra.mxu0 0.0
        %4929 = vmatprep.subr.mxu0 0.0
        %4930 = vmatpush1.msra.mxu0 0.0
        %4931 = vmatprep.subr.mxu0 0.0
        %4932 = vmatpush1.msra.mxu0 0.0
        %4933 = vmatprep.subr.mxu0 0.0
        %4934 = vmatpush1.msra.mxu0 0.0
        %4935 = vmatprep.subr.mxu0 0.0
        %4936 = vmatpush1.msra.mxu0 0.0
        %4937 = vmatprep.subr.mxu0 0.0
        %4938 = vmatpush1.msra.mxu0 0.0
        %4939 = vmatprep.subr.mxu0 0.0
        %4940 = vmatpush1.msra.mxu0 0.0
        %4941 = vmatprep.subr.mxu0 0.0
        %4942 = vmatpush1.msra.mxu0 0.0
        %4943 = vmatprep.subr.mxu0 0.0
        %4944 = vmatpush1.msra.mxu0 0.0
        %4945 = vmatprep.subr.mxu0 0.0
        %4946 = vmatpush1.msra.mxu0 0.0
        %4947 = vmatprep.subr.mxu0 0.0
        %4948 = vmatpush1.msra.mxu0 0.0
        %4949 = vmatprep.subr.mxu0 0.0
        %4950 = vmatpush1.msra.mxu0 0.0
        %4951 = vmatprep.subr.mxu0 0.0
        %4952 = vmatpush1.msra.mxu0 0.0
        %4953 = vmatprep.subr.mxu0 0.0
        %4954 = vmatpush1.msra.mxu0 0.0
        %4955 = vmatprep.mubr.f32.mxu0 0.0
        %4956 = vmatmul.mubr.f32.gmra.mrb[0].mxu0 %v3461
        %v4957 = vpop.f32.mrb[0].mxu0
        %v4958 = vadd.f32 %v4884, %v4957
        %v4959 = vpop.f32.mrb[0].mxu0
        %4960 = vmatprep.mubr.f32.mxu0 0.0
        %4961 = vmatmul.mubr.f32.gmra.mrb[0].mxu0 %v3464
        %v4962 = vpop.f32.mrb[0].mxu0
        %v4963 = vadd.f32 %v4884, %v4962
        %v4964 = vpop.f32.mrb[0].mxu0
        %4965 = vmatprep.mubr.f32.mxu0 0.0
        %4966 = vmatmul.mubr.f32.gmra.mrb[0].mxu0 %v3467
        %v4967 = vpop.f32.mrb[0].mxu0
        %v4968 = vadd.f32 %v4884, %v4967
        %v4969 = vpop.f32.mrb[0].mxu0
        %4970 = vmatprep.mubr.f32.mxu0 0.0
        %4971 = vmatmul.mubr.f32.gmra.mrb[0].mxu0 %v3470
        %v4972 = vpop.f32.mrb[0].mxu0
        %v4973 = vadd.f32 %v4884, %v4972
        %v4974 = vpop.f32.mrb[0].mxu0
        %4975 = vdwg.mxu0
        %s4976 = sld [smem:[#allocation2 + $0x280]]
        %v4977 = vstv %s4976
        %v4978 = vmul.f32 %v4977, %v414
        %v4979 = vmul.f32 %v4977, %v415
        %v4980 = vmul.f32 %v4977, %v416
        %v4981 = vmul.f32 %v4977, %v417
        %v4982 = vadd.f32 %v4958, %v4978
        %v4983 = vadd.f32 %v4963, %v4979
        %v4984 = vadd.f32 %v4968, %v4980
        %v4985 = vadd.f32 %v4973, %v4981
        %s4986 = sld [smem:[#allocation2 + $0x281]]
        %v4987 = vstv %s4986
        %v4988 = vmul.f32 %v4987, %v418
        %v4989 = vmul.f32 %v4987, %v419
        %v4990 = vmul.f32 %v4987, %v420
        %v4991 = vmul.f32 %v4987, %v421
        %v4992 = vadd.f32 %v4982, %v4988
        %v4993 = vadd.f32 %v4983, %v4989
        %v4994 = vadd.f32 %v4984, %v4990
        %v4995 = vadd.f32 %v4985, %v4991
        %s4996 = sld [smem:[#allocation2 + $0x282]]
        %v4997 = vstv %s4996
        %v4998 = vmul.f32 %v4997, %v422
        %v4999 = vmul.f32 %v4997, %v423
        %v5000 = vmul.f32 %v4997, %v424
        %v5001 = vmul.f32 %v4997, %v425
        %v5002 = vadd.f32 %v4992, %v4998
        %v5003 = vadd.f32 %v4993, %v4999
        %v5004 = vadd.f32 %v4994, %v5000
        %v5005 = vadd.f32 %v4995, %v5001
        %s5006 = sld [smem:[#allocation2 + $0x283]]
        %v5007 = vstv %s5006
        %v5008 = vmul.f32 %v5007, %v426
        %v5009 = vmul.f32 %v5007, %v427
        %v5010 = vmul.f32 %v5007, %v428
        %v5011 = vmul.f32 %v5007, %v429
        %v5012 = vadd.f32 %v5002, %v5008
        %v5013 = vadd.f32 %v5003, %v5009
        %v5014 = vadd.f32 %v5004, %v5010
        %v5015 = vadd.f32 %v5005, %v5011
        %s5016 = sld [smem:[#allocation2 + $0x284]]
        %v5017 = vstv %s5016
        %v5018 = vmul.f32 %v5017, %v430
        %v5019 = vmul.f32 %v5017, %v431
        %v5020 = vmul.f32 %v5017, %v432
        %v5021 = vmul.f32 %v5017, %v433
        %v5022 = vadd.f32 %v5012, %v5018
        %v5023 = vadd.f32 %v5013, %v5019
        %v5024 = vadd.f32 %v5014, %v5020
        %v5025 = vadd.f32 %v5015, %v5021
        %s5026 = sld [smem:[#allocation2 + $0x285]]
        %v5027 = vstv %s5026
        %v5028 = vmul.f32 %v5027, %v434
        %v5029 = vmul.f32 %v5027, %v435
        %v5030 = vmul.f32 %v5027, %v436
        %v5031 = vmul.f32 %v5027, %v437
        %v5032 = vadd.f32 %v5022, %v5028
        %v5033 = vadd.f32 %v5023, %v5029
        %v5034 = vadd.f32 %v5024, %v5030
        %v5035 = vadd.f32 %v5025, %v5031
        %s5036 = sld [smem:[#allocation2 + $0x286]]
        %v5037 = vstv %s5036
        %v5038 = vmul.f32 %v5037, %v438
        %v5039 = vmul.f32 %v5037, %v439
        %v5040 = vmul.f32 %v5037, %v440
        %v5041 = vmul.f32 %v5037, %v441
        %v5042 = vadd.f32 %v5032, %v5038
        %v5043 = vadd.f32 %v5033, %v5039
        %v5044 = vadd.f32 %v5034, %v5040
        %v5045 = vadd.f32 %v5035, %v5041
        %s5046 = sld [smem:[#allocation2 + $0x287]]
        %v5047 = vstv %s5046
        %v5048 = vmul.f32 %v5047, %v442
        %v5049 = vmul.f32 %v5047, %v443
        %v5050 = vmul.f32 %v5047, %v444
        %v5051 = vmul.f32 %v5047, %v445
        %v5052 = vadd.f32 %v5042, %v5048
        %v5053 = vadd.f32 %v5043, %v5049
        %v5054 = vadd.f32 %v5044, %v5050
        %v5055 = vadd.f32 %v5045, %v5051
        %s5056 = sld [smem:[#allocation2 + $0x288]]
        %v5057 = vstv %s5056
        %v5058 = vmul.f32 %v5057, %v446
        %v5059 = vmul.f32 %v5057, %v447
        %v5060 = vmul.f32 %v5057, %v448
        %v5061 = vmul.f32 %v5057, %v449
        %v5062 = vadd.f32 %v5052, %v5058
        %v5063 = vadd.f32 %v5053, %v5059
        %v5064 = vadd.f32 %v5054, %v5060
        %v5065 = vadd.f32 %v5055, %v5061
        %s5066 = sld [smem:[#allocation2 + $0x289]]
        %v5067 = vstv %s5066
        %v5068 = vmul.f32 %v5067, %v450
        %v5069 = vmul.f32 %v5067, %v451
        %v5070 = vmul.f32 %v5067, %v452
        %v5071 = vmul.f32 %v5067, %v453
        %v5072 = vadd.f32 %v5062, %v5068
        %v5073 = vadd.f32 %v5063, %v5069
        %v5074 = vadd.f32 %v5064, %v5070
        %v5075 = vadd.f32 %v5065, %v5071
        %s5076 = sld [smem:[#allocation2 + $0x28a]]
        %v5077 = vstv %s5076
        %v5078 = vmul.f32 %v5077, %v454
        %v5079 = vmul.f32 %v5077, %v455
        %v5080 = vmul.f32 %v5077, %v456
        %v5081 = vmul.f32 %v5077, %v457
        %v5082 = vadd.f32 %v5072, %v5078
        %v5083 = vadd.f32 %v5073, %v5079
        %v5084 = vadd.f32 %v5074, %v5080
        %v5085 = vadd.f32 %v5075, %v5081
        %s5086 = sld [smem:[#allocation2 + $0x28b]]
        %v5087 = vstv %s5086
        %v5088 = vmul.f32 %v5087, %v458
        %v5089 = vmul.f32 %v5087, %v459
        %v5090 = vmul.f32 %v5087, %v460
        %v5091 = vmul.f32 %v5087, %v461
        %v5092 = vadd.f32 %v5082, %v5088
        %v5093 = vadd.f32 %v5083, %v5089
        %v5094 = vadd.f32 %v5084, %v5090
        %v5095 = vadd.f32 %v5085, %v5091
        %s5096 = sld [smem:[#allocation2 + $0x28c]]
        %v5097 = vstv %s5096
        %v5098 = vmul.f32 %v5097, %v462
        %v5099 = vmul.f32 %v5097, %v463
        %v5100 = vmul.f32 %v5097, %v464
        %v5101 = vmul.f32 %v5097, %v465
        %v5102 = vadd.f32 %v5092, %v5098
        %v5103 = vadd.f32 %v5093, %v5099
        %v5104 = vadd.f32 %v5094, %v5100
        %v5105 = vadd.f32 %v5095, %v5101
        %s5106 = sld [smem:[#allocation2 + $0x28d]]
        %v5107 = vstv %s5106
        %v5108 = vmul.f32 %v5107, %v466
        %v5109 = vmul.f32 %v5107, %v467
        %v5110 = vmul.f32 %v5107, %v468
        %v5111 = vmul.f32 %v5107, %v469
        %v5112 = vadd.f32 %v5102, %v5108
        %v5113 = vadd.f32 %v5103, %v5109
        %v5114 = vadd.f32 %v5104, %v5110
        %v5115 = vadd.f32 %v5105, %v5111
        %s5116 = sld [smem:[#allocation2 + $0x28e]]
        %v5117 = vstv %s5116
        %v5118 = vmul.f32 %v5117, %v470
        %v5119 = vmul.f32 %v5117, %v471
        %v5120 = vmul.f32 %v5117, %v472
        %v5121 = vmul.f32 %v5117, %v473
        %v5122 = vadd.f32 %v5112, %v5118
        %v5123 = vadd.f32 %v5113, %v5119
        %v5124 = vadd.f32 %v5114, %v5120
        %v5125 = vadd.f32 %v5115, %v5121
        %s5126 = sld [smem:[#allocation2 + $0x28f]]
        %v5127 = vstv %s5126
        %v5128 = vmul.f32 %v5127, %v474
        %v5129 = vmul.f32 %v5127, %v475
        %v5130 = vmul.f32 %v5127, %v476
        %v5131 = vmul.f32 %v5127, %v477
        %v5132 = vadd.f32 %v5122, %v5128
        %v5133 = vadd.f32 %v5123, %v5129
        %v5134 = vadd.f32 %v5124, %v5130
        %v5135 = vadd.f32 %v5125, %v5131
        %v5136 = vsub.f32 0.0, %v5132
        %v5137 = vsub.f32 0.0, %v5133
        %v5138 = vsub.f32 0.0, %v5134
        %v5139 = vsub.f32 0.0, %v5135
        %v5140 = vmul.f32 %v5136, 1.442695
        %v5141 = vpow.pop %v5140
        %v5142 = vmul.f32 %v5137, 1.442695
        %v5143 = vpow.pop %v5142
        %v5144 = vmul.f32 %v5138, 1.442695
        %v5145 = vpow.pop %v5144
        %v5146 = vmul.f32 %v5139, 1.442695
        %v5147 = vpow.pop %v5146
        %v5148 = vadd.f32 %v5141, 1.0
        %v5149 = vadd.f32 %v5143, 1.0
        %v5150 = vadd.f32 %v5145, 1.0
        %v5151 = vadd.f32 %v5147, 1.0
        %v5152 = vrcp.pop %v5148
        %v5153 = vmul.f32 1.0, %v5152
        %v5154 = vrcp.pop %v5149
        %v5155 = vmul.f32 1.0, %v5154
        %v5156 = vrcp.pop %v5150
        %v5157 = vmul.f32 1.0, %v5156
        %v5158 = vrcp.pop %v5151
        %v5159 = vmul.f32 1.0, %v5158
        %v5160 = vmul.f32 %v434, %v5153
        %v5161 = vmul.f32 %v435, %v5155
        %v5162 = vmul.f32 %v436, %v5157
        %v5163 = vmul.f32 %v437, %v5159
        %5164 = vst.msk [vmem:[%s408 + $0xa0] sm:$0xff] %vm482, %v5160
        %5165 = vst.msk [vmem:[%s408 + $0xa8] sm:$0xff] %vm482, %v5161
        %5166 = vst.msk [vmem:[%s408 + $0xb0] sm:$0xff] %vm482, %v5162
        %5167 = vst.msk [vmem:[%s408 + $0xb8] sm:$0xff] %vm482, %v5163
        %s5168 = sld [smem:[#allocation5 + $0x6]]
        %v5169 = vstv %s5168
        %v5170 = vrot.slane %v3436, 2
        %v5171 = vsel %vm3042, %v5170, 0
        %5173 = vmatprep.subr.mxu0 0.0
        %5174 = vmatpush1.msra.mxu0 %v5171
        %5175 = vmatprep.subr.mxu0 0.0
        %5176 = vmatpush1.msra.mxu0 0.0
        %5177 = vmatprep.subr.mxu0 0.0
        %5178 = vmatpush1.msra.mxu0 0.0
        %5179 = vmatprep.subr.mxu0 0.0
        %5180 = vmatpush1.msra.mxu0 0.0
        %5181 = vmatprep.subr.mxu0 0.0
        %5182 = vmatpush1.msra.mxu0 0.0
        %5183 = vmatprep.subr.mxu0 0.0
        %5184 = vmatpush1.msra.mxu0 0.0
        %5185 = vmatprep.subr.mxu0 0.0
        %5186 = vmatpush1.msra.mxu0 0.0
        %5187 = vmatprep.subr.mxu0 0.0
        %5188 = vmatpush1.msra.mxu0 0.0
        %5189 = vmatprep.subr.mxu0 0.0
        %5190 = vmatpush1.msra.mxu0 0.0
        %5191 = vmatprep.subr.mxu0 0.0
        %5192 = vmatpush1.msra.mxu0 0.0
        %5193 = vmatprep.subr.mxu0 0.0
        %5194 = vmatpush1.msra.mxu0 0.0
        %5195 = vmatprep.subr.mxu0 0.0
        %5196 = vmatpush1.msra.mxu0 0.0
        %5197 = vmatprep.subr.mxu0 0.0
        %5198 = vmatpush1.msra.mxu0 0.0
        %5199 = vmatprep.subr.mxu0 0.0
        %5200 = vmatpush1.msra.mxu0 0.0
        %5201 = vmatprep.subr.mxu0 0.0
        %5202 = vmatpush1.msra.mxu0 0.0
        %5203 = vmatprep.subr.mxu0 0.0
        %5204 = vmatpush1.msra.mxu0 0.0
        %5205 = vmatprep.subr.mxu0 0.0
        %5206 = vmatpush1.msra.mxu0 0.0
        %5207 = vmatprep.subr.mxu0 0.0
        %5208 = vmatpush1.msra.mxu0 0.0
        %5209 = vmatprep.subr.mxu0 0.0
        %5210 = vmatpush1.msra.mxu0 0.0
        %5211 = vmatprep.subr.mxu0 0.0
        %5212 = vmatpush1.msra.mxu0 0.0
        %5213 = vmatprep.subr.mxu0 0.0
        %5214 = vmatpush1.msra.mxu0 0.0
        %5215 = vmatprep.subr.mxu0 0.0
        %5216 = vmatpush1.msra.mxu0 0.0
        %5217 = vmatprep.subr.mxu0 0.0
        %5218 = vmatpush1.msra.mxu0 0.0
        %5219 = vmatprep.subr.mxu0 0.0
        %5220 = vmatpush1.msra.mxu0 0.0
        %5221 = vmatprep.subr.mxu0 0.0
        %5222 = vmatpush1.msra.mxu0 0.0
        %5223 = vmatprep.subr.mxu0 0.0
        %5224 = vmatpush1.msra.mxu0 0.0
        %5225 = vmatprep.subr.mxu0 0.0
        %5226 = vmatpush1.msra.mxu0 0.0
        %5227 = vmatprep.subr.mxu0 0.0
        %5228 = vmatpush1.msra.mxu0 0.0
        %5229 = vmatprep.subr.mxu0 0.0
        %5230 = vmatpush1.msra.mxu0 0.0
        %5231 = vmatprep.subr.mxu0 0.0
        %5232 = vmatpush1.msra.mxu0 0.0
        %5233 = vmatprep.subr.mxu0 0.0
        %5234 = vmatpush1.msra.mxu0 0.0
        %5235 = vmatprep.subr.mxu0 0.0
        %5236 = vmatpush1.msra.mxu0 0.0
        %5237 = vmatprep.mubr.f32.mxu0 0.0
        %5238 = vmatmul.mubr.f32.gmra.mrb[0].mxu0 %v3461
        %v5239 = vpop.f32.mrb[0].mxu0
        %v5240 = vadd.f32 %v5169, %v5239
        %v5241 = vpop.f32.mrb[0].mxu0
        %5242 = vmatprep.mubr.f32.mxu0 0.0
        %5243 = vmatmul.mubr.f32.gmra.mrb[0].mxu0 %v3464
        %v5244 = vpop.f32.mrb[0].mxu0
        %v5245 = vadd.f32 %v5169, %v5244
        %v5246 = vpop.f32.mrb[0].mxu0
        %5247 = vmatprep.mubr.f32.mxu0 0.0
        %5248 = vmatmul.mubr.f32.gmra.mrb[0].mxu0 %v3467
        %v5249 = vpop.f32.mrb[0].mxu0
        %v5250 = vadd.f32 %v5169, %v5249
        %v5251 = vpop.f32.mrb[0].mxu0
        %5252 = vmatprep.mubr.f32.mxu0 0.0
        %5253 = vmatmul.mubr.f32.gmra.mrb[0].mxu0 %v3470
        %v5254 = vpop.f32.mrb[0].mxu0
        %v5255 = vadd.f32 %v5169, %v5254
        %v5256 = vpop.f32.mrb[0].mxu0
        %5257 = vdwg.mxu0
        %s5258 = sld [smem:[#allocation2 + $0x300]]
        %v5259 = vstv %s5258
        %v5260 = vmul.f32 %v5259, %v414
        %v5261 = vmul.f32 %v5259, %v415
        %v5262 = vmul.f32 %v5259, %v416
        %v5263 = vmul.f32 %v5259, %v417
        %v5264 = vadd.f32 %v5240, %v5260
        %v5265 = vadd.f32 %v5245, %v5261
        %v5266 = vadd.f32 %v5250, %v5262
        %v5267 = vadd.f32 %v5255, %v5263
        %s5268 = sld [smem:[#allocation2 + $0x301]]
        %v5269 = vstv %s5268
        %v5270 = vmul.f32 %v5269, %v418
        %v5271 = vmul.f32 %v5269, %v419
        %v5272 = vmul.f32 %v5269, %v420
        %v5273 = vmul.f32 %v5269, %v421
        %v5274 = vadd.f32 %v5264, %v5270
        %v5275 = vadd.f32 %v5265, %v5271
        %v5276 = vadd.f32 %v5266, %v5272
        %v5277 = vadd.f32 %v5267, %v5273
        %s5278 = sld [smem:[#allocation2 + $0x302]]
        %v5279 = vstv %s5278
        %v5280 = vmul.f32 %v5279, %v422
        %v5281 = vmul.f32 %v5279, %v423
        %v5282 = vmul.f32 %v5279, %v424
        %v5283 = vmul.f32 %v5279, %v425
        %v5284 = vadd.f32 %v5274, %v5280
        %v5285 = vadd.f32 %v5275, %v5281
        %v5286 = vadd.f32 %v5276, %v5282
        %v5287 = vadd.f32 %v5277, %v5283
        %s5288 = sld [smem:[#allocation2 + $0x303]]
        %v5289 = vstv %s5288
        %v5290 = vmul.f32 %v5289, %v426
        %v5291 = vmul.f32 %v5289, %v427
        %v5292 = vmul.f32 %v5289, %v428
        %v5293 = vmul.f32 %v5289, %v429
        %v5294 = vadd.f32 %v5284, %v5290
        %v5295 = vadd.f32 %v5285, %v5291
        %v5296 = vadd.f32 %v5286, %v5292
        %v5297 = vadd.f32 %v5287, %v5293
        %s5298 = sld [smem:[#allocation2 + $0x304]]
        %v5299 = vstv %s5298
        %v5300 = vmul.f32 %v5299, %v430
        %v5301 = vmul.f32 %v5299, %v431
        %v5302 = vmul.f32 %v5299, %v432
        %v5303 = vmul.f32 %v5299, %v433
        %v5304 = vadd.f32 %v5294, %v5300
        %v5305 = vadd.f32 %v5295, %v5301
        %v5306 = vadd.f32 %v5296, %v5302
        %v5307 = vadd.f32 %v5297, %v5303
        %s5308 = sld [smem:[#allocation2 + $0x305]]
        %v5309 = vstv %s5308
        %v5310 = vmul.f32 %v5309, %v434
        %v5311 = vmul.f32 %v5309, %v435
        %v5312 = vmul.f32 %v5309, %v436
        %v5313 = vmul.f32 %v5309, %v437
        %v5314 = vadd.f32 %v5304, %v5310
        %v5315 = vadd.f32 %v5305, %v5311
        %v5316 = vadd.f32 %v5306, %v5312
        %v5317 = vadd.f32 %v5307, %v5313
        %s5318 = sld [smem:[#allocation2 + $0x306]]
        %v5319 = vstv %s5318
        %v5320 = vmul.f32 %v5319, %v438
        %v5321 = vmul.f32 %v5319, %v439
        %v5322 = vmul.f32 %v5319, %v440
        %v5323 = vmul.f32 %v5319, %v441
        %v5324 = vadd.f32 %v5314, %v5320
        %v5325 = vadd.f32 %v5315, %v5321
        %v5326 = vadd.f32 %v5316, %v5322
        %v5327 = vadd.f32 %v5317, %v5323
        %s5328 = sld [smem:[#allocation2 + $0x307]]
        %v5329 = vstv %s5328
        %v5330 = vmul.f32 %v5329, %v442
        %v5331 = vmul.f32 %v5329, %v443
        %v5332 = vmul.f32 %v5329, %v444
        %v5333 = vmul.f32 %v5329, %v445
        %v5334 = vadd.f32 %v5324, %v5330
        %v5335 = vadd.f32 %v5325, %v5331
        %v5336 = vadd.f32 %v5326, %v5332
        %v5337 = vadd.f32 %v5327, %v5333
        %s5338 = sld [smem:[#allocation2 + $0x308]]
        %v5339 = vstv %s5338
        %v5340 = vmul.f32 %v5339, %v446
        %v5341 = vmul.f32 %v5339, %v447
        %v5342 = vmul.f32 %v5339, %v448
        %v5343 = vmul.f32 %v5339, %v449
        %v5344 = vadd.f32 %v5334, %v5340
        %v5345 = vadd.f32 %v5335, %v5341
        %v5346 = vadd.f32 %v5336, %v5342
        %v5347 = vadd.f32 %v5337, %v5343
        %s5348 = sld [smem:[#allocation2 + $0x309]]
        %v5349 = vstv %s5348
        %v5350 = vmul.f32 %v5349, %v450
        %v5351 = vmul.f32 %v5349, %v451
        %v5352 = vmul.f32 %v5349, %v452
        %v5353 = vmul.f32 %v5349, %v453
        %v5354 = vadd.f32 %v5344, %v5350
        %v5355 = vadd.f32 %v5345, %v5351
        %v5356 = vadd.f32 %v5346, %v5352
        %v5357 = vadd.f32 %v5347, %v5353
        %s5358 = sld [smem:[#allocation2 + $0x30a]]
        %v5359 = vstv %s5358
        %v5360 = vmul.f32 %v5359, %v454
        %v5361 = vmul.f32 %v5359, %v455
        %v5362 = vmul.f32 %v5359, %v456
        %v5363 = vmul.f32 %v5359, %v457
        %v5364 = vadd.f32 %v5354, %v5360
        %v5365 = vadd.f32 %v5355, %v5361
        %v5366 = vadd.f32 %v5356, %v5362
        %v5367 = vadd.f32 %v5357, %v5363
        %s5368 = sld [smem:[#allocation2 + $0x30b]]
        %v5369 = vstv %s5368
        %v5370 = vmul.f32 %v5369, %v458
        %v5371 = vmul.f32 %v5369, %v459
        %v5372 = vmul.f32 %v5369, %v460
        %v5373 = vmul.f32 %v5369, %v461
        %v5374 = vadd.f32 %v5364, %v5370
        %v5375 = vadd.f32 %v5365, %v5371
        %v5376 = vadd.f32 %v5366, %v5372
        %v5377 = vadd.f32 %v5367, %v5373
        %s5378 = sld [smem:[#allocation2 + $0x30c]]
        %v5379 = vstv %s5378
        %v5380 = vmul.f32 %v5379, %v462
        %v5381 = vmul.f32 %v5379, %v463
        %v5382 = vmul.f32 %v5379, %v464
        %v5383 = vmul.f32 %v5379, %v465
        %v5384 = vadd.f32 %v5374, %v5380
        %v5385 = vadd.f32 %v5375, %v5381
        %v5386 = vadd.f32 %v5376, %v5382
        %v5387 = vadd.f32 %v5377, %v5383
        %s5388 = sld [smem:[#allocation2 + $0x30d]]
        %v5389 = vstv %s5388
        %v5390 = vmul.f32 %v5389, %v466
        %v5391 = vmul.f32 %v5389, %v467
        %v5392 = vmul.f32 %v5389, %v468
        %v5393 = vmul.f32 %v5389, %v469
        %v5394 = vadd.f32 %v5384, %v5390
        %v5395 = vadd.f32 %v5385, %v5391
        %v5396 = vadd.f32 %v5386, %v5392
        %v5397 = vadd.f32 %v5387, %v5393
        %s5398 = sld [smem:[#allocation2 + $0x30e]]
        %v5399 = vstv %s5398
        %v5400 = vmul.f32 %v5399, %v470
        %v5401 = vmul.f32 %v5399, %v471
        %v5402 = vmul.f32 %v5399, %v472
        %v5403 = vmul.f32 %v5399, %v473
        %v5404 = vadd.f32 %v5394, %v5400
        %v5405 = vadd.f32 %v5395, %v5401
        %v5406 = vadd.f32 %v5396, %v5402
        %v5407 = vadd.f32 %v5397, %v5403
        %s5408 = sld [smem:[#allocation2 + $0x30f]]
        %v5409 = vstv %s5408
        %v5410 = vmul.f32 %v5409, %v474
        %v5411 = vmul.f32 %v5409, %v475
        %v5412 = vmul.f32 %v5409, %v476
        %v5413 = vmul.f32 %v5409, %v477
        %v5414 = vadd.f32 %v5404, %v5410
        %v5415 = vadd.f32 %v5405, %v5411
        %v5416 = vadd.f32 %v5406, %v5412
        %v5417 = vadd.f32 %v5407, %v5413
        %v5418 = vsub.f32 0.0, %v5414
        %v5419 = vsub.f32 0.0, %v5415
        %v5420 = vsub.f32 0.0, %v5416
        %v5421 = vsub.f32 0.0, %v5417
        %v5422 = vmul.f32 %v5418, 1.442695
        %v5423 = vpow.pop %v5422
        %v5424 = vmul.f32 %v5419, 1.442695
        %v5425 = vpow.pop %v5424
        %v5426 = vmul.f32 %v5420, 1.442695
        %v5427 = vpow.pop %v5426
        %v5428 = vmul.f32 %v5421, 1.442695
        %v5429 = vpow.pop %v5428
        %v5430 = vadd.f32 %v5423, 1.0
        %v5431 = vadd.f32 %v5425, 1.0
        %v5432 = vadd.f32 %v5427, 1.0
        %v5433 = vadd.f32 %v5429, 1.0
        %v5434 = vrcp.pop %v5430
        %v5435 = vmul.f32 1.0, %v5434
        %v5436 = vrcp.pop %v5431
        %v5437 = vmul.f32 1.0, %v5436
        %v5438 = vrcp.pop %v5432
        %v5439 = vmul.f32 1.0, %v5438
        %v5440 = vrcp.pop %v5433
        %v5441 = vmul.f32 1.0, %v5440
        %v5442 = vmul.f32 %v438, %v5435
        %v5443 = vmul.f32 %v439, %v5437
        %v5444 = vmul.f32 %v440, %v5439
        %v5445 = vmul.f32 %v441, %v5441
        %5446 = vst.msk [vmem:[%s408 + $0xc0] sm:$0xff] %vm482, %v5442
        %5447 = vst.msk [vmem:[%s408 + $0xc8] sm:$0xff] %vm482, %v5443
        %5448 = vst.msk [vmem:[%s408 + $0xd0] sm:$0xff] %vm482, %v5444
        %5449 = vst.msk [vmem:[%s408 + $0xd8] sm:$0xff] %vm482, %v5445
        %s5450 = sld [smem:[#allocation5 + $0x7]]
        %v5451 = vstv %s5450
        %v5452 = vrot.slane %v3436, 5
        %v5453 = vsel %vm3042, %v5452, 0
        %5455 = vmatprep.subr.mxu0 0.0
        %5456 = vmatpush1.msra.mxu0 %v5453
        %5457 = vmatprep.subr.mxu0 0.0
        %5458 = vmatpush1.msra.mxu0 0.0
        %5459 = vmatprep.subr.mxu0 0.0
        %5460 = vmatpush1.msra.mxu0 0.0
        %5461 = vmatprep.subr.mxu0 0.0
        %5462 = vmatpush1.msra.mxu0 0.0
        %5463 = vmatprep.subr.mxu0 0.0
        %5464 = vmatpush1.msra.mxu0 0.0
        %5465 = vmatprep.subr.mxu0 0.0
        %5466 = vmatpush1.msra.mxu0 0.0
        %5467 = vmatprep.subr.mxu0 0.0
        %5468 = vmatpush1.msra.mxu0 0.0
        %5469 = vmatprep.subr.mxu0 0.0
        %5470 = vmatpush1.msra.mxu0 0.0
        %5471 = vmatprep.subr.mxu0 0.0
        %5472 = vmatpush1.msra.mxu0 0.0
        %5473 = vmatprep.subr.mxu0 0.0
        %5474 = vmatpush1.msra.mxu0 0.0
        %5475 = vmatprep.subr.mxu0 0.0
        %5476 = vmatpush1.msra.mxu0 0.0
        %5477 = vmatprep.subr.mxu0 0.0
        %5478 = vmatpush1.msra.mxu0 0.0
        %5479 = vmatprep.subr.mxu0 0.0
        %5480 = vmatpush1.msra.mxu0 0.0
        %5481 = vmatprep.subr.mxu0 0.0
        %5482 = vmatpush1.msra.mxu0 0.0
        %5483 = vmatprep.subr.mxu0 0.0
        %5484 = vmatpush1.msra.mxu0 0.0
        %5485 = vmatprep.subr.mxu0 0.0
        %5486 = vmatpush1.msra.mxu0 0.0
        %5487 = vmatprep.subr.mxu0 0.0
        %5488 = vmatpush1.msra.mxu0 0.0
        %5489 = vmatprep.subr.mxu0 0.0
        %5490 = vmatpush1.msra.mxu0 0.0
        %5491 = vmatprep.subr.mxu0 0.0
        %5492 = vmatpush1.msra.mxu0 0.0
        %5493 = vmatprep.subr.mxu0 0.0
        %5494 = vmatpush1.msra.mxu0 0.0
        %5495 = vmatprep.subr.mxu0 0.0
        %5496 = vmatpush1.msra.mxu0 0.0
        %5497 = vmatprep.subr.mxu0 0.0
        %5498 = vmatpush1.msra.mxu0 0.0
        %5499 = vmatprep.subr.mxu0 0.0
        %5500 = vmatpush1.msra.mxu0 0.0
        %5501 = vmatprep.subr.mxu0 0.0
        %5502 = vmatpush1.msra.mxu0 0.0
        %5503 = vmatprep.subr.mxu0 0.0
        %5504 = vmatpush1.msra.mxu0 0.0
        %5505 = vmatprep.subr.mxu0 0.0
        %5506 = vmatpush1.msra.mxu0 0.0
        %5507 = vmatprep.subr.mxu0 0.0
        %5508 = vmatpush1.msra.mxu0 0.0
        %5509 = vmatprep.subr.mxu0 0.0
        %5510 = vmatpush1.msra.mxu0 0.0
        %5511 = vmatprep.subr.mxu0 0.0
        %5512 = vmatpush1.msra.mxu0 0.0
        %5513 = vmatprep.subr.mxu0 0.0
        %5514 = vmatpush1.msra.mxu0 0.0
        %5515 = vmatprep.subr.mxu0 0.0
        %5516 = vmatpush1.msra.mxu0 0.0
        %5517 = vmatprep.subr.mxu0 0.0
        %5518 = vmatpush1.msra.mxu0 0.0
        %5519 = vmatprep.mubr.f32.mxu0 0.0
        %5520 = vmatmul.mubr.f32.gmra.mrb[0].mxu0 %v3461
        %v5521 = vpop.f32.mrb[0].mxu0
        %v5522 = vadd.f32 %v5451, %v5521
        %v5523 = vpop.f32.mrb[0].mxu0
        %5524 = vmatprep.mubr.f32.mxu0 0.0
        %5525 = vmatmul.mubr.f32.gmra.mrb[0].mxu0 %v3464
        %v5526 = vpop.f32.mrb[0].mxu0
        %v5527 = vadd.f32 %v5451, %v5526
        %v5528 = vpop.f32.mrb[0].mxu0
        %5529 = vmatprep.mubr.f32.mxu0 0.0
        %5530 = vmatmul.mubr.f32.gmra.mrb[0].mxu0 %v3467
        %v5531 = vpop.f32.mrb[0].mxu0
        %v5532 = vadd.f32 %v5451, %v5531
        %v5533 = vpop.f32.mrb[0].mxu0
        %5534 = vmatprep.mubr.f32.mxu0 0.0
        %5535 = vmatmul.mubr.f32.gmra.mrb[0].mxu0 %v3470
        %v5536 = vpop.f32.mrb[0].mxu0
        %v5537 = vadd.f32 %v5451, %v5536
        %v5538 = vpop.f32.mrb[0].mxu0
        %5539 = vdwg.mxu0
        %s5540 = sld [smem:[#allocation2 + $0x380]]
        %v5541 = vstv %s5540
        %v5542 = vmul.f32 %v5541, %v414
        %v5543 = vmul.f32 %v5541, %v415
        %v5544 = vmul.f32 %v5541, %v416
        %v5545 = vmul.f32 %v5541, %v417
        %v5546 = vadd.f32 %v5522, %v5542
        %v5547 = vadd.f32 %v5527, %v5543
        %v5548 = vadd.f32 %v5532, %v5544
        %v5549 = vadd.f32 %v5537, %v5545
        %s5550 = sld [smem:[#allocation2 + $0x381]]
        %v5551 = vstv %s5550
        %v5552 = vmul.f32 %v5551, %v418
        %v5553 = vmul.f32 %v5551, %v419
        %v5554 = vmul.f32 %v5551, %v420
        %v5555 = vmul.f32 %v5551, %v421
        %v5556 = vadd.f32 %v5546, %v5552
        %v5557 = vadd.f32 %v5547, %v5553
        %v5558 = vadd.f32 %v5548, %v5554
        %v5559 = vadd.f32 %v5549, %v5555
        %s5560 = sld [smem:[#allocation2 + $0x382]]
        %v5561 = vstv %s5560
        %v5562 = vmul.f32 %v5561, %v422
        %v5563 = vmul.f32 %v5561, %v423
        %v5564 = vmul.f32 %v5561, %v424
        %v5565 = vmul.f32 %v5561, %v425
        %v5566 = vadd.f32 %v5556, %v5562
        %v5567 = vadd.f32 %v5557, %v5563
        %v5568 = vadd.f32 %v5558, %v5564
        %v5569 = vadd.f32 %v5559, %v5565
        %s5570 = sld [smem:[#allocation2 + $0x383]]
        %v5571 = vstv %s5570
        %v5572 = vmul.f32 %v5571, %v426
        %v5573 = vmul.f32 %v5571, %v427
        %v5574 = vmul.f32 %v5571, %v428
        %v5575 = vmul.f32 %v5571, %v429
        %v5576 = vadd.f32 %v5566, %v5572
        %v5577 = vadd.f32 %v5567, %v5573
        %v5578 = vadd.f32 %v5568, %v5574
        %v5579 = vadd.f32 %v5569, %v5575
        %s5580 = sld [smem:[#allocation2 + $0x384]]
        %v5581 = vstv %s5580
        %v5582 = vmul.f32 %v5581, %v430
        %v5583 = vmul.f32 %v5581, %v431
        %v5584 = vmul.f32 %v5581, %v432
        %v5585 = vmul.f32 %v5581, %v433
        %v5586 = vadd.f32 %v5576, %v5582
        %v5587 = vadd.f32 %v5577, %v5583
        %v5588 = vadd.f32 %v5578, %v5584
        %v5589 = vadd.f32 %v5579, %v5585
        %s5590 = sld [smem:[#allocation2 + $0x385]]
        %v5591 = vstv %s5590
        %v5592 = vmul.f32 %v5591, %v434
        %v5593 = vmul.f32 %v5591, %v435
        %v5594 = vmul.f32 %v5591, %v436
        %v5595 = vmul.f32 %v5591, %v437
        %v5596 = vadd.f32 %v5586, %v5592
        %v5597 = vadd.f32 %v5587, %v5593
        %v5598 = vadd.f32 %v5588, %v5594
        %v5599 = vadd.f32 %v5589, %v5595
        %s5600 = sld [smem:[#allocation2 + $0x386]]
        %v5601 = vstv %s5600
        %v5602 = vmul.f32 %v5601, %v438
        %v5603 = vmul.f32 %v5601, %v439
        %v5604 = vmul.f32 %v5601, %v440
        %v5605 = vmul.f32 %v5601, %v441
        %v5606 = vadd.f32 %v5596, %v5602
        %v5607 = vadd.f32 %v5597, %v5603
        %v5608 = vadd.f32 %v5598, %v5604
        %v5609 = vadd.f32 %v5599, %v5605
        %s5610 = sld [smem:[#allocation2 + $0x387]]
        %v5611 = vstv %s5610
        %v5612 = vmul.f32 %v5611, %v442
        %v5613 = vmul.f32 %v5611, %v443
        %v5614 = vmul.f32 %v5611, %v444
        %v5615 = vmul.f32 %v5611, %v445
        %v5616 = vadd.f32 %v5606, %v5612
        %v5617 = vadd.f32 %v5607, %v5613
        %v5618 = vadd.f32 %v5608, %v5614
        %v5619 = vadd.f32 %v5609, %v5615
        %s5620 = sld [smem:[#allocation2 + $0x388]]
        %v5621 = vstv %s5620
        %v5622 = vmul.f32 %v5621, %v446
        %v5623 = vmul.f32 %v5621, %v447
        %v5624 = vmul.f32 %v5621, %v448
        %v5625 = vmul.f32 %v5621, %v449
        %v5626 = vadd.f32 %v5616, %v5622
        %v5627 = vadd.f32 %v5617, %v5623
        %v5628 = vadd.f32 %v5618, %v5624
        %v5629 = vadd.f32 %v5619, %v5625
        %s5630 = sld [smem:[#allocation2 + $0x389]]
        %v5631 = vstv %s5630
        %v5632 = vmul.f32 %v5631, %v450
        %v5633 = vmul.f32 %v5631, %v451
        %v5634 = vmul.f32 %v5631, %v452
        %v5635 = vmul.f32 %v5631, %v453
        %v5636 = vadd.f32 %v5626, %v5632
        %v5637 = vadd.f32 %v5627, %v5633
        %v5638 = vadd.f32 %v5628, %v5634
        %v5639 = vadd.f32 %v5629, %v5635
        %s5640 = sld [smem:[#allocation2 + $0x38a]]
        %v5641 = vstv %s5640
        %v5642 = vmul.f32 %v5641, %v454
        %v5643 = vmul.f32 %v5641, %v455
        %v5644 = vmul.f32 %v5641, %v456
        %v5645 = vmul.f32 %v5641, %v457
        %v5646 = vadd.f32 %v5636, %v5642
        %v5647 = vadd.f32 %v5637, %v5643
        %v5648 = vadd.f32 %v5638, %v5644
        %v5649 = vadd.f32 %v5639, %v5645
        %s5650 = sld [smem:[#allocation2 + $0x38b]]
        %v5651 = vstv %s5650
        %v5652 = vmul.f32 %v5651, %v458
        %v5653 = vmul.f32 %v5651, %v459
        %v5654 = vmul.f32 %v5651, %v460
        %v5655 = vmul.f32 %v5651, %v461
        %v5656 = vadd.f32 %v5646, %v5652
        %v5657 = vadd.f32 %v5647, %v5653
        %v5658 = vadd.f32 %v5648, %v5654
        %v5659 = vadd.f32 %v5649, %v5655
        %s5660 = sld [smem:[#allocation2 + $0x38c]]
        %v5661 = vstv %s5660
        %v5662 = vmul.f32 %v5661, %v462
        %v5663 = vmul.f32 %v5661, %v463
        %v5664 = vmul.f32 %v5661, %v464
        %v5665 = vmul.f32 %v5661, %v465
        %v5666 = vadd.f32 %v5656, %v5662
        %v5667 = vadd.f32 %v5657, %v5663
        %v5668 = vadd.f32 %v5658, %v5664
        %v5669 = vadd.f32 %v5659, %v5665
        %s5670 = sld [smem:[#allocation2 + $0x38d]]
        %v5671 = vstv %s5670
        %v5672 = vmul.f32 %v5671, %v466
        %v5673 = vmul.f32 %v5671, %v467
        %v5674 = vmul.f32 %v5671, %v468
        %v5675 = vmul.f32 %v5671, %v469
        %v5676 = vadd.f32 %v5666, %v5672
        %v5677 = vadd.f32 %v5667, %v5673
        %v5678 = vadd.f32 %v5668, %v5674
        %v5679 = vadd.f32 %v5669, %v5675
        %s5680 = sld [smem:[#allocation2 + $0x38e]]
        %v5681 = vstv %s5680
        %v5682 = vmul.f32 %v5681, %v470
        %v5683 = vmul.f32 %v5681, %v471
        %v5684 = vmul.f32 %v5681, %v472
        %v5685 = vmul.f32 %v5681, %v473
        %v5686 = vadd.f32 %v5676, %v5682
        %v5687 = vadd.f32 %v5677, %v5683
        %v5688 = vadd.f32 %v5678, %v5684
        %v5689 = vadd.f32 %v5679, %v5685
        %s5690 = sld [smem:[#allocation2 + $0x38f]]
        %v5691 = vstv %s5690
        %v5692 = vmul.f32 %v5691, %v474
        %v5693 = vmul.f32 %v5691, %v475
        %v5694 = vmul.f32 %v5691, %v476
        %v5695 = vmul.f32 %v5691, %v477
        %v5696 = vadd.f32 %v5686, %v5692
        %v5697 = vadd.f32 %v5687, %v5693
        %v5698 = vadd.f32 %v5688, %v5694
        %v5699 = vadd.f32 %v5689, %v5695
        %v5700 = vsub.f32 0.0, %v5696
        %v5701 = vsub.f32 0.0, %v5697
        %v5702 = vsub.f32 0.0, %v5698
        %v5703 = vsub.f32 0.0, %v5699
        %v5704 = vmul.f32 %v5700, 1.442695
        %v5705 = vpow.pop %v5704
        %v5706 = vmul.f32 %v5701, 1.442695
        %v5707 = vpow.pop %v5706
        %v5708 = vmul.f32 %v5702, 1.442695
        %v5709 = vpow.pop %v5708
        %v5710 = vmul.f32 %v5703, 1.442695
        %v5711 = vpow.pop %v5710
        %v5712 = vadd.f32 %v5705, 1.0
        %v5713 = vadd.f32 %v5707, 1.0
        %v5714 = vadd.f32 %v5709, 1.0
        %v5715 = vadd.f32 %v5711, 1.0
        %v5716 = vrcp.pop %v5712
        %v5717 = vmul.f32 1.0, %v5716
        %v5718 = vrcp.pop %v5713
        %v5719 = vmul.f32 1.0, %v5718
        %v5720 = vrcp.pop %v5714
        %v5721 = vmul.f32 1.0, %v5720
        %v5722 = vrcp.pop %v5715
        %v5723 = vmul.f32 1.0, %v5722
        %v5724 = vmul.f32 %v442, %v5717
        %v5725 = vmul.f32 %v443, %v5719
        %v5726 = vmul.f32 %v444, %v5721
        %v5727 = vmul.f32 %v445, %v5723
        %5728 = vst.msk [vmem:[%s408 + $0xe0] sm:$0xff] %vm482, %v5724
        %5729 = vst.msk [vmem:[%s408 + $0xe8] sm:$0xff] %vm482, %v5725
        %5730 = vst.msk [vmem:[%s408 + $0xf0] sm:$0xff] %vm482, %v5726
        %5731 = vst.msk [vmem:[%s408 + $0xf8] sm:$0xff] %vm482, %v5727
        %s5732 = sld [smem:[#allocation5 + $0x8]]
        %v5733 = vstv %s5732
        %v5735 = vsel %vm3042, %v3441, 0
        %5737 = vmatprep.subr.mxu0 0.0
        %5738 = vmatpush1.msra.mxu0 %v5735
        %5739 = vmatprep.subr.mxu0 0.0
        %5740 = vmatpush1.msra.mxu0 0.0
        %5741 = vmatprep.subr.mxu0 0.0
        %5742 = vmatpush1.msra.mxu0 0.0
        %5743 = vmatprep.subr.mxu0 0.0
        %5744 = vmatpush1.msra.mxu0 0.0
        %5745 = vmatprep.subr.mxu0 0.0
        %5746 = vmatpush1.msra.mxu0 0.0
        %5747 = vmatprep.subr.mxu0 0.0
        %5748 = vmatpush1.msra.mxu0 0.0
        %5749 = vmatprep.subr.mxu0 0.0
        %5750 = vmatpush1.msra.mxu0 0.0
        %5751 = vmatprep.subr.mxu0 0.0
        %5752 = vmatpush1.msra.mxu0 0.0
        %5753 = vmatprep.subr.mxu0 0.0
        %5754 = vmatpush1.msra.mxu0 0.0
        %5755 = vmatprep.subr.mxu0 0.0
        %5756 = vmatpush1.msra.mxu0 0.0
        %5757 = vmatprep.subr.mxu0 0.0
        %5758 = vmatpush1.msra.mxu0 0.0
        %5759 = vmatprep.subr.mxu0 0.0
        %5760 = vmatpush1.msra.mxu0 0.0
        %5761 = vmatprep.subr.mxu0 0.0
        %5762 = vmatpush1.msra.mxu0 0.0
        %5763 = vmatprep.subr.mxu0 0.0
        %5764 = vmatpush1.msra.mxu0 0.0
        %5765 = vmatprep.subr.mxu0 0.0
        %5766 = vmatpush1.msra.mxu0 0.0
        %5767 = vmatprep.subr.mxu0 0.0
        %5768 = vmatpush1.msra.mxu0 0.0
        %5769 = vmatprep.subr.mxu0 0.0
        %5770 = vmatpush1.msra.mxu0 0.0
        %5771 = vmatprep.subr.mxu0 0.0
        %5772 = vmatpush1.msra.mxu0 0.0
        %5773 = vmatprep.subr.mxu0 0.0
        %5774 = vmatpush1.msra.mxu0 0.0
        %5775 = vmatprep.subr.mxu0 0.0
        %5776 = vmatpush1.msra.mxu0 0.0
        %5777 = vmatprep.subr.mxu0 0.0
        %5778 = vmatpush1.msra.mxu0 0.0
        %5779 = vmatprep.subr.mxu0 0.0
        %5780 = vmatpush1.msra.mxu0 0.0
        %5781 = vmatprep.subr.mxu0 0.0
        %5782 = vmatpush1.msra.mxu0 0.0
        %5783 = vmatprep.subr.mxu0 0.0
        %5784 = vmatpush1.msra.mxu0 0.0
        %5785 = vmatprep.subr.mxu0 0.0
        %5786 = vmatpush1.msra.mxu0 0.0
        %5787 = vmatprep.subr.mxu0 0.0
        %5788 = vmatpush1.msra.mxu0 0.0
        %5789 = vmatprep.subr.mxu0 0.0
        %5790 = vmatpush1.msra.mxu0 0.0
        %5791 = vmatprep.subr.mxu0 0.0
        %5792 = vmatpush1.msra.mxu0 0.0
        %5793 = vmatprep.subr.mxu0 0.0
        %5794 = vmatpush1.msra.mxu0 0.0
        %5795 = vmatprep.subr.mxu0 0.0
        %5796 = vmatpush1.msra.mxu0 0.0
        %5797 = vmatprep.subr.mxu0 0.0
        %5798 = vmatpush1.msra.mxu0 0.0
        %5799 = vmatprep.subr.mxu0 0.0
        %5800 = vmatpush1.msra.mxu0 0.0
        %5801 = vmatprep.mubr.f32.mxu0 0.0
        %5802 = vmatmul.mubr.f32.gmra.mrb[0].mxu0 %v3461
        %v5803 = vpop.f32.mrb[0].mxu0
        %v5804 = vadd.f32 %v5733, %v5803
        %v5805 = vpop.f32.mrb[0].mxu0
        %5806 = vmatprep.mubr.f32.mxu0 0.0
        %5807 = vmatmul.mubr.f32.gmra.mrb[0].mxu0 %v3464
        %v5808 = vpop.f32.mrb[0].mxu0
        %v5809 = vadd.f32 %v5733, %v5808
        %v5810 = vpop.f32.mrb[0].mxu0
        %5811 = vmatprep.mubr.f32.mxu0 0.0
        %5812 = vmatmul.mubr.f32.gmra.mrb[0].mxu0 %v3467
        %v5813 = vpop.f32.mrb[0].mxu0
        %v5814 = vadd.f32 %v5733, %v5813
        %v5815 = vpop.f32.mrb[0].mxu0
        %5816 = vmatprep.mubr.f32.mxu0 0.0
        %5817 = vmatmul.mubr.f32.gmra.mrb[0].mxu0 %v3470
        %v5818 = vpop.f32.mrb[0].mxu0
        %v5819 = vadd.f32 %v5733, %v5818
        %v5820 = vpop.f32.mrb[0].mxu0
        %5821 = vdwg.mxu0
        %s5822 = sld [smem:[#allocation2 + $0x400]]
        %v5823 = vstv %s5822
        %v5824 = vmul.f32 %v5823, %v414
        %v5825 = vmul.f32 %v5823, %v415
        %v5826 = vmul.f32 %v5823, %v416
        %v5827 = vmul.f32 %v5823, %v417
        %v5828 = vadd.f32 %v5804, %v5824
        %v5829 = vadd.f32 %v5809, %v5825
        %v5830 = vadd.f32 %v5814, %v5826
        %v5831 = vadd.f32 %v5819, %v5827
        %s5832 = sld [smem:[#allocation2 + $0x401]]
        %v5833 = vstv %s5832
        %v5834 = vmul.f32 %v5833, %v418
        %v5835 = vmul.f32 %v5833, %v419
        %v5836 = vmul.f32 %v5833, %v420
        %v5837 = vmul.f32 %v5833, %v421
        %v5838 = vadd.f32 %v5828, %v5834
        %v5839 = vadd.f32 %v5829, %v5835
        %v5840 = vadd.f32 %v5830, %v5836
        %v5841 = vadd.f32 %v5831, %v5837
        %s5842 = sld [smem:[#allocation2 + $0x402]]
        %v5843 = vstv %s5842
        %v5844 = vmul.f32 %v5843, %v422
        %v5845 = vmul.f32 %v5843, %v423
        %v5846 = vmul.f32 %v5843, %v424
        %v5847 = vmul.f32 %v5843, %v425
        %v5848 = vadd.f32 %v5838, %v5844
        %v5849 = vadd.f32 %v5839, %v5845
        %v5850 = vadd.f32 %v5840, %v5846
        %v5851 = vadd.f32 %v5841, %v5847
        %s5852 = sld [smem:[#allocation2 + $0x403]]
        %v5853 = vstv %s5852
        %v5854 = vmul.f32 %v5853, %v426
        %v5855 = vmul.f32 %v5853, %v427
        %v5856 = vmul.f32 %v5853, %v428
        %v5857 = vmul.f32 %v5853, %v429
        %v5858 = vadd.f32 %v5848, %v5854
        %v5859 = vadd.f32 %v5849, %v5855
        %v5860 = vadd.f32 %v5850, %v5856
        %v5861 = vadd.f32 %v5851, %v5857
        %s5862 = sld [smem:[#allocation2 + $0x404]]
        %v5863 = vstv %s5862
        %v5864 = vmul.f32 %v5863, %v430
        %v5865 = vmul.f32 %v5863, %v431
        %v5866 = vmul.f32 %v5863, %v432
        %v5867 = vmul.f32 %v5863, %v433
        %v5868 = vadd.f32 %v5858, %v5864
        %v5869 = vadd.f32 %v5859, %v5865
        %v5870 = vadd.f32 %v5860, %v5866
        %v5871 = vadd.f32 %v5861, %v5867
        %s5872 = sld [smem:[#allocation2 + $0x405]]
        %v5873 = vstv %s5872
        %v5874 = vmul.f32 %v5873, %v434
        %v5875 = vmul.f32 %v5873, %v435
        %v5876 = vmul.f32 %v5873, %v436
        %v5877 = vmul.f32 %v5873, %v437
        %v5878 = vadd.f32 %v5868, %v5874
        %v5879 = vadd.f32 %v5869, %v5875
        %v5880 = vadd.f32 %v5870, %v5876
        %v5881 = vadd.f32 %v5871, %v5877
        %s5882 = sld [smem:[#allocation2 + $0x406]]
        %v5883 = vstv %s5882
        %v5884 = vmul.f32 %v5883, %v438
        %v5885 = vmul.f32 %v5883, %v439
        %v5886 = vmul.f32 %v5883, %v440
        %v5887 = vmul.f32 %v5883, %v441
        %v5888 = vadd.f32 %v5878, %v5884
        %v5889 = vadd.f32 %v5879, %v5885
        %v5890 = vadd.f32 %v5880, %v5886
        %v5891 = vadd.f32 %v5881, %v5887
        %s5892 = sld [smem:[#allocation2 + $0x407]]
        %v5893 = vstv %s5892
        %v5894 = vmul.f32 %v5893, %v442
        %v5895 = vmul.f32 %v5893, %v443
        %v5896 = vmul.f32 %v5893, %v444
        %v5897 = vmul.f32 %v5893, %v445
        %v5898 = vadd.f32 %v5888, %v5894
        %v5899 = vadd.f32 %v5889, %v5895
        %v5900 = vadd.f32 %v5890, %v5896
        %v5901 = vadd.f32 %v5891, %v5897
        %s5902 = sld [smem:[#allocation2 + $0x408]]
        %v5903 = vstv %s5902
        %v5904 = vmul.f32 %v5903, %v446
        %v5905 = vmul.f32 %v5903, %v447
        %v5906 = vmul.f32 %v5903, %v448
        %v5907 = vmul.f32 %v5903, %v449
        %v5908 = vadd.f32 %v5898, %v5904
        %v5909 = vadd.f32 %v5899, %v5905
        %v5910 = vadd.f32 %v5900, %v5906
        %v5911 = vadd.f32 %v5901, %v5907
        %s5912 = sld [smem:[#allocation2 + $0x409]]
        %v5913 = vstv %s5912
        %v5914 = vmul.f32 %v5913, %v450
        %v5915 = vmul.f32 %v5913, %v451
        %v5916 = vmul.f32 %v5913, %v452
        %v5917 = vmul.f32 %v5913, %v453
        %v5918 = vadd.f32 %v5908, %v5914
        %v5919 = vadd.f32 %v5909, %v5915
        %v5920 = vadd.f32 %v5910, %v5916
        %v5921 = vadd.f32 %v5911, %v5917
        %s5922 = sld [smem:[#allocation2 + $0x40a]]
        %v5923 = vstv %s5922
        %v5924 = vmul.f32 %v5923, %v454
        %v5925 = vmul.f32 %v5923, %v455
        %v5926 = vmul.f32 %v5923, %v456
        %v5927 = vmul.f32 %v5923, %v457
        %v5928 = vadd.f32 %v5918, %v5924
        %v5929 = vadd.f32 %v5919, %v5925
        %v5930 = vadd.f32 %v5920, %v5926
        %v5931 = vadd.f32 %v5921, %v5927
        %s5932 = sld [smem:[#allocation2 + $0x40b]]
        %v5933 = vstv %s5932
        %v5934 = vmul.f32 %v5933, %v458
        %v5935 = vmul.f32 %v5933, %v459
        %v5936 = vmul.f32 %v5933, %v460
        %v5937 = vmul.f32 %v5933, %v461
        %v5938 = vadd.f32 %v5928, %v5934
        %v5939 = vadd.f32 %v5929, %v5935
        %v5940 = vadd.f32 %v5930, %v5936
        %v5941 = vadd.f32 %v5931, %v5937
        %s5942 = sld [smem:[#allocation2 + $0x40c]]
        %v5943 = vstv %s5942
        %v5944 = vmul.f32 %v5943, %v462
        %v5945 = vmul.f32 %v5943, %v463
        %v5946 = vmul.f32 %v5943, %v464
        %v5947 = vmul.f32 %v5943, %v465
        %v5948 = vadd.f32 %v5938, %v5944
        %v5949 = vadd.f32 %v5939, %v5945
        %v5950 = vadd.f32 %v5940, %v5946
        %v5951 = vadd.f32 %v5941, %v5947
        %s5952 = sld [smem:[#allocation2 + $0x40d]]
        %v5953 = vstv %s5952
        %v5954 = vmul.f32 %v5953, %v466
        %v5955 = vmul.f32 %v5953, %v467
        %v5956 = vmul.f32 %v5953, %v468
        %v5957 = vmul.f32 %v5953, %v469
        %v5958 = vadd.f32 %v5948, %v5954
        %v5959 = vadd.f32 %v5949, %v5955
        %v5960 = vadd.f32 %v5950, %v5956
        %v5961 = vadd.f32 %v5951, %v5957
        %s5962 = sld [smem:[#allocation2 + $0x40e]]
        %v5963 = vstv %s5962
        %v5964 = vmul.f32 %v5963, %v470
        %v5965 = vmul.f32 %v5963, %v471
        %v5966 = vmul.f32 %v5963, %v472
        %v5967 = vmul.f32 %v5963, %v473
        %v5968 = vadd.f32 %v5958, %v5964
        %v5969 = vadd.f32 %v5959, %v5965
        %v5970 = vadd.f32 %v5960, %v5966
        %v5971 = vadd.f32 %v5961, %v5967
        %s5972 = sld [smem:[#allocation2 + $0x40f]]
        %v5973 = vstv %s5972
        %v5974 = vmul.f32 %v5973, %v474
        %v5975 = vmul.f32 %v5973, %v475
        %v5976 = vmul.f32 %v5973, %v476
        %v5977 = vmul.f32 %v5973, %v477
        %v5978 = vadd.f32 %v5968, %v5974
        %v5979 = vadd.f32 %v5969, %v5975
        %v5980 = vadd.f32 %v5970, %v5976
        %v5981 = vadd.f32 %v5971, %v5977
        %v5982 = vsub.f32 0.0, %v5978
        %v5983 = vsub.f32 0.0, %v5979
        %v5984 = vsub.f32 0.0, %v5980
        %v5985 = vsub.f32 0.0, %v5981
        %v5986 = vmul.f32 %v5982, 1.442695
        %v5987 = vpow.pop %v5986
        %v5988 = vmul.f32 %v5983, 1.442695
        %v5989 = vpow.pop %v5988
        %v5990 = vmul.f32 %v5984, 1.442695
        %v5991 = vpow.pop %v5990
        %v5992 = vmul.f32 %v5985, 1.442695
        %v5993 = vpow.pop %v5992
        %v5994 = vadd.f32 %v5987, 1.0
        %v5995 = vadd.f32 %v5989, 1.0
        %v5996 = vadd.f32 %v5991, 1.0
        %v5997 = vadd.f32 %v5993, 1.0
        %v5998 = vrcp.pop %v5994
        %v5999 = vmul.f32 1.0, %v5998
        %v6000 = vrcp.pop %v5995
        %v6001 = vmul.f32 1.0, %v6000
        %v6002 = vrcp.pop %v5996
        %v6003 = vmul.f32 1.0, %v6002
        %v6004 = vrcp.pop %v5997
        %v6005 = vmul.f32 1.0, %v6004
        %v6006 = vmul.f32 %v446, %v5999
        %v6007 = vmul.f32 %v447, %v6001
        %v6008 = vmul.f32 %v448, %v6003
        %v6009 = vmul.f32 %v449, %v6005
        %6010 = vst.msk [vmem:[%s408 + $0x100] sm:$0xff] %vm482, %v6006
        %6011 = vst.msk [vmem:[%s408 + $0x108] sm:$0xff] %vm482, %v6007
        %6012 = vst.msk [vmem:[%s408 + $0x110] sm:$0xff] %vm482, %v6008
        %6013 = vst.msk [vmem:[%s408 + $0x118] sm:$0xff] %vm482, %v6009
        %s6014 = sld [smem:[#allocation5 + $0x9]]
        %v6015 = vstv %s6014
        %v6016 = vrot.slane %v3441, 3
        %v6017 = vsel %vm3042, %v6016, 0
        %6019 = vmatprep.subr.mxu0 0.0
        %6020 = vmatpush1.msra.mxu0 %v6017
        %6021 = vmatprep.subr.mxu0 0.0
        %6022 = vmatpush1.msra.mxu0 0.0
        %6023 = vmatprep.subr.mxu0 0.0
        %6024 = vmatpush1.msra.mxu0 0.0
        %6025 = vmatprep.subr.mxu0 0.0
        %6026 = vmatpush1.msra.mxu0 0.0
        %6027 = vmatprep.subr.mxu0 0.0
        %6028 = vmatpush1.msra.mxu0 0.0
        %6029 = vmatprep.subr.mxu0 0.0
        %6030 = vmatpush1.msra.mxu0 0.0
        %6031 = vmatprep.subr.mxu0 0.0
        %6032 = vmatpush1.msra.mxu0 0.0
        %6033 = vmatprep.subr.mxu0 0.0
        %6034 = vmatpush1.msra.mxu0 0.0
        %6035 = vmatprep.subr.mxu0 0.0
        %6036 = vmatpush1.msra.mxu0 0.0
        %6037 = vmatprep.subr.mxu0 0.0
        %6038 = vmatpush1.msra.mxu0 0.0
        %6039 = vmatprep.subr.mxu0 0.0
        %6040 = vmatpush1.msra.mxu0 0.0
        %6041 = vmatprep.subr.mxu0 0.0
        %6042 = vmatpush1.msra.mxu0 0.0
        %6043 = vmatprep.subr.mxu0 0.0
        %6044 = vmatpush1.msra.mxu0 0.0
        %6045 = vmatprep.subr.mxu0 0.0
        %6046 = vmatpush1.msra.mxu0 0.0
        %6047 = vmatprep.subr.mxu0 0.0
        %6048 = vmatpush1.msra.mxu0 0.0
        %6049 = vmatprep.subr.mxu0 0.0
        %6050 = vmatpush1.msra.mxu0 0.0
        %6051 = vmatprep.subr.mxu0 0.0
        %6052 = vmatpush1.msra.mxu0 0.0
        %6053 = vmatprep.subr.mxu0 0.0
        %6054 = vmatpush1.msra.mxu0 0.0
        %6055 = vmatprep.subr.mxu0 0.0
        %6056 = vmatpush1.msra.mxu0 0.0
        %6057 = vmatprep.subr.mxu0 0.0
        %6058 = vmatpush1.msra.mxu0 0.0
        %6059 = vmatprep.subr.mxu0 0.0
        %6060 = vmatpush1.msra.mxu0 0.0
        %6061 = vmatprep.subr.mxu0 0.0
        %6062 = vmatpush1.msra.mxu0 0.0
        %6063 = vmatprep.subr.mxu0 0.0
        %6064 = vmatpush1.msra.mxu0 0.0
        %6065 = vmatprep.subr.mxu0 0.0
        %6066 = vmatpush1.msra.mxu0 0.0
        %6067 = vmatprep.subr.mxu0 0.0
        %6068 = vmatpush1.msra.mxu0 0.0
        %6069 = vmatprep.subr.mxu0 0.0
        %6070 = vmatpush1.msra.mxu0 0.0
        %6071 = vmatprep.subr.mxu0 0.0
        %6072 = vmatpush1.msra.mxu0 0.0
        %6073 = vmatprep.subr.mxu0 0.0
        %6074 = vmatpush1.msra.mxu0 0.0
        %6075 = vmatprep.subr.mxu0 0.0
        %6076 = vmatpush1.msra.mxu0 0.0
        %6077 = vmatprep.subr.mxu0 0.0
        %6078 = vmatpush1.msra.mxu0 0.0
        %6079 = vmatprep.subr.mxu0 0.0
        %6080 = vmatpush1.msra.mxu0 0.0
        %6081 = vmatprep.subr.mxu0 0.0
        %6082 = vmatpush1.msra.mxu0 0.0
        %6083 = vmatprep.mubr.f32.mxu0 0.0
        %6084 = vmatmul.mubr.f32.gmra.mrb[0].mxu0 %v3461
        %v6085 = vpop.f32.mrb[0].mxu0
        %v6086 = vadd.f32 %v6015, %v6085
        %v6087 = vpop.f32.mrb[0].mxu0
        %6088 = vmatprep.mubr.f32.mxu0 0.0
        %6089 = vmatmul.mubr.f32.gmra.mrb[0].mxu0 %v3464
        %v6090 = vpop.f32.mrb[0].mxu0
        %v6091 = vadd.f32 %v6015, %v6090
        %v6092 = vpop.f32.mrb[0].mxu0
        %6093 = vmatprep.mubr.f32.mxu0 0.0
        %6094 = vmatmul.mubr.f32.gmra.mrb[0].mxu0 %v3467
        %v6095 = vpop.f32.mrb[0].mxu0
        %v6096 = vadd.f32 %v6015, %v6095
        %v6097 = vpop.f32.mrb[0].mxu0
        %6098 = vmatprep.mubr.f32.mxu0 0.0
        %6099 = vmatmul.mubr.f32.gmra.mrb[0].mxu0 %v3470
        %v6100 = vpop.f32.mrb[0].mxu0
        %v6101 = vadd.f32 %v6015, %v6100
        %v6102 = vpop.f32.mrb[0].mxu0
        %6103 = vdwg.mxu0
        %s6104 = sld [smem:[#allocation2 + $0x480]]
        %v6105 = vstv %s6104
        %v6106 = vmul.f32 %v6105, %v414
        %v6107 = vmul.f32 %v6105, %v415
        %v6108 = vmul.f32 %v6105, %v416
        %v6109 = vmul.f32 %v6105, %v417
        %v6110 = vadd.f32 %v6086, %v6106
        %v6111 = vadd.f32 %v6091, %v6107
        %v6112 = vadd.f32 %v6096, %v6108
        %v6113 = vadd.f32 %v6101, %v6109
        %s6114 = sld [smem:[#allocation2 + $0x481]]
        %v6115 = vstv %s6114
        %v6116 = vmul.f32 %v6115, %v418
        %v6117 = vmul.f32 %v6115, %v419
        %v6118 = vmul.f32 %v6115, %v420
        %v6119 = vmul.f32 %v6115, %v421
        %v6120 = vadd.f32 %v6110, %v6116
        %v6121 = vadd.f32 %v6111, %v6117
        %v6122 = vadd.f32 %v6112, %v6118
        %v6123 = vadd.f32 %v6113, %v6119
        %s6124 = sld [smem:[#allocation2 + $0x482]]
        %v6125 = vstv %s6124
        %v6126 = vmul.f32 %v6125, %v422
        %v6127 = vmul.f32 %v6125, %v423
        %v6128 = vmul.f32 %v6125, %v424
        %v6129 = vmul.f32 %v6125, %v425
        %v6130 = vadd.f32 %v6120, %v6126
        %v6131 = vadd.f32 %v6121, %v6127
        %v6132 = vadd.f32 %v6122, %v6128
        %v6133 = vadd.f32 %v6123, %v6129
        %s6134 = sld [smem:[#allocation2 + $0x483]]
        %v6135 = vstv %s6134
        %v6136 = vmul.f32 %v6135, %v426
        %v6137 = vmul.f32 %v6135, %v427
        %v6138 = vmul.f32 %v6135, %v428
        %v6139 = vmul.f32 %v6135, %v429
        %v6140 = vadd.f32 %v6130, %v6136
        %v6141 = vadd.f32 %v6131, %v6137
        %v6142 = vadd.f32 %v6132, %v6138
        %v6143 = vadd.f32 %v6133, %v6139
        %s6144 = sld [smem:[#allocation2 + $0x484]]
        %v6145 = vstv %s6144
        %v6146 = vmul.f32 %v6145, %v430
        %v6147 = vmul.f32 %v6145, %v431
        %v6148 = vmul.f32 %v6145, %v432
        %v6149 = vmul.f32 %v6145, %v433
        %v6150 = vadd.f32 %v6140, %v6146
        %v6151 = vadd.f32 %v6141, %v6147
        %v6152 = vadd.f32 %v6142, %v6148
        %v6153 = vadd.f32 %v6143, %v6149
        %s6154 = sld [smem:[#allocation2 + $0x485]]
        %v6155 = vstv %s6154
        %v6156 = vmul.f32 %v6155, %v434
        %v6157 = vmul.f32 %v6155, %v435
        %v6158 = vmul.f32 %v6155, %v436
        %v6159 = vmul.f32 %v6155, %v437
        %v6160 = vadd.f32 %v6150, %v6156
        %v6161 = vadd.f32 %v6151, %v6157
        %v6162 = vadd.f32 %v6152, %v6158
        %v6163 = vadd.f32 %v6153, %v6159
        %s6164 = sld [smem:[#allocation2 + $0x486]]
        %v6165 = vstv %s6164
        %v6166 = vmul.f32 %v6165, %v438
        %v6167 = vmul.f32 %v6165, %v439
        %v6168 = vmul.f32 %v6165, %v440
        %v6169 = vmul.f32 %v6165, %v441
        %v6170 = vadd.f32 %v6160, %v6166
        %v6171 = vadd.f32 %v6161, %v6167
        %v6172 = vadd.f32 %v6162, %v6168
        %v6173 = vadd.f32 %v6163, %v6169
        %s6174 = sld [smem:[#allocation2 + $0x487]]
        %v6175 = vstv %s6174
        %v6176 = vmul.f32 %v6175, %v442
        %v6177 = vmul.f32 %v6175, %v443
        %v6178 = vmul.f32 %v6175, %v444
        %v6179 = vmul.f32 %v6175, %v445
        %v6180 = vadd.f32 %v6170, %v6176
        %v6181 = vadd.f32 %v6171, %v6177
        %v6182 = vadd.f32 %v6172, %v6178
        %v6183 = vadd.f32 %v6173, %v6179
        %s6184 = sld [smem:[#allocation2 + $0x488]]
        %v6185 = vstv %s6184
        %v6186 = vmul.f32 %v6185, %v446
        %v6187 = vmul.f32 %v6185, %v447
        %v6188 = vmul.f32 %v6185, %v448
        %v6189 = vmul.f32 %v6185, %v449
        %v6190 = vadd.f32 %v6180, %v6186
        %v6191 = vadd.f32 %v6181, %v6187
        %v6192 = vadd.f32 %v6182, %v6188
        %v6193 = vadd.f32 %v6183, %v6189
        %s6194 = sld [smem:[#allocation2 + $0x489]]
        %v6195 = vstv %s6194
        %v6196 = vmul.f32 %v6195, %v450
        %v6197 = vmul.f32 %v6195, %v451
        %v6198 = vmul.f32 %v6195, %v452
        %v6199 = vmul.f32 %v6195, %v453
        %v6200 = vadd.f32 %v6190, %v6196
        %v6201 = vadd.f32 %v6191, %v6197
        %v6202 = vadd.f32 %v6192, %v6198
        %v6203 = vadd.f32 %v6193, %v6199
        %s6204 = sld [smem:[#allocation2 + $0x48a]]
        %v6205 = vstv %s6204
        %v6206 = vmul.f32 %v6205, %v454
        %v6207 = vmul.f32 %v6205, %v455
        %v6208 = vmul.f32 %v6205, %v456
        %v6209 = vmul.f32 %v6205, %v457
        %v6210 = vadd.f32 %v6200, %v6206
        %v6211 = vadd.f32 %v6201, %v6207
        %v6212 = vadd.f32 %v6202, %v6208
        %v6213 = vadd.f32 %v6203, %v6209
        %s6214 = sld [smem:[#allocation2 + $0x48b]]
        %v6215 = vstv %s6214
        %v6216 = vmul.f32 %v6215, %v458
        %v6217 = vmul.f32 %v6215, %v459
        %v6218 = vmul.f32 %v6215, %v460
        %v6219 = vmul.f32 %v6215, %v461
        %v6220 = vadd.f32 %v6210, %v6216
        %v6221 = vadd.f32 %v6211, %v6217
        %v6222 = vadd.f32 %v6212, %v6218
        %v6223 = vadd.f32 %v6213, %v6219
        %s6224 = sld [smem:[#allocation2 + $0x48c]]
        %v6225 = vstv %s6224
        %v6226 = vmul.f32 %v6225, %v462
        %v6227 = vmul.f32 %v6225, %v463
        %v6228 = vmul.f32 %v6225, %v464
        %v6229 = vmul.f32 %v6225, %v465
        %v6230 = vadd.f32 %v6220, %v6226
        %v6231 = vadd.f32 %v6221, %v6227
        %v6232 = vadd.f32 %v6222, %v6228
        %v6233 = vadd.f32 %v6223, %v6229
        %s6234 = sld [smem:[#allocation2 + $0x48d]]
        %v6235 = vstv %s6234
        %v6236 = vmul.f32 %v6235, %v466
        %v6237 = vmul.f32 %v6235, %v467
        %v6238 = vmul.f32 %v6235, %v468
        %v6239 = vmul.f32 %v6235, %v469
        %v6240 = vadd.f32 %v6230, %v6236
        %v6241 = vadd.f32 %v6231, %v6237
        %v6242 = vadd.f32 %v6232, %v6238
        %v6243 = vadd.f32 %v6233, %v6239
        %s6244 = sld [smem:[#allocation2 + $0x48e]]
        %v6245 = vstv %s6244
        %v6246 = vmul.f32 %v6245, %v470
        %v6247 = vmul.f32 %v6245, %v471
        %v6248 = vmul.f32 %v6245, %v472
        %v6249 = vmul.f32 %v6245, %v473
        %v6250 = vadd.f32 %v6240, %v6246
        %v6251 = vadd.f32 %v6241, %v6247
        %v6252 = vadd.f32 %v6242, %v6248
        %v6253 = vadd.f32 %v6243, %v6249
        %s6254 = sld [smem:[#allocation2 + $0x48f]]
        %v6255 = vstv %s6254
        %v6256 = vmul.f32 %v6255, %v474
        %v6257 = vmul.f32 %v6255, %v475
        %v6258 = vmul.f32 %v6255, %v476
        %v6259 = vmul.f32 %v6255, %v477
        %v6260 = vadd.f32 %v6250, %v6256
        %v6261 = vadd.f32 %v6251, %v6257
        %v6262 = vadd.f32 %v6252, %v6258
        %v6263 = vadd.f32 %v6253, %v6259
        %v6264 = vsub.f32 0.0, %v6260
        %v6265 = vsub.f32 0.0, %v6261
        %v6266 = vsub.f32 0.0, %v6262
        %v6267 = vsub.f32 0.0, %v6263
        %v6268 = vmul.f32 %v6264, 1.442695
        %v6269 = vpow.pop %v6268
        %v6270 = vmul.f32 %v6265, 1.442695
        %v6271 = vpow.pop %v6270
        %v6272 = vmul.f32 %v6266, 1.442695
        %v6273 = vpow.pop %v6272
        %v6274 = vmul.f32 %v6267, 1.442695
        %v6275 = vpow.pop %v6274
        %v6276 = vadd.f32 %v6269, 1.0
        %v6277 = vadd.f32 %v6271, 1.0
        %v6278 = vadd.f32 %v6273, 1.0
        %v6279 = vadd.f32 %v6275, 1.0
        %v6280 = vrcp.pop %v6276
        %v6281 = vmul.f32 1.0, %v6280
        %v6282 = vrcp.pop %v6277
        %v6283 = vmul.f32 1.0, %v6282
        %v6284 = vrcp.pop %v6278
        %v6285 = vmul.f32 1.0, %v6284
        %v6286 = vrcp.pop %v6279
        %v6287 = vmul.f32 1.0, %v6286
        %v6288 = vmul.f32 %v450, %v6281
        %v6289 = vmul.f32 %v451, %v6283
        %v6290 = vmul.f32 %v452, %v6285
        %v6291 = vmul.f32 %v453, %v6287
        %6292 = vst.msk [vmem:[%s408 + $0x120] sm:$0xff] %vm482, %v6288
        %6293 = vst.msk [vmem:[%s408 + $0x128] sm:$0xff] %vm482, %v6289
        %6294 = vst.msk [vmem:[%s408 + $0x130] sm:$0xff] %vm482, %v6290
        %6295 = vst.msk [vmem:[%s408 + $0x138] sm:$0xff] %vm482, %v6291
        %s6296 = sld [smem:[#allocation5 + $0xa]]
        %v6297 = vstv %s6296
        %v6299 = vrot.slane %v3441, 6
        %v6300 = vrot.slane %v3446, 6
        %v6301 = vsel %vm3040, %v6299, %v6300
        %v6302 = vsel %vm3042, %v6301, 0
        %6304 = vmatprep.subr.mxu0 0.0
        %6305 = vmatpush1.msra.mxu0 %v6302
        %6306 = vmatprep.subr.mxu0 0.0
        %6307 = vmatpush1.msra.mxu0 0.0
        %6308 = vmatprep.subr.mxu0 0.0
        %6309 = vmatpush1.msra.mxu0 0.0
        %6310 = vmatprep.subr.mxu0 0.0
        %6311 = vmatpush1.msra.mxu0 0.0
        %6312 = vmatprep.subr.mxu0 0.0
        %6313 = vmatpush1.msra.mxu0 0.0
        %6314 = vmatprep.subr.mxu0 0.0
        %6315 = vmatpush1.msra.mxu0 0.0
        %6316 = vmatprep.subr.mxu0 0.0
        %6317 = vmatpush1.msra.mxu0 0.0
        %6318 = vmatprep.subr.mxu0 0.0
        %6319 = vmatpush1.msra.mxu0 0.0
        %6320 = vmatprep.subr.mxu0 0.0
        %6321 = vmatpush1.msra.mxu0 0.0
        %6322 = vmatprep.subr.mxu0 0.0
        %6323 = vmatpush1.msra.mxu0 0.0
        %6324 = vmatprep.subr.mxu0 0.0
        %6325 = vmatpush1.msra.mxu0 0.0
        %6326 = vmatprep.subr.mxu0 0.0
        %6327 = vmatpush1.msra.mxu0 0.0
        %6328 = vmatprep.subr.mxu0 0.0
        %6329 = vmatpush1.msra.mxu0 0.0
        %6330 = vmatprep.subr.mxu0 0.0
        %6331 = vmatpush1.msra.mxu0 0.0
        %6332 = vmatprep.subr.mxu0 0.0
        %6333 = vmatpush1.msra.mxu0 0.0
        %6334 = vmatprep.subr.mxu0 0.0
        %6335 = vmatpush1.msra.mxu0 0.0
        %6336 = vmatprep.subr.mxu0 0.0
        %6337 = vmatpush1.msra.mxu0 0.0
        %6338 = vmatprep.subr.mxu0 0.0
        %6339 = vmatpush1.msra.mxu0 0.0
        %6340 = vmatprep.subr.mxu0 0.0
        %6341 = vmatpush1.msra.mxu0 0.0
        %6342 = vmatprep.subr.mxu0 0.0
        %6343 = vmatpush1.msra.mxu0 0.0
        %6344 = vmatprep.subr.mxu0 0.0
        %6345 = vmatpush1.msra.mxu0 0.0
        %6346 = vmatprep.subr.mxu0 0.0
        %6347 = vmatpush1.msra.mxu0 0.0
        %6348 = vmatprep.subr.mxu0 0.0
        %6349 = vmatpush1.msra.mxu0 0.0
        %6350 = vmatprep.subr.mxu0 0.0
        %6351 = vmatpush1.msra.mxu0 0.0
        %6352 = vmatprep.subr.mxu0 0.0
        %6353 = vmatpush1.msra.mxu0 0.0
        %6354 = vmatprep.subr.mxu0 0.0
        %6355 = vmatpush1.msra.mxu0 0.0
        %6356 = vmatprep.subr.mxu0 0.0
        %6357 = vmatpush1.msra.mxu0 0.0
        %6358 = vmatprep.subr.mxu0 0.0
        %6359 = vmatpush1.msra.mxu0 0.0
        %6360 = vmatprep.subr.mxu0 0.0
        %6361 = vmatpush1.msra.mxu0 0.0
        %6362 = vmatprep.subr.mxu0 0.0
        %6363 = vmatpush1.msra.mxu0 0.0
        %6364 = vmatprep.subr.mxu0 0.0
        %6365 = vmatpush1.msra.mxu0 0.0
        %6366 = vmatprep.subr.mxu0 0.0
        %6367 = vmatpush1.msra.mxu0 0.0
        %6368 = vmatprep.mubr.f32.mxu0 0.0
        %6369 = vmatmul.mubr.f32.gmra.mrb[0].mxu0 %v3461
        %v6370 = vpop.f32.mrb[0].mxu0
        %v6371 = vadd.f32 %v6297, %v6370
        %v6372 = vpop.f32.mrb[0].mxu0
        %6373 = vmatprep.mubr.f32.mxu0 0.0
        %6374 = vmatmul.mubr.f32.gmra.mrb[0].mxu0 %v3464
        %v6375 = vpop.f32.mrb[0].mxu0
        %v6376 = vadd.f32 %v6297, %v6375
        %v6377 = vpop.f32.mrb[0].mxu0
        %6378 = vmatprep.mubr.f32.mxu0 0.0
        %6379 = vmatmul.mubr.f32.gmra.mrb[0].mxu0 %v3467
        %v6380 = vpop.f32.mrb[0].mxu0
        %v6381 = vadd.f32 %v6297, %v6380
        %v6382 = vpop.f32.mrb[0].mxu0
        %6383 = vmatprep.mubr.f32.mxu0 0.0
        %6384 = vmatmul.mubr.f32.gmra.mrb[0].mxu0 %v3470
        %v6385 = vpop.f32.mrb[0].mxu0
        %v6386 = vadd.f32 %v6297, %v6385
        %v6387 = vpop.f32.mrb[0].mxu0
        %6388 = vdwg.mxu0
        %s6389 = sld [smem:[#allocation2 + $0x500]]
        %v6390 = vstv %s6389
        %v6391 = vmul.f32 %v6390, %v414
        %v6392 = vmul.f32 %v6390, %v415
        %v6393 = vmul.f32 %v6390, %v416
        %v6394 = vmul.f32 %v6390, %v417
        %v6395 = vadd.f32 %v6371, %v6391
        %v6396 = vadd.f32 %v6376, %v6392
        %v6397 = vadd.f32 %v6381, %v6393
        %v6398 = vadd.f32 %v6386, %v6394
        %s6399 = sld [smem:[#allocation2 + $0x501]]
        %v6400 = vstv %s6399
        %v6401 = vmul.f32 %v6400, %v418
        %v6402 = vmul.f32 %v6400, %v419
        %v6403 = vmul.f32 %v6400, %v420
        %v6404 = vmul.f32 %v6400, %v421
        %v6405 = vadd.f32 %v6395, %v6401
        %v6406 = vadd.f32 %v6396, %v6402
        %v6407 = vadd.f32 %v6397, %v6403
        %v6408 = vadd.f32 %v6398, %v6404
        %s6409 = sld [smem:[#allocation2 + $0x502]]
        %v6410 = vstv %s6409
        %v6411 = vmul.f32 %v6410, %v422
        %v6412 = vmul.f32 %v6410, %v423
        %v6413 = vmul.f32 %v6410, %v424
        %v6414 = vmul.f32 %v6410, %v425
        %v6415 = vadd.f32 %v6405, %v6411
        %v6416 = vadd.f32 %v6406, %v6412
        %v6417 = vadd.f32 %v6407, %v6413
        %v6418 = vadd.f32 %v6408, %v6414
        %s6419 = sld [smem:[#allocation2 + $0x503]]
        %v6420 = vstv %s6419
        %v6421 = vmul.f32 %v6420, %v426
        %v6422 = vmul.f32 %v6420, %v427
        %v6423 = vmul.f32 %v6420, %v428
        %v6424 = vmul.f32 %v6420, %v429
        %v6425 = vadd.f32 %v6415, %v6421
        %v6426 = vadd.f32 %v6416, %v6422
        %v6427 = vadd.f32 %v6417, %v6423
        %v6428 = vadd.f32 %v6418, %v6424
        %s6429 = sld [smem:[#allocation2 + $0x504]]
        %v6430 = vstv %s6429
        %v6431 = vmul.f32 %v6430, %v430
        %v6432 = vmul.f32 %v6430, %v431
        %v6433 = vmul.f32 %v6430, %v432
        %v6434 = vmul.f32 %v6430, %v433
        %v6435 = vadd.f32 %v6425, %v6431
        %v6436 = vadd.f32 %v6426, %v6432
        %v6437 = vadd.f32 %v6427, %v6433
        %v6438 = vadd.f32 %v6428, %v6434
        %s6439 = sld [smem:[#allocation2 + $0x505]]
        %v6440 = vstv %s6439
        %v6441 = vmul.f32 %v6440, %v434
        %v6442 = vmul.f32 %v6440, %v435
        %v6443 = vmul.f32 %v6440, %v436
        %v6444 = vmul.f32 %v6440, %v437
        %v6445 = vadd.f32 %v6435, %v6441
        %v6446 = vadd.f32 %v6436, %v6442
        %v6447 = vadd.f32 %v6437, %v6443
        %v6448 = vadd.f32 %v6438, %v6444
        %s6449 = sld [smem:[#allocation2 + $0x506]]
        %v6450 = vstv %s6449
        %v6451 = vmul.f32 %v6450, %v438
        %v6452 = vmul.f32 %v6450, %v439
        %v6453 = vmul.f32 %v6450, %v440
        %v6454 = vmul.f32 %v6450, %v441
        %v6455 = vadd.f32 %v6445, %v6451
        %v6456 = vadd.f32 %v6446, %v6452
        %v6457 = vadd.f32 %v6447, %v6453
        %v6458 = vadd.f32 %v6448, %v6454
        %s6459 = sld [smem:[#allocation2 + $0x507]]
        %v6460 = vstv %s6459
        %v6461 = vmul.f32 %v6460, %v442
        %v6462 = vmul.f32 %v6460, %v443
        %v6463 = vmul.f32 %v6460, %v444
        %v6464 = vmul.f32 %v6460, %v445
        %v6465 = vadd.f32 %v6455, %v6461
        %v6466 = vadd.f32 %v6456, %v6462
        %v6467 = vadd.f32 %v6457, %v6463
        %v6468 = vadd.f32 %v6458, %v6464
        %s6469 = sld [smem:[#allocation2 + $0x508]]
        %v6470 = vstv %s6469
        %v6471 = vmul.f32 %v6470, %v446
        %v6472 = vmul.f32 %v6470, %v447
        %v6473 = vmul.f32 %v6470, %v448
        %v6474 = vmul.f32 %v6470, %v449
        %v6475 = vadd.f32 %v6465, %v6471
        %v6476 = vadd.f32 %v6466, %v6472
        %v6477 = vadd.f32 %v6467, %v6473
        %v6478 = vadd.f32 %v6468, %v6474
        %s6479 = sld [smem:[#allocation2 + $0x509]]
        %v6480 = vstv %s6479
        %v6481 = vmul.f32 %v6480, %v450
        %v6482 = vmul.f32 %v6480, %v451
        %v6483 = vmul.f32 %v6480, %v452
        %v6484 = vmul.f32 %v6480, %v453
        %v6485 = vadd.f32 %v6475, %v6481
        %v6486 = vadd.f32 %v6476, %v6482
        %v6487 = vadd.f32 %v6477, %v6483
        %v6488 = vadd.f32 %v6478, %v6484
        %s6489 = sld [smem:[#allocation2 + $0x50a]]
        %v6490 = vstv %s6489
        %v6491 = vmul.f32 %v6490, %v454
        %v6492 = vmul.f32 %v6490, %v455
        %v6493 = vmul.f32 %v6490, %v456
        %v6494 = vmul.f32 %v6490, %v457
        %v6495 = vadd.f32 %v6485, %v6491
        %v6496 = vadd.f32 %v6486, %v6492
        %v6497 = vadd.f32 %v6487, %v6493
        %v6498 = vadd.f32 %v6488, %v6494
        %s6499 = sld [smem:[#allocation2 + $0x50b]]
        %v6500 = vstv %s6499
        %v6501 = vmul.f32 %v6500, %v458
        %v6502 = vmul.f32 %v6500, %v459
        %v6503 = vmul.f32 %v6500, %v460
        %v6504 = vmul.f32 %v6500, %v461
        %v6505 = vadd.f32 %v6495, %v6501
        %v6506 = vadd.f32 %v6496, %v6502
        %v6507 = vadd.f32 %v6497, %v6503
        %v6508 = vadd.f32 %v6498, %v6504
        %s6509 = sld [smem:[#allocation2 + $0x50c]]
        %v6510 = vstv %s6509
        %v6511 = vmul.f32 %v6510, %v462
        %v6512 = vmul.f32 %v6510, %v463
        %v6513 = vmul.f32 %v6510, %v464
        %v6514 = vmul.f32 %v6510, %v465
        %v6515 = vadd.f32 %v6505, %v6511
        %v6516 = vadd.f32 %v6506, %v6512
        %v6517 = vadd.f32 %v6507, %v6513
        %v6518 = vadd.f32 %v6508, %v6514
        %s6519 = sld [smem:[#allocation2 + $0x50d]]
        %v6520 = vstv %s6519
        %v6521 = vmul.f32 %v6520, %v466
        %v6522 = vmul.f32 %v6520, %v467
        %v6523 = vmul.f32 %v6520, %v468
        %v6524 = vmul.f32 %v6520, %v469
        %v6525 = vadd.f32 %v6515, %v6521
        %v6526 = vadd.f32 %v6516, %v6522
        %v6527 = vadd.f32 %v6517, %v6523
        %v6528 = vadd.f32 %v6518, %v6524
        %s6529 = sld [smem:[#allocation2 + $0x50e]]
        %v6530 = vstv %s6529
        %v6531 = vmul.f32 %v6530, %v470
        %v6532 = vmul.f32 %v6530, %v471
        %v6533 = vmul.f32 %v6530, %v472
        %v6534 = vmul.f32 %v6530, %v473
        %v6535 = vadd.f32 %v6525, %v6531
        %v6536 = vadd.f32 %v6526, %v6532
        %v6537 = vadd.f32 %v6527, %v6533
        %v6538 = vadd.f32 %v6528, %v6534
        %s6539 = sld [smem:[#allocation2 + $0x50f]]
        %v6540 = vstv %s6539
        %v6541 = vmul.f32 %v6540, %v474
        %v6542 = vmul.f32 %v6540, %v475
        %v6543 = vmul.f32 %v6540, %v476
        %v6544 = vmul.f32 %v6540, %v477
        %v6545 = vadd.f32 %v6535, %v6541
        %v6546 = vadd.f32 %v6536, %v6542
        %v6547 = vadd.f32 %v6537, %v6543
        %v6548 = vadd.f32 %v6538, %v6544
        %v6549 = vsub.f32 0.0, %v6545
        %v6550 = vsub.f32 0.0, %v6546
        %v6551 = vsub.f32 0.0, %v6547
        %v6552 = vsub.f32 0.0, %v6548
        %v6553 = vmul.f32 %v6549, 1.442695
        %v6554 = vpow.pop %v6553
        %v6555 = vmul.f32 %v6550, 1.442695
        %v6556 = vpow.pop %v6555
        %v6557 = vmul.f32 %v6551, 1.442695
        %v6558 = vpow.pop %v6557
        %v6559 = vmul.f32 %v6552, 1.442695
        %v6560 = vpow.pop %v6559
        %v6561 = vadd.f32 %v6554, 1.0
        %v6562 = vadd.f32 %v6556, 1.0
        %v6563 = vadd.f32 %v6558, 1.0
        %v6564 = vadd.f32 %v6560, 1.0
        %v6565 = vrcp.pop %v6561
        %v6566 = vmul.f32 1.0, %v6565
        %v6567 = vrcp.pop %v6562
        %v6568 = vmul.f32 1.0, %v6567
        %v6569 = vrcp.pop %v6563
        %v6570 = vmul.f32 1.0, %v6569
        %v6571 = vrcp.pop %v6564
        %v6572 = vmul.f32 1.0, %v6571
        %v6573 = vmul.f32 %v454, %v6566
        %v6574 = vmul.f32 %v455, %v6568
        %v6575 = vmul.f32 %v456, %v6570
        %v6576 = vmul.f32 %v457, %v6572
        %6577 = vst.msk [vmem:[%s408 + $0x140] sm:$0xff] %vm482, %v6573
        %6578 = vst.msk [vmem:[%s408 + $0x148] sm:$0xff] %vm482, %v6574
        %6579 = vst.msk [vmem:[%s408 + $0x150] sm:$0xff] %vm482, %v6575
        %6580 = vst.msk [vmem:[%s408 + $0x158] sm:$0xff] %vm482, %v6576
        %s6581 = sld [smem:[#allocation5 + $0xb]]
        %v6582 = vstv %s6581
        %v6583 = vrot.slane %v3446, 1
        %v6584 = vsel %vm3042, %v6583, 0
        %6586 = vmatprep.subr.mxu0 0.0
        %6587 = vmatpush1.msra.mxu0 %v6584
        %6588 = vmatprep.subr.mxu0 0.0
        %6589 = vmatpush1.msra.mxu0 0.0
        %6590 = vmatprep.subr.mxu0 0.0
        %6591 = vmatpush1.msra.mxu0 0.0
        %6592 = vmatprep.subr.mxu0 0.0
        %6593 = vmatpush1.msra.mxu0 0.0
        %6594 = vmatprep.subr.mxu0 0.0
        %6595 = vmatpush1.msra.mxu0 0.0
        %6596 = vmatprep.subr.mxu0 0.0
        %6597 = vmatpush1.msra.mxu0 0.0
        %6598 = vmatprep.subr.mxu0 0.0
        %6599 = vmatpush1.msra.mxu0 0.0
        %6600 = vmatprep.subr.mxu0 0.0
        %6601 = vmatpush1.msra.mxu0 0.0
        %6602 = vmatprep.subr.mxu0 0.0
        %6603 = vmatpush1.msra.mxu0 0.0
        %6604 = vmatprep.subr.mxu0 0.0
        %6605 = vmatpush1.msra.mxu0 0.0
        %6606 = vmatprep.subr.mxu0 0.0
        %6607 = vmatpush1.msra.mxu0 0.0
        %6608 = vmatprep.subr.mxu0 0.0
        %6609 = vmatpush1.msra.mxu0 0.0
        %6610 = vmatprep.subr.mxu0 0.0
        %6611 = vmatpush1.msra.mxu0 0.0
        %6612 = vmatprep.subr.mxu0 0.0
        %6613 = vmatpush1.msra.mxu0 0.0
        %6614 = vmatprep.subr.mxu0 0.0
        %6615 = vmatpush1.msra.mxu0 0.0
        %6616 = vmatprep.subr.mxu0 0.0
        %6617 = vmatpush1.msra.mxu0 0.0
        %6618 = vmatprep.subr.mxu0 0.0
        %6619 = vmatpush1.msra.mxu0 0.0
        %6620 = vmatprep.subr.mxu0 0.0
        %6621 = vmatpush1.msra.mxu0 0.0
        %6622 = vmatprep.subr.mxu0 0.0
        %6623 = vmatpush1.msra.mxu0 0.0
        %6624 = vmatprep.subr.mxu0 0.0
        %6625 = vmatpush1.msra.mxu0 0.0
        %6626 = vmatprep.subr.mxu0 0.0
        %6627 = vmatpush1.msra.mxu0 0.0
        %6628 = vmatprep.subr.mxu0 0.0
        %6629 = vmatpush1.msra.mxu0 0.0
        %6630 = vmatprep.subr.mxu0 0.0
        %6631 = vmatpush1.msra.mxu0 0.0
        %6632 = vmatprep.subr.mxu0 0.0
        %6633 = vmatpush1.msra.mxu0 0.0
        %6634 = vmatprep.subr.mxu0 0.0
        %6635 = vmatpush1.msra.mxu0 0.0
        %6636 = vmatprep.subr.mxu0 0.0
        %6637 = vmatpush1.msra.mxu0 0.0
        %6638 = vmatprep.subr.mxu0 0.0
        %6639 = vmatpush1.msra.mxu0 0.0
        %6640 = vmatprep.subr.mxu0 0.0
        %6641 = vmatpush1.msra.mxu0 0.0
        %6642 = vmatprep.subr.mxu0 0.0
        %6643 = vmatpush1.msra.mxu0 0.0
        %6644 = vmatprep.subr.mxu0 0.0
        %6645 = vmatpush1.msra.mxu0 0.0
        %6646 = vmatprep.subr.mxu0 0.0
        %6647 = vmatpush1.msra.mxu0 0.0
        %6648 = vmatprep.subr.mxu0 0.0
        %6649 = vmatpush1.msra.mxu0 0.0
        %6650 = vmatprep.mubr.f32.mxu0 0.0
        %6651 = vmatmul.mubr.f32.gmra.mrb[0].mxu0 %v3461
        %v6652 = vpop.f32.mrb[0].mxu0
        %v6653 = vadd.f32 %v6582, %v6652
        %v6654 = vpop.f32.mrb[0].mxu0
        %6655 = vmatprep.mubr.f32.mxu0 0.0
        %6656 = vmatmul.mubr.f32.gmra.mrb[0].mxu0 %v3464
        %v6657 = vpop.f32.mrb[0].mxu0
        %v6658 = vadd.f32 %v6582, %v6657
        %v6659 = vpop.f32.mrb[0].mxu0
        %6660 = vmatprep.mubr.f32.mxu0 0.0
        %6661 = vmatmul.mubr.f32.gmra.mrb[0].mxu0 %v3467
        %v6662 = vpop.f32.mrb[0].mxu0
        %v6663 = vadd.f32 %v6582, %v6662
        %v6664 = vpop.f32.mrb[0].mxu0
        %6665 = vmatprep.mubr.f32.mxu0 0.0
        %6666 = vmatmul.mubr.f32.gmra.mrb[0].mxu0 %v3470
        %v6667 = vpop.f32.mrb[0].mxu0
        %v6668 = vadd.f32 %v6582, %v6667
        %v6669 = vpop.f32.mrb[0].mxu0
        %6670 = vdwg.mxu0
        %s6671 = sld [smem:[#allocation2 + $0x580]]
        %v6672 = vstv %s6671
        %v6673 = vmul.f32 %v6672, %v414
        %v6674 = vmul.f32 %v6672, %v415
        %v6675 = vmul.f32 %v6672, %v416
        %v6676 = vmul.f32 %v6672, %v417
        %v6677 = vadd.f32 %v6653, %v6673
        %v6678 = vadd.f32 %v6658, %v6674
        %v6679 = vadd.f32 %v6663, %v6675
        %v6680 = vadd.f32 %v6668, %v6676
        %s6681 = sld [smem:[#allocation2 + $0x581]]
        %v6682 = vstv %s6681
        %v6683 = vmul.f32 %v6682, %v418
        %v6684 = vmul.f32 %v6682, %v419
        %v6685 = vmul.f32 %v6682, %v420
        %v6686 = vmul.f32 %v6682, %v421
        %v6687 = vadd.f32 %v6677, %v6683
        %v6688 = vadd.f32 %v6678, %v6684
        %v6689 = vadd.f32 %v6679, %v6685
        %v6690 = vadd.f32 %v6680, %v6686
        %s6691 = sld [smem:[#allocation2 + $0x582]]
        %v6692 = vstv %s6691
        %v6693 = vmul.f32 %v6692, %v422
        %v6694 = vmul.f32 %v6692, %v423
        %v6695 = vmul.f32 %v6692, %v424
        %v6696 = vmul.f32 %v6692, %v425
        %v6697 = vadd.f32 %v6687, %v6693
        %v6698 = vadd.f32 %v6688, %v6694
        %v6699 = vadd.f32 %v6689, %v6695
        %v6700 = vadd.f32 %v6690, %v6696
        %s6701 = sld [smem:[#allocation2 + $0x583]]
        %v6702 = vstv %s6701
        %v6703 = vmul.f32 %v6702, %v426
        %v6704 = vmul.f32 %v6702, %v427
        %v6705 = vmul.f32 %v6702, %v428
        %v6706 = vmul.f32 %v6702, %v429
        %v6707 = vadd.f32 %v6697, %v6703
        %v6708 = vadd.f32 %v6698, %v6704
        %v6709 = vadd.f32 %v6699, %v6705
        %v6710 = vadd.f32 %v6700, %v6706
        %s6711 = sld [smem:[#allocation2 + $0x584]]
        %v6712 = vstv %s6711
        %v6713 = vmul.f32 %v6712, %v430
        %v6714 = vmul.f32 %v6712, %v431
        %v6715 = vmul.f32 %v6712, %v432
        %v6716 = vmul.f32 %v6712, %v433
        %v6717 = vadd.f32 %v6707, %v6713
        %v6718 = vadd.f32 %v6708, %v6714
        %v6719 = vadd.f32 %v6709, %v6715
        %v6720 = vadd.f32 %v6710, %v6716
        %s6721 = sld [smem:[#allocation2 + $0x585]]
        %v6722 = vstv %s6721
        %v6723 = vmul.f32 %v6722, %v434
        %v6724 = vmul.f32 %v6722, %v435
        %v6725 = vmul.f32 %v6722, %v436
        %v6726 = vmul.f32 %v6722, %v437
        %v6727 = vadd.f32 %v6717, %v6723
        %v6728 = vadd.f32 %v6718, %v6724
        %v6729 = vadd.f32 %v6719, %v6725
        %v6730 = vadd.f32 %v6720, %v6726
        %s6731 = sld [smem:[#allocation2 + $0x586]]
        %v6732 = vstv %s6731
        %v6733 = vmul.f32 %v6732, %v438
        %v6734 = vmul.f32 %v6732, %v439
        %v6735 = vmul.f32 %v6732, %v440
        %v6736 = vmul.f32 %v6732, %v441
        %v6737 = vadd.f32 %v6727, %v6733
        %v6738 = vadd.f32 %v6728, %v6734
        %v6739 = vadd.f32 %v6729, %v6735
        %v6740 = vadd.f32 %v6730, %v6736
        %s6741 = sld [smem:[#allocation2 + $0x587]]
        %v6742 = vstv %s6741
        %v6743 = vmul.f32 %v6742, %v442
        %v6744 = vmul.f32 %v6742, %v443
        %v6745 = vmul.f32 %v6742, %v444
        %v6746 = vmul.f32 %v6742, %v445
        %v6747 = vadd.f32 %v6737, %v6743
        %v6748 = vadd.f32 %v6738, %v6744
        %v6749 = vadd.f32 %v6739, %v6745
        %v6750 = vadd.f32 %v6740, %v6746
        %s6751 = sld [smem:[#allocation2 + $0x588]]
        %v6752 = vstv %s6751
        %v6753 = vmul.f32 %v6752, %v446
        %v6754 = vmul.f32 %v6752, %v447
        %v6755 = vmul.f32 %v6752, %v448
        %v6756 = vmul.f32 %v6752, %v449
        %v6757 = vadd.f32 %v6747, %v6753
        %v6758 = vadd.f32 %v6748, %v6754
        %v6759 = vadd.f32 %v6749, %v6755
        %v6760 = vadd.f32 %v6750, %v6756
        %s6761 = sld [smem:[#allocation2 + $0x589]]
        %v6762 = vstv %s6761
        %v6763 = vmul.f32 %v6762, %v450
        %v6764 = vmul.f32 %v6762, %v451
        %v6765 = vmul.f32 %v6762, %v452
        %v6766 = vmul.f32 %v6762, %v453
        %v6767 = vadd.f32 %v6757, %v6763
        %v6768 = vadd.f32 %v6758, %v6764
        %v6769 = vadd.f32 %v6759, %v6765
        %v6770 = vadd.f32 %v6760, %v6766
        %s6771 = sld [smem:[#allocation2 + $0x58a]]
        %v6772 = vstv %s6771
        %v6773 = vmul.f32 %v6772, %v454
        %v6774 = vmul.f32 %v6772, %v455
        %v6775 = vmul.f32 %v6772, %v456
        %v6776 = vmul.f32 %v6772, %v457
        %v6777 = vadd.f32 %v6767, %v6773
        %v6778 = vadd.f32 %v6768, %v6774
        %v6779 = vadd.f32 %v6769, %v6775
        %v6780 = vadd.f32 %v6770, %v6776
        %s6781 = sld [smem:[#allocation2 + $0x58b]]
        %v6782 = vstv %s6781
        %v6783 = vmul.f32 %v6782, %v458
        %v6784 = vmul.f32 %v6782, %v459
        %v6785 = vmul.f32 %v6782, %v460
        %v6786 = vmul.f32 %v6782, %v461
        %v6787 = vadd.f32 %v6777, %v6783
        %v6788 = vadd.f32 %v6778, %v6784
        %v6789 = vadd.f32 %v6779, %v6785
        %v6790 = vadd.f32 %v6780, %v6786
        %s6791 = sld [smem:[#allocation2 + $0x58c]]
        %v6792 = vstv %s6791
        %v6793 = vmul.f32 %v6792, %v462
        %v6794 = vmul.f32 %v6792, %v463
        %v6795 = vmul.f32 %v6792, %v464
        %v6796 = vmul.f32 %v6792, %v465
        %v6797 = vadd.f32 %v6787, %v6793
        %v6798 = vadd.f32 %v6788, %v6794
        %v6799 = vadd.f32 %v6789, %v6795
        %v6800 = vadd.f32 %v6790, %v6796
        %s6801 = sld [smem:[#allocation2 + $0x58d]]
        %v6802 = vstv %s6801
        %v6803 = vmul.f32 %v6802, %v466
        %v6804 = vmul.f32 %v6802, %v467
        %v6805 = vmul.f32 %v6802, %v468
        %v6806 = vmul.f32 %v6802, %v469
        %v6807 = vadd.f32 %v6797, %v6803
        %v6808 = vadd.f32 %v6798, %v6804
        %v6809 = vadd.f32 %v6799, %v6805
        %v6810 = vadd.f32 %v6800, %v6806
        %s6811 = sld [smem:[#allocation2 + $0x58e]]
        %v6812 = vstv %s6811
        %v6813 = vmul.f32 %v6812, %v470
        %v6814 = vmul.f32 %v6812, %v471
        %v6815 = vmul.f32 %v6812, %v472
        %v6816 = vmul.f32 %v6812, %v473
        %v6817 = vadd.f32 %v6807, %v6813
        %v6818 = vadd.f32 %v6808, %v6814
        %v6819 = vadd.f32 %v6809, %v6815
        %v6820 = vadd.f32 %v6810, %v6816
        %s6821 = sld [smem:[#allocation2 + $0x58f]]
        %v6822 = vstv %s6821
        %v6823 = vmul.f32 %v6822, %v474
        %v6824 = vmul.f32 %v6822, %v475
        %v6825 = vmul.f32 %v6822, %v476
        %v6826 = vmul.f32 %v6822, %v477
        %v6827 = vadd.f32 %v6817, %v6823
        %v6828 = vadd.f32 %v6818, %v6824
        %v6829 = vadd.f32 %v6819, %v6825
        %v6830 = vadd.f32 %v6820, %v6826
        %v6831 = vsub.f32 0.0, %v6827
        %v6832 = vsub.f32 0.0, %v6828
        %v6833 = vsub.f32 0.0, %v6829
        %v6834 = vsub.f32 0.0, %v6830
        %v6835 = vmul.f32 %v6831, 1.442695
        %v6836 = vpow.pop %v6835
        %v6837 = vmul.f32 %v6832, 1.442695
        %v6838 = vpow.pop %v6837
        %v6839 = vmul.f32 %v6833, 1.442695
        %v6840 = vpow.pop %v6839
        %v6841 = vmul.f32 %v6834, 1.442695
        %v6842 = vpow.pop %v6841
        %v6843 = vadd.f32 %v6836, 1.0
        %v6844 = vadd.f32 %v6838, 1.0
        %v6845 = vadd.f32 %v6840, 1.0
        %v6846 = vadd.f32 %v6842, 1.0
        %v6847 = vrcp.pop %v6843
        %v6848 = vmul.f32 1.0, %v6847
        %v6849 = vrcp.pop %v6844
        %v6850 = vmul.f32 1.0, %v6849
        %v6851 = vrcp.pop %v6845
        %v6852 = vmul.f32 1.0, %v6851
        %v6853 = vrcp.pop %v6846
        %v6854 = vmul.f32 1.0, %v6853
        %v6855 = vmul.f32 %v458, %v6848
        %v6856 = vmul.f32 %v459, %v6850
        %v6857 = vmul.f32 %v460, %v6852
        %v6858 = vmul.f32 %v461, %v6854
        %6859 = vst.msk [vmem:[%s408 + $0x160] sm:$0xff] %vm482, %v6855
        %6860 = vst.msk [vmem:[%s408 + $0x168] sm:$0xff] %vm482, %v6856
        %6861 = vst.msk [vmem:[%s408 + $0x170] sm:$0xff] %vm482, %v6857
        %6862 = vst.msk [vmem:[%s408 + $0x178] sm:$0xff] %vm482, %v6858
        %s6863 = sld [smem:[#allocation5 + $0xc]]
        %v6864 = vstv %s6863
        %v6865 = vrot.slane %v3446, 4
        %v6866 = vsel %vm3042, %v6865, 0
        %6868 = vmatprep.subr.mxu0 0.0
        %6869 = vmatpush1.msra.mxu0 %v6866
        %6870 = vmatprep.subr.mxu0 0.0
        %6871 = vmatpush1.msra.mxu0 0.0
        %6872 = vmatprep.subr.mxu0 0.0
        %6873 = vmatpush1.msra.mxu0 0.0
        %6874 = vmatprep.subr.mxu0 0.0
        %6875 = vmatpush1.msra.mxu0 0.0
        %6876 = vmatprep.subr.mxu0 0.0
        %6877 = vmatpush1.msra.mxu0 0.0
        %6878 = vmatprep.subr.mxu0 0.0
        %6879 = vmatpush1.msra.mxu0 0.0
        %6880 = vmatprep.subr.mxu0 0.0
        %6881 = vmatpush1.msra.mxu0 0.0
        %6882 = vmatprep.subr.mxu0 0.0
        %6883 = vmatpush1.msra.mxu0 0.0
        %6884 = vmatprep.subr.mxu0 0.0
        %6885 = vmatpush1.msra.mxu0 0.0
        %6886 = vmatprep.subr.mxu0 0.0
        %6887 = vmatpush1.msra.mxu0 0.0
        %6888 = vmatprep.subr.mxu0 0.0
        %6889 = vmatpush1.msra.mxu0 0.0
        %6890 = vmatprep.subr.mxu0 0.0
        %6891 = vmatpush1.msra.mxu0 0.0
        %6892 = vmatprep.subr.mxu0 0.0
        %6893 = vmatpush1.msra.mxu0 0.0
        %6894 = vmatprep.subr.mxu0 0.0
        %6895 = vmatpush1.msra.mxu0 0.0
        %6896 = vmatprep.subr.mxu0 0.0
        %6897 = vmatpush1.msra.mxu0 0.0
        %6898 = vmatprep.subr.mxu0 0.0
        %6899 = vmatpush1.msra.mxu0 0.0
        %6900 = vmatprep.subr.mxu0 0.0
        %6901 = vmatpush1.msra.mxu0 0.0
        %6902 = vmatprep.subr.mxu0 0.0
        %6903 = vmatpush1.msra.mxu0 0.0
        %6904 = vmatprep.subr.mxu0 0.0
        %6905 = vmatpush1.msra.mxu0 0.0
        %6906 = vmatprep.subr.mxu0 0.0
        %6907 = vmatpush1.msra.mxu0 0.0
        %6908 = vmatprep.subr.mxu0 0.0
        %6909 = vmatpush1.msra.mxu0 0.0
        %6910 = vmatprep.subr.mxu0 0.0
        %6911 = vmatpush1.msra.mxu0 0.0
        %6912 = vmatprep.subr.mxu0 0.0
        %6913 = vmatpush1.msra.mxu0 0.0
        %6914 = vmatprep.subr.mxu0 0.0
        %6915 = vmatpush1.msra.mxu0 0.0
        %6916 = vmatprep.subr.mxu0 0.0
        %6917 = vmatpush1.msra.mxu0 0.0
        %6918 = vmatprep.subr.mxu0 0.0
        %6919 = vmatpush1.msra.mxu0 0.0
        %6920 = vmatprep.subr.mxu0 0.0
        %6921 = vmatpush1.msra.mxu0 0.0
        %6922 = vmatprep.subr.mxu0 0.0
        %6923 = vmatpush1.msra.mxu0 0.0
        %6924 = vmatprep.subr.mxu0 0.0
        %6925 = vmatpush1.msra.mxu0 0.0
        %6926 = vmatprep.subr.mxu0 0.0
        %6927 = vmatpush1.msra.mxu0 0.0
        %6928 = vmatprep.subr.mxu0 0.0
        %6929 = vmatpush1.msra.mxu0 0.0
        %6930 = vmatprep.subr.mxu0 0.0
        %6931 = vmatpush1.msra.mxu0 0.0
        %6932 = vmatprep.mubr.f32.mxu0 0.0
        %6933 = vmatmul.mubr.f32.gmra.mrb[0].mxu0 %v3461
        %v6934 = vpop.f32.mrb[0].mxu0
        %v6935 = vadd.f32 %v6864, %v6934
        %v6936 = vpop.f32.mrb[0].mxu0
        %6937 = vmatprep.mubr.f32.mxu0 0.0
        %6938 = vmatmul.mubr.f32.gmra.mrb[0].mxu0 %v3464
        %v6939 = vpop.f32.mrb[0].mxu0
        %v6940 = vadd.f32 %v6864, %v6939
        %v6941 = vpop.f32.mrb[0].mxu0
        %6942 = vmatprep.mubr.f32.mxu0 0.0
        %6943 = vmatmul.mubr.f32.gmra.mrb[0].mxu0 %v3467
        %v6944 = vpop.f32.mrb[0].mxu0
        %v6945 = vadd.f32 %v6864, %v6944
        %v6946 = vpop.f32.mrb[0].mxu0
        %6947 = vmatprep.mubr.f32.mxu0 0.0
        %6948 = vmatmul.mubr.f32.gmra.mrb[0].mxu0 %v3470
        %v6949 = vpop.f32.mrb[0].mxu0
        %v6950 = vadd.f32 %v6864, %v6949
        %v6951 = vpop.f32.mrb[0].mxu0
        %6952 = vdwg.mxu0
        %s6953 = sld [smem:[#allocation2 + $0x600]]
        %v6954 = vstv %s6953
        %v6955 = vmul.f32 %v6954, %v414
        %v6956 = vmul.f32 %v6954, %v415
        %v6957 = vmul.f32 %v6954, %v416
        %v6958 = vmul.f32 %v6954, %v417
        %v6959 = vadd.f32 %v6935, %v6955
        %v6960 = vadd.f32 %v6940, %v6956
        %v6961 = vadd.f32 %v6945, %v6957
        %v6962 = vadd.f32 %v6950, %v6958
        %s6963 = sld [smem:[#allocation2 + $0x601]]
        %v6964 = vstv %s6963
        %v6965 = vmul.f32 %v6964, %v418
        %v6966 = vmul.f32 %v6964, %v419
        %v6967 = vmul.f32 %v6964, %v420
        %v6968 = vmul.f32 %v6964, %v421
        %v6969 = vadd.f32 %v6959, %v6965
        %v6970 = vadd.f32 %v6960, %v6966
        %v6971 = vadd.f32 %v6961, %v6967
        %v6972 = vadd.f32 %v6962, %v6968
        %s6973 = sld [smem:[#allocation2 + $0x602]]
        %v6974 = vstv %s6973
        %v6975 = vmul.f32 %v6974, %v422
        %v6976 = vmul.f32 %v6974, %v423
        %v6977 = vmul.f32 %v6974, %v424
        %v6978 = vmul.f32 %v6974, %v425
        %v6979 = vadd.f32 %v6969, %v6975
        %v6980 = vadd.f32 %v6970, %v6976
        %v6981 = vadd.f32 %v6971, %v6977
        %v6982 = vadd.f32 %v6972, %v6978
        %s6983 = sld [smem:[#allocation2 + $0x603]]
        %v6984 = vstv %s6983
        %v6985 = vmul.f32 %v6984, %v426
        %v6986 = vmul.f32 %v6984, %v427
        %v6987 = vmul.f32 %v6984, %v428
        %v6988 = vmul.f32 %v6984, %v429
        %v6989 = vadd.f32 %v6979, %v6985
        %v6990 = vadd.f32 %v6980, %v6986
        %v6991 = vadd.f32 %v6981, %v6987
        %v6992 = vadd.f32 %v6982, %v6988
        %s6993 = sld [smem:[#allocation2 + $0x604]]
        %v6994 = vstv %s6993
        %v6995 = vmul.f32 %v6994, %v430
        %v6996 = vmul.f32 %v6994, %v431
        %v6997 = vmul.f32 %v6994, %v432
        %v6998 = vmul.f32 %v6994, %v433
        %v6999 = vadd.f32 %v6989, %v6995
        %v7000 = vadd.f32 %v6990, %v6996
        %v7001 = vadd.f32 %v6991, %v6997
        %v7002 = vadd.f32 %v6992, %v6998
        %s7003 = sld [smem:[#allocation2 + $0x605]]
        %v7004 = vstv %s7003
        %v7005 = vmul.f32 %v7004, %v434
        %v7006 = vmul.f32 %v7004, %v435
        %v7007 = vmul.f32 %v7004, %v436
        %v7008 = vmul.f32 %v7004, %v437
        %v7009 = vadd.f32 %v6999, %v7005
        %v7010 = vadd.f32 %v7000, %v7006
        %v7011 = vadd.f32 %v7001, %v7007
        %v7012 = vadd.f32 %v7002, %v7008
        %s7013 = sld [smem:[#allocation2 + $0x606]]
        %v7014 = vstv %s7013
        %v7015 = vmul.f32 %v7014, %v438
        %v7016 = vmul.f32 %v7014, %v439
        %v7017 = vmul.f32 %v7014, %v440
        %v7018 = vmul.f32 %v7014, %v441
        %v7019 = vadd.f32 %v7009, %v7015
        %v7020 = vadd.f32 %v7010, %v7016
        %v7021 = vadd.f32 %v7011, %v7017
        %v7022 = vadd.f32 %v7012, %v7018
        %s7023 = sld [smem:[#allocation2 + $0x607]]
        %v7024 = vstv %s7023
        %v7025 = vmul.f32 %v7024, %v442
        %v7026 = vmul.f32 %v7024, %v443
        %v7027 = vmul.f32 %v7024, %v444
        %v7028 = vmul.f32 %v7024, %v445
        %v7029 = vadd.f32 %v7019, %v7025
        %v7030 = vadd.f32 %v7020, %v7026
        %v7031 = vadd.f32 %v7021, %v7027
        %v7032 = vadd.f32 %v7022, %v7028
        %s7033 = sld [smem:[#allocation2 + $0x608]]
        %v7034 = vstv %s7033
        %v7035 = vmul.f32 %v7034, %v446
        %v7036 = vmul.f32 %v7034, %v447
        %v7037 = vmul.f32 %v7034, %v448
        %v7038 = vmul.f32 %v7034, %v449
        %v7039 = vadd.f32 %v7029, %v7035
        %v7040 = vadd.f32 %v7030, %v7036
        %v7041 = vadd.f32 %v7031, %v7037
        %v7042 = vadd.f32 %v7032, %v7038
        %s7043 = sld [smem:[#allocation2 + $0x609]]
        %v7044 = vstv %s7043
        %v7045 = vmul.f32 %v7044, %v450
        %v7046 = vmul.f32 %v7044, %v451
        %v7047 = vmul.f32 %v7044, %v452
        %v7048 = vmul.f32 %v7044, %v453
        %v7049 = vadd.f32 %v7039, %v7045
        %v7050 = vadd.f32 %v7040, %v7046
        %v7051 = vadd.f32 %v7041, %v7047
        %v7052 = vadd.f32 %v7042, %v7048
        %s7053 = sld [smem:[#allocation2 + $0x60a]]
        %v7054 = vstv %s7053
        %v7055 = vmul.f32 %v7054, %v454
        %v7056 = vmul.f32 %v7054, %v455
        %v7057 = vmul.f32 %v7054, %v456
        %v7058 = vmul.f32 %v7054, %v457
        %v7059 = vadd.f32 %v7049, %v7055
        %v7060 = vadd.f32 %v7050, %v7056
        %v7061 = vadd.f32 %v7051, %v7057
        %v7062 = vadd.f32 %v7052, %v7058
        %s7063 = sld [smem:[#allocation2 + $0x60b]]
        %v7064 = vstv %s7063
        %v7065 = vmul.f32 %v7064, %v458
        %v7066 = vmul.f32 %v7064, %v459
        %v7067 = vmul.f32 %v7064, %v460
        %v7068 = vmul.f32 %v7064, %v461
        %v7069 = vadd.f32 %v7059, %v7065
        %v7070 = vadd.f32 %v7060, %v7066
        %v7071 = vadd.f32 %v7061, %v7067
        %v7072 = vadd.f32 %v7062, %v7068
        %s7073 = sld [smem:[#allocation2 + $0x60c]]
        %v7074 = vstv %s7073
        %v7075 = vmul.f32 %v7074, %v462
        %v7076 = vmul.f32 %v7074, %v463
        %v7077 = vmul.f32 %v7074, %v464
        %v7078 = vmul.f32 %v7074, %v465
        %v7079 = vadd.f32 %v7069, %v7075
        %v7080 = vadd.f32 %v7070, %v7076
        %v7081 = vadd.f32 %v7071, %v7077
        %v7082 = vadd.f32 %v7072, %v7078
        %s7083 = sld [smem:[#allocation2 + $0x60d]]
        %v7084 = vstv %s7083
        %v7085 = vmul.f32 %v7084, %v466
        %v7086 = vmul.f32 %v7084, %v467
        %v7087 = vmul.f32 %v7084, %v468
        %v7088 = vmul.f32 %v7084, %v469
        %v7089 = vadd.f32 %v7079, %v7085
        %v7090 = vadd.f32 %v7080, %v7086
        %v7091 = vadd.f32 %v7081, %v7087
        %v7092 = vadd.f32 %v7082, %v7088
        %s7093 = sld [smem:[#allocation2 + $0x60e]]
        %v7094 = vstv %s7093
        %v7095 = vmul.f32 %v7094, %v470
        %v7096 = vmul.f32 %v7094, %v471
        %v7097 = vmul.f32 %v7094, %v472
        %v7098 = vmul.f32 %v7094, %v473
        %v7099 = vadd.f32 %v7089, %v7095
        %v7100 = vadd.f32 %v7090, %v7096
        %v7101 = vadd.f32 %v7091, %v7097
        %v7102 = vadd.f32 %v7092, %v7098
        %s7103 = sld [smem:[#allocation2 + $0x60f]]
        %v7104 = vstv %s7103
        %v7105 = vmul.f32 %v7104, %v474
        %v7106 = vmul.f32 %v7104, %v475
        %v7107 = vmul.f32 %v7104, %v476
        %v7108 = vmul.f32 %v7104, %v477
        %v7109 = vadd.f32 %v7099, %v7105
        %v7110 = vadd.f32 %v7100, %v7106
        %v7111 = vadd.f32 %v7101, %v7107
        %v7112 = vadd.f32 %v7102, %v7108
        %v7113 = vsub.f32 0.0, %v7109
        %v7114 = vsub.f32 0.0, %v7110
        %v7115 = vsub.f32 0.0, %v7111
        %v7116 = vsub.f32 0.0, %v7112
        %v7117 = vmul.f32 %v7113, 1.442695
        %v7118 = vpow.pop %v7117
        %v7119 = vmul.f32 %v7114, 1.442695
        %v7120 = vpow.pop %v7119
        %v7121 = vmul.f32 %v7115, 1.442695
        %v7122 = vpow.pop %v7121
        %v7123 = vmul.f32 %v7116, 1.442695
        %v7124 = vpow.pop %v7123
        %v7125 = vadd.f32 %v7118, 1.0
        %v7126 = vadd.f32 %v7120, 1.0
        %v7127 = vadd.f32 %v7122, 1.0
        %v7128 = vadd.f32 %v7124, 1.0
        %v7129 = vrcp.pop %v7125
        %v7130 = vmul.f32 1.0, %v7129
        %v7131 = vrcp.pop %v7126
        %v7132 = vmul.f32 1.0, %v7131
        %v7133 = vrcp.pop %v7127
        %v7134 = vmul.f32 1.0, %v7133
        %v7135 = vrcp.pop %v7128
        %v7136 = vmul.f32 1.0, %v7135
        %v7137 = vmul.f32 %v462, %v7130
        %v7138 = vmul.f32 %v463, %v7132
        %v7139 = vmul.f32 %v464, %v7134
        %v7140 = vmul.f32 %v465, %v7136
        %7141 = vst.msk [vmem:[%s408 + $0x180] sm:$0xff] %vm482, %v7137
        %7142 = vst.msk [vmem:[%s408 + $0x188] sm:$0xff] %vm482, %v7138
        %7143 = vst.msk [vmem:[%s408 + $0x190] sm:$0xff] %vm482, %v7139
        %7144 = vst.msk [vmem:[%s408 + $0x198] sm:$0xff] %vm482, %v7140
        %s7145 = sld [smem:[#allocation5 + $0xd]]
        %v7146 = vstv %s7145
        %v7148 = vrot.slane %v3446, 7
        %v7149 = vrot.slane %v3451, 7
        %v7150 = vsel %vm3038, %v7148, %v7149
        %v7151 = vsel %vm3042, %v7150, 0
        %7153 = vmatprep.subr.mxu0 0.0
        %7154 = vmatpush1.msra.mxu0 %v7151
        %7155 = vmatprep.subr.mxu0 0.0
        %7156 = vmatpush1.msra.mxu0 0.0
        %7157 = vmatprep.subr.mxu0 0.0
        %7158 = vmatpush1.msra.mxu0 0.0
        %7159 = vmatprep.subr.mxu0 0.0
        %7160 = vmatpush1.msra.mxu0 0.0
        %7161 = vmatprep.subr.mxu0 0.0
        %7162 = vmatpush1.msra.mxu0 0.0
        %7163 = vmatprep.subr.mxu0 0.0
        %7164 = vmatpush1.msra.mxu0 0.0
        %7165 = vmatprep.subr.mxu0 0.0
        %7166 = vmatpush1.msra.mxu0 0.0
        %7167 = vmatprep.subr.mxu0 0.0
        %7168 = vmatpush1.msra.mxu0 0.0
        %7169 = vmatprep.subr.mxu0 0.0
        %7170 = vmatpush1.msra.mxu0 0.0
        %7171 = vmatprep.subr.mxu0 0.0
        %7172 = vmatpush1.msra.mxu0 0.0
        %7173 = vmatprep.subr.mxu0 0.0
        %7174 = vmatpush1.msra.mxu0 0.0
        %7175 = vmatprep.subr.mxu0 0.0
        %7176 = vmatpush1.msra.mxu0 0.0
        %7177 = vmatprep.subr.mxu0 0.0
        %7178 = vmatpush1.msra.mxu0 0.0
        %7179 = vmatprep.subr.mxu0 0.0
        %7180 = vmatpush1.msra.mxu0 0.0
        %7181 = vmatprep.subr.mxu0 0.0
        %7182 = vmatpush1.msra.mxu0 0.0
        %7183 = vmatprep.subr.mxu0 0.0
        %7184 = vmatpush1.msra.mxu0 0.0
        %7185 = vmatprep.subr.mxu0 0.0
        %7186 = vmatpush1.msra.mxu0 0.0
        %7187 = vmatprep.subr.mxu0 0.0
        %7188 = vmatpush1.msra.mxu0 0.0
        %7189 = vmatprep.subr.mxu0 0.0
        %7190 = vmatpush1.msra.mxu0 0.0
        %7191 = vmatprep.subr.mxu0 0.0
        %7192 = vmatpush1.msra.mxu0 0.0
        %7193 = vmatprep.subr.mxu0 0.0
        %7194 = vmatpush1.msra.mxu0 0.0
        %7195 = vmatprep.subr.mxu0 0.0
        %7196 = vmatpush1.msra.mxu0 0.0
        %7197 = vmatprep.subr.mxu0 0.0
        %7198 = vmatpush1.msra.mxu0 0.0
        %7199 = vmatprep.subr.mxu0 0.0
        %7200 = vmatpush1.msra.mxu0 0.0
        %7201 = vmatprep.subr.mxu0 0.0
        %7202 = vmatpush1.msra.mxu0 0.0
        %7203 = vmatprep.subr.mxu0 0.0
        %7204 = vmatpush1.msra.mxu0 0.0
        %7205 = vmatprep.subr.mxu0 0.0
        %7206 = vmatpush1.msra.mxu0 0.0
        %7207 = vmatprep.subr.mxu0 0.0
        %7208 = vmatpush1.msra.mxu0 0.0
        %7209 = vmatprep.subr.mxu0 0.0
        %7210 = vmatpush1.msra.mxu0 0.0
        %7211 = vmatprep.subr.mxu0 0.0
        %7212 = vmatpush1.msra.mxu0 0.0
        %7213 = vmatprep.subr.mxu0 0.0
        %7214 = vmatpush1.msra.mxu0 0.0
        %7215 = vmatprep.subr.mxu0 0.0
        %7216 = vmatpush1.msra.mxu0 0.0
        %7217 = vmatprep.mubr.f32.mxu0 0.0
        %7218 = vmatmul.mubr.f32.gmra.mrb[0].mxu0 %v3461
        %v7219 = vpop.f32.mrb[0].mxu0
        %v7220 = vadd.f32 %v7146, %v7219
        %v7221 = vpop.f32.mrb[0].mxu0
        %7222 = vmatprep.mubr.f32.mxu0 0.0
        %7223 = vmatmul.mubr.f32.gmra.mrb[0].mxu0 %v3464
        %v7224 = vpop.f32.mrb[0].mxu0
        %v7225 = vadd.f32 %v7146, %v7224
        %v7226 = vpop.f32.mrb[0].mxu0
        %7227 = vmatprep.mubr.f32.mxu0 0.0
        %7228 = vmatmul.mubr.f32.gmra.mrb[0].mxu0 %v3467
        %v7229 = vpop.f32.mrb[0].mxu0
        %v7230 = vadd.f32 %v7146, %v7229
        %v7231 = vpop.f32.mrb[0].mxu0
        %7232 = vmatprep.mubr.f32.mxu0 0.0
        %7233 = vmatmul.mubr.f32.gmra.mrb[0].mxu0 %v3470
        %v7234 = vpop.f32.mrb[0].mxu0
        %v7235 = vadd.f32 %v7146, %v7234
        %v7236 = vpop.f32.mrb[0].mxu0
        %7237 = vdwg.mxu0
        %s7238 = sld [smem:[#allocation2 + $0x680]]
        %v7239 = vstv %s7238
        %v7240 = vmul.f32 %v7239, %v414
        %v7241 = vmul.f32 %v7239, %v415
        %v7242 = vmul.f32 %v7239, %v416
        %v7243 = vmul.f32 %v7239, %v417
        %v7244 = vadd.f32 %v7220, %v7240
        %v7245 = vadd.f32 %v7225, %v7241
        %v7246 = vadd.f32 %v7230, %v7242
        %v7247 = vadd.f32 %v7235, %v7243
        %s7248 = sld [smem:[#allocation2 + $0x681]]
        %v7249 = vstv %s7248
        %v7250 = vmul.f32 %v7249, %v418
        %v7251 = vmul.f32 %v7249, %v419
        %v7252 = vmul.f32 %v7249, %v420
        %v7253 = vmul.f32 %v7249, %v421
        %v7254 = vadd.f32 %v7244, %v7250
        %v7255 = vadd.f32 %v7245, %v7251
        %v7256 = vadd.f32 %v7246, %v7252
        %v7257 = vadd.f32 %v7247, %v7253
        %s7258 = sld [smem:[#allocation2 + $0x682]]
        %v7259 = vstv %s7258
        %v7260 = vmul.f32 %v7259, %v422
        %v7261 = vmul.f32 %v7259, %v423
        %v7262 = vmul.f32 %v7259, %v424
        %v7263 = vmul.f32 %v7259, %v425
        %v7264 = vadd.f32 %v7254, %v7260
        %v7265 = vadd.f32 %v7255, %v7261
        %v7266 = vadd.f32 %v7256, %v7262
        %v7267 = vadd.f32 %v7257, %v7263
        %s7268 = sld [smem:[#allocation2 + $0x683]]
        %v7269 = vstv %s7268
        %v7270 = vmul.f32 %v7269, %v426
        %v7271 = vmul.f32 %v7269, %v427
        %v7272 = vmul.f32 %v7269, %v428
        %v7273 = vmul.f32 %v7269, %v429
        %v7274 = vadd.f32 %v7264, %v7270
        %v7275 = vadd.f32 %v7265, %v7271
        %v7276 = vadd.f32 %v7266, %v7272
        %v7277 = vadd.f32 %v7267, %v7273
        %s7278 = sld [smem:[#allocation2 + $0x684]]
        %v7279 = vstv %s7278
        %v7280 = vmul.f32 %v7279, %v430
        %v7281 = vmul.f32 %v7279, %v431
        %v7282 = vmul.f32 %v7279, %v432
        %v7283 = vmul.f32 %v7279, %v433
        %v7284 = vadd.f32 %v7274, %v7280
        %v7285 = vadd.f32 %v7275, %v7281
        %v7286 = vadd.f32 %v7276, %v7282
        %v7287 = vadd.f32 %v7277, %v7283
        %s7288 = sld [smem:[#allocation2 + $0x685]]
        %v7289 = vstv %s7288
        %v7290 = vmul.f32 %v7289, %v434
        %v7291 = vmul.f32 %v7289, %v435
        %v7292 = vmul.f32 %v7289, %v436
        %v7293 = vmul.f32 %v7289, %v437
        %v7294 = vadd.f32 %v7284, %v7290
        %v7295 = vadd.f32 %v7285, %v7291
        %v7296 = vadd.f32 %v7286, %v7292
        %v7297 = vadd.f32 %v7287, %v7293
        %s7298 = sld [smem:[#allocation2 + $0x686]]
        %v7299 = vstv %s7298
        %v7300 = vmul.f32 %v7299, %v438
        %v7301 = vmul.f32 %v7299, %v439
        %v7302 = vmul.f32 %v7299, %v440
        %v7303 = vmul.f32 %v7299, %v441
        %v7304 = vadd.f32 %v7294, %v7300
        %v7305 = vadd.f32 %v7295, %v7301
        %v7306 = vadd.f32 %v7296, %v7302
        %v7307 = vadd.f32 %v7297, %v7303
        %s7308 = sld [smem:[#allocation2 + $0x687]]
        %v7309 = vstv %s7308
        %v7310 = vmul.f32 %v7309, %v442
        %v7311 = vmul.f32 %v7309, %v443
        %v7312 = vmul.f32 %v7309, %v444
        %v7313 = vmul.f32 %v7309, %v445
        %v7314 = vadd.f32 %v7304, %v7310
        %v7315 = vadd.f32 %v7305, %v7311
        %v7316 = vadd.f32 %v7306, %v7312
        %v7317 = vadd.f32 %v7307, %v7313
        %s7318 = sld [smem:[#allocation2 + $0x688]]
        %v7319 = vstv %s7318
        %v7320 = vmul.f32 %v7319, %v446
        %v7321 = vmul.f32 %v7319, %v447
        %v7322 = vmul.f32 %v7319, %v448
        %v7323 = vmul.f32 %v7319, %v449
        %v7324 = vadd.f32 %v7314, %v7320
        %v7325 = vadd.f32 %v7315, %v7321
        %v7326 = vadd.f32 %v7316, %v7322
        %v7327 = vadd.f32 %v7317, %v7323
        %s7328 = sld [smem:[#allocation2 + $0x689]]
        %v7329 = vstv %s7328
        %v7330 = vmul.f32 %v7329, %v450
        %v7331 = vmul.f32 %v7329, %v451
        %v7332 = vmul.f32 %v7329, %v452
        %v7333 = vmul.f32 %v7329, %v453
        %v7334 = vadd.f32 %v7324, %v7330
        %v7335 = vadd.f32 %v7325, %v7331
        %v7336 = vadd.f32 %v7326, %v7332
        %v7337 = vadd.f32 %v7327, %v7333
        %s7338 = sld [smem:[#allocation2 + $0x68a]]
        %v7339 = vstv %s7338
        %v7340 = vmul.f32 %v7339, %v454
        %v7341 = vmul.f32 %v7339, %v455
        %v7342 = vmul.f32 %v7339, %v456
        %v7343 = vmul.f32 %v7339, %v457
        %v7344 = vadd.f32 %v7334, %v7340
        %v7345 = vadd.f32 %v7335, %v7341
        %v7346 = vadd.f32 %v7336, %v7342
        %v7347 = vadd.f32 %v7337, %v7343
        %s7348 = sld [smem:[#allocation2 + $0x68b]]
        %v7349 = vstv %s7348
        %v7350 = vmul.f32 %v7349, %v458
        %v7351 = vmul.f32 %v7349, %v459
        %v7352 = vmul.f32 %v7349, %v460
        %v7353 = vmul.f32 %v7349, %v461
        %v7354 = vadd.f32 %v7344, %v7350
        %v7355 = vadd.f32 %v7345, %v7351
        %v7356 = vadd.f32 %v7346, %v7352
        %v7357 = vadd.f32 %v7347, %v7353
        %s7358 = sld [smem:[#allocation2 + $0x68c]]
        %v7359 = vstv %s7358
        %v7360 = vmul.f32 %v7359, %v462
        %v7361 = vmul.f32 %v7359, %v463
        %v7362 = vmul.f32 %v7359, %v464
        %v7363 = vmul.f32 %v7359, %v465
        %v7364 = vadd.f32 %v7354, %v7360
        %v7365 = vadd.f32 %v7355, %v7361
        %v7366 = vadd.f32 %v7356, %v7362
        %v7367 = vadd.f32 %v7357, %v7363
        %s7368 = sld [smem:[#allocation2 + $0x68d]]
        %v7369 = vstv %s7368
        %v7370 = vmul.f32 %v7369, %v466
        %v7371 = vmul.f32 %v7369, %v467
        %v7372 = vmul.f32 %v7369, %v468
        %v7373 = vmul.f32 %v7369, %v469
        %v7374 = vadd.f32 %v7364, %v7370
        %v7375 = vadd.f32 %v7365, %v7371
        %v7376 = vadd.f32 %v7366, %v7372
        %v7377 = vadd.f32 %v7367, %v7373
        %s7378 = sld [smem:[#allocation2 + $0x68e]]
        %v7379 = vstv %s7378
        %v7380 = vmul.f32 %v7379, %v470
        %v7381 = vmul.f32 %v7379, %v471
        %v7382 = vmul.f32 %v7379, %v472
        %v7383 = vmul.f32 %v7379, %v473
        %v7384 = vadd.f32 %v7374, %v7380
        %v7385 = vadd.f32 %v7375, %v7381
        %v7386 = vadd.f32 %v7376, %v7382
        %v7387 = vadd.f32 %v7377, %v7383
        %s7388 = sld [smem:[#allocation2 + $0x68f]]
        %v7389 = vstv %s7388
        %v7390 = vmul.f32 %v7389, %v474
        %v7391 = vmul.f32 %v7389, %v475
        %v7392 = vmul.f32 %v7389, %v476
        %v7393 = vmul.f32 %v7389, %v477
        %v7394 = vadd.f32 %v7384, %v7390
        %v7395 = vadd.f32 %v7385, %v7391
        %v7396 = vadd.f32 %v7386, %v7392
        %v7397 = vadd.f32 %v7387, %v7393
        %v7398 = vsub.f32 0.0, %v7394
        %v7399 = vsub.f32 0.0, %v7395
        %v7400 = vsub.f32 0.0, %v7396
        %v7401 = vsub.f32 0.0, %v7397
        %v7402 = vmul.f32 %v7398, 1.442695
        %v7403 = vpow.pop %v7402
        %v7404 = vmul.f32 %v7399, 1.442695
        %v7405 = vpow.pop %v7404
        %v7406 = vmul.f32 %v7400, 1.442695
        %v7407 = vpow.pop %v7406
        %v7408 = vmul.f32 %v7401, 1.442695
        %v7409 = vpow.pop %v7408
        %v7410 = vadd.f32 %v7403, 1.0
        %v7411 = vadd.f32 %v7405, 1.0
        %v7412 = vadd.f32 %v7407, 1.0
        %v7413 = vadd.f32 %v7409, 1.0
        %v7414 = vrcp.pop %v7410
        %v7415 = vmul.f32 1.0, %v7414
        %v7416 = vrcp.pop %v7411
        %v7417 = vmul.f32 1.0, %v7416
        %v7418 = vrcp.pop %v7412
        %v7419 = vmul.f32 1.0, %v7418
        %v7420 = vrcp.pop %v7413
        %v7421 = vmul.f32 1.0, %v7420
        %v7422 = vmul.f32 %v466, %v7415
        %v7423 = vmul.f32 %v467, %v7417
        %v7424 = vmul.f32 %v468, %v7419
        %v7425 = vmul.f32 %v469, %v7421
        %7426 = vst.msk [vmem:[%s408 + $0x1a0] sm:$0xff] %vm482, %v7422
        %7427 = vst.msk [vmem:[%s408 + $0x1a8] sm:$0xff] %vm482, %v7423
        %7428 = vst.msk [vmem:[%s408 + $0x1b0] sm:$0xff] %vm482, %v7424
        %7429 = vst.msk [vmem:[%s408 + $0x1b8] sm:$0xff] %vm482, %v7425
        %s7430 = sld [smem:[#allocation5 + $0xe]]
        %v7431 = vstv %s7430
        %v7432 = vrot.slane %v3451, 2
        %v7433 = vsel %vm3042, %v7432, 0
        %7435 = vmatprep.subr.mxu0 0.0
        %7436 = vmatpush1.msra.mxu0 %v7433
        %7437 = vmatprep.subr.mxu0 0.0
        %7438 = vmatpush1.msra.mxu0 0.0
        %7439 = vmatprep.subr.mxu0 0.0
        %7440 = vmatpush1.msra.mxu0 0.0
        %7441 = vmatprep.subr.mxu0 0.0
        %7442 = vmatpush1.msra.mxu0 0.0
        %7443 = vmatprep.subr.mxu0 0.0
        %7444 = vmatpush1.msra.mxu0 0.0
        %7445 = vmatprep.subr.mxu0 0.0
        %7446 = vmatpush1.msra.mxu0 0.0
        %7447 = vmatprep.subr.mxu0 0.0
        %7448 = vmatpush1.msra.mxu0 0.0
        %7449 = vmatprep.subr.mxu0 0.0
        %7450 = vmatpush1.msra.mxu0 0.0
        %7451 = vmatprep.subr.mxu0 0.0
        %7452 = vmatpush1.msra.mxu0 0.0
        %7453 = vmatprep.subr.mxu0 0.0
        %7454 = vmatpush1.msra.mxu0 0.0
        %7455 = vmatprep.subr.mxu0 0.0
        %7456 = vmatpush1.msra.mxu0 0.0
        %7457 = vmatprep.subr.mxu0 0.0
        %7458 = vmatpush1.msra.mxu0 0.0
        %7459 = vmatprep.subr.mxu0 0.0
        %7460 = vmatpush1.msra.mxu0 0.0
        %7461 = vmatprep.subr.mxu0 0.0
        %7462 = vmatpush1.msra.mxu0 0.0
        %7463 = vmatprep.subr.mxu0 0.0
        %7464 = vmatpush1.msra.mxu0 0.0
        %7465 = vmatprep.subr.mxu0 0.0
        %7466 = vmatpush1.msra.mxu0 0.0
        %7467 = vmatprep.subr.mxu0 0.0
        %7468 = vmatpush1.msra.mxu0 0.0
        %7469 = vmatprep.subr.mxu0 0.0
        %7470 = vmatpush1.msra.mxu0 0.0
        %7471 = vmatprep.subr.mxu0 0.0
        %7472 = vmatpush1.msra.mxu0 0.0
        %7473 = vmatprep.subr.mxu0 0.0
        %7474 = vmatpush1.msra.mxu0 0.0
        %7475 = vmatprep.subr.mxu0 0.0
        %7476 = vmatpush1.msra.mxu0 0.0
        %7477 = vmatprep.subr.mxu0 0.0
        %7478 = vmatpush1.msra.mxu0 0.0
        %7479 = vmatprep.subr.mxu0 0.0
        %7480 = vmatpush1.msra.mxu0 0.0
        %7481 = vmatprep.subr.mxu0 0.0
        %7482 = vmatpush1.msra.mxu0 0.0
        %7483 = vmatprep.subr.mxu0 0.0
        %7484 = vmatpush1.msra.mxu0 0.0
        %7485 = vmatprep.subr.mxu0 0.0
        %7486 = vmatpush1.msra.mxu0 0.0
        %7487 = vmatprep.subr.mxu0 0.0
        %7488 = vmatpush1.msra.mxu0 0.0
        %7489 = vmatprep.subr.mxu0 0.0
        %7490 = vmatpush1.msra.mxu0 0.0
        %7491 = vmatprep.subr.mxu0 0.0
        %7492 = vmatpush1.msra.mxu0 0.0
        %7493 = vmatprep.subr.mxu0 0.0
        %7494 = vmatpush1.msra.mxu0 0.0
        %7495 = vmatprep.subr.mxu0 0.0
        %7496 = vmatpush1.msra.mxu0 0.0
        %7497 = vmatprep.subr.mxu0 0.0
        %7498 = vmatpush1.msra.mxu0 0.0
        %7499 = vmatprep.mubr.f32.mxu0 0.0
        %7500 = vmatmul.mubr.f32.gmra.mrb[0].mxu0 %v3461
        %v7501 = vpop.f32.mrb[0].mxu0
        %v7502 = vadd.f32 %v7431, %v7501
        %v7503 = vpop.f32.mrb[0].mxu0
        %7504 = vmatprep.mubr.f32.mxu0 0.0
        %7505 = vmatmul.mubr.f32.gmra.mrb[0].mxu0 %v3464
        %v7506 = vpop.f32.mrb[0].mxu0
        %v7507 = vadd.f32 %v7431, %v7506
        %v7508 = vpop.f32.mrb[0].mxu0
        %7509 = vmatprep.mubr.f32.mxu0 0.0
        %7510 = vmatmul.mubr.f32.gmra.mrb[0].mxu0 %v3467
        %v7511 = vpop.f32.mrb[0].mxu0
        %v7512 = vadd.f32 %v7431, %v7511
        %v7513 = vpop.f32.mrb[0].mxu0
        %7514 = vmatprep.mubr.f32.mxu0 0.0
        %7515 = vmatmul.mubr.f32.gmra.mrb[0].mxu0 %v3470
        %v7516 = vpop.f32.mrb[0].mxu0
        %v7517 = vadd.f32 %v7431, %v7516
        %v7518 = vpop.f32.mrb[0].mxu0
        %7519 = vdwg.mxu0
        %s7520 = sld [smem:[#allocation2 + $0x700]]
        %v7521 = vstv %s7520
        %v7522 = vmul.f32 %v7521, %v414
        %v7523 = vmul.f32 %v7521, %v415
        %v7524 = vmul.f32 %v7521, %v416
        %v7525 = vmul.f32 %v7521, %v417
        %v7526 = vadd.f32 %v7502, %v7522
        %v7527 = vadd.f32 %v7507, %v7523
        %v7528 = vadd.f32 %v7512, %v7524
        %v7529 = vadd.f32 %v7517, %v7525
        %s7530 = sld [smem:[#allocation2 + $0x701]]
        %v7531 = vstv %s7530
        %v7532 = vmul.f32 %v7531, %v418
        %v7533 = vmul.f32 %v7531, %v419
        %v7534 = vmul.f32 %v7531, %v420
        %v7535 = vmul.f32 %v7531, %v421
        %v7536 = vadd.f32 %v7526, %v7532
        %v7537 = vadd.f32 %v7527, %v7533
        %v7538 = vadd.f32 %v7528, %v7534
        %v7539 = vadd.f32 %v7529, %v7535
        %s7540 = sld [smem:[#allocation2 + $0x702]]
        %v7541 = vstv %s7540
        %v7542 = vmul.f32 %v7541, %v422
        %v7543 = vmul.f32 %v7541, %v423
        %v7544 = vmul.f32 %v7541, %v424
        %v7545 = vmul.f32 %v7541, %v425
        %v7546 = vadd.f32 %v7536, %v7542
        %v7547 = vadd.f32 %v7537, %v7543
        %v7548 = vadd.f32 %v7538, %v7544
        %v7549 = vadd.f32 %v7539, %v7545
        %s7550 = sld [smem:[#allocation2 + $0x703]]
        %v7551 = vstv %s7550
        %v7552 = vmul.f32 %v7551, %v426
        %v7553 = vmul.f32 %v7551, %v427
        %v7554 = vmul.f32 %v7551, %v428
        %v7555 = vmul.f32 %v7551, %v429
        %v7556 = vadd.f32 %v7546, %v7552
        %v7557 = vadd.f32 %v7547, %v7553
        %v7558 = vadd.f32 %v7548, %v7554
        %v7559 = vadd.f32 %v7549, %v7555
        %s7560 = sld [smem:[#allocation2 + $0x704]]
        %v7561 = vstv %s7560
        %v7562 = vmul.f32 %v7561, %v430
        %v7563 = vmul.f32 %v7561, %v431
        %v7564 = vmul.f32 %v7561, %v432
        %v7565 = vmul.f32 %v7561, %v433
        %v7566 = vadd.f32 %v7556, %v7562
        %v7567 = vadd.f32 %v7557, %v7563
        %v7568 = vadd.f32 %v7558, %v7564
        %v7569 = vadd.f32 %v7559, %v7565
        %s7570 = sld [smem:[#allocation2 + $0x705]]
        %v7571 = vstv %s7570
        %v7572 = vmul.f32 %v7571, %v434
        %v7573 = vmul.f32 %v7571, %v435
        %v7574 = vmul.f32 %v7571, %v436
        %v7575 = vmul.f32 %v7571, %v437
        %v7576 = vadd.f32 %v7566, %v7572
        %v7577 = vadd.f32 %v7567, %v7573
        %v7578 = vadd.f32 %v7568, %v7574
        %v7579 = vadd.f32 %v7569, %v7575
        %s7580 = sld [smem:[#allocation2 + $0x706]]
        %v7581 = vstv %s7580
        %v7582 = vmul.f32 %v7581, %v438
        %v7583 = vmul.f32 %v7581, %v439
        %v7584 = vmul.f32 %v7581, %v440
        %v7585 = vmul.f32 %v7581, %v441
        %v7586 = vadd.f32 %v7576, %v7582
        %v7587 = vadd.f32 %v7577, %v7583
        %v7588 = vadd.f32 %v7578, %v7584
        %v7589 = vadd.f32 %v7579, %v7585
        %s7590 = sld [smem:[#allocation2 + $0x707]]
        %v7591 = vstv %s7590
        %v7592 = vmul.f32 %v7591, %v442
        %v7593 = vmul.f32 %v7591, %v443
        %v7594 = vmul.f32 %v7591, %v444
        %v7595 = vmul.f32 %v7591, %v445
        %v7596 = vadd.f32 %v7586, %v7592
        %v7597 = vadd.f32 %v7587, %v7593
        %v7598 = vadd.f32 %v7588, %v7594
        %v7599 = vadd.f32 %v7589, %v7595
        %s7600 = sld [smem:[#allocation2 + $0x708]]
        %v7601 = vstv %s7600
        %v7602 = vmul.f32 %v7601, %v446
        %v7603 = vmul.f32 %v7601, %v447
        %v7604 = vmul.f32 %v7601, %v448
        %v7605 = vmul.f32 %v7601, %v449
        %v7606 = vadd.f32 %v7596, %v7602
        %v7607 = vadd.f32 %v7597, %v7603
        %v7608 = vadd.f32 %v7598, %v7604
        %v7609 = vadd.f32 %v7599, %v7605
        %s7610 = sld [smem:[#allocation2 + $0x709]]
        %v7611 = vstv %s7610
        %v7612 = vmul.f32 %v7611, %v450
        %v7613 = vmul.f32 %v7611, %v451
        %v7614 = vmul.f32 %v7611, %v452
        %v7615 = vmul.f32 %v7611, %v453
        %v7616 = vadd.f32 %v7606, %v7612
        %v7617 = vadd.f32 %v7607, %v7613
        %v7618 = vadd.f32 %v7608, %v7614
        %v7619 = vadd.f32 %v7609, %v7615
        %s7620 = sld [smem:[#allocation2 + $0x70a]]
        %v7621 = vstv %s7620
        %v7622 = vmul.f32 %v7621, %v454
        %v7623 = vmul.f32 %v7621, %v455
        %v7624 = vmul.f32 %v7621, %v456
        %v7625 = vmul.f32 %v7621, %v457
        %v7626 = vadd.f32 %v7616, %v7622
        %v7627 = vadd.f32 %v7617, %v7623
        %v7628 = vadd.f32 %v7618, %v7624
        %v7629 = vadd.f32 %v7619, %v7625
        %s7630 = sld [smem:[#allocation2 + $0x70b]]
        %v7631 = vstv %s7630
        %v7632 = vmul.f32 %v7631, %v458
        %v7633 = vmul.f32 %v7631, %v459
        %v7634 = vmul.f32 %v7631, %v460
        %v7635 = vmul.f32 %v7631, %v461
        %v7636 = vadd.f32 %v7626, %v7632
        %v7637 = vadd.f32 %v7627, %v7633
        %v7638 = vadd.f32 %v7628, %v7634
        %v7639 = vadd.f32 %v7629, %v7635
        %s7640 = sld [smem:[#allocation2 + $0x70c]]
        %v7641 = vstv %s7640
        %v7642 = vmul.f32 %v7641, %v462
        %v7643 = vmul.f32 %v7641, %v463
        %v7644 = vmul.f32 %v7641, %v464
        %v7645 = vmul.f32 %v7641, %v465
        %v7646 = vadd.f32 %v7636, %v7642
        %v7647 = vadd.f32 %v7637, %v7643
        %v7648 = vadd.f32 %v7638, %v7644
        %v7649 = vadd.f32 %v7639, %v7645
        %s7650 = sld [smem:[#allocation2 + $0x70d]]
        %v7651 = vstv %s7650
        %v7652 = vmul.f32 %v7651, %v466
        %v7653 = vmul.f32 %v7651, %v467
        %v7654 = vmul.f32 %v7651, %v468
        %v7655 = vmul.f32 %v7651, %v469
        %v7656 = vadd.f32 %v7646, %v7652
        %v7657 = vadd.f32 %v7647, %v7653
        %v7658 = vadd.f32 %v7648, %v7654
        %v7659 = vadd.f32 %v7649, %v7655
        %s7660 = sld [smem:[#allocation2 + $0x70e]]
        %v7661 = vstv %s7660
        %v7662 = vmul.f32 %v7661, %v470
        %v7663 = vmul.f32 %v7661, %v471
        %v7664 = vmul.f32 %v7661, %v472
        %v7665 = vmul.f32 %v7661, %v473
        %v7666 = vadd.f32 %v7656, %v7662
        %v7667 = vadd.f32 %v7657, %v7663
        %v7668 = vadd.f32 %v7658, %v7664
        %v7669 = vadd.f32 %v7659, %v7665
        %s7670 = sld [smem:[#allocation2 + $0x70f]]
        %v7671 = vstv %s7670
        %v7672 = vmul.f32 %v7671, %v474
        %v7673 = vmul.f32 %v7671, %v475
        %v7674 = vmul.f32 %v7671, %v476
        %v7675 = vmul.f32 %v7671, %v477
        %v7676 = vadd.f32 %v7666, %v7672
        %v7677 = vadd.f32 %v7667, %v7673
        %v7678 = vadd.f32 %v7668, %v7674
        %v7679 = vadd.f32 %v7669, %v7675
        %v7680 = vsub.f32 0.0, %v7676
        %v7681 = vsub.f32 0.0, %v7677
        %v7682 = vsub.f32 0.0, %v7678
        %v7683 = vsub.f32 0.0, %v7679
        %v7684 = vmul.f32 %v7680, 1.442695
        %v7685 = vpow.pop %v7684
        %v7686 = vmul.f32 %v7681, 1.442695
        %v7687 = vpow.pop %v7686
        %v7688 = vmul.f32 %v7682, 1.442695
        %v7689 = vpow.pop %v7688
        %v7690 = vmul.f32 %v7683, 1.442695
        %v7691 = vpow.pop %v7690
        %v7692 = vadd.f32 %v7685, 1.0
        %v7693 = vadd.f32 %v7687, 1.0
        %v7694 = vadd.f32 %v7689, 1.0
        %v7695 = vadd.f32 %v7691, 1.0
        %v7696 = vrcp.pop %v7692
        %v7697 = vmul.f32 1.0, %v7696
        %v7698 = vrcp.pop %v7693
        %v7699 = vmul.f32 1.0, %v7698
        %v7700 = vrcp.pop %v7694
        %v7701 = vmul.f32 1.0, %v7700
        %v7702 = vrcp.pop %v7695
        %v7703 = vmul.f32 1.0, %v7702
        %v7704 = vmul.f32 %v470, %v7697
        %v7705 = vmul.f32 %v471, %v7699
        %v7706 = vmul.f32 %v472, %v7701
        %v7707 = vmul.f32 %v473, %v7703
        %7708 = vst.msk [vmem:[%s408 + $0x1c0] sm:$0xff] %vm482, %v7704
        %7709 = vst.msk [vmem:[%s408 + $0x1c8] sm:$0xff] %vm482, %v7705
        %7710 = vst.msk [vmem:[%s408 + $0x1d0] sm:$0xff] %vm482, %v7706
        %7711 = vst.msk [vmem:[%s408 + $0x1d8] sm:$0xff] %vm482, %v7707
        %s7712 = sld [smem:[#allocation5 + $0xf]]
        %v7713 = vstv %s7712
        %v7714 = vrot.slane %v3451, 5
        %v7715 = vsel %vm3042, %v7714, 0
        %7717 = vmatprep.subr.mxu0 0.0
        %7718 = vmatpush1.msra.mxu0 %v7715
        %7719 = vmatprep.subr.mxu0 0.0
        %7720 = vmatpush1.msra.mxu0 0.0
        %7721 = vmatprep.subr.mxu0 0.0
        %7722 = vmatpush1.msra.mxu0 0.0
        %7723 = vmatprep.subr.mxu0 0.0
        %7724 = vmatpush1.msra.mxu0 0.0
        %7725 = vmatprep.subr.mxu0 0.0
        %7726 = vmatpush1.msra.mxu0 0.0
        %7727 = vmatprep.subr.mxu0 0.0
        %7728 = vmatpush1.msra.mxu0 0.0
        %7729 = vmatprep.subr.mxu0 0.0
        %7730 = vmatpush1.msra.mxu0 0.0
        %7731 = vmatprep.subr.mxu0 0.0
        %7732 = vmatpush1.msra.mxu0 0.0
        %7733 = vmatprep.subr.mxu0 0.0
        %7734 = vmatpush1.msra.mxu0 0.0
        %7735 = vmatprep.subr.mxu0 0.0
        %7736 = vmatpush1.msra.mxu0 0.0
        %7737 = vmatprep.subr.mxu0 0.0
        %7738 = vmatpush1.msra.mxu0 0.0
        %7739 = vmatprep.subr.mxu0 0.0
        %7740 = vmatpush1.msra.mxu0 0.0
        %7741 = vmatprep.subr.mxu0 0.0
        %7742 = vmatpush1.msra.mxu0 0.0
        %7743 = vmatprep.subr.mxu0 0.0
        %7744 = vmatpush1.msra.mxu0 0.0
        %7745 = vmatprep.subr.mxu0 0.0
        %7746 = vmatpush1.msra.mxu0 0.0
        %7747 = vmatprep.subr.mxu0 0.0
        %7748 = vmatpush1.msra.mxu0 0.0
        %7749 = vmatprep.subr.mxu0 0.0
        %7750 = vmatpush1.msra.mxu0 0.0
        %7751 = vmatprep.subr.mxu0 0.0
        %7752 = vmatpush1.msra.mxu0 0.0
        %7753 = vmatprep.subr.mxu0 0.0
        %7754 = vmatpush1.msra.mxu0 0.0
        %7755 = vmatprep.subr.mxu0 0.0
        %7756 = vmatpush1.msra.mxu0 0.0
        %7757 = vmatprep.subr.mxu0 0.0
        %7758 = vmatpush1.msra.mxu0 0.0
        %7759 = vmatprep.subr.mxu0 0.0
        %7760 = vmatpush1.msra.mxu0 0.0
        %7761 = vmatprep.subr.mxu0 0.0
        %7762 = vmatpush1.msra.mxu0 0.0
        %7763 = vmatprep.subr.mxu0 0.0
        %7764 = vmatpush1.msra.mxu0 0.0
        %7765 = vmatprep.subr.mxu0 0.0
        %7766 = vmatpush1.msra.mxu0 0.0
        %7767 = vmatprep.subr.mxu0 0.0
        %7768 = vmatpush1.msra.mxu0 0.0
        %7769 = vmatprep.subr.mxu0 0.0
        %7770 = vmatpush1.msra.mxu0 0.0
        %7771 = vmatprep.subr.mxu0 0.0
        %7772 = vmatpush1.msra.mxu0 0.0
        %7773 = vmatprep.subr.mxu0 0.0
        %7774 = vmatpush1.msra.mxu0 0.0
        %7775 = vmatprep.subr.mxu0 0.0
        %7776 = vmatpush1.msra.mxu0 0.0
        %7777 = vmatprep.subr.mxu0 0.0
        %7778 = vmatpush1.msra.mxu0 0.0
        %7779 = vmatprep.subr.mxu0 0.0
        %7780 = vmatpush1.msra.mxu0 0.0
        %7781 = vmatprep.mubr.f32.mxu0 0.0
        %7782 = vmatmul.mubr.f32.gmra.mrb[0].mxu0 %v3461
        %v7783 = vpop.f32.mrb[0].mxu0
        %v7784 = vadd.f32 %v7713, %v7783
        %v7785 = vpop.f32.mrb[0].mxu0
        %7786 = vmatprep.mubr.f32.mxu0 0.0
        %7787 = vmatmul.mubr.f32.gmra.mrb[0].mxu0 %v3464
        %v7788 = vpop.f32.mrb[0].mxu0
        %v7789 = vadd.f32 %v7713, %v7788
        %v7790 = vpop.f32.mrb[0].mxu0
        %7791 = vmatprep.mubr.f32.mxu0 0.0
        %7792 = vmatmul.mubr.f32.gmra.mrb[0].mxu0 %v3467
        %v7793 = vpop.f32.mrb[0].mxu0
        %v7794 = vadd.f32 %v7713, %v7793
        %v7795 = vpop.f32.mrb[0].mxu0
        %7796 = vmatprep.mubr.f32.mxu0 0.0
        %7797 = vmatmul.mubr.f32.gmra.mrb[0].mxu0 %v3470
        %v7798 = vpop.f32.mrb[0].mxu0
        %v7799 = vadd.f32 %v7713, %v7798
        %v7800 = vpop.f32.mrb[0].mxu0
        %7801 = vdwg.mxu0
        %s7802 = sld [smem:[#allocation2 + $0x780]]
        %v7803 = vstv %s7802
        %v7804 = vmul.f32 %v7803, %v414
        %v7805 = vmul.f32 %v7803, %v415
        %v7806 = vmul.f32 %v7803, %v416
        %v7807 = vmul.f32 %v7803, %v417
        %v7808 = vadd.f32 %v7784, %v7804
        %v7809 = vadd.f32 %v7789, %v7805
        %v7810 = vadd.f32 %v7794, %v7806
        %v7811 = vadd.f32 %v7799, %v7807
        %s7812 = sld [smem:[#allocation2 + $0x781]]
        %v7813 = vstv %s7812
        %v7814 = vmul.f32 %v7813, %v418
        %v7815 = vmul.f32 %v7813, %v419
        %v7816 = vmul.f32 %v7813, %v420
        %v7817 = vmul.f32 %v7813, %v421
        %v7818 = vadd.f32 %v7808, %v7814
        %v7819 = vadd.f32 %v7809, %v7815
        %v7820 = vadd.f32 %v7810, %v7816
        %v7821 = vadd.f32 %v7811, %v7817
        %s7822 = sld [smem:[#allocation2 + $0x782]]
        %v7823 = vstv %s7822
        %v7824 = vmul.f32 %v7823, %v422
        %v7825 = vmul.f32 %v7823, %v423
        %v7826 = vmul.f32 %v7823, %v424
        %v7827 = vmul.f32 %v7823, %v425
        %v7828 = vadd.f32 %v7818, %v7824
        %v7829 = vadd.f32 %v7819, %v7825
        %v7830 = vadd.f32 %v7820, %v7826
        %v7831 = vadd.f32 %v7821, %v7827
        %s7832 = sld [smem:[#allocation2 + $0x783]]
        %v7833 = vstv %s7832
        %v7834 = vmul.f32 %v7833, %v426
        %v7835 = vmul.f32 %v7833, %v427
        %v7836 = vmul.f32 %v7833, %v428
        %v7837 = vmul.f32 %v7833, %v429
        %v7838 = vadd.f32 %v7828, %v7834
        %v7839 = vadd.f32 %v7829, %v7835
        %v7840 = vadd.f32 %v7830, %v7836
        %v7841 = vadd.f32 %v7831, %v7837
        %s7842 = sld [smem:[#allocation2 + $0x784]]
        %v7843 = vstv %s7842
        %v7844 = vmul.f32 %v7843, %v430
        %v7845 = vmul.f32 %v7843, %v431
        %v7846 = vmul.f32 %v7843, %v432
        %v7847 = vmul.f32 %v7843, %v433
        %v7848 = vadd.f32 %v7838, %v7844
        %v7849 = vadd.f32 %v7839, %v7845
        %v7850 = vadd.f32 %v7840, %v7846
        %v7851 = vadd.f32 %v7841, %v7847
        %s7852 = sld [smem:[#allocation2 + $0x785]]
        %v7853 = vstv %s7852
        %v7854 = vmul.f32 %v7853, %v434
        %v7855 = vmul.f32 %v7853, %v435
        %v7856 = vmul.f32 %v7853, %v436
        %v7857 = vmul.f32 %v7853, %v437
        %v7858 = vadd.f32 %v7848, %v7854
        %v7859 = vadd.f32 %v7849, %v7855
        %v7860 = vadd.f32 %v7850, %v7856
        %v7861 = vadd.f32 %v7851, %v7857
        %s7862 = sld [smem:[#allocation2 + $0x786]]
        %v7863 = vstv %s7862
        %v7864 = vmul.f32 %v7863, %v438
        %v7865 = vmul.f32 %v7863, %v439
        %v7866 = vmul.f32 %v7863, %v440
        %v7867 = vmul.f32 %v7863, %v441
        %v7868 = vadd.f32 %v7858, %v7864
        %v7869 = vadd.f32 %v7859, %v7865
        %v7870 = vadd.f32 %v7860, %v7866
        %v7871 = vadd.f32 %v7861, %v7867
        %s7872 = sld [smem:[#allocation2 + $0x787]]
        %v7873 = vstv %s7872
        %v7874 = vmul.f32 %v7873, %v442
        %v7875 = vmul.f32 %v7873, %v443
        %v7876 = vmul.f32 %v7873, %v444
        %v7877 = vmul.f32 %v7873, %v445
        %v7878 = vadd.f32 %v7868, %v7874
        %v7879 = vadd.f32 %v7869, %v7875
        %v7880 = vadd.f32 %v7870, %v7876
        %v7881 = vadd.f32 %v7871, %v7877
        %s7882 = sld [smem:[#allocation2 + $0x788]]
        %v7883 = vstv %s7882
        %v7884 = vmul.f32 %v7883, %v446
        %v7885 = vmul.f32 %v7883, %v447
        %v7886 = vmul.f32 %v7883, %v448
        %v7887 = vmul.f32 %v7883, %v449
        %v7888 = vadd.f32 %v7878, %v7884
        %v7889 = vadd.f32 %v7879, %v7885
        %v7890 = vadd.f32 %v7880, %v7886
        %v7891 = vadd.f32 %v7881, %v7887
        %s7892 = sld [smem:[#allocation2 + $0x789]]
        %v7893 = vstv %s7892
        %v7894 = vmul.f32 %v7893, %v450
        %v7895 = vmul.f32 %v7893, %v451
        %v7896 = vmul.f32 %v7893, %v452
        %v7897 = vmul.f32 %v7893, %v453
        %v7898 = vadd.f32 %v7888, %v7894
        %v7899 = vadd.f32 %v7889, %v7895
        %v7900 = vadd.f32 %v7890, %v7896
        %v7901 = vadd.f32 %v7891, %v7897
        %s7902 = sld [smem:[#allocation2 + $0x78a]]
        %v7903 = vstv %s7902
        %v7904 = vmul.f32 %v7903, %v454
        %v7905 = vmul.f32 %v7903, %v455
        %v7906 = vmul.f32 %v7903, %v456
        %v7907 = vmul.f32 %v7903, %v457
        %v7908 = vadd.f32 %v7898, %v7904
        %v7909 = vadd.f32 %v7899, %v7905
        %v7910 = vadd.f32 %v7900, %v7906
        %v7911 = vadd.f32 %v7901, %v7907
        %s7912 = sld [smem:[#allocation2 + $0x78b]]
        %v7913 = vstv %s7912
        %v7914 = vmul.f32 %v7913, %v458
        %v7915 = vmul.f32 %v7913, %v459
        %v7916 = vmul.f32 %v7913, %v460
        %v7917 = vmul.f32 %v7913, %v461
        %v7918 = vadd.f32 %v7908, %v7914
        %v7919 = vadd.f32 %v7909, %v7915
        %v7920 = vadd.f32 %v7910, %v7916
        %v7921 = vadd.f32 %v7911, %v7917
        %s7922 = sld [smem:[#allocation2 + $0x78c]]
        %v7923 = vstv %s7922
        %v7924 = vmul.f32 %v7923, %v462
        %v7925 = vmul.f32 %v7923, %v463
        %v7926 = vmul.f32 %v7923, %v464
        %v7927 = vmul.f32 %v7923, %v465
        %v7928 = vadd.f32 %v7918, %v7924
        %v7929 = vadd.f32 %v7919, %v7925
        %v7930 = vadd.f32 %v7920, %v7926
        %v7931 = vadd.f32 %v7921, %v7927
        %s7932 = sld [smem:[#allocation2 + $0x78d]]
        %v7933 = vstv %s7932
        %v7934 = vmul.f32 %v7933, %v466
        %v7935 = vmul.f32 %v7933, %v467
        %v7936 = vmul.f32 %v7933, %v468
        %v7937 = vmul.f32 %v7933, %v469
        %v7938 = vadd.f32 %v7928, %v7934
        %v7939 = vadd.f32 %v7929, %v7935
        %v7940 = vadd.f32 %v7930, %v7936
        %v7941 = vadd.f32 %v7931, %v7937
        %s7942 = sld [smem:[#allocation2 + $0x78e]]
        %v7943 = vstv %s7942
        %v7944 = vmul.f32 %v7943, %v470
        %v7945 = vmul.f32 %v7943, %v471
        %v7946 = vmul.f32 %v7943, %v472
        %v7947 = vmul.f32 %v7943, %v473
        %v7948 = vadd.f32 %v7938, %v7944
        %v7949 = vadd.f32 %v7939, %v7945
        %v7950 = vadd.f32 %v7940, %v7946
        %v7951 = vadd.f32 %v7941, %v7947
        %s7952 = sld [smem:[#allocation2 + $0x78f]]
        %v7953 = vstv %s7952
        %v7954 = vmul.f32 %v7953, %v474
        %v7955 = vmul.f32 %v7953, %v475
        %v7956 = vmul.f32 %v7953, %v476
        %v7957 = vmul.f32 %v7953, %v477
        %v7958 = vadd.f32 %v7948, %v7954
        %v7959 = vadd.f32 %v7949, %v7955
        %v7960 = vadd.f32 %v7950, %v7956
        %v7961 = vadd.f32 %v7951, %v7957
        %v7962 = vsub.f32 0.0, %v7958
        %v7963 = vsub.f32 0.0, %v7959
        %v7964 = vsub.f32 0.0, %v7960
        %v7965 = vsub.f32 0.0, %v7961
        %v7966 = vmul.f32 %v7962, 1.442695
        %v7967 = vpow.pop %v7966
        %v7968 = vmul.f32 %v7963, 1.442695
        %v7969 = vpow.pop %v7968
        %v7970 = vmul.f32 %v7964, 1.442695
        %v7971 = vpow.pop %v7970
        %v7972 = vmul.f32 %v7965, 1.442695
        %v7973 = vpow.pop %v7972
        %v7974 = vadd.f32 %v7967, 1.0
        %v7975 = vadd.f32 %v7969, 1.0
        %v7976 = vadd.f32 %v7971, 1.0
        %v7977 = vadd.f32 %v7973, 1.0
        %v7978 = vrcp.pop %v7974
        %v7979 = vmul.f32 1.0, %v7978
        %v7980 = vrcp.pop %v7975
        %v7981 = vmul.f32 1.0, %v7980
        %v7982 = vrcp.pop %v7976
        %v7983 = vmul.f32 1.0, %v7982
        %v7984 = vrcp.pop %v7977
        %v7985 = vmul.f32 1.0, %v7984
        %v7986 = vmul.f32 %v474, %v7979
        %v7987 = vmul.f32 %v475, %v7981
        %v7988 = vmul.f32 %v476, %v7983
        %v7989 = vmul.f32 %v477, %v7985
        %7990 = vst.msk [vmem:[%s408 + $0x1e0] sm:$0xff] %vm482, %v7986
        %7991 = vst.msk [vmem:[%s408 + $0x1e8] sm:$0xff] %vm482, %v7987
        %7992 = vst.msk [vmem:[%s408 + $0x1f0] sm:$0xff] %vm482, %v7988
        %7993 = vst.msk [vmem:[%s408 + $0x1f8] sm:$0xff] %vm482, %v7989
        %s7994 = sand.u32 %s271, 1
        %s7995 = scalar_lea.sflag [#allocation3], %s7994
        %s7996 = sand.u32 %s271, 1
        %s7997 = smul.addr %s7996, 512
        %s7998 = scalar_lea.vmem [#allocation7], %s7997
        // Predicated region
        $region73: #{esa_forward.1} parent=63 // pred_check
          %p7999 = pneg %p281
        $region74: #{esa_forward.1} parent=63 // pred_check_branch
          %8001 = sbr.rel (%p7999) target = $region76
        $region75: #{esa_forward.1} parent=63 // pred_region
          %s8003 = ssub.s32 8192, 8192
          %8004 = vsyncadd %s7995, %s8003
          %s8005 = smul.addr %s27, 64
          %s8006 = smul.addr %s8005, 128
          %s8007 = scalar_lea.hbm %s11, %s8006
          %s8008 = sshll.u32 %s7998, 4
          %s8009 = int_to_ptr.vmem [resolvable:$true] %s8008
          %8014 = dma.vmem_to_hbm [thread:$0]  %s8009, 8192, %s8007, %s7995, 128, 128, 8
        $region76: #{esa_forward.1} parent=63 // pred_fallthru
          _
      $region64: #{esa_forward.1} parent=5 // pred_fallthru
        _
      %p8015 = scmp.le.s32.totalorder 2, %s22
      // Predicated region
      $region77: #{esa_forward.1} parent=5 // pred_check
        %p8016 = pneg %p8015
      $region78: #{esa_forward.1} parent=5 // pred_check_branch
        %8018 = sbr.rel (%p8016) target = $region80
      $region79: #{esa_forward.1} parent=5 // pred_region
        %s8019 = ssub.s32 %s22, 2
        // Predicated region
        $region81: #{esa_forward.1} parent=79 // pred_check
          %p8020 = pneg %p287
        $region82: #{esa_forward.1} parent=79 // pred_check_branch
          %8022 = sbr.rel (%p8020) target = $region84
        $region83: #{esa_forward.1} parent=79 // pred_region
          %s8023 = sand.u32 %s272, 1
          %s8024 = scalar_lea.sflag [#allocation3], %s8023
          %s8025 = sand.u32 %s272, 1
          %s8026 = smul.addr %s8025, 512
          %s8027 = scalar_lea.vmem [#allocation7], %s8026
          %8028 = dma.done %s8024, 8192
        $region84: #{esa_forward.1} parent=79 // pred_fallthru
          _
      $region80: #{esa_forward.1} parent=5 // pred_fallthru
        _
    $region6: #{esa_forward.1} parent=1 // loop_footer
      %s26 = sadd.s32 1, %s22
    $region7: #{esa_forward.1} parent=1 // loop_footer_branch
      %21 = sbr.rel target = $region3
    $region8: #{esa_forward.1} parent=1 // loop_exit
      _
    %8029 = vsyncpa [#allocation3], 1
    %s8030 = scalar_lea.sflag [#allocation3], 1
    %8031 = vsyncpa %s8030, 1
    %8032 = vsyncpa [#allocation4], 1
    %s8033 = scalar_lea.sflag [#allocation4], 1
    %8034 = vsyncpa %s8033, 1
    %8035 = vsyncpa [#allocation6], 1

</llo_original>
